<compile_context>
chip_gen: v7x
topology: tpu7x:2x2x1
jax: 0.10.0
libtpu: 0.0.40
codegen_flags: <defaults>
</compile_context>

<pallas_src>
import functools

import jax
import jax.numpy as jnp
from jax.experimental import pallas as pl
from jax.experimental.pallas import tpu as pltpu

LN_EPS = 1e-5  # torch.nn.LayerNorm default
INV_SQRT2 = 0.7071067811865476


def _layernorm(x, g, b):
    mu = jnp.mean(x, axis=-1, keepdims=True)
    var = jnp.mean((x - mu) ** 2, axis=-1, keepdims=True)
    return (x - mu) * jax.lax.rsqrt(var + LN_EPS) * g + b


def _gelu_exact(x):
    # torch.nn.GELU default: exact (erf-based) GELU
    return 0.5 * x * (1.0 + jax.lax.erf(x * INV_SQRT2))


# ------------------------------ fused kernel ------------------------------- #

def fused_block_kernel(
    x_ref,
    pre_g_ref, pre_b_ref,
    ln1g_ref, ln1b_ref, wqkv_ref, wo_ref, bo_ref, ls1_ref,
    ln2g_ref, ln2b_ref, w1_ref, b1_ref, w2_ref, b2_ref, ls2_ref,
    norm_g_ref, norm_b_ref, head_w_ref, head_b_ref,
    o_ref,
    x_vmem,
    *, num_heads, num_latent_tokens,
):
    l = pl.program_id(1)
    num_layers = pl.num_programs(1)
    S, D = x_vmem.shape
    H = num_heads
    Dh = D // H
    L = num_latent_tokens

    # first layer step for this batch element: pre-LayerNorm into the VMEM carry
    @pl.when(l == 0)
    def _():
        x_vmem[...] = _layernorm(x_ref[0], pre_g_ref[...], pre_b_ref[...])

    x = x_vmem[...]

    # ---------------- attention branch ----------------
    h = _layernorm(x, ln1g_ref[...], ln1b_ref[...])
    # one full-depth (K=D) matmul; columns = [Q(scaled) | K | V], head-major inside
    qkv = jnp.dot(h, wqkv_ref[...], preferred_element_type=jnp.float32)   # (S, 3D)

    def _split_heads(m2):  # (S, D) -> (H, S, Dh) via static lane slices (no transpose)
        return jnp.stack([m2[:, i * Dh:(i + 1) * Dh] for i in range(H)], axis=0)

    q = _split_heads(qkv[:, :D])            # 1/sqrt(Dh) folded in at pack time
    k = _split_heads(qkv[:, D:2 * D])
    v = _split_heads(qkv[:, 2 * D:])

    s = jnp.einsum("hqd,hkd->hqk", q, k, preferred_element_type=jnp.float32)
    s = s - jnp.max(s, axis=-1, keepdims=True)
    p = jnp.exp(s)
    denom = jnp.sum(p, axis=-1, keepdims=True)                            # (H, S, 1)
    ctx = jnp.einsum("hqk,hkd->hqd", p, v, preferred_element_type=jnp.float32)
    # deferred softmax normalization: H*S*Dh elements instead of H*S*S
    ctx = ctx * pl.reciprocal(denom, approx=False)
    # concat heads back to (S, D); ONE full-depth output projection
    ctx_cat = jnp.concatenate([ctx[i] for i in range(H)], axis=-1)        # (S, D)
    attn = jnp.dot(ctx_cat, wo_ref[...], preferred_element_type=jnp.float32) + bo_ref[...]
    x = x + ls1_ref[...] * attn            # LayerScale (init_values=0.01) + residual

    # ------------------- MLP branch --------------------
    h2 = _layernorm(x, ln2g_ref[...], ln2b_ref[...])
    z = jnp.dot(h2, w1_ref[...], preferred_element_type=jnp.float32) + b1_ref[...]
    z = _gelu_exact(z)
    z = jnp.dot(z, w2_ref[...], preferred_element_type=jnp.float32) + b2_ref[...]
    x = x + ls2_ref[...] * z

    x_vmem[...] = x                        # carry to next layer step

    # last layer step: final LayerNorm + head on the latent tokens only,
    # written to a lane-dense (padded) output block
    @pl.when(l == num_layers - 1)
    def _():
        xl = _layernorm(x[S - L:, :], norm_g_ref[...], norm_b_ref[...])
        o_ref[0] = (jnp.dot(xl, head_w_ref[...], preferred_element_type=jnp.float32)
                    + head_b_ref[...])


# ----------------------------- param packaging ----------------------------- #

def _pack_block_params(blocks, num_heads):
    """Stack per-layer weights with a leading layer axis.

    wqkv is (NL, D, 3D) with columns [Q | K | V]; the Q columns are pre-scaled
    by 1/sqrt(Dh) so the kernel never scales the (H,S,S) score tensor.
    wo stays (NL, D, D) (concat-heads input convention).
    """
    D = blocks[0]["wq"].shape[0]
    Dh = D // num_heads
    scale = Dh ** -0.5
    stack = lambda key: jnp.stack([p[key] for p in blocks])
    wqkv = jnp.stack(
        [jnp.concatenate([p["wq"] * scale, p["wk"], p["wv"]], axis=1) for p in blocks])
    return {
        "ln1_g": stack("ln1_g"), "ln1_b": stack("ln1_b"),
        "wqkv": wqkv,
        "wo": stack("wo"), "bo": stack("bo"), "ls1": stack("ls1"),
        "ln2_g": stack("ln2_g"), "ln2_b": stack("ln2_b"),
        "w1": stack("w1"), "b1": stack("b1"),
        "w2": stack("w2"), "b2": stack("b2"), "ls2": stack("ls2"),
    }


# ------------------------------ Pallas wrapper ------------------------------ #

def transformer_intervention_forward(x, params, num_heads, num_latent_tokens):
    """x: (B, N, D) token sequence -> (B, num_latent_tokens, output_size)."""
    B, N, D = x.shape
    L = num_latent_tokens
    lat = jnp.broadcast_to(params["latent_embed"][None], (B, L, D))
    xs = jnp.concatenate([x, lat], axis=1)                 # (B, S, D)
    S = N + L

    blocks = params["blocks"]
    NL = len(blocks)
    H4 = blocks[0]["w1"].shape[1]
    O = params["head_w"].shape[1]

    # lane-dense output: pad head output width to a multiple of 128 lanes
    O_pad = max(128, -(-O // 128) * 128)
    head_w = jnp.zeros((D, O_pad), jnp.float32).at[:, :O].set(params["head_w"])
    head_b = jnp.zeros((1, O_pad), jnp.float32).at[:, :O].set(params["head_b"])

    packed = _pack_block_params(blocks, num_heads)

    def const(shape):  # grid-invariant (small) weights
        return pl.BlockSpec(shape, lambda b, l, _nd=len(shape): (0,) * _nd)

    def per_layer(shape):  # stacked (NL, ...) weights streamed by layer index l
        return pl.BlockSpec((None,) + shape,
                            lambda b, l, _nd=len(shape): (l,) + (0,) * _nd)

    in_specs = [
        pl.BlockSpec((1, S, D), lambda b, l: (b, 0, 0)),   # x (per batch element)
        const((1, D)), const((1, D)),                      # pre-LN gamma/beta
        per_layer((1, D)), per_layer((1, D)),              # ln1 gamma/beta
        per_layer((D, 3 * D)),                             # packed QKV (Q pre-scaled)
        per_layer((D, D)),                                 # Wo (concat-heads)
        per_layer((1, D)), per_layer((1, D)),              # bo, layerscale1
        per_layer((1, D)), per_layer((1, D)),              # ln2 gamma/beta
        per_layer((D, H4)), per_layer((1, H4)),            # fc1
        per_layer((H4, D)), per_layer((1, D)),             # fc2
        per_layer((1, D)),                                 # layerscale2
        const((1, D)), const((1, D)),                      # final norm gamma/beta
        const((D, O_pad)), const((1, O_pad)),              # head (lane-padded)
    ]

    kernel = functools.partial(
        fused_block_kernel, num_heads=num_heads, num_latent_tokens=L)

    # explicit VMEM budget: ~2 layers of streamed weights (double-buffered)
    # + activations/carry + constants, with generous headroom, capped for v7x.
    per_layer_bytes = 4 * (D * 3 * D + D * D + D * H4 + H4 * D + 6 * D + H4)
    act_bytes = 4 * (3 * S * D + S * 3 * D + num_heads * S * S
                     + S * H4 + 2 * L * O_pad + D * O_pad + 8 * D + O_pad)
    vmem_limit = min(max(3 * per_layer_bytes + act_bytes + (4 << 20), 32 << 20),
                     64 << 20)

    out = pl.pallas_call(
        kernel,
        out_shape=jax.ShapeDtypeStruct((B, L, O_pad), jnp.float32),
        grid=(B, NL),
        in_specs=in_specs,
        out_specs=pl.BlockSpec((1, L, O_pad), lambda b, l: (b, 0, 0)),
        scratch_shapes=[pltpu.VMEM((S, D), jnp.float32)],   # x carried across layers
        compiler_params=pltpu.CompilerParams(
            dimension_semantics=("parallel", "arbitrary"),
            vmem_limit_bytes=int(vmem_limit),
        ),
    )(
        xs,
        params["pre_g"], params["pre_b"],
        packed["ln1_g"], packed["ln1_b"],
        packed["wqkv"], packed["wo"], packed["bo"], packed["ls1"],
        packed["ln2_g"], packed["ln2_b"],
        packed["w1"], packed["b1"], packed["w2"], packed["b2"], packed["ls2"],
        params["norm_g"], params["norm_b"],
        head_w, head_b,
    )
    return out[:, :, :O]


# --------------------------- Params & reference ---------------------------- #

def init_params(key, num_latent_tokens, embed_dim, output_size, num_layers):
    D, O, L = embed_dim, output_size, num_latent_tokens
    H4 = 4 * D
    keys = iter(jax.random.split(key, 4 + 16 * num_layers))

    def rnd(shape, scale=0.02):
        return scale * jax.random.normal(next(keys), shape, dtype=jnp.float32)

    params = {
        "latent_embed": rnd((L, D)),                      # torch.randn(...) * 0.02
        "pre_g": jnp.ones((1, D), jnp.float32),
        "pre_b": jnp.zeros((1, D), jnp.float32),
        "blocks": [],
        "norm_g": jnp.ones((1, D), jnp.float32),
        "norm_b": jnp.zeros((1, D), jnp.float32),
        "head_w": rnd((D, O)),
        "head_b": rnd((1, O)),
    }
    for _ in range(num_layers):
        params["blocks"].append({
            "ln1_g": jnp.ones((1, D), jnp.float32),
            "ln1_b": jnp.zeros((1, D), jnp.float32),
            "wq": rnd((D, D)), "wk": rnd((D, D)), "wv": rnd((D, D)),
            "wo": rnd((D, D)), "bo": rnd((1, D)),
            "ls1": jnp.full((1, D), 0.01, jnp.float32),   # init_values=0.01
            "ln2_g": jnp.ones((1, D), jnp.float32),
            "ln2_b": jnp.zeros((1, D), jnp.float32),
            "w1": rnd((D, H4)), "b1": rnd((1, H4)),
            "w2": rnd((H4, D)), "b2": rnd((1, D)),
            "ls2": jnp.full((1, D), 0.01, jnp.float32),
        })
    return params


def ref_forward(x, params, num_heads, num_latent_tokens):
    """Pure-JAX reference (same math as the timm Block forward)."""
    B, N, D = x.shape
    L = num_latent_tokens
    lat = jnp.broadcast_to(params["latent_embed"][None], (B, L, D))
    x = jnp.concatenate([x, lat], axis=1)
    S = N + L
    x = _layernorm(x, params["pre_g"], params["pre_b"])
    Dh = D // num_heads
    for p in params["blocks"]:
        h = _layernorm(x, p["ln1_g"], p["ln1_b"])
        q = (h @ p["wq"]).reshape(B, S, num_heads, Dh).transpose(0, 2, 1, 3)
        k = (h @ p["wk"]).reshape(B, S, num_heads, Dh).transpose(0, 2, 1, 3)
        v = (h @ p["wv"]).reshape(B, S, num_heads, Dh).transpose(0, 2, 1, 3)
        s = jnp.einsum("bhqd,bhkd->bhqk", q, k) * (Dh ** -0.5)
        a = jax.nn.softmax(s, axis=-1)
        o = jnp.einsum("bhqk,bhkd->bhqd", a, v).transpose(0, 2, 1, 3).reshape(B, S, D)
        o = o @ p["wo"] + p["bo"]
        x = x + p["ls1"] * o
        h2 = _layernorm(x, p["ln2_g"], p["ln2_b"])
        z = _gelu_exact(h2 @ p["w1"] + p["b1"])
        z = z @ p["w2"] + p["b2"]
        x = x + p["ls2"] * z
    x = _layernorm(x, params["norm_g"], params["norm_b"])
    x = x @ params["head_w"] + params["head_b"]
    return x[:, -L:]


# ---------------------------------- main ----------------------------------- #

if __name__ == "__main__":
    jax.config.update("jax_default_matmul_precision", "highest")

    # Small, forward-consistent shapes.
    B, N = 2, 8                       # batch, input tokens
    L = 4                             # num_latent_tokens
    D = 32                            # embed_dim
    H = 4                             # num_heads
    O = 16                            # output_size
    NUM_LAYERS = 2

    key = jax.random.PRNGKey(0)
    kx, kp = jax.random.split(key)
    x = jax.random.normal(kx, (B, N, D), dtype=jnp.float32)
    params = init_params(kp, L, D, O, NUM_LAYERS)

    out = transformer_intervention_forward(x, params, H, L)
    out = jax.block_until_ready(out)
    assert out.shape == (B, L, O), out.shape

    ref = ref_forward(x, params, H, L)
    if not jnp.allclose(out, ref, atol=1e-3, rtol=1e-3):
        max_err = jnp.max(jnp.abs(out - ref))
        raise AssertionError(f"Pallas output mismatch, max abs err = {max_err}")

    print("KERNEL_OK")
</pallas_src>

<mosaic_0001>
module attributes {stable_mosaic.version = 11 : i64} {
  func.func @fused_block_kernel(%arg0: i32, %arg1: i32, %arg2: memref<1x12x32xf32, #tpu.memory_space<vmem>>, %arg3: memref<1x32xf32, #tpu.memory_space<vmem>>, %arg4: memref<1x32xf32, #tpu.memory_space<vmem>>, %arg5: memref<1x1x32xf32, #tpu.memory_space<vmem>>, %arg6: memref<1x1x32xf32, #tpu.memory_space<vmem>>, %arg7: memref<1x32x96xf32, #tpu.memory_space<vmem>>, %arg8: memref<1x32x32xf32, #tpu.memory_space<vmem>>, %arg9: memref<1x1x32xf32, #tpu.memory_space<vmem>>, %arg10: memref<1x1x32xf32, #tpu.memory_space<vmem>>, %arg11: memref<1x1x32xf32, #tpu.memory_space<vmem>>, %arg12: memref<1x1x32xf32, #tpu.memory_space<vmem>>, %arg13: memref<1x32x128xf32, #tpu.memory_space<vmem>>, %arg14: memref<1x1x128xf32, #tpu.memory_space<vmem>>, %arg15: memref<1x128x32xf32, #tpu.memory_space<vmem>>, %arg16: memref<1x1x32xf32, #tpu.memory_space<vmem>>, %arg17: memref<1x1x32xf32, #tpu.memory_space<vmem>>, %arg18: memref<1x32xf32, #tpu.memory_space<vmem>>, %arg19: memref<1x32xf32, #tpu.memory_space<vmem>>, %arg20: memref<32x128xf32, #tpu.memory_space<vmem>>, %arg21: memref<1x128xf32, #tpu.memory_space<vmem>>, %arg22: memref<1x4x128xf32, #tpu.memory_space<vmem>>, %arg23: memref<12x32xf32, #tpu.memory_space<vmem>>) attributes {dimension_semantics = [#tpu.dimension_semantics<parallel>, #tpu.dimension_semantics<arbitrary>], iteration_bounds = array<i64: 2, 2>, scalar_prefetch = 0 : i64, scratch_operands = 1 : i64, tpu.core_type = #tpu.core_type<tc>, window_params = [{transform_indices = @transform_0, window_bounds = array<i64: 1, 12, 32>}, {pipeline_mode = #tpu.pipeline_mode<synchronous>, transform_indices = @transform_1, window_bounds = array<i64: 1, 32>}, {pipeline_mode = #tpu.pipeline_mode<synchronous>, transform_indices = @transform_2, window_bounds = array<i64: 1, 32>}, {transform_indices = @transform_3, window_bounds = array<i64: 1, 1, 32>}, {transform_indices = @transform_4, window_bounds = array<i64: 1, 1, 32>}, {transform_indices = @transform_5, window_bounds = array<i64: 1, 32, 96>}, {transform_indices = @transform_6, window_bounds = array<i64: 1, 32, 32>}, {transform_indices = @transform_7, window_bounds = array<i64: 1, 1, 32>}, {transform_indices = @transform_8, window_bounds = array<i64: 1, 1, 32>}, {transform_indices = @transform_9, window_bounds = array<i64: 1, 1, 32>}, {transform_indices = @transform_10, window_bounds = array<i64: 1, 1, 32>}, {transform_indices = @transform_11, window_bounds = array<i64: 1, 32, 128>}, {transform_indices = @transform_12, window_bounds = array<i64: 1, 1, 128>}, {transform_indices = @transform_13, window_bounds = array<i64: 1, 128, 32>}, {transform_indices = @transform_14, window_bounds = array<i64: 1, 1, 32>}, {transform_indices = @transform_15, window_bounds = array<i64: 1, 1, 32>}, {pipeline_mode = #tpu.pipeline_mode<synchronous>, transform_indices = @transform_16, window_bounds = array<i64: 1, 32>}, {pipeline_mode = #tpu.pipeline_mode<synchronous>, transform_indices = @transform_17, window_bounds = array<i64: 1, 32>}, {pipeline_mode = #tpu.pipeline_mode<synchronous>, transform_indices = @transform_18, window_bounds = array<i64: 32, 128>}, {pipeline_mode = #tpu.pipeline_mode<synchronous>, transform_indices = @transform_19, window_bounds = array<i64: 1, 128>}, {transform_indices = @transform_20, window_bounds = array<i64: 1, 4, 128>}]} {
    %c0_i32 = arith.constant 0 : i32
    %0 = arith.cmpi eq, %arg1, %c0_i32 : i32
    %1 = arith.extui %0 : i1 to i32
    %c0_i32_0 = arith.constant 0 : i32
    %2 = arith.cmpi ne, %1, %c0_i32_0 : i32
    scf.if %2 {
      %c0_64 = arith.constant 0 : index
      %c0_65 = arith.constant 0 : index
      %c0_66 = arith.constant 0 : index
      %153 = vector.load %arg2[%c0_64, %c0_65, %c0_66] : memref<1x12x32xf32, #tpu.memory_space<vmem>>, vector<1x12x32xf32>
      %154 = vector.shape_cast %153 : vector<1x12x32xf32> to vector<12x32xf32>
      %c0_67 = arith.constant 0 : index
      %c0_68 = arith.constant 0 : index
      %155 = vector.load %arg3[%c0_67, %c0_68] : memref<1x32xf32, #tpu.memory_space<vmem>>, vector<1x32xf32>
      %c0_69 = arith.constant 0 : index
      %c0_70 = arith.constant 0 : index
      %156 = vector.load %arg4[%c0_69, %c0_70] : memref<1x32xf32, #tpu.memory_space<vmem>>, vector<1x32xf32>
      %cst_71 = arith.constant dense<0.000000e+00> : vector<12xf32>
      %157 = vector.multi_reduction <add>, %154, %cst_71 [1] : vector<12x32xf32> to vector<12xf32>
      %158 = vector.shape_cast %157 : vector<12xf32> to vector<12x1xf32>
      %cst_72 = arith.constant 3.200000e+01 : f32
      %159 = vector.broadcast %cst_72 : f32 to vector<12x1xf32>
      %160 = arith.divf %158, %159 : vector<12x1xf32>
      %161 = vector.broadcast %160 : vector<12x1xf32> to vector<12x32xf32>
      %162 = arith.subf %154, %161 : vector<12x32xf32>
      %163 = arith.mulf %162, %162 : vector<12x32xf32>
      %cst_73 = arith.constant dense<0.000000e+00> : vector<12xf32>
      %164 = vector.multi_reduction <add>, %163, %cst_73 [1] : vector<12x32xf32> to vector<12xf32>
      %165 = vector.shape_cast %164 : vector<12xf32> to vector<12x1xf32>
      %cst_74 = arith.constant 3.200000e+01 : f32
      %166 = vector.broadcast %cst_74 : f32 to vector<12x1xf32>
      %167 = arith.divf %165, %166 : vector<12x1xf32>
      %168 = vector.broadcast %160 : vector<12x1xf32> to vector<12x32xf32>
      %169 = arith.subf %154, %168 : vector<12x32xf32>
      %cst_75 = arith.constant 9.99999974E-6 : f32
      %170 = vector.broadcast %cst_75 : f32 to vector<12x1xf32>
      %171 = arith.addf %167, %170 : vector<12x1xf32>
      %172 = math.rsqrt %171 : vector<12x1xf32>
      %173 = vector.broadcast %172 : vector<12x1xf32> to vector<12x32xf32>
      %174 = arith.mulf %169, %173 : vector<12x32xf32>
      %175 = vector.broadcast %155 : vector<1x32xf32> to vector<12x32xf32>
      %176 = arith.mulf %174, %175 : vector<12x32xf32>
      %177 = vector.broadcast %156 : vector<1x32xf32> to vector<12x32xf32>
      %178 = arith.addf %176, %177 : vector<12x32xf32>
      %c0_76 = arith.constant 0 : index
      %c0_77 = arith.constant 0 : index
      %179 = vector.load %arg23[%c0_76, %c0_77] : memref<12x32xf32, #tpu.memory_space<vmem>>, vector<12x32xf32>
      tpu.vector_store %arg23[%c0_76, %c0_77], %178 {strides = array<i32>} : memref<12x32xf32, #tpu.memory_space<vmem>>, vector<12x32xf32>,
    } else {
    }
    %c0 = arith.constant 0 : index
    %c0_1 = arith.constant 0 : index
    %3 = vector.load %arg23[%c0, %c0_1] : memref<12x32xf32, #tpu.memory_space<vmem>>, vector<12x32xf32>
    %c0_2 = arith.constant 0 : index
    %c0_3 = arith.constant 0 : index
    %c0_4 = arith.constant 0 : index
    %4 = vector.load %arg5[%c0_2, %c0_3, %c0_4] : memref<1x1x32xf32, #tpu.memory_space<vmem>>, vector<1x1x32xf32>
    %5 = vector.shape_cast %4 : vector<1x1x32xf32> to vector<1x32xf32>
    %c0_5 = arith.constant 0 : index
    %c0_6 = arith.constant 0 : index
    %c0_7 = arith.constant 0 : index
    %6 = vector.load %arg6[%c0_5, %c0_6, %c0_7] : memref<1x1x32xf32, #tpu.memory_space<vmem>>, vector<1x1x32xf32>
    %7 = vector.shape_cast %6 : vector<1x1x32xf32> to vector<1x32xf32>
    %cst = arith.constant dense<0.000000e+00> : vector<12xf32>
    %8 = vector.multi_reduction <add>, %3, %cst [1] : vector<12x32xf32> to vector<12xf32>
    %9 = vector.shape_cast %8 : vector<12xf32> to vector<12x1xf32>
    %cst_8 = arith.constant 3.200000e+01 : f32
    %10 = vector.broadcast %cst_8 : f32 to vector<12x1xf32>
    %11 = arith.divf %9, %10 : vector<12x1xf32>
    %12 = vector.broadcast %11 : vector<12x1xf32> to vector<12x32xf32>
    %13 = arith.subf %3, %12 : vector<12x32xf32>
    %14 = arith.mulf %13, %13 : vector<12x32xf32>
    %cst_9 = arith.constant dense<0.000000e+00> : vector<12xf32>
    %15 = vector.multi_reduction <add>, %14, %cst_9 [1] : vector<12x32xf32> to vector<12xf32>
    %16 = vector.shape_cast %15 : vector<12xf32> to vector<12x1xf32>
    %cst_10 = arith.constant 3.200000e+01 : f32
    %17 = vector.broadcast %cst_10 : f32 to vector<12x1xf32>
    %18 = arith.divf %16, %17 : vector<12x1xf32>
    %19 = vector.broadcast %11 : vector<12x1xf32> to vector<12x32xf32>
    %20 = arith.subf %3, %19 : vector<12x32xf32>
    %cst_11 = arith.constant 9.99999974E-6 : f32
    %21 = vector.broadcast %cst_11 : f32 to vector<12x1xf32>
    %22 = arith.addf %18, %21 : vector<12x1xf32>
    %23 = math.rsqrt %22 : vector<12x1xf32>
    %24 = vector.broadcast %23 : vector<12x1xf32> to vector<12x32xf32>
    %25 = arith.mulf %20, %24 : vector<12x32xf32>
    %26 = vector.broadcast %5 : vector<1x32xf32> to vector<12x32xf32>
    %27 = arith.mulf %25, %26 : vector<12x32xf32>
    %28 = vector.broadcast %7 : vector<1x32xf32> to vector<12x32xf32>
    %29 = arith.addf %27, %28 : vector<12x32xf32>
    %c0_12 = arith.constant 0 : index
    %c0_13 = arith.constant 0 : index
    %c0_14 = arith.constant 0 : index
    %30 = vector.load %arg7[%c0_12, %c0_13, %c0_14] : memref<1x32x96xf32, #tpu.memory_space<vmem>>, vector<1x32x96xf32>
    %31 = vector.shape_cast %30 : vector<1x32x96xf32> to vector<32x96xf32>
    %cst_15 = arith.constant dense<0.000000e+00> : vector<12x96xf32>
    %32 = tpu.matmul %29, %31, %cst_15 {dimension_numbers = #tpu.dot_dimension_numbers<[1], [0], [0], [1], [0, 0, 1, 1], [], []>, precision = #tpu.contract_precision<fp32>} : vector<12x32xf32>, vector<32x96xf32>, vector<12x96xf32> -> vector<12x96xf32>
    %33 = vector.extract_strided_slice %32 {offsets = [0, 0], sizes = [12, 32], strides = [1, 1]} : vector<12x96xf32> to vector<12x32xf32>
    %34 = vector.extract_strided_slice %33 {offsets = [0, 0], sizes = [12, 8], strides = [1, 1]} : vector<12x32xf32> to vector<12x8xf32>
    %35 = vector.extract_strided_slice %33 {offsets = [0, 8], sizes = [12, 8], strides = [1, 1]} : vector<12x32xf32> to vector<12x8xf32>
    %36 = vector.extract_strided_slice %33 {offsets = [0, 16], sizes = [12, 8], strides = [1, 1]} : vector<12x32xf32> to vector<12x8xf32>
    %37 = vector.extract_strided_slice %33 {offsets = [0, 24], sizes = [12, 8], strides = [1, 1]} : vector<12x32xf32> to vector<12x8xf32>
    %38 = vector.shape_cast %34 : vector<12x8xf32> to vector<1x12x8xf32>
    %39 = vector.shape_cast %35 : vector<12x8xf32> to vector<1x12x8xf32>
    %40 = vector.shape_cast %36 : vector<12x8xf32> to vector<1x12x8xf32>
    %41 = vector.shape_cast %37 : vector<12x8xf32> to vector<1x12x8xf32>
    %42 = tpu.concatenate %38, %39, %40, %41 in 0 : vector<1x12x8xf32>, vector<1x12x8xf32>, vector<1x12x8xf32>, vector<1x12x8xf32> -> vector<4x12x8xf32>
    %43 = vector.extract_strided_slice %32 {offsets = [0, 32], sizes = [12, 32], strides = [1, 1]} : vector<12x96xf32> to vector<12x32xf32>
    %44 = vector.extract_strided_slice %43 {offsets = [0, 0], sizes = [12, 8], strides = [1, 1]} : vector<12x32xf32> to vector<12x8xf32>
    %45 = vector.extract_strided_slice %43 {offsets = [0, 8], sizes = [12, 8], strides = [1, 1]} : vector<12x32xf32> to vector<12x8xf32>
    %46 = vector.extract_strided_slice %43 {offsets = [0, 16], sizes = [12, 8], strides = [1, 1]} : vector<12x32xf32> to vector<12x8xf32>
    %47 = vector.extract_strided_slice %43 {offsets = [0, 24], sizes = [12, 8], strides = [1, 1]} : vector<12x32xf32> to vector<12x8xf32>
    %48 = vector.shape_cast %44 : vector<12x8xf32> to vector<1x12x8xf32>
    %49 = vector.shape_cast %45 : vector<12x8xf32> to vector<1x12x8xf32>
    %50 = vector.shape_cast %46 : vector<12x8xf32> to vector<1x12x8xf32>
    %51 = vector.shape_cast %47 : vector<12x8xf32> to vector<1x12x8xf32>
    %52 = tpu.concatenate %48, %49, %50, %51 in 0 : vector<1x12x8xf32>, vector<1x12x8xf32>, vector<1x12x8xf32>, vector<1x12x8xf32> -> vector<4x12x8xf32>
    %53 = vector.extract_strided_slice %32 {offsets = [0, 64], sizes = [12, 32], strides = [1, 1]} : vector<12x96xf32> to vector<12x32xf32>
    %54 = vector.extract_strided_slice %53 {offsets = [0, 0], sizes = [12, 8], strides = [1, 1]} : vector<12x32xf32> to vector<12x8xf32>
    %55 = vector.extract_strided_slice %53 {offsets = [0, 8], sizes = [12, 8], strides = [1, 1]} : vector<12x32xf32> to vector<12x8xf32>
    %56 = vector.extract_strided_slice %53 {offsets = [0, 16], sizes = [12, 8], strides = [1, 1]} : vector<12x32xf32> to vector<12x8xf32>
    %57 = vector.extract_strided_slice %53 {offsets = [0, 24], sizes = [12, 8], strides = [1, 1]} : vector<12x32xf32> to vector<12x8xf32>
    %58 = vector.shape_cast %54 : vector<12x8xf32> to vector<1x12x8xf32>
    %59 = vector.shape_cast %55 : vector<12x8xf32> to vector<1x12x8xf32>
    %60 = vector.shape_cast %56 : vector<12x8xf32> to vector<1x12x8xf32>
    %61 = vector.shape_cast %57 : vector<12x8xf32> to vector<1x12x8xf32>
    %62 = tpu.concatenate %58, %59, %60, %61 in 0 : vector<1x12x8xf32>, vector<1x12x8xf32>, vector<1x12x8xf32>, vector<1x12x8xf32> -> vector<4x12x8xf32>
    "tpu.trace_start"() <{level = 10 : i32, message = "hqd,hkd->hqk"}> : () -> ()
    %cst_16 = arith.constant dense<0.000000e+00> : vector<4x12x12xf32>
    %63 = tpu.matmul %42, %52, %cst_16 {dimension_numbers = #tpu.dot_dimension_numbers<[2], [2], [1], [1], [0, 0, 0, 1, 1, 1], [0], [0]>, precision = #tpu.contract_precision<fp32>} : vector<4x12x8xf32>, vector<4x12x8xf32>, vector<4x12x12xf32> -> vector<4x12x12xf32>
    "tpu.trace_stop"() : () -> ()
    %cst_17 = arith.constant dense<0xFF800000> : vector<4x12xf32>
    %64 = vector.multi_reduction <maximumf>, %63, %cst_17 [2] : vector<4x12x12xf32> to vector<4x12xf32>
    %65 = vector.shape_cast %64 : vector<4x12xf32> to vector<4x12x1xf32>
    %66 = vector.broadcast %65 : vector<4x12x1xf32> to vector<4x12x12xf32>
    %67 = arith.subf %63, %66 : vector<4x12x12xf32>
    %68 = math.exp %67 : vector<4x12x12xf32>
    %cst_18 = arith.constant dense<0.000000e+00> : vector<4x12xf32>
    %69 = vector.multi_reduction <add>, %68, %cst_18 [2] : vector<4x12x12xf32> to vector<4x12xf32>
    %70 = vector.shape_cast %69 : vector<4x12xf32> to vector<4x12x1xf32>
    "tpu.trace_start"() <{level = 10 : i32, message = "hqk,hkd->hqd"}> : () -> ()
    %cst_19 = arith.constant dense<0.000000e+00> : vector<4x12x8xf32>
    %71 = tpu.matmul %68, %62, %cst_19 {dimension_numbers = #tpu.dot_dimension_numbers<[2], [1], [1], [2], [0, 0, 0, 1, 1, 2], [0], [0]>, precision = #tpu.contract_precision<fp32>} : vector<4x12x12xf32>, vector<4x12x8xf32>, vector<4x12x8xf32> -> vector<4x12x8xf32>
    "tpu.trace_stop"() : () -> ()
    %72 = tpu.reciprocal %70 : vector<4x12x1xf32> -> vector<4x12x1xf32>
    %73 = vector.broadcast %72 : vector<4x12x1xf32> to vector<4x12x8xf32>
    %74 = arith.mulf %71, %73 : vector<4x12x8xf32>
    %75 = vector.extract_strided_slice %74 {offsets = [0, 0, 0], sizes = [1, 12, 8], strides = [1, 1, 1]} : vector<4x12x8xf32> to vector<1x12x8xf32>
    %76 = vector.shape_cast %75 : vector<1x12x8xf32> to vector<12x8xf32>
    %77 = vector.extract_strided_slice %74 {offsets = [1, 0, 0], sizes = [1, 12, 8], strides = [1, 1, 1]} : vector<4x12x8xf32> to vector<1x12x8xf32>
    %78 = vector.shape_cast %77 : vector<1x12x8xf32> to vector<12x8xf32>
    %79 = vector.extract_strided_slice %74 {offsets = [2, 0, 0], sizes = [1, 12, 8], strides = [1, 1, 1]} : vector<4x12x8xf32> to vector<1x12x8xf32>
    %80 = vector.shape_cast %79 : vector<1x12x8xf32> to vector<12x8xf32>
    %81 = vector.extract_strided_slice %74 {offsets = [3, 0, 0], sizes = [1, 12, 8], strides = [1, 1, 1]} : vector<4x12x8xf32> to vector<1x12x8xf32>
    %82 = vector.shape_cast %81 : vector<1x12x8xf32> to vector<12x8xf32>
    %83 = tpu.concatenate %76, %78, %80, %82 in 1 : vector<12x8xf32>, vector<12x8xf32>, vector<12x8xf32>, vector<12x8xf32> -> vector<12x32xf32>
    %c0_20 = arith.constant 0 : index
    %c0_21 = arith.constant 0 : index
    %c0_22 = arith.constant 0 : index
    %84 = vector.load %arg8[%c0_20, %c0_21, %c0_22] : memref<1x32x32xf32, #tpu.memory_space<vmem>>, vector<1x32x32xf32>
    %85 = vector.shape_cast %84 : vector<1x32x32xf32> to vector<32x32xf32>
    %cst_23 = arith.constant dense<0.000000e+00> : vector<12x32xf32>
    %86 = tpu.matmul %83, %85, %cst_23 {dimension_numbers = #tpu.dot_dimension_numbers<[1], [0], [0], [1], [0, 0, 1, 1], [], []>, precision = #tpu.contract_precision<fp32>} : vector<12x32xf32>, vector<32x32xf32>, vector<12x32xf32> -> vector<12x32xf32>
    %c0_24 = arith.constant 0 : index
    %c0_25 = arith.constant 0 : index
    %c0_26 = arith.constant 0 : index
    %87 = vector.load %arg9[%c0_24, %c0_25, %c0_26] : memref<1x1x32xf32, #tpu.memory_space<vmem>>, vector<1x1x32xf32>
    %88 = vector.shape_cast %87 : vector<1x1x32xf32> to vector<1x32xf32>
    %89 = vector.broadcast %88 : vector<1x32xf32> to vector<12x32xf32>
    %90 = arith.addf %86, %89 : vector<12x32xf32>
    %c0_27 = arith.constant 0 : index
    %c0_28 = arith.constant 0 : index
    %c0_29 = arith.constant 0 : index
    %91 = vector.load %arg10[%c0_27, %c0_28, %c0_29] : memref<1x1x32xf32, #tpu.memory_space<vmem>>, vector<1x1x32xf32>
    %92 = vector.shape_cast %91 : vector<1x1x32xf32> to vector<1x32xf32>
    %93 = vector.broadcast %92 : vector<1x32xf32> to vector<12x32xf32>
    %94 = arith.mulf %93, %90 : vector<12x32xf32>
    %95 = arith.addf %3, %94 : vector<12x32xf32>
    %c0_30 = arith.constant 0 : index
    %c0_31 = arith.constant 0 : index
    %c0_32 = arith.constant 0 : index
    %96 = vector.load %arg11[%c0_30, %c0_31, %c0_32] : memref<1x1x32xf32, #tpu.memory_space<vmem>>, vector<1x1x32xf32>
    %97 = vector.shape_cast %96 : vector<1x1x32xf32> to vector<1x32xf32>
    %c0_33 = arith.constant 0 : index
    %c0_34 = arith.constant 0 : index
    %c0_35 = arith.constant 0 : index
    %98 = vector.load %arg12[%c0_33, %c0_34, %c0_35] : memref<1x1x32xf32, #tpu.memory_space<vmem>>, vector<1x1x32xf32>
    %99 = vector.shape_cast %98 : vector<1x1x32xf32> to vector<1x32xf32>
    %cst_36 = arith.constant dense<0.000000e+00> : vector<12xf32>
    %100 = vector.multi_reduction <add>, %95, %cst_36 [1] : vector<12x32xf32> to vector<12xf32>
    %101 = vector.shape_cast %100 : vector<12xf32> to vector<12x1xf32>
    %cst_37 = arith.constant 3.200000e+01 : f32
    %102 = vector.broadcast %cst_37 : f32 to vector<12x1xf32>
    %103 = arith.divf %101, %102 : vector<12x1xf32>
    %104 = vector.broadcast %103 : vector<12x1xf32> to vector<12x32xf32>
    %105 = arith.subf %95, %104 : vector<12x32xf32>
    %106 = arith.mulf %105, %105 : vector<12x32xf32>
    %cst_38 = arith.constant dense<0.000000e+00> : vector<12xf32>
    %107 = vector.multi_reduction <add>, %106, %cst_38 [1] : vector<12x32xf32> to vector<12xf32>
    %108 = vector.shape_cast %107 : vector<12xf32> to vector<12x1xf32>
    %cst_39 = arith.constant 3.200000e+01 : f32
    %109 = vector.broadcast %cst_39 : f32 to vector<12x1xf32>
    %110 = arith.divf %108, %109 : vector<12x1xf32>
    %111 = vector.broadcast %103 : vector<12x1xf32> to vector<12x32xf32>
    %112 = arith.subf %95, %111 : vector<12x32xf32>
    %cst_40 = arith.constant 9.99999974E-6 : f32
    %113 = vector.broadcast %cst_40 : f32 to vector<12x1xf32>
    %114 = arith.addf %110, %113 : vector<12x1xf32>
    %115 = math.rsqrt %114 : vector<12x1xf32>
    %116 = vector.broadcast %115 : vector<12x1xf32> to vector<12x32xf32>
    %117 = arith.mulf %112, %116 : vector<12x32xf32>
    %118 = vector.broadcast %97 : vector<1x32xf32> to vector<12x32xf32>
    %119 = arith.mulf %117, %118 : vector<12x32xf32>
    %120 = vector.broadcast %99 : vector<1x32xf32> to vector<12x32xf32>
    %121 = arith.addf %119, %120 : vector<12x32xf32>
    %c0_41 = arith.constant 0 : index
    %c0_42 = arith.constant 0 : index
    %c0_43 = arith.constant 0 : index
    %122 = vector.load %arg13[%c0_41, %c0_42, %c0_43] : memref<1x32x128xf32, #tpu.memory_space<vmem>>, vector<1x32x128xf32>
    %123 = vector.shape_cast %122 : vector<1x32x128xf32> to vector<32x128xf32>
    %cst_44 = arith.constant dense<0.000000e+00> : vector<12x128xf32>
    %124 = tpu.matmul %121, %123, %cst_44 {dimension_numbers = #tpu.dot_dimension_numbers<[1], [0], [0], [1], [0, 0, 1, 1], [], []>, precision = #tpu.contract_precision<fp32>} : vector<12x32xf32>, vector<32x128xf32>, vector<12x128xf32> -> vector<12x128xf32>
    %c0_45 = arith.constant 0 : index
    %c0_46 = arith.constant 0 : index
    %c0_47 = arith.constant 0 : index
    %125 = vector.load %arg14[%c0_45, %c0_46, %c0_47] : memref<1x1x128xf32, #tpu.memory_space<vmem>>, vector<1x1x128xf32>
    %126 = vector.shape_cast %125 : vector<1x1x128xf32> to vector<1x128xf32>
    %127 = vector.broadcast %126 : vector<1x128xf32> to vector<12x128xf32>
    %128 = arith.addf %124, %127 : vector<12x128xf32>
    %cst_48 = arith.constant 5.000000e-01 : f32
    %129 = vector.broadcast %cst_48 : f32 to vector<12x128xf32>
    %130 = arith.mulf %129, %128 : vector<12x128xf32>
    %cst_49 = arith.constant 0.707106769 : f32
    %131 = vector.broadcast %cst_49 : f32 to vector<12x128xf32>
    %132 = arith.mulf %128, %131 : vector<12x128xf32>
    %133 = math.erf %132 : vector<12x128xf32>
    %cst_50 = arith.constant 1.000000e+00 : f32
    %134 = vector.broadcast %cst_50 : f32 to vector<12x128xf32>
    %135 = arith.addf %134, %133 : vector<12x128xf32>
    %136 = arith.mulf %130, %135 : vector<12x128xf32>
    %c0_51 = arith.constant 0 : index
    %c0_52 = arith.constant 0 : index
    %c0_53 = arith.constant 0 : index
    %137 = vector.load %arg15[%c0_51, %c0_52, %c0_53] : memref<1x128x32xf32, #tpu.memory_space<vmem>>, vector<1x128x32xf32>
    %138 = vector.shape_cast %137 : vector<1x128x32xf32> to vector<128x32xf32>
    %cst_54 = arith.constant dense<0.000000e+00> : vector<12x32xf32>
    %139 = tpu.matmul %136, %138, %cst_54 {dimension_numbers = #tpu.dot_dimension_numbers<[1], [0], [0], [1], [0, 0, 1, 1], [], []>, precision = #tpu.contract_precision<fp32>} : vector<12x128xf32>, vector<128x32xf32>, vector<12x32xf32> -> vector<12x32xf32>
    %c0_55 = arith.constant 0 : index
    %c0_56 = arith.constant 0 : index
    %c0_57 = arith.constant 0 : index
    %140 = vector.load %arg16[%c0_55, %c0_56, %c0_57] : memref<1x1x32xf32, #tpu.memory_space<vmem>>, vector<1x1x32xf32>
    %141 = vector.shape_cast %140 : vector<1x1x32xf32> to vector<1x32xf32>
    %142 = vector.broadcast %141 : vector<1x32xf32> to vector<12x32xf32>
    %143 = arith.addf %139, %142 : vector<12x32xf32>
    %c0_58 = arith.constant 0 : index
    %c0_59 = arith.constant 0 : index
    %c0_60 = arith.constant 0 : index
    %144 = vector.load %arg17[%c0_58, %c0_59, %c0_60] : memref<1x1x32xf32, #tpu.memory_space<vmem>>, vector<1x1x32xf32>
    %145 = vector.shape_cast %144 : vector<1x1x32xf32> to vector<1x32xf32>
    %146 = vector.broadcast %145 : vector<1x32xf32> to vector<12x32xf32>
    %147 = arith.mulf %146, %143 : vector<12x32xf32>
    %148 = arith.addf %95, %147 : vector<12x32xf32>
    %c0_61 = arith.constant 0 : index
    %c0_62 = arith.constant 0 : index
    %149 = vector.load %arg23[%c0_61, %c0_62] : memref<12x32xf32, #tpu.memory_space<vmem>>, vector<12x32xf32>
    tpu.vector_store %arg23[%c0_61, %c0_62], %148 {strides = array<i32>} : memref<12x32xf32, #tpu.memory_space<vmem>>, vector<12x32xf32>,
    %c1_i32 = arith.constant 1 : i32
    %150 = arith.cmpi eq, %arg1, %c1_i32 : i32
    %151 = arith.extui %150 : i1 to i32
    %c0_i32_63 = arith.constant 0 : i32
    %152 = arith.cmpi ne, %151, %c0_i32_63 : i32
    scf.if %152 {
      %153 = vector.extract_strided_slice %148 {offsets = [8, 0], sizes = [4, 32], strides = [1, 1]} : vector<12x32xf32> to vector<4x32xf32>
      %c0_64 = arith.constant 0 : index
      %c0_65 = arith.constant 0 : index
      %154 = vector.load %arg18[%c0_64, %c0_65] : memref<1x32xf32, #tpu.memory_space<vmem>>, vector<1x32xf32>
      %c0_66 = arith.constant 0 : index
      %c0_67 = arith.constant 0 : index
      %155 = vector.load %arg19[%c0_66, %c0_67] : memref<1x32xf32, #tpu.memory_space<vmem>>, vector<1x32xf32>
      %cst_68 = arith.constant dense<0.000000e+00> : vector<4xf32>
      %156 = vector.multi_reduction <add>, %153, %cst_68 [1] : vector<4x32xf32> to vector<4xf32>
      %157 = vector.shape_cast %156 : vector<4xf32> to vector<4x1xf32>
      %cst_69 = arith.constant 3.200000e+01 : f32
      %158 = vector.broadcast %cst_69 : f32 to vector<4x1xf32>
      %159 = arith.divf %157, %158 : vector<4x1xf32>
      %160 = vector.broadcast %159 : vector<4x1xf32> to vector<4x32xf32>
      %161 = arith.subf %153, %160 : vector<4x32xf32>
      %162 = arith.mulf %161, %161 : vector<4x32xf32>
      %cst_70 = arith.constant dense<0.000000e+00> : vector<4xf32>
      %163 = vector.multi_reduction <add>, %162, %cst_70 [1] : vector<4x32xf32> to vector<4xf32>
      %164 = vector.shape_cast %163 : vector<4xf32> to vector<4x1xf32>
      %cst_71 = arith.constant 3.200000e+01 : f32
      %165 = vector.broadcast %cst_71 : f32 to vector<4x1xf32>
      %166 = arith.divf %164, %165 : vector<4x1xf32>
      %167 = vector.broadcast %159 : vector<4x1xf32> to vector<4x32xf32>
      %168 = arith.subf %153, %167 : vector<4x32xf32>
      %cst_72 = arith.constant 9.99999974E-6 : f32
      %169 = vector.broadcast %cst_72 : f32 to vector<4x1xf32>
      %170 = arith.addf %166, %169 : vector<4x1xf32>
      %171 = math.rsqrt %170 : vector<4x1xf32>
      %172 = vector.broadcast %171 : vector<4x1xf32> to vector<4x32xf32>
      %173 = arith.mulf %168, %172 : vector<4x32xf32>
      %174 = vector.broadcast %154 : vector<1x32xf32> to vector<4x32xf32>
      %175 = arith.mulf %173, %174 : vector<4x32xf32>
      %176 = vector.broadcast %155 : vector<1x32xf32> to vector<4x32xf32>
      %177 = arith.addf %175, %176 : vector<4x32xf32>
      %c0_73 = arith.constant 0 : index
      %c0_74 = arith.constant 0 : index
      %178 = vector.load %arg20[%c0_73, %c0_74] : memref<32x128xf32, #tpu.memory_space<vmem>>, vector<32x128xf32>
      %cst_75 = arith.constant dense<0.000000e+00> : vector<4x128xf32>
      %179 = tpu.matmul %177, %178, %cst_75 {dimension_numbers = #tpu.dot_dimension_numbers<[1], [0], [0], [1], [0, 0, 1, 1], [], []>, precision = #tpu.contract_precision<fp32>} : vector<4x32xf32>, vector<32x128xf32>, vector<4x128xf32> -> vector<4x128xf32>
      %c0_76 = arith.constant 0 : index
      %c0_77 = arith.constant 0 : index
      %180 = vector.load %arg21[%c0_76, %c0_77] : memref<1x128xf32, #tpu.memory_space<vmem>>, vector<1x128xf32>
      %181 = vector.broadcast %180 : vector<1x128xf32> to vector<4x128xf32>
      %182 = arith.addf %179, %181 : vector<4x128xf32>
      %c0_78 = arith.constant 0 : index
      %c0_79 = arith.constant 0 : index
      %c0_80 = arith.constant 0 : index
      %183 = vector.load %arg22[%c0_78, %c0_79, %c0_80] : memref<1x4x128xf32, #tpu.memory_space<vmem>>, vector<1x4x128xf32>
      %184 = vector.shape_cast %183 : vector<1x4x128xf32> to vector<4x128xf32>
      %185 = vector.shape_cast %182 : vector<4x128xf32> to vector<1x4x128xf32>
      tpu.vector_store %arg22[%c0_78, %c0_79, %c0_80], %185 {strides = array<i32>} : memref<1x4x128xf32, #tpu.memory_space<vmem>>, vector<1x4x128xf32>,
    } else {
    }
    return
  }
  func.func @transform_0(%arg0: i32, %arg1: i32) -> (i32, i32, i32) {
    %c0_i32 = arith.constant 0 : i32
    %c0_i32_0 = arith.constant 0 : i32
    %c0_i32_1 = arith.constant 0 : i32
    return %arg0, %c0_i32, %c0_i32_0 : i32, i32, i32
  }
  func.func @transform_1(%arg0: i32, %arg1: i32) -> (i32, i32) {
    %c0_i32 = arith.constant 0 : i32
    %c0_i32_0 = arith.constant 0 : i32
    %c0_i32_1 = arith.constant 0 : i32
    return %c0_i32, %c0_i32_0 : i32, i32
  }
  func.func @transform_2(%arg0: i32, %arg1: i32) -> (i32, i32) {
    %c0_i32 = arith.constant 0 : i32
    %c0_i32_0 = arith.constant 0 : i32
    %c0_i32_1 = arith.constant 0 : i32
    return %c0_i32, %c0_i32_0 : i32, i32
  }
  func.func @transform_3(%arg0: i32, %arg1: i32) -> (i32, i32, i32) {
    %c0_i32 = arith.constant 0 : i32
    %c0_i32_0 = arith.constant 0 : i32
    %c0_i32_1 = arith.constant 0 : i32
    return %arg1, %c0_i32, %c0_i32_0 : i32, i32, i32
  }
  func.func @transform_4(%arg0: i32, %arg1: i32) -> (i32, i32, i32) {
    %c0_i32 = arith.constant 0 : i32
    %c0_i32_0 = arith.constant 0 : i32
    %c0_i32_1 = arith.constant 0 : i32
    return %arg1, %c0_i32, %c0_i32_0 : i32, i32, i32
  }
  func.func @transform_5(%arg0: i32, %arg1: i32) -> (i32, i32, i32) {
    %c0_i32 = arith.constant 0 : i32
    %c0_i32_0 = arith.constant 0 : i32
    %c0_i32_1 = arith.constant 0 : i32
    return %arg1, %c0_i32, %c0_i32_0 : i32, i32, i32
  }
  func.func @transform_6(%arg0: i32, %arg1: i32) -> (i32, i32, i32) {
    %c0_i32 = arith.constant 0 : i32
    %c0_i32_0 = arith.constant 0 : i32
    %c0_i32_1 = arith.constant 0 : i32
    return %arg1, %c0_i32, %c0_i32_0 : i32, i32, i32
  }
  func.func @transform_7(%arg0: i32, %arg1: i32) -> (i32, i32, i32) {
    %c0_i32 = arith.constant 0 : i32
    %c0_i32_0 = arith.constant 0 : i32
    %c0_i32_1 = arith.constant 0 : i32
    return %arg1, %c0_i32, %c0_i32_0 : i32, i32, i32
  }
  func.func @transform_8(%arg0: i32, %arg1: i32) -> (i32, i32, i32) {
    %c0_i32 = arith.constant 0 : i32
    %c0_i32_0 = arith.constant 0 : i32
    %c0_i32_1 = arith.constant 0 : i32
    return %arg1, %c0_i32, %c0_i32_0 : i32, i32, i32
  }
  func.func @transform_9(%arg0: i32, %arg1: i32) -> (i32, i32, i32) {
    %c0_i32 = arith.constant 0 : i32
    %c0_i32_0 = arith.constant 0 : i32
    %c0_i32_1 = arith.constant 0 : i32
    return %arg1, %c0_i32, %c0_i32_0 : i32, i32, i32
  }
  func.func @transform_10(%arg0: i32, %arg1: i32) -> (i32, i32, i32) {
    %c0_i32 = arith.constant 0 : i32
    %c0_i32_0 = arith.constant 0 : i32
    %c0_i32_1 = arith.constant 0 : i32
    return %arg1, %c0_i32, %c0_i32_0 : i32, i32, i32
  }
  func.func @transform_11(%arg0: i32, %arg1: i32) -> (i32, i32, i32) {
    %c0_i32 = arith.constant 0 : i32
    %c0_i32_0 = arith.constant 0 : i32
    %c0_i32_1 = arith.constant 0 : i32
    return %arg1, %c0_i32, %c0_i32_0 : i32, i32, i32
  }
  func.func @transform_12(%arg0: i32, %arg1: i32) -> (i32, i32, i32) {
    %c0_i32 = arith.constant 0 : i32
    %c0_i32_0 = arith.constant 0 : i32
    %c0_i32_1 = arith.constant 0 : i32
    return %arg1, %c0_i32, %c0_i32_0 : i32, i32, i32
  }
  func.func @transform_13(%arg0: i32, %arg1: i32) -> (i32, i32, i32) {
    %c0_i32 = arith.constant 0 : i32
    %c0_i32_0 = arith.constant 0 : i32
    %c0_i32_1 = arith.constant 0 : i32
    return %arg1, %c0_i32, %c0_i32_0 : i32, i32, i32
  }
  func.func @transform_14(%arg0: i32, %arg1: i32) -> (i32, i32, i32) {
    %c0_i32 = arith.constant 0 : i32
    %c0_i32_0 = arith.constant 0 : i32
    %c0_i32_1 = arith.constant 0 : i32
    return %arg1, %c0_i32, %c0_i32_0 : i32, i32, i32
  }
  func.func @transform_15(%arg0: i32, %arg1: i32) -> (i32, i32, i32) {
    %c0_i32 = arith.constant 0 : i32
    %c0_i32_0 = arith.constant 0 : i32
    %c0_i32_1 = arith.constant 0 : i32
    return %arg1, %c0_i32, %c0_i32_0 : i32, i32, i32
  }
  func.func @transform_16(%arg0: i32, %arg1: i32) -> (i32, i32) {
    %c0_i32 = arith.constant 0 : i32
    %c0_i32_0 = arith.constant 0 : i32
    %c0_i32_1 = arith.constant 0 : i32
    return %c0_i32, %c0_i32_0 : i32, i32
  }
  func.func @transform_17(%arg0: i32, %arg1: i32) -> (i32, i32) {
    %c0_i32 = arith.constant 0 : i32
    %c0_i32_0 = arith.constant 0 : i32
    %c0_i32_1 = arith.constant 0 : i32
    return %c0_i32, %c0_i32_0 : i32, i32
  }
  func.func @transform_18(%arg0: i32, %arg1: i32) -> (i32, i32) {
    %c0_i32 = arith.constant 0 : i32
    %c0_i32_0 = arith.constant 0 : i32
    %c0_i32_1 = arith.constant 0 : i32
    return %c0_i32, %c0_i32_0 : i32, i32
  }
  func.func @transform_19(%arg0: i32, %arg1: i32) -> (i32, i32) {
    %c0_i32 = arith.constant 0 : i32
    %c0_i32_0 = arith.constant 0 : i32
    %c0_i32_1 = arith.constant 0 : i32
    return %c0_i32, %c0_i32_0 : i32, i32
  }
  func.func @transform_20(%arg0: i32, %arg1: i32) -> (i32, i32, i32) {
    %c0_i32 = arith.constant 0 : i32
    %c0_i32_0 = arith.constant 0 : i32
    %c0_i32_1 = arith.constant 0 : i32
    return %arg0, %c0_i32, %c0_i32_0 : i32, i32, i32
  }
}

</mosaic_0001>

<llo_original>
// kernel: tpu_custom_call.1
$region0: #{tpu_custom_call.1}
  #allocation0 [shape = 'u32[]', space=smem, size = 0x4, offset = 0x4, fixed_abs, tag = 'smem constant byte address 0x4 - core index']
  #allocation1 [shape = 'u32[144,128]{1,0:T(1,128)}', space=vmem, size = 0x12000, scoped, tag = 'internal scratch']
  #allocation2 [shape = 'f32[12,32]{1,0:T(8,128)}', space=vmem, size = 0x2000, scoped, tag = 'scratch operand']
  %s0 = inlined_call_operand.vmem [shape: f32[2,12,32], index: 0, kind: input, shape index: {}]
  %s1 = inlined_call_operand.vmem [shape: f32[1,32], index: 1, kind: input, shape index: {}]
  %s2 = inlined_call_operand.vmem [shape: f32[1,32], index: 2, kind: input, shape index: {}]
  %s3 = inlined_call_operand.vmem [shape: f32[2,1,32], index: 3, kind: input, shape index: {}]
  %s4 = inlined_call_operand.vmem [shape: f32[2,1,32], index: 4, kind: input, shape index: {}]
  %s5 = inlined_call_operand.vmem [shape: f32[2,32,96], index: 5, kind: input, shape index: {}]
  %s6 = inlined_call_operand.vmem [shape: f32[2,32,32], index: 6, kind: input, shape index: {}]
  %s7 = inlined_call_operand.vmem [shape: f32[2,1,32], index: 7, kind: input, shape index: {}]
  %s8 = inlined_call_operand.vmem [shape: f32[2,1,32], index: 8, kind: input, shape index: {}]
  %s9 = inlined_call_operand.vmem [shape: f32[2,1,32], index: 9, kind: input, shape index: {}]
  %s10 = inlined_call_operand.vmem [shape: f32[2,1,32], index: 10, kind: input, shape index: {}]
  %s11 = inlined_call_operand.vmem [shape: f32[2,32,128], index: 11, kind: input, shape index: {}]
  %s12 = inlined_call_operand.vmem [shape: f32[2,1,128], index: 12, kind: input, shape index: {}]
  %s13 = inlined_call_operand.vmem [shape: f32[2,128,32], index: 13, kind: input, shape index: {}]
  %s14 = inlined_call_operand.vmem [shape: f32[2,1,32], index: 14, kind: input, shape index: {}]
  %s15 = inlined_call_operand.vmem [shape: f32[2,1,32], index: 15, kind: input, shape index: {}]
  %s16 = inlined_call_operand.vmem [shape: f32[1,32], index: 16, kind: input, shape index: {}]
  %s17 = inlined_call_operand.vmem [shape: f32[1,32], index: 17, kind: input, shape index: {}]
  %s18 = inlined_call_operand.vmem [shape: f32[32,128], index: 18, kind: input, shape index: {}]
  %s19 = inlined_call_operand.vmem [shape: f32[1,128], index: 19, kind: input, shape index: {}]
  %s20 = inlined_call_operand.hbm [shape: f32[2,4,128], index: 20, kind: output, shape index: {}]
  %s21 = sld [smem:[#allocation0]]
  $region121: #{tpu_custom_call.1} parent=0
    _
  %s23 = ssub.s32 1, %s21
  %s24 = scalar_select 0, %s23, %s21
  $region1: #{tpu_custom_call.1} parent=0
    #allocation3 [shape = 'u8[4096]{0}', space=vmem, size = 0x1000, scoped, tag = 'output window, operand 0']
    #allocation4 [shape = 's32[2]{0}', space=sflag, size = 0x8, scoped, tag = 'scoped memory for tpu_custom_call.1']
    %25 = vsyncpa [#allocation4], 0
    %s26 = scalar_lea.sflag [#allocation4], 1
    %27 = vsyncpa %s26, 0
    loop: start=0, step=1, limit=6
    $region2: #{tpu_custom_call.1} parent=1 // loop_pre_header
      _
    $region3: #{tpu_custom_call.1} parent=1 // loop_header
      %s29 = sphi 0, %s33
      %p30 = scmp.ge.s32.totalorder %s29, 6
      %s36 = sphi 0, %s48
      %s37 = sphi 0, %s44
      %s38 = sphi 0, %s36
      %s39 = sphi 0, %s37
      %s40 = sphi 0, %s38
      %s41 = sphi 0, %s39
      %s51 = sphi 0, %s53
      %s54 = sphi 0, %s51
      %s55 = sphi 0, %s54
      %s71 = sphi 0, %s55
      %s75 = sphi 0, %s75
      %s77 = sphi 0, %s75
      %s78 = sphi 0, %s77
      %s92 = sphi 0, %s78
      %s96 = sphi 0, %s96
      %s98 = sphi 0, %s96
      %s99 = sphi 0, %s98
      %s113 = sphi 0, %s99
      %s119 = sphi 0, %s121
      %s122 = sphi 0, %s119
      %s123 = sphi 0, %s122
      %s139 = sphi 0, %s123
      %s145 = sphi 0, %s147
      %s148 = sphi 0, %s145
      %s149 = sphi 0, %s148
      %s165 = sphi 0, %s149
      %s171 = sphi 0, %s173
      %s174 = sphi 0, %s171
      %s175 = sphi 0, %s174
      %s191 = sphi 0, %s175
      %s197 = sphi 0, %s199
      %s200 = sphi 0, %s197
      %s201 = sphi 0, %s200
      %s217 = sphi 0, %s201
      %s223 = sphi 0, %s225
      %s226 = sphi 0, %s223
      %s227 = sphi 0, %s226
      %s243 = sphi 0, %s227
      %s249 = sphi 0, %s251
      %s252 = sphi 0, %s249
      %s253 = sphi 0, %s252
      %s269 = sphi 0, %s253
      %s275 = sphi 0, %s277
      %s278 = sphi 0, %s275
      %s279 = sphi 0, %s278
      %s295 = sphi 0, %s279
      %s301 = sphi 0, %s303
      %s304 = sphi 0, %s301
      %s305 = sphi 0, %s304
      %s321 = sphi 0, %s305
      %s327 = sphi 0, %s329
      %s330 = sphi 0, %s327
      %s331 = sphi 0, %s330
      %s347 = sphi 0, %s331
      %s353 = sphi 0, %s355
      %s356 = sphi 0, %s353
      %s357 = sphi 0, %s356
      %s373 = sphi 0, %s357
      %s379 = sphi 0, %s381
      %s382 = sphi 0, %s379
      %s383 = sphi 0, %s382
      %s399 = sphi 0, %s383
      %s405 = sphi 0, %s407
      %s408 = sphi 0, %s405
      %s409 = sphi 0, %s408
      %s425 = sphi 0, %s409
      %s431 = sphi 0, %s433
      %s434 = sphi 0, %s431
      %s435 = sphi 0, %s434
      %s451 = sphi 0, %s435
      %s455 = sphi 0, %s455
      %s457 = sphi 0, %s455
      %s458 = sphi 0, %s457
      %s472 = sphi 0, %s458
      %s476 = sphi 0, %s476
      %s478 = sphi 0, %s476
      %s479 = sphi 0, %s478
      %s493 = sphi 0, %s479
      %s497 = sphi 0, %s497
      %s499 = sphi 0, %s497
      %s500 = sphi 0, %s499
      %s514 = sphi 0, %s500
      %s518 = sphi 0, %s518
      %s520 = sphi 0, %s518
      %s521 = sphi 0, %s520
      %s535 = sphi 0, %s521
      %s541 = sphi 0, %s543
      %s544 = sphi 0, %s541
      %s545 = sphi 0, %s544
      %s561 = sphi 0, %s545
    $region4: #{tpu_custom_call.1} parent=1 // loop_header_branch
      %32 = sbr.rel (%p30) target = $region8
    $region5: #{tpu_custom_call.1} parent=1 // loop_body
      %s34 = ssub.s32 %s29, 1
      %s35 = ssub.s32 %s29, 2
      %s42 = sadd.s32 1, %s37
      %p43 = scmp.ge.s32.totalorder %s42, 2
      %s44 = scalar_select %p43, 0, %s42
      %s45 = sadd.s32 1, %s36
      %s46 = scalar_select %p43, %s45, %s36
      %p47 = scmp.ge.s32.totalorder %s46, 2
      %s48 = scalar_select %p47, 0, %s46
      %s49 = ssub.s32 %s36, %s48
      %p50 = scmp.eq.s32.totalorder %s49, 0
      %s52 = sadd.s32 %s51, 1
      %s53 = scalar_select %p50, %s51, %s52
      %p56 = pneg %p50
      %p57 = scmp.eq.s32.totalorder %s29, 3
      %p58 = por %p56, %p57
      %p59 = scmp.ne.s32.totalorder %s51, %s54
      %p60 = scmp.eq.s32.totalorder %s29, 0
      %p61 = por %p59, %p60
      %p62 = scmp.ne.s32.totalorder %s51, %s54
      %p63 = scmp.eq.s32.totalorder %s34, 3
      %p64 = por %p62, %p63
      %p65 = scmp.ne.s32.totalorder %s54, %s55
      %p66 = scmp.eq.s32.totalorder %s34, 0
      %p67 = por %p65, %p66
      %p68 = scmp.ne.s32.totalorder %s54, %s55
      %p69 = scmp.eq.s32.totalorder %s35, 3
      %p70 = por %p68, %p69
      %p72 = scmp.ne.s32.totalorder %s55, %s71
      %p73 = scmp.eq.s32.totalorder %s35, 0
      %p74 = por %p72, %p73
      %s76 = sadd.s32 %s75, 1
      %p79 = scmp.eq.s32.totalorder %s29, 3
      %p80 = scmp.ne.s32.totalorder %s75, %s77
      %p81 = scmp.eq.s32.totalorder %s29, 0
      %p82 = por %p80, %p81
      %p83 = scmp.ne.s32.totalorder %s75, %s77
      %p84 = scmp.eq.s32.totalorder %s34, 3
      %p85 = por %p83, %p84
      %p86 = scmp.ne.s32.totalorder %s77, %s78
      %p87 = scmp.eq.s32.totalorder %s34, 0
      %p88 = por %p86, %p87
      %p89 = scmp.ne.s32.totalorder %s77, %s78
      %p90 = scmp.eq.s32.totalorder %s35, 3
      %p91 = por %p89, %p90
      %p93 = scmp.ne.s32.totalorder %s78, %s92
      %p94 = scmp.eq.s32.totalorder %s35, 0
      %p95 = por %p93, %p94
      %s97 = sadd.s32 %s96, 1
      %p100 = scmp.eq.s32.totalorder %s29, 3
      %p101 = scmp.ne.s32.totalorder %s96, %s98
      %p102 = scmp.eq.s32.totalorder %s29, 0
      %p103 = por %p101, %p102
      %p104 = scmp.ne.s32.totalorder %s96, %s98
      %p105 = scmp.eq.s32.totalorder %s34, 3
      %p106 = por %p104, %p105
      %p107 = scmp.ne.s32.totalorder %s98, %s99
      %p108 = scmp.eq.s32.totalorder %s34, 0
      %p109 = por %p107, %p108
      %p110 = scmp.ne.s32.totalorder %s98, %s99
      %p111 = scmp.eq.s32.totalorder %s35, 3
      %p112 = por %p110, %p111
      %p114 = scmp.ne.s32.totalorder %s99, %s113
      %p115 = scmp.eq.s32.totalorder %s35, 0
      %p116 = por %p114, %p115
      %s117 = ssub.s32 %s37, %s44
      %p118 = scmp.eq.s32.totalorder %s117, 0
      %s120 = sadd.s32 %s119, 1
      %s121 = scalar_select %p118, %s119, %s120
      %p124 = pneg %p118
      %p125 = scmp.eq.s32.totalorder %s29, 3
      %p126 = por %p124, %p125
      %p127 = scmp.ne.s32.totalorder %s119, %s122
      %p128 = scmp.eq.s32.totalorder %s29, 0
      %p129 = por %p127, %p128
      %p130 = scmp.ne.s32.totalorder %s119, %s122
      %p131 = scmp.eq.s32.totalorder %s34, 3
      %p132 = por %p130, %p131
      %p133 = scmp.ne.s32.totalorder %s122, %s123
      %p134 = scmp.eq.s32.totalorder %s34, 0
      %p135 = por %p133, %p134
      %p136 = scmp.ne.s32.totalorder %s122, %s123
      %p137 = scmp.eq.s32.totalorder %s35, 3
      %p138 = por %p136, %p137
      %p140 = scmp.ne.s32.totalorder %s123, %s139
      %p141 = scmp.eq.s32.totalorder %s35, 0
      %p142 = por %p140, %p141
      %s143 = ssub.s32 %s37, %s44
      %p144 = scmp.eq.s32.totalorder %s143, 0
      %s146 = sadd.s32 %s145, 1
      %s147 = scalar_select %p144, %s145, %s146
      %p150 = pneg %p144
      %p151 = scmp.eq.s32.totalorder %s29, 3
      %p152 = por %p150, %p151
      %p153 = scmp.ne.s32.totalorder %s145, %s148
      %p154 = scmp.eq.s32.totalorder %s29, 0
      %p155 = por %p153, %p154
      %p156 = scmp.ne.s32.totalorder %s145, %s148
      %p157 = scmp.eq.s32.totalorder %s34, 3
      %p158 = por %p156, %p157
      %p159 = scmp.ne.s32.totalorder %s148, %s149
      %p160 = scmp.eq.s32.totalorder %s34, 0
      %p161 = por %p159, %p160
      %p162 = scmp.ne.s32.totalorder %s148, %s149
      %p163 = scmp.eq.s32.totalorder %s35, 3
      %p164 = por %p162, %p163
      %p166 = scmp.ne.s32.totalorder %s149, %s165
      %p167 = scmp.eq.s32.totalorder %s35, 0
      %p168 = por %p166, %p167
      %s169 = ssub.s32 %s37, %s44
      %p170 = scmp.eq.s32.totalorder %s169, 0
      %s172 = sadd.s32 %s171, 1
      %s173 = scalar_select %p170, %s171, %s172
      %p176 = pneg %p170
      %p177 = scmp.eq.s32.totalorder %s29, 3
      %p178 = por %p176, %p177
      %p179 = scmp.ne.s32.totalorder %s171, %s174
      %p180 = scmp.eq.s32.totalorder %s29, 0
      %p181 = por %p179, %p180
      %p182 = scmp.ne.s32.totalorder %s171, %s174
      %p183 = scmp.eq.s32.totalorder %s34, 3
      %p184 = por %p182, %p183
      %p185 = scmp.ne.s32.totalorder %s174, %s175
      %p186 = scmp.eq.s32.totalorder %s34, 0
      %p187 = por %p185, %p186
      %p188 = scmp.ne.s32.totalorder %s174, %s175
      %p189 = scmp.eq.s32.totalorder %s35, 3
      %p190 = por %p188, %p189
      %p192 = scmp.ne.s32.totalorder %s175, %s191
      %p193 = scmp.eq.s32.totalorder %s35, 0
      %p194 = por %p192, %p193
      %s195 = ssub.s32 %s37, %s44
      %p196 = scmp.eq.s32.totalorder %s195, 0
      %s198 = sadd.s32 %s197, 1
      %s199 = scalar_select %p196, %s197, %s198
      %p202 = pneg %p196
      %p203 = scmp.eq.s32.totalorder %s29, 3
      %p204 = por %p202, %p203
      %p205 = scmp.ne.s32.totalorder %s197, %s200
      %p206 = scmp.eq.s32.totalorder %s29, 0
      %p207 = por %p205, %p206
      %p208 = scmp.ne.s32.totalorder %s197, %s200
      %p209 = scmp.eq.s32.totalorder %s34, 3
      %p210 = por %p208, %p209
      %p211 = scmp.ne.s32.totalorder %s200, %s201
      %p212 = scmp.eq.s32.totalorder %s34, 0
      %p213 = por %p211, %p212
      %p214 = scmp.ne.s32.totalorder %s200, %s201
      %p215 = scmp.eq.s32.totalorder %s35, 3
      %p216 = por %p214, %p215
      %p218 = scmp.ne.s32.totalorder %s201, %s217
      %p219 = scmp.eq.s32.totalorder %s35, 0
      %p220 = por %p218, %p219
      %s221 = ssub.s32 %s37, %s44
      %p222 = scmp.eq.s32.totalorder %s221, 0
      %s224 = sadd.s32 %s223, 1
      %s225 = scalar_select %p222, %s223, %s224
      %p228 = pneg %p222
      %p229 = scmp.eq.s32.totalorder %s29, 3
      %p230 = por %p228, %p229
      %p231 = scmp.ne.s32.totalorder %s223, %s226
      %p232 = scmp.eq.s32.totalorder %s29, 0
      %p233 = por %p231, %p232
      %p234 = scmp.ne.s32.totalorder %s223, %s226
      %p235 = scmp.eq.s32.totalorder %s34, 3
      %p236 = por %p234, %p235
      %p237 = scmp.ne.s32.totalorder %s226, %s227
      %p238 = scmp.eq.s32.totalorder %s34, 0
      %p239 = por %p237, %p238
      %p240 = scmp.ne.s32.totalorder %s226, %s227
      %p241 = scmp.eq.s32.totalorder %s35, 3
      %p242 = por %p240, %p241
      %p244 = scmp.ne.s32.totalorder %s227, %s243
      %p245 = scmp.eq.s32.totalorder %s35, 0
      %p246 = por %p244, %p245
      %s247 = ssub.s32 %s37, %s44
      %p248 = scmp.eq.s32.totalorder %s247, 0
      %s250 = sadd.s32 %s249, 1
      %s251 = scalar_select %p248, %s249, %s250
      %p254 = pneg %p248
      %p255 = scmp.eq.s32.totalorder %s29, 3
      %p256 = por %p254, %p255
      %p257 = scmp.ne.s32.totalorder %s249, %s252
      %p258 = scmp.eq.s32.totalorder %s29, 0
      %p259 = por %p257, %p258
      %p260 = scmp.ne.s32.totalorder %s249, %s252
      %p261 = scmp.eq.s32.totalorder %s34, 3
      %p262 = por %p260, %p261
      %p263 = scmp.ne.s32.totalorder %s252, %s253
      %p264 = scmp.eq.s32.totalorder %s34, 0
      %p265 = por %p263, %p264
      %p266 = scmp.ne.s32.totalorder %s252, %s253
      %p267 = scmp.eq.s32.totalorder %s35, 3
      %p268 = por %p266, %p267
      %p270 = scmp.ne.s32.totalorder %s253, %s269
      %p271 = scmp.eq.s32.totalorder %s35, 0
      %p272 = por %p270, %p271
      %s273 = ssub.s32 %s37, %s44
      %p274 = scmp.eq.s32.totalorder %s273, 0
      %s276 = sadd.s32 %s275, 1
      %s277 = scalar_select %p274, %s275, %s276
      %p280 = pneg %p274
      %p281 = scmp.eq.s32.totalorder %s29, 3
      %p282 = por %p280, %p281
      %p283 = scmp.ne.s32.totalorder %s275, %s278
      %p284 = scmp.eq.s32.totalorder %s29, 0
      %p285 = por %p283, %p284
      %p286 = scmp.ne.s32.totalorder %s275, %s278
      %p287 = scmp.eq.s32.totalorder %s34, 3
      %p288 = por %p286, %p287
      %p289 = scmp.ne.s32.totalorder %s278, %s279
      %p290 = scmp.eq.s32.totalorder %s34, 0
      %p291 = por %p289, %p290
      %p292 = scmp.ne.s32.totalorder %s278, %s279
      %p293 = scmp.eq.s32.totalorder %s35, 3
      %p294 = por %p292, %p293
      %p296 = scmp.ne.s32.totalorder %s279, %s295
      %p297 = scmp.eq.s32.totalorder %s35, 0
      %p298 = por %p296, %p297
      %s299 = ssub.s32 %s37, %s44
      %p300 = scmp.eq.s32.totalorder %s299, 0
      %s302 = sadd.s32 %s301, 1
      %s303 = scalar_select %p300, %s301, %s302
      %p306 = pneg %p300
      %p307 = scmp.eq.s32.totalorder %s29, 3
      %p308 = por %p306, %p307
      %p309 = scmp.ne.s32.totalorder %s301, %s304
      %p310 = scmp.eq.s32.totalorder %s29, 0
      %p311 = por %p309, %p310
      %p312 = scmp.ne.s32.totalorder %s301, %s304
      %p313 = scmp.eq.s32.totalorder %s34, 3
      %p314 = por %p312, %p313
      %p315 = scmp.ne.s32.totalorder %s304, %s305
      %p316 = scmp.eq.s32.totalorder %s34, 0
      %p317 = por %p315, %p316
      %p318 = scmp.ne.s32.totalorder %s304, %s305
      %p319 = scmp.eq.s32.totalorder %s35, 3
      %p320 = por %p318, %p319
      %p322 = scmp.ne.s32.totalorder %s305, %s321
      %p323 = scmp.eq.s32.totalorder %s35, 0
      %p324 = por %p322, %p323
      %s325 = ssub.s32 %s37, %s44
      %p326 = scmp.eq.s32.totalorder %s325, 0
      %s328 = sadd.s32 %s327, 1
      %s329 = scalar_select %p326, %s327, %s328
      %p332 = pneg %p326
      %p333 = scmp.eq.s32.totalorder %s29, 3
      %p334 = por %p332, %p333
      %p335 = scmp.ne.s32.totalorder %s327, %s330
      %p336 = scmp.eq.s32.totalorder %s29, 0
      %p337 = por %p335, %p336
      %p338 = scmp.ne.s32.totalorder %s327, %s330
      %p339 = scmp.eq.s32.totalorder %s34, 3
      %p340 = por %p338, %p339
      %p341 = scmp.ne.s32.totalorder %s330, %s331
      %p342 = scmp.eq.s32.totalorder %s34, 0
      %p343 = por %p341, %p342
      %p344 = scmp.ne.s32.totalorder %s330, %s331
      %p345 = scmp.eq.s32.totalorder %s35, 3
      %p346 = por %p344, %p345
      %p348 = scmp.ne.s32.totalorder %s331, %s347
      %p349 = scmp.eq.s32.totalorder %s35, 0
      %p350 = por %p348, %p349
      %s351 = ssub.s32 %s37, %s44
      %p352 = scmp.eq.s32.totalorder %s351, 0
      %s354 = sadd.s32 %s353, 1
      %s355 = scalar_select %p352, %s353, %s354
      %p358 = pneg %p352
      %p359 = scmp.eq.s32.totalorder %s29, 3
      %p360 = por %p358, %p359
      %p361 = scmp.ne.s32.totalorder %s353, %s356
      %p362 = scmp.eq.s32.totalorder %s29, 0
      %p363 = por %p361, %p362
      %p364 = scmp.ne.s32.totalorder %s353, %s356
      %p365 = scmp.eq.s32.totalorder %s34, 3
      %p366 = por %p364, %p365
      %p367 = scmp.ne.s32.totalorder %s356, %s357
      %p368 = scmp.eq.s32.totalorder %s34, 0
      %p369 = por %p367, %p368
      %p370 = scmp.ne.s32.totalorder %s356, %s357
      %p371 = scmp.eq.s32.totalorder %s35, 3
      %p372 = por %p370, %p371
      %p374 = scmp.ne.s32.totalorder %s357, %s373
      %p375 = scmp.eq.s32.totalorder %s35, 0
      %p376 = por %p374, %p375
      %s377 = ssub.s32 %s37, %s44
      %p378 = scmp.eq.s32.totalorder %s377, 0
      %s380 = sadd.s32 %s379, 1
      %s381 = scalar_select %p378, %s379, %s380
      %p384 = pneg %p378
      %p385 = scmp.eq.s32.totalorder %s29, 3
      %p386 = por %p384, %p385
      %p387 = scmp.ne.s32.totalorder %s379, %s382
      %p388 = scmp.eq.s32.totalorder %s29, 0
      %p389 = por %p387, %p388
      %p390 = scmp.ne.s32.totalorder %s379, %s382
      %p391 = scmp.eq.s32.totalorder %s34, 3
      %p392 = por %p390, %p391
      %p393 = scmp.ne.s32.totalorder %s382, %s383
      %p394 = scmp.eq.s32.totalorder %s34, 0
      %p395 = por %p393, %p394
      %p396 = scmp.ne.s32.totalorder %s382, %s383
      %p397 = scmp.eq.s32.totalorder %s35, 3
      %p398 = por %p396, %p397
      %p400 = scmp.ne.s32.totalorder %s383, %s399
      %p401 = scmp.eq.s32.totalorder %s35, 0
      %p402 = por %p400, %p401
      %s403 = ssub.s32 %s37, %s44
      %p404 = scmp.eq.s32.totalorder %s403, 0
      %s406 = sadd.s32 %s405, 1
      %s407 = scalar_select %p404, %s405, %s406
      %p410 = pneg %p404
      %p411 = scmp.eq.s32.totalorder %s29, 3
      %p412 = por %p410, %p411
      %p413 = scmp.ne.s32.totalorder %s405, %s408
      %p414 = scmp.eq.s32.totalorder %s29, 0
      %p415 = por %p413, %p414
      %p416 = scmp.ne.s32.totalorder %s405, %s408
      %p417 = scmp.eq.s32.totalorder %s34, 3
      %p418 = por %p416, %p417
      %p419 = scmp.ne.s32.totalorder %s408, %s409
      %p420 = scmp.eq.s32.totalorder %s34, 0
      %p421 = por %p419, %p420
      %p422 = scmp.ne.s32.totalorder %s408, %s409
      %p423 = scmp.eq.s32.totalorder %s35, 3
      %p424 = por %p422, %p423
      %p426 = scmp.ne.s32.totalorder %s409, %s425
      %p427 = scmp.eq.s32.totalorder %s35, 0
      %p428 = por %p426, %p427
      %s429 = ssub.s32 %s37, %s44
      %p430 = scmp.eq.s32.totalorder %s429, 0
      %s432 = sadd.s32 %s431, 1
      %s433 = scalar_select %p430, %s431, %s432
      %p436 = pneg %p430
      %p437 = scmp.eq.s32.totalorder %s29, 3
      %p438 = por %p436, %p437
      %p439 = scmp.ne.s32.totalorder %s431, %s434
      %p440 = scmp.eq.s32.totalorder %s29, 0
      %p441 = por %p439, %p440
      %p442 = scmp.ne.s32.totalorder %s431, %s434
      %p443 = scmp.eq.s32.totalorder %s34, 3
      %p444 = por %p442, %p443
      %p445 = scmp.ne.s32.totalorder %s434, %s435
      %p446 = scmp.eq.s32.totalorder %s34, 0
      %p447 = por %p445, %p446
      %p448 = scmp.ne.s32.totalorder %s434, %s435
      %p449 = scmp.eq.s32.totalorder %s35, 3
      %p450 = por %p448, %p449
      %p452 = scmp.ne.s32.totalorder %s435, %s451
      %p453 = scmp.eq.s32.totalorder %s35, 0
      %p454 = por %p452, %p453
      %s456 = sadd.s32 %s455, 1
      %p459 = scmp.eq.s32.totalorder %s29, 3
      %p460 = scmp.ne.s32.totalorder %s455, %s457
      %p461 = scmp.eq.s32.totalorder %s29, 0
      %p462 = por %p460, %p461
      %p463 = scmp.ne.s32.totalorder %s455, %s457
      %p464 = scmp.eq.s32.totalorder %s34, 3
      %p465 = por %p463, %p464
      %p466 = scmp.ne.s32.totalorder %s457, %s458
      %p467 = scmp.eq.s32.totalorder %s34, 0
      %p468 = por %p466, %p467
      %p469 = scmp.ne.s32.totalorder %s457, %s458
      %p470 = scmp.eq.s32.totalorder %s35, 3
      %p471 = por %p469, %p470
      %p473 = scmp.ne.s32.totalorder %s458, %s472
      %p474 = scmp.eq.s32.totalorder %s35, 0
      %p475 = por %p473, %p474
      %s477 = sadd.s32 %s476, 1
      %p480 = scmp.eq.s32.totalorder %s29, 3
      %p481 = scmp.ne.s32.totalorder %s476, %s478
      %p482 = scmp.eq.s32.totalorder %s29, 0
      %p483 = por %p481, %p482
      %p484 = scmp.ne.s32.totalorder %s476, %s478
      %p485 = scmp.eq.s32.totalorder %s34, 3
      %p486 = por %p484, %p485
      %p487 = scmp.ne.s32.totalorder %s478, %s479
      %p488 = scmp.eq.s32.totalorder %s34, 0
      %p489 = por %p487, %p488
      %p490 = scmp.ne.s32.totalorder %s478, %s479
      %p491 = scmp.eq.s32.totalorder %s35, 3
      %p492 = por %p490, %p491
      %p494 = scmp.ne.s32.totalorder %s479, %s493
      %p495 = scmp.eq.s32.totalorder %s35, 0
      %p496 = por %p494, %p495
      %s498 = sadd.s32 %s497, 1
      %p501 = scmp.eq.s32.totalorder %s29, 3
      %p502 = scmp.ne.s32.totalorder %s497, %s499
      %p503 = scmp.eq.s32.totalorder %s29, 0
      %p504 = por %p502, %p503
      %p505 = scmp.ne.s32.totalorder %s497, %s499
      %p506 = scmp.eq.s32.totalorder %s34, 3
      %p507 = por %p505, %p506
      %p508 = scmp.ne.s32.totalorder %s499, %s500
      %p509 = scmp.eq.s32.totalorder %s34, 0
      %p510 = por %p508, %p509
      %p511 = scmp.ne.s32.totalorder %s499, %s500
      %p512 = scmp.eq.s32.totalorder %s35, 3
      %p513 = por %p511, %p512
      %p515 = scmp.ne.s32.totalorder %s500, %s514
      %p516 = scmp.eq.s32.totalorder %s35, 0
      %p517 = por %p515, %p516
      %s519 = sadd.s32 %s518, 1
      %p522 = scmp.eq.s32.totalorder %s29, 3
      %p523 = scmp.ne.s32.totalorder %s518, %s520
      %p524 = scmp.eq.s32.totalorder %s29, 0
      %p525 = por %p523, %p524
      %p526 = scmp.ne.s32.totalorder %s518, %s520
      %p527 = scmp.eq.s32.totalorder %s34, 3
      %p528 = por %p526, %p527
      %p529 = scmp.ne.s32.totalorder %s520, %s521
      %p530 = scmp.eq.s32.totalorder %s34, 0
      %p531 = por %p529, %p530
      %p532 = scmp.ne.s32.totalorder %s520, %s521
      %p533 = scmp.eq.s32.totalorder %s35, 3
      %p534 = por %p532, %p533
      %p536 = scmp.ne.s32.totalorder %s521, %s535
      %p537 = scmp.eq.s32.totalorder %s35, 0
      %p538 = por %p536, %p537
      %s539 = ssub.s32 %s36, %s48
      %p540 = scmp.eq.s32.totalorder %s539, 0
      %s542 = sadd.s32 %s541, 1
      %s543 = scalar_select %p540, %s541, %s542
      %p546 = pneg %p540
      %p547 = scmp.eq.s32.totalorder %s29, 3
      %p548 = por %p546, %p547
      %p549 = scmp.ne.s32.totalorder %s541, %s544
      %p550 = scmp.eq.s32.totalorder %s29, 0
      %p551 = por %p549, %p550
      %p552 = scmp.ne.s32.totalorder %s541, %s544
      %p553 = scmp.eq.s32.totalorder %s34, 3
      %p554 = por %p552, %p553
      %p555 = scmp.ne.s32.totalorder %s544, %s545
      %p556 = scmp.eq.s32.totalorder %s34, 0
      %p557 = por %p555, %p556
      %p558 = scmp.ne.s32.totalorder %s544, %s545
      %p559 = scmp.eq.s32.totalorder %s35, 3
      %p560 = por %p558, %p559
      %p562 = scmp.ne.s32.totalorder %s545, %s561
      %p563 = scmp.eq.s32.totalorder %s35, 0
      %p564 = por %p562, %p563
      %p565 = scmp.le.s32.totalorder 1, %s29
      %p566 = scmp.lt.s32.totalorder %s29, 5
      %p567 = pnand %p565, %p566
      %p568 = pneg %p567
      // Predicated region
      $region9: #{tpu_custom_call.1} parent=5 // pred_check
        _
      $region10: #{tpu_custom_call.1} parent=5 // pred_check_branch
        %570 = sbr.rel (%p567) target = $region12
      $region11: #{tpu_custom_call.1} parent=5 // pred_region
        %s571 = ssub.s32 %s29, 1
        // Predicated region
        $region13: #{tpu_custom_call.1} parent=11 // pred_check
          %p572 = pneg %p88
        $region14: #{tpu_custom_call.1} parent=11 // pred_check_branch
          %574 = sbr.rel (%p572) target = $region16
        $region15: #{tpu_custom_call.1} parent=11 // pred_region
          _
        $region16: #{tpu_custom_call.1} parent=11 // pred_fallthru
          _
        // Predicated region
        $region17: #{tpu_custom_call.1} parent=11 // pred_check
          %p575 = pneg %p109
        $region18: #{tpu_custom_call.1} parent=11 // pred_check_branch
          %577 = sbr.rel (%p575) target = $region20
        $region19: #{tpu_custom_call.1} parent=11 // pred_region
          _
        $region20: #{tpu_custom_call.1} parent=11 // pred_fallthru
          _
        // Predicated region
        $region21: #{tpu_custom_call.1} parent=11 // pred_check
          %p578 = pneg %p468
        $region22: #{tpu_custom_call.1} parent=11 // pred_check_branch
          %580 = sbr.rel (%p578) target = $region24
        $region23: #{tpu_custom_call.1} parent=11 // pred_region
          _
        $region24: #{tpu_custom_call.1} parent=11 // pred_fallthru
          _
        // Predicated region
        $region25: #{tpu_custom_call.1} parent=11 // pred_check
          %p581 = pneg %p489
        $region26: #{tpu_custom_call.1} parent=11 // pred_check_branch
          %583 = sbr.rel (%p581) target = $region28
        $region27: #{tpu_custom_call.1} parent=11 // pred_region
          _
        $region28: #{tpu_custom_call.1} parent=11 // pred_fallthru
          _
        // Predicated region
        $region29: #{tpu_custom_call.1} parent=11 // pred_check
          %p584 = pneg %p510
        $region30: #{tpu_custom_call.1} parent=11 // pred_check_branch
          %586 = sbr.rel (%p584) target = $region32
        $region31: #{tpu_custom_call.1} parent=11 // pred_region
          _
        $region32: #{tpu_custom_call.1} parent=11 // pred_fallthru
          _
        // Predicated region
        $region33: #{tpu_custom_call.1} parent=11 // pred_check
          %p587 = pneg %p531
        $region34: #{tpu_custom_call.1} parent=11 // pred_check_branch
          %589 = sbr.rel (%p587) target = $region36
        $region35: #{tpu_custom_call.1} parent=11 // pred_region
          _
        $region36: #{tpu_custom_call.1} parent=11 // pred_fallthru
          _
      $region12: #{tpu_custom_call.1} parent=5 // pred_fallthru
        _
      %p590 = scmp.lt.s32.totalorder %s29, 4
      // Predicated region
      $region37: #{tpu_custom_call.1} parent=5 // pred_check
        %p591 = pneg %p590
      $region38: #{tpu_custom_call.1} parent=5 // pred_check_branch
        %593 = sbr.rel (%p591) target = $region40
      $region39: #{tpu_custom_call.1} parent=5 // pred_region
        // Predicated region
        $region41: #{tpu_custom_call.1} parent=39 // pred_check
          %p594 = pneg %p61
        $region42: #{tpu_custom_call.1} parent=39 // pred_check_branch
          %596 = sbr.rel (%p594) target = $region44
        $region43: #{tpu_custom_call.1} parent=39 // pred_region
          %p597 = scmp.lt.s32.totalorder %s36, 1
          %s598 = scalar_select %p597, %s36, 1
          %s599 = smul.addr %s598, 2
          %s600 = smul.addr %s599, 8
          %s601 = scalar_lea.vmem %s0, %s600
        $region44: #{tpu_custom_call.1} parent=39 // pred_fallthru
          _
        // Predicated region
        $region45: #{tpu_custom_call.1} parent=39 // pred_check
          %p602 = pneg %p129
        $region46: #{tpu_custom_call.1} parent=39 // pred_check_branch
          %604 = sbr.rel (%p602) target = $region48
        $region47: #{tpu_custom_call.1} parent=39 // pred_region
          %p605 = scmp.lt.s32.totalorder %s37, 1
          %s606 = scalar_select %p605, %s37, 1
          %s607 = scalar_lea.vmem %s3, %s606
        $region48: #{tpu_custom_call.1} parent=39 // pred_fallthru
          _
        // Predicated region
        $region49: #{tpu_custom_call.1} parent=39 // pred_check
          %p608 = pneg %p155
        $region50: #{tpu_custom_call.1} parent=39 // pred_check_branch
          %610 = sbr.rel (%p608) target = $region52
        $region51: #{tpu_custom_call.1} parent=39 // pred_region
          %p611 = scmp.lt.s32.totalorder %s37, 1
          %s612 = scalar_select %p611, %s37, 1
          %s613 = scalar_lea.vmem %s4, %s612
        $region52: #{tpu_custom_call.1} parent=39 // pred_fallthru
          _
        // Predicated region
        $region53: #{tpu_custom_call.1} parent=39 // pred_check
          %p614 = pneg %p181
        $region54: #{tpu_custom_call.1} parent=39 // pred_check_branch
          %616 = sbr.rel (%p614) target = $region56
        $region55: #{tpu_custom_call.1} parent=39 // pred_region
          %p617 = scmp.lt.s32.totalorder %s37, 1
          %s618 = scalar_select %p617, %s37, 1
          %s619 = smul.addr %s618, 4
          %s620 = smul.addr %s619, 8
          %s621 = scalar_lea.vmem %s5, %s620
        $region56: #{tpu_custom_call.1} parent=39 // pred_fallthru
          _
        // Predicated region
        $region57: #{tpu_custom_call.1} parent=39 // pred_check
          %p622 = pneg %p207
        $region58: #{tpu_custom_call.1} parent=39 // pred_check_branch
          %624 = sbr.rel (%p622) target = $region60
        $region59: #{tpu_custom_call.1} parent=39 // pred_region
          %p625 = scmp.lt.s32.totalorder %s37, 1
          %s626 = scalar_select %p625, %s37, 1
          %s627 = smul.addr %s626, 4
          %s628 = smul.addr %s627, 8
          %s629 = scalar_lea.vmem %s6, %s628
        $region60: #{tpu_custom_call.1} parent=39 // pred_fallthru
          _
        // Predicated region
        $region61: #{tpu_custom_call.1} parent=39 // pred_check
          %p630 = pneg %p233
        $region62: #{tpu_custom_call.1} parent=39 // pred_check_branch
          %632 = sbr.rel (%p630) target = $region64
        $region63: #{tpu_custom_call.1} parent=39 // pred_region
          %p633 = scmp.lt.s32.totalorder %s37, 1
          %s634 = scalar_select %p633, %s37, 1
          %s635 = scalar_lea.vmem %s7, %s634
        $region64: #{tpu_custom_call.1} parent=39 // pred_fallthru
          _
        // Predicated region
        $region65: #{tpu_custom_call.1} parent=39 // pred_check
          %p636 = pneg %p259
        $region66: #{tpu_custom_call.1} parent=39 // pred_check_branch
          %638 = sbr.rel (%p636) target = $region68
        $region67: #{tpu_custom_call.1} parent=39 // pred_region
          %p639 = scmp.lt.s32.totalorder %s37, 1
          %s640 = scalar_select %p639, %s37, 1
          %s641 = scalar_lea.vmem %s8, %s640
        $region68: #{tpu_custom_call.1} parent=39 // pred_fallthru
          _
        // Predicated region
        $region69: #{tpu_custom_call.1} parent=39 // pred_check
          %p642 = pneg %p285
        $region70: #{tpu_custom_call.1} parent=39 // pred_check_branch
          %644 = sbr.rel (%p642) target = $region72
        $region71: #{tpu_custom_call.1} parent=39 // pred_region
          %p645 = scmp.lt.s32.totalorder %s37, 1
          %s646 = scalar_select %p645, %s37, 1
          %s647 = scalar_lea.vmem %s9, %s646
        $region72: #{tpu_custom_call.1} parent=39 // pred_fallthru
          _
        // Predicated region
        $region73: #{tpu_custom_call.1} parent=39 // pred_check
          %p648 = pneg %p311
        $region74: #{tpu_custom_call.1} parent=39 // pred_check_branch
          %650 = sbr.rel (%p648) target = $region76
        $region75: #{tpu_custom_call.1} parent=39 // pred_region
          %p651 = scmp.lt.s32.totalorder %s37, 1
          %s652 = scalar_select %p651, %s37, 1
          %s653 = scalar_lea.vmem %s10, %s652
        $region76: #{tpu_custom_call.1} parent=39 // pred_fallthru
          _
        // Predicated region
        $region77: #{tpu_custom_call.1} parent=39 // pred_check
          %p654 = pneg %p337
        $region78: #{tpu_custom_call.1} parent=39 // pred_check_branch
          %656 = sbr.rel (%p654) target = $region80
        $region79: #{tpu_custom_call.1} parent=39 // pred_region
          %p657 = scmp.lt.s32.totalorder %s37, 1
          %s658 = scalar_select %p657, %s37, 1
          %s659 = smul.addr %s658, 4
          %s660 = smul.addr %s659, 8
          %s661 = scalar_lea.vmem %s11, %s660
        $region80: #{tpu_custom_call.1} parent=39 // pred_fallthru
          _
        // Predicated region
        $region81: #{tpu_custom_call.1} parent=39 // pred_check
          %p662 = pneg %p363
        $region82: #{tpu_custom_call.1} parent=39 // pred_check_branch
          %664 = sbr.rel (%p662) target = $region84
        $region83: #{tpu_custom_call.1} parent=39 // pred_region
          %p665 = scmp.lt.s32.totalorder %s37, 1
          %s666 = scalar_select %p665, %s37, 1
          %s667 = scalar_lea.vmem %s12, %s666
        $region84: #{tpu_custom_call.1} parent=39 // pred_fallthru
          _
        // Predicated region
        $region85: #{tpu_custom_call.1} parent=39 // pred_check
          %p668 = pneg %p389
        $region86: #{tpu_custom_call.1} parent=39 // pred_check_branch
          %670 = sbr.rel (%p668) target = $region88
        $region87: #{tpu_custom_call.1} parent=39 // pred_region
          %p671 = scmp.lt.s32.totalorder %s37, 1
          %s672 = scalar_select %p671, %s37, 1
          %s673 = smul.addr %s672, 16
          %s674 = smul.addr %s673, 8
          %s675 = scalar_lea.vmem %s13, %s674
        $region88: #{tpu_custom_call.1} parent=39 // pred_fallthru
          _
        // Predicated region
        $region89: #{tpu_custom_call.1} parent=39 // pred_check
          %p676 = pneg %p415
        $region90: #{tpu_custom_call.1} parent=39 // pred_check_branch
          %678 = sbr.rel (%p676) target = $region92
        $region91: #{tpu_custom_call.1} parent=39 // pred_region
          %p679 = scmp.lt.s32.totalorder %s37, 1
          %s680 = scalar_select %p679, %s37, 1
          %s681 = scalar_lea.vmem %s14, %s680
        $region92: #{tpu_custom_call.1} parent=39 // pred_fallthru
          _
        // Predicated region
        $region93: #{tpu_custom_call.1} parent=39 // pred_check
          %p682 = pneg %p441
        $region94: #{tpu_custom_call.1} parent=39 // pred_check_branch
          %684 = sbr.rel (%p682) target = $region96
        $region95: #{tpu_custom_call.1} parent=39 // pred_region
          %p685 = scmp.lt.s32.totalorder %s37, 1
          %s686 = scalar_select %p685, %s37, 1
          %s687 = scalar_lea.vmem %s15, %s686
        $region96: #{tpu_custom_call.1} parent=39 // pred_fallthru
          _
      $region40: #{tpu_custom_call.1} parent=5 // pred_fallthru
        _
      %p688 = scmp.le.s32.totalorder 1, %s29
      %p689 = scmp.lt.s32.totalorder %s29, 5
      %p690 = pnand %p688, %p689
      %p691 = pneg %p690
      // Predicated region
      $region97: #{tpu_custom_call.1} parent=5 // pred_check
        _
      $region98: #{tpu_custom_call.1} parent=5 // pred_check_branch
        %693 = sbr.rel (%p690) target = $region100
      $region99: #{tpu_custom_call.1} parent=5 // pred_region
        %s694 = ssub.s32 %s29, 1
        %p695 = scmp.lt.s32.totalorder %s38, 1
        %s696 = scalar_select %p695, %s38, 1
        %s697 = smul.addr %s696, 2
        %s698 = smul.addr %s697, 8
        %s699 = scalar_lea.vmem %s0, %s698
        %p700 = pneg %p67
        %p701 = pneg %p64
        %p702 = pneg %p88
        %p703 = pneg %p85
        %p704 = pneg %p109
        %p705 = pneg %p106
        %p706 = scmp.lt.s32.totalorder %s39, 1
        %s707 = scalar_select %p706, %s39, 1
        %s708 = scalar_lea.vmem %s3, %s707
        %p709 = pneg %p135
        %p710 = pneg %p132
        %p711 = scmp.lt.s32.totalorder %s39, 1
        %s712 = scalar_select %p711, %s39, 1
        %s713 = scalar_lea.vmem %s4, %s712
        %p714 = pneg %p161
        %p715 = pneg %p158
        %p716 = scmp.lt.s32.totalorder %s39, 1
        %s717 = scalar_select %p716, %s39, 1
        %s718 = smul.addr %s717, 4
        %s719 = smul.addr %s718, 8
        %s720 = scalar_lea.vmem %s5, %s719
        %p721 = pneg %p187
        %p722 = pneg %p184
        %p723 = scmp.lt.s32.totalorder %s39, 1
        %s724 = scalar_select %p723, %s39, 1
        %s725 = smul.addr %s724, 4
        %s726 = smul.addr %s725, 8
        %s727 = scalar_lea.vmem %s6, %s726
        %p728 = pneg %p213
        %p729 = pneg %p210
        %p730 = scmp.lt.s32.totalorder %s39, 1
        %s731 = scalar_select %p730, %s39, 1
        %s732 = scalar_lea.vmem %s7, %s731
        %p733 = pneg %p239
        %p734 = pneg %p236
        %p735 = scmp.lt.s32.totalorder %s39, 1
        %s736 = scalar_select %p735, %s39, 1
        %s737 = scalar_lea.vmem %s8, %s736
        %p738 = pneg %p265
        %p739 = pneg %p262
        %p740 = scmp.lt.s32.totalorder %s39, 1
        %s741 = scalar_select %p740, %s39, 1
        %s742 = scalar_lea.vmem %s9, %s741
        %p743 = pneg %p291
        %p744 = pneg %p288
        %p745 = scmp.lt.s32.totalorder %s39, 1
        %s746 = scalar_select %p745, %s39, 1
        %s747 = scalar_lea.vmem %s10, %s746
        %p748 = pneg %p317
        %p749 = pneg %p314
        %p750 = scmp.lt.s32.totalorder %s39, 1
        %s751 = scalar_select %p750, %s39, 1
        %s752 = smul.addr %s751, 4
        %s753 = smul.addr %s752, 8
        %s754 = scalar_lea.vmem %s11, %s753
        %p755 = pneg %p343
        %p756 = pneg %p340
        %p757 = scmp.lt.s32.totalorder %s39, 1
        %s758 = scalar_select %p757, %s39, 1
        %s759 = scalar_lea.vmem %s12, %s758
        %p760 = pneg %p369
        %p761 = pneg %p366
        %p762 = scmp.lt.s32.totalorder %s39, 1
        %s763 = scalar_select %p762, %s39, 1
        %s764 = smul.addr %s763, 16
        %s765 = smul.addr %s764, 8
        %s766 = scalar_lea.vmem %s13, %s765
        %p767 = pneg %p395
        %p768 = pneg %p392
        %p769 = scmp.lt.s32.totalorder %s39, 1
        %s770 = scalar_select %p769, %s39, 1
        %s771 = scalar_lea.vmem %s14, %s770
        %p772 = pneg %p421
        %p773 = pneg %p418
        %p774 = scmp.lt.s32.totalorder %s39, 1
        %s775 = scalar_select %p774, %s39, 1
        %s776 = scalar_lea.vmem %s15, %s775
        %p777 = pneg %p447
        %p778 = pneg %p444
        %p779 = pneg %p468
        %p780 = pneg %p465
        %p781 = pneg %p489
        %p782 = pneg %p486
        %p783 = pneg %p510
        %p784 = pneg %p507
        %p785 = pneg %p531
        %p786 = pneg %p528
        %p787 = pneg %p557
        %p788 = pneg %p554
        %s789 = sand.u32 %s544, 1
        %s790 = scalar_lea.sflag [#allocation4], %s789
        %s791 = sand.u32 %s544, 1
        %s792 = smul.addr %s791, 4
        %s793 = scalar_lea.vmem [#allocation3], %s792
        %p794 = scmp.lt.s32.totalorder %s38, 1
        %s795 = scalar_select %p794, %s38, 1
        %s796 = smul.addr %s795, 2
        %s797 = smul.addr %s796, 8
        %s798 = scalar_lea.vmem %s0, %s797
        %p799 = scmp.lt.s32.totalorder %s39, 1
        %s800 = scalar_select %p799, %s39, 1
        %s801 = scalar_lea.vmem %s3, %s800
        %p802 = scmp.lt.s32.totalorder %s39, 1
        %s803 = scalar_select %p802, %s39, 1
        %s804 = scalar_lea.vmem %s4, %s803
        %p805 = scmp.lt.s32.totalorder %s39, 1
        %s806 = scalar_select %p805, %s39, 1
        %s807 = smul.addr %s806, 4
        %s808 = smul.addr %s807, 8
        %s809 = scalar_lea.vmem %s5, %s808
        %p810 = scmp.lt.s32.totalorder %s39, 1
        %s811 = scalar_select %p810, %s39, 1
        %s812 = smul.addr %s811, 4
        %s813 = smul.addr %s812, 8
        %s814 = scalar_lea.vmem %s6, %s813
        %p815 = scmp.lt.s32.totalorder %s39, 1
        %s816 = scalar_select %p815, %s39, 1
        %s817 = scalar_lea.vmem %s7, %s816
        %p818 = scmp.lt.s32.totalorder %s39, 1
        %s819 = scalar_select %p818, %s39, 1
        %s820 = scalar_lea.vmem %s8, %s819
        %p821 = scmp.lt.s32.totalorder %s39, 1
        %s822 = scalar_select %p821, %s39, 1
        %s823 = scalar_lea.vmem %s9, %s822
        %p824 = scmp.lt.s32.totalorder %s39, 1
        %s825 = scalar_select %p824, %s39, 1
        %s826 = scalar_lea.vmem %s10, %s825
        %p827 = scmp.lt.s32.totalorder %s39, 1
        %s828 = scalar_select %p827, %s39, 1
        %s829 = smul.addr %s828, 4
        %s830 = smul.addr %s829, 8
        %s831 = scalar_lea.vmem %s11, %s830
        %p832 = scmp.lt.s32.totalorder %s39, 1
        %s833 = scalar_select %p832, %s39, 1
        %s834 = scalar_lea.vmem %s12, %s833
        %p835 = scmp.lt.s32.totalorder %s39, 1
        %s836 = scalar_select %p835, %s39, 1
        %s837 = smul.addr %s836, 16
        %s838 = smul.addr %s837, 8
        %s839 = scalar_lea.vmem %s13, %s838
        %p840 = scmp.lt.s32.totalorder %s39, 1
        %s841 = scalar_select %p840, %s39, 1
        %s842 = scalar_lea.vmem %s14, %s841
        %p843 = scmp.lt.s32.totalorder %s39, 1
        %s844 = scalar_select %p843, %s39, 1
        %s845 = scalar_lea.vmem %s15, %s844
        %p846 = scmp.eq.s32.totalorder %s39, 0
        // Predicated region
        $region101: #{tpu_custom_call.1} parent=99 // pred_check
          %p847 = pneg %p846
        $region102: #{tpu_custom_call.1} parent=99 // pred_check_branch
          %849 = sbr.rel (%p847) target = $region104
        $region103: #{tpu_custom_call.1} parent=99 // pred_region
          %v850 = vld [vmem:[%s798] sm:$0xff]
          %v851 = vld [vmem:[%s798 + $0x8] sm:$0xf]
          %v852 = vld [vmem:[%s1] sm:$0x1]
          %v853 = vld [vmem:[%s2] sm:$0x1]
          %vm854 = vcmask 261120
          %v855 = vsel %vm854, %v850, 0.0
          %856 = vadd.xlane.f32.xlu0 %v855
          %v857 = vpop.xlane.xlu0 %856
          %vm858 = vcmask 257024
          %v859 = vsel %vm858, %v851, 0.0
          %860 = vadd.xlane.f32.xlu0 %v859
          %v861 = vpop.xlane.xlu0 %860
          %v862 = vrcp.pop 32.0
          %v863 = vmul.f32 %v857, %v862
          %v864 = vmul.f32 %v861, %v862
          %v865 = vsub.f32 %v850, %v863
          %v866 = vsub.f32 %v851, %v864
          %v867 = vmul.f32 %v865, %v865
          %v868 = vmul.f32 %v866, %v866
          %v869 = vsel %vm854, %v867, 0.0
          %870 = vadd.xlane.f32.xlu0 %v869
          %v871 = vpop.xlane.xlu0 %870
          %v872 = vsel %vm858, %v868, 0.0
          %873 = vadd.xlane.f32.xlu0 %v872
          %v874 = vpop.xlane.xlu0 %873
          %v875 = vmul.f32 %v871, %v862
          %v876 = vmul.f32 %v874, %v862
          %v877 = vadd.f32 %v875, 1e-05
          %v878 = vadd.f32 %v876, 1e-05
          %v879 = vrsqrt.pop %v877
          %v880 = vrsqrt.pop %v878
          %v881 = vmul.f32 %v865, %v879
          %v882 = vmul.f32 %v866, %v880
          %v884 = vlaneseq
          %v885 = vshrl.u32 %v884, 7
          %v886 = vsub.s32 0, %v885
          %v887 = vrot.slane %v852, %v886
          %v889 = vmul.f32 %v881, %v887
          %v890 = vmul.f32 %v882, %v887
          %v892 = vlaneseq
          %v893 = vshrl.u32 %v892, 7
          %v894 = vsub.s32 0, %v893
          %v895 = vrot.slane %v853, %v894
          %v897 = vadd.f32 %v889, %v895
          %v898 = vadd.f32 %v890, %v895
          %899 = vst.msk [vmem:[#allocation2] sm:$0xff] %vm854, %v897
          %900 = vst.msk [vmem:[#allocation2 + $0x8] sm:$0xf] %vm858, %v898
        $region104: #{tpu_custom_call.1} parent=99 // pred_fallthru
          _
        %v901 = vld [vmem:[#allocation2] sm:$0xff]
        %v902 = vld [vmem:[#allocation2 + $0x8] sm:$0xf]
        %v903 = vld [vmem:[%s801] sm:$0x1]
        %v904 = vld [vmem:[%s804] sm:$0x1]
        %vm905 = vcmask 261120
        %v906 = vsel %vm905, %v901, 0.0
        %907 = vadd.xlane.f32.xlu0 %v906
        %v908 = vpop.xlane.xlu0 %907
        %vm909 = vcmask 257024
        %v910 = vsel %vm909, %v902, 0.0
        %911 = vadd.xlane.f32.xlu0 %v910
        %v912 = vpop.xlane.xlu0 %911
        %v913 = vrcp.pop 32.0
        %v914 = vmul.f32 %v908, %v913
        %v915 = vmul.f32 %v912, %v913
        %v916 = vsub.f32 %v901, %v914
        %v917 = vsub.f32 %v902, %v915
        %v918 = vmul.f32 %v916, %v916
        %v919 = vmul.f32 %v917, %v917
        %v920 = vsel %vm905, %v918, 0.0
        %921 = vadd.xlane.f32.xlu0 %v920
        %v922 = vpop.xlane.xlu0 %921
        %v923 = vsel %vm909, %v919, 0.0
        %924 = vadd.xlane.f32.xlu0 %v923
        %v925 = vpop.xlane.xlu0 %924
        %v926 = vmul.f32 %v922, %v913
        %v927 = vmul.f32 %v925, %v913
        %v928 = vadd.f32 %v926, 1e-05
        %v929 = vadd.f32 %v927, 1e-05
        %v930 = vrsqrt.pop %v928
        %v931 = vrsqrt.pop %v929
        %v932 = vmul.f32 %v916, %v930
        %v933 = vmul.f32 %v917, %v931
        %v935 = vlaneseq
        %v936 = vshrl.u32 %v935, 7
        %v937 = vsub.s32 0, %v936
        %v938 = vrot.slane %v903, %v937
        %v940 = vmul.f32 %v932, %v938
        %v941 = vmul.f32 %v933, %v938
        %v943 = vlaneseq
        %v944 = vshrl.u32 %v943, 7
        %v945 = vsub.s32 0, %v944
        %v946 = vrot.slane %v904, %v945
        %v948 = vadd.f32 %v940, %v946
        %v949 = vadd.f32 %v941, %v946
        %v950 = vld [vmem:[%s809] sm:$0xff]
        %v951 = vld [vmem:[%s809 + $0x8] sm:$0xff]
        %v952 = vld [vmem:[%s809 + $0x10] sm:$0xff]
        %v953 = vld [vmem:[%s809 + $0x18] sm:$0xff]
        %v955 = vsel %vm905, %v948, 0
        %v958 = vsel %vm905, %v949, 0
        %960 = vmatprep.subr.mxu0 0.0
        %v961 = vand.u32 %v950, 4294901760
        %962 = vmatpush1.msra.mxu0 %v961
        %963 = vmatprep.subr.mxu0 0.0
        %v964 = vand.u32 %v951, 4294901760
        %965 = vmatpush1.msra.mxu0 %v964
        %966 = vmatprep.subr.mxu0 0.0
        %v967 = vand.u32 %v952, 4294901760
        %968 = vmatpush1.msra.mxu0 %v967
        %969 = vmatprep.subr.mxu0 0.0
        %v970 = vand.u32 %v953, 4294901760
        %971 = vmatpush1.msra.mxu0 %v970
        %972 = vmatprep.subr.mxu0 0.0
        %973 = vmatpush1.msra.mxu0 0.0
        %974 = vmatprep.subr.mxu0 0.0
        %975 = vmatpush1.msra.mxu0 0.0
        %976 = vmatprep.subr.mxu0 0.0
        %977 = vmatpush1.msra.mxu0 0.0
        %978 = vmatprep.subr.mxu0 0.0
        %979 = vmatpush1.msra.mxu0 0.0
        %980 = vmatprep.subr.mxu0 0.0
        %981 = vmatpush1.msra.mxu0 0.0
        %982 = vmatprep.subr.mxu0 0.0
        %983 = vmatpush1.msra.mxu0 0.0
        %984 = vmatprep.subr.mxu0 0.0
        %985 = vmatpush1.msra.mxu0 0.0
        %986 = vmatprep.subr.mxu0 0.0
        %987 = vmatpush1.msra.mxu0 0.0
        %988 = vmatprep.subr.mxu0 0.0
        %989 = vmatpush1.msra.mxu0 0.0
        %990 = vmatprep.subr.mxu0 0.0
        %991 = vmatpush1.msra.mxu0 0.0
        %992 = vmatprep.subr.mxu0 0.0
        %993 = vmatpush1.msra.mxu0 0.0
        %994 = vmatprep.subr.mxu0 0.0
        %995 = vmatpush1.msra.mxu0 0.0
        %996 = vmatprep.subr.mxu0 0.0
        %997 = vmatpush1.msra.mxu0 0.0
        %998 = vmatprep.subr.mxu0 0.0
        %999 = vmatpush1.msra.mxu0 0.0
        %1000 = vmatprep.subr.mxu0 0.0
        %1001 = vmatpush1.msra.mxu0 0.0
        %1002 = vmatprep.subr.mxu0 0.0
        %1003 = vmatpush1.msra.mxu0 0.0
        %1004 = vmatprep.subr.mxu0 0.0
        %1005 = vmatpush1.msra.mxu0 0.0
        %1006 = vmatprep.subr.mxu0 0.0
        %1007 = vmatpush1.msra.mxu0 0.0
        %1008 = vmatprep.subr.mxu0 0.0
        %1009 = vmatpush1.msra.mxu0 0.0
        %1010 = vmatprep.subr.mxu0 0.0
        %1011 = vmatpush1.msra.mxu0 0.0
        %1012 = vmatprep.subr.mxu0 0.0
        %1013 = vmatpush1.msra.mxu0 0.0
        %1014 = vmatprep.subr.mxu0 0.0
        %1015 = vmatpush1.msra.mxu0 0.0
        %1016 = vmatprep.subr.mxu0 0.0
        %1017 = vmatpush1.msra.mxu0 0.0
        %1018 = vmatprep.subr.mxu0 0.0
        %1019 = vmatpush1.msra.mxu0 0.0
        %1020 = vmatprep.subr.mxu0 0.0
        %1021 = vmatpush1.msra.mxu0 0.0
        %1022 = vmatprep.subr.mxu0 0.0
        %1023 = vmatpush1.msra.mxu0 0.0
        %1024 = vmatprep.subr.mxu0 0.0
        %1025 = vmatpush1.msra.mxu0 0.0
        %1026 = vmatprep.subr.mxu0 0.0
        %1027 = vmatpush1.msra.mxu0 0.0
        %1028 = vmatprep.mubr.f32.mxu0 0.0
        %v1029 = vand.u32 %v955, 4294901760
        %v1030 = vsub.f32 %v955, %v1029
        %v1031 = vand.u32 %v1030, 4294901760
        %v1032 = vsub.f32 %v1030, %v1031
        %v1033 = vand.u32 %v1032, 4294901760
        %1034 = vmatmul.mubr.f32.gmra.mrb[0].mxu0 %v1033
        %v1035 = vpop.f32.mrb[0].mxu0
        %v1036 = vadd.f32 0.0, %v1035
        %v1037 = vpop.f32.mrb[0].mxu0
        %1038 = vmatprep.mubr.f32.mxu0 0.0
        %v1039 = vand.u32 %v958, 4294901760
        %v1040 = vsub.f32 %v958, %v1039
        %v1041 = vand.u32 %v1040, 4294901760
        %v1042 = vsub.f32 %v1040, %v1041
        %v1043 = vand.u32 %v1042, 4294901760
        %1044 = vmatmul.mubr.f32.gmra.mrb[0].mxu0 %v1043
        %v1045 = vpop.f32.mrb[0].mxu0
        %v1046 = vadd.f32 0.0, %v1045
        %v1047 = vpop.f32.mrb[0].mxu0
        %1048 = vdwg.mxu0
        %1049 = vmatprep.subr.mxu0 0.0
        %v1050 = vand.u32 %v950, 4294901760
        %v1051 = vsub.f32 %v950, %v1050
        %v1052 = vand.u32 %v1051, 4294901760
        %v1053 = vsub.f32 %v1051, %v1052
        %v1054 = vand.u32 %v1053, 4294901760
        %1055 = vmatpush1.msra.mxu0 %v1054
        %1056 = vmatprep.subr.mxu0 0.0
        %v1057 = vand.u32 %v951, 4294901760
        %v1058 = vsub.f32 %v951, %v1057
        %v1059 = vand.u32 %v1058, 4294901760
        %v1060 = vsub.f32 %v1058, %v1059
        %v1061 = vand.u32 %v1060, 4294901760
        %1062 = vmatpush1.msra.mxu0 %v1061
        %1063 = vmatprep.subr.mxu0 0.0
        %v1064 = vand.u32 %v952, 4294901760
        %v1065 = vsub.f32 %v952, %v1064
        %v1066 = vand.u32 %v1065, 4294901760
        %v1067 = vsub.f32 %v1065, %v1066
        %v1068 = vand.u32 %v1067, 4294901760
        %1069 = vmatpush1.msra.mxu0 %v1068
        %1070 = vmatprep.subr.mxu0 0.0
        %v1071 = vand.u32 %v953, 4294901760
        %v1072 = vsub.f32 %v953, %v1071
        %v1073 = vand.u32 %v1072, 4294901760
        %v1074 = vsub.f32 %v1072, %v1073
        %v1075 = vand.u32 %v1074, 4294901760
        %1076 = vmatpush1.msra.mxu0 %v1075
        %1077 = vmatprep.subr.mxu0 0.0
        %1078 = vmatpush1.msra.mxu0 0.0
        %1079 = vmatprep.subr.mxu0 0.0
        %1080 = vmatpush1.msra.mxu0 0.0
        %1081 = vmatprep.subr.mxu0 0.0
        %1082 = vmatpush1.msra.mxu0 0.0
        %1083 = vmatprep.subr.mxu0 0.0
        %1084 = vmatpush1.msra.mxu0 0.0
        %1085 = vmatprep.subr.mxu0 0.0
        %1086 = vmatpush1.msra.mxu0 0.0
        %1087 = vmatprep.subr.mxu0 0.0
        %1088 = vmatpush1.msra.mxu0 0.0
        %1089 = vmatprep.subr.mxu0 0.0
        %1090 = vmatpush1.msra.mxu0 0.0
        %1091 = vmatprep.subr.mxu0 0.0
        %1092 = vmatpush1.msra.mxu0 0.0
        %1093 = vmatprep.subr.mxu0 0.0
        %1094 = vmatpush1.msra.mxu0 0.0
        %1095 = vmatprep.subr.mxu0 0.0
        %1096 = vmatpush1.msra.mxu0 0.0
        %1097 = vmatprep.subr.mxu0 0.0
        %1098 = vmatpush1.msra.mxu0 0.0
        %1099 = vmatprep.subr.mxu0 0.0
        %1100 = vmatpush1.msra.mxu0 0.0
        %1101 = vmatprep.subr.mxu0 0.0
        %1102 = vmatpush1.msra.mxu0 0.0
        %1103 = vmatprep.subr.mxu0 0.0
        %1104 = vmatpush1.msra.mxu0 0.0
        %1105 = vmatprep.subr.mxu0 0.0
        %1106 = vmatpush1.msra.mxu0 0.0
        %1107 = vmatprep.subr.mxu0 0.0
        %1108 = vmatpush1.msra.mxu0 0.0
        %1109 = vmatprep.subr.mxu0 0.0
        %1110 = vmatpush1.msra.mxu0 0.0
        %1111 = vmatprep.subr.mxu0 0.0
        %1112 = vmatpush1.msra.mxu0 0.0
        %1113 = vmatprep.subr.mxu0 0.0
        %1114 = vmatpush1.msra.mxu0 0.0
        %1115 = vmatprep.subr.mxu0 0.0
        %1116 = vmatpush1.msra.mxu0 0.0
        %1117 = vmatprep.subr.mxu0 0.0
        %1118 = vmatpush1.msra.mxu0 0.0
        %1119 = vmatprep.subr.mxu0 0.0
        %1120 = vmatpush1.msra.mxu0 0.0
        %1121 = vmatprep.subr.mxu0 0.0
        %1122 = vmatpush1.msra.mxu0 0.0
        %1123 = vmatprep.subr.mxu0 0.0
        %1124 = vmatpush1.msra.mxu0 0.0
        %1125 = vmatprep.subr.mxu0 0.0
        %1126 = vmatpush1.msra.mxu0 0.0
        %1127 = vmatprep.subr.mxu0 0.0
        %1128 = vmatpush1.msra.mxu0 0.0
        %1129 = vmatprep.subr.mxu0 0.0
        %1130 = vmatpush1.msra.mxu0 0.0
        %1131 = vmatprep.subr.mxu0 0.0
        %1132 = vmatpush1.msra.mxu0 0.0
        %1133 = vmatprep.mubr.f32.mxu0 0.0
        %v1134 = vand.u32 %v955, 4294901760
        %1135 = vmatmul.mubr.f32.gmra.mrb[0].mxu0 %v1134
        %v1136 = vpop.f32.mrb[0].mxu0
        %v1137 = vadd.f32 %v1036, %v1136
        %v1138 = vpop.f32.mrb[0].mxu0
        %1139 = vmatprep.mubr.f32.mxu0 0.0
        %v1140 = vand.u32 %v958, 4294901760
        %1141 = vmatmul.mubr.f32.gmra.mrb[0].mxu0 %v1140
        %v1142 = vpop.f32.mrb[0].mxu0
        %v1143 = vadd.f32 %v1046, %v1142
        %v1144 = vpop.f32.mrb[0].mxu0
        %1145 = vdwg.mxu0
        %1146 = vmatprep.subr.mxu0 0.0
        %v1147 = vand.u32 %v950, 4294901760
        %v1148 = vsub.f32 %v950, %v1147
        %1149 = vmatpush1.msra.mxu0 %v1148
        %1150 = vmatprep.subr.mxu0 0.0
        %v1151 = vand.u32 %v951, 4294901760
        %v1152 = vsub.f32 %v951, %v1151
        %1153 = vmatpush1.msra.mxu0 %v1152
        %1154 = vmatprep.subr.mxu0 0.0
        %v1155 = vand.u32 %v952, 4294901760
        %v1156 = vsub.f32 %v952, %v1155
        %1157 = vmatpush1.msra.mxu0 %v1156
        %1158 = vmatprep.subr.mxu0 0.0
        %v1159 = vand.u32 %v953, 4294901760
        %v1160 = vsub.f32 %v953, %v1159
        %1161 = vmatpush1.msra.mxu0 %v1160
        %1162 = vmatprep.subr.mxu0 0.0
        %1163 = vmatpush1.msra.mxu0 0.0
        %1164 = vmatprep.subr.mxu0 0.0
        %1165 = vmatpush1.msra.mxu0 0.0
        %1166 = vmatprep.subr.mxu0 0.0
        %1167 = vmatpush1.msra.mxu0 0.0
        %1168 = vmatprep.subr.mxu0 0.0
        %1169 = vmatpush1.msra.mxu0 0.0
        %1170 = vmatprep.subr.mxu0 0.0
        %1171 = vmatpush1.msra.mxu0 0.0
        %1172 = vmatprep.subr.mxu0 0.0
        %1173 = vmatpush1.msra.mxu0 0.0
        %1174 = vmatprep.subr.mxu0 0.0
        %1175 = vmatpush1.msra.mxu0 0.0
        %1176 = vmatprep.subr.mxu0 0.0
        %1177 = vmatpush1.msra.mxu0 0.0
        %1178 = vmatprep.subr.mxu0 0.0
        %1179 = vmatpush1.msra.mxu0 0.0
        %1180 = vmatprep.subr.mxu0 0.0
        %1181 = vmatpush1.msra.mxu0 0.0
        %1182 = vmatprep.subr.mxu0 0.0
        %1183 = vmatpush1.msra.mxu0 0.0
        %1184 = vmatprep.subr.mxu0 0.0
        %1185 = vmatpush1.msra.mxu0 0.0
        %1186 = vmatprep.subr.mxu0 0.0
        %1187 = vmatpush1.msra.mxu0 0.0
        %1188 = vmatprep.subr.mxu0 0.0
        %1189 = vmatpush1.msra.mxu0 0.0
        %1190 = vmatprep.subr.mxu0 0.0
        %1191 = vmatpush1.msra.mxu0 0.0
        %1192 = vmatprep.subr.mxu0 0.0
        %1193 = vmatpush1.msra.mxu0 0.0
        %1194 = vmatprep.subr.mxu0 0.0
        %1195 = vmatpush1.msra.mxu0 0.0
        %1196 = vmatprep.subr.mxu0 0.0
        %1197 = vmatpush1.msra.mxu0 0.0
        %1198 = vmatprep.subr.mxu0 0.0
        %1199 = vmatpush1.msra.mxu0 0.0
        %1200 = vmatprep.subr.mxu0 0.0
        %1201 = vmatpush1.msra.mxu0 0.0
        %1202 = vmatprep.subr.mxu0 0.0
        %1203 = vmatpush1.msra.mxu0 0.0
        %1204 = vmatprep.subr.mxu0 0.0
        %1205 = vmatpush1.msra.mxu0 0.0
        %1206 = vmatprep.subr.mxu0 0.0
        %1207 = vmatpush1.msra.mxu0 0.0
        %1208 = vmatprep.subr.mxu0 0.0
        %1209 = vmatpush1.msra.mxu0 0.0
        %1210 = vmatprep.subr.mxu0 0.0
        %1211 = vmatpush1.msra.mxu0 0.0
        %1212 = vmatprep.subr.mxu0 0.0
        %1213 = vmatpush1.msra.mxu0 0.0
        %1214 = vmatprep.subr.mxu0 0.0
        %1215 = vmatpush1.msra.mxu0 0.0
        %1216 = vmatprep.subr.mxu0 0.0
        %1217 = vmatpush1.msra.mxu0 0.0
        %1218 = vmatprep.mubr.f32.mxu0 0.0
        %v1219 = vand.u32 %v955, 4294901760
        %v1220 = vsub.f32 %v955, %v1219
        %1221 = vmatmul.mubr.f32.gmra.mrb[0].mxu0 %v1220
        %v1222 = vpop.f32.mrb[0].mxu0
        %v1223 = vadd.f32 %v1137, %v1222
        %v1224 = vpop.f32.mrb[0].mxu0
        %1225 = vmatprep.mubr.f32.mxu0 0.0
        %v1226 = vand.u32 %v958, 4294901760
        %v1227 = vsub.f32 %v958, %v1226
        %1228 = vmatmul.mubr.f32.gmra.mrb[0].mxu0 %v1227
        %v1229 = vpop.f32.mrb[0].mxu0
        %v1230 = vadd.f32 %v1143, %v1229
        %v1231 = vpop.f32.mrb[0].mxu0
        %1232 = vdwg.mxu0
        %1233 = vmatprep.subr.mxu0 0.0
        %v1234 = vand.u32 %v950, 4294901760
        %1235 = vmatpush1.msra.mxu0 %v1234
        %1236 = vmatprep.subr.mxu0 0.0
        %v1237 = vand.u32 %v951, 4294901760
        %1238 = vmatpush1.msra.mxu0 %v1237
        %1239 = vmatprep.subr.mxu0 0.0
        %v1240 = vand.u32 %v952, 4294901760
        %1241 = vmatpush1.msra.mxu0 %v1240
        %1242 = vmatprep.subr.mxu0 0.0
        %v1243 = vand.u32 %v953, 4294901760
        %1244 = vmatpush1.msra.mxu0 %v1243
        %1245 = vmatprep.subr.mxu0 0.0
        %1246 = vmatpush1.msra.mxu0 0.0
        %1247 = vmatprep.subr.mxu0 0.0
        %1248 = vmatpush1.msra.mxu0 0.0
        %1249 = vmatprep.subr.mxu0 0.0
        %1250 = vmatpush1.msra.mxu0 0.0
        %1251 = vmatprep.subr.mxu0 0.0
        %1252 = vmatpush1.msra.mxu0 0.0
        %1253 = vmatprep.subr.mxu0 0.0
        %1254 = vmatpush1.msra.mxu0 0.0
        %1255 = vmatprep.subr.mxu0 0.0
        %1256 = vmatpush1.msra.mxu0 0.0
        %1257 = vmatprep.subr.mxu0 0.0
        %1258 = vmatpush1.msra.mxu0 0.0
        %1259 = vmatprep.subr.mxu0 0.0
        %1260 = vmatpush1.msra.mxu0 0.0
        %1261 = vmatprep.subr.mxu0 0.0
        %1262 = vmatpush1.msra.mxu0 0.0
        %1263 = vmatprep.subr.mxu0 0.0
        %1264 = vmatpush1.msra.mxu0 0.0
        %1265 = vmatprep.subr.mxu0 0.0
        %1266 = vmatpush1.msra.mxu0 0.0
        %1267 = vmatprep.subr.mxu0 0.0
        %1268 = vmatpush1.msra.mxu0 0.0
        %1269 = vmatprep.subr.mxu0 0.0
        %1270 = vmatpush1.msra.mxu0 0.0
        %1271 = vmatprep.subr.mxu0 0.0
        %1272 = vmatpush1.msra.mxu0 0.0
        %1273 = vmatprep.subr.mxu0 0.0
        %1274 = vmatpush1.msra.mxu0 0.0
        %1275 = vmatprep.subr.mxu0 0.0
        %1276 = vmatpush1.msra.mxu0 0.0
        %1277 = vmatprep.subr.mxu0 0.0
        %1278 = vmatpush1.msra.mxu0 0.0
        %1279 = vmatprep.subr.mxu0 0.0
        %1280 = vmatpush1.msra.mxu0 0.0
        %1281 = vmatprep.subr.mxu0 0.0
        %1282 = vmatpush1.msra.mxu0 0.0
        %1283 = vmatprep.subr.mxu0 0.0
        %1284 = vmatpush1.msra.mxu0 0.0
        %1285 = vmatprep.subr.mxu0 0.0
        %1286 = vmatpush1.msra.mxu0 0.0
        %1287 = vmatprep.subr.mxu0 0.0
        %1288 = vmatpush1.msra.mxu0 0.0
        %1289 = vmatprep.subr.mxu0 0.0
        %1290 = vmatpush1.msra.mxu0 0.0
        %1291 = vmatprep.subr.mxu0 0.0
        %1292 = vmatpush1.msra.mxu0 0.0
        %1293 = vmatprep.subr.mxu0 0.0
        %1294 = vmatpush1.msra.mxu0 0.0
        %1295 = vmatprep.subr.mxu0 0.0
        %1296 = vmatpush1.msra.mxu0 0.0
        %1297 = vmatprep.subr.mxu0 0.0
        %1298 = vmatpush1.msra.mxu0 0.0
        %1299 = vmatprep.subr.mxu0 0.0
        %1300 = vmatpush1.msra.mxu0 0.0
        %1301 = vmatprep.mubr.f32.mxu0 0.0
        %v1302 = vand.u32 %v955, 4294901760
        %v1303 = vsub.f32 %v955, %v1302
        %v1304 = vand.u32 %v1303, 4294901760
        %1305 = vmatmul.mubr.f32.gmra.mrb[0].mxu0 %v1304
        %v1306 = vpop.f32.mrb[0].mxu0
        %v1307 = vadd.f32 %v1223, %v1306
        %v1308 = vpop.f32.mrb[0].mxu0
        %1309 = vmatprep.mubr.f32.mxu0 0.0
        %v1310 = vand.u32 %v958, 4294901760
        %v1311 = vsub.f32 %v958, %v1310
        %v1312 = vand.u32 %v1311, 4294901760
        %1313 = vmatmul.mubr.f32.gmra.mrb[0].mxu0 %v1312
        %v1314 = vpop.f32.mrb[0].mxu0
        %v1315 = vadd.f32 %v1230, %v1314
        %v1316 = vpop.f32.mrb[0].mxu0
        %1317 = vdwg.mxu0
        %1318 = vmatprep.subr.mxu0 0.0
        %v1319 = vand.u32 %v950, 4294901760
        %v1320 = vsub.f32 %v950, %v1319
        %v1321 = vand.u32 %v1320, 4294901760
        %1322 = vmatpush1.msra.mxu0 %v1321
        %1323 = vmatprep.subr.mxu0 0.0
        %v1324 = vand.u32 %v951, 4294901760
        %v1325 = vsub.f32 %v951, %v1324
        %v1326 = vand.u32 %v1325, 4294901760
        %1327 = vmatpush1.msra.mxu0 %v1326
        %1328 = vmatprep.subr.mxu0 0.0
        %v1329 = vand.u32 %v952, 4294901760
        %v1330 = vsub.f32 %v952, %v1329
        %v1331 = vand.u32 %v1330, 4294901760
        %1332 = vmatpush1.msra.mxu0 %v1331
        %1333 = vmatprep.subr.mxu0 0.0
        %v1334 = vand.u32 %v953, 4294901760
        %v1335 = vsub.f32 %v953, %v1334
        %v1336 = vand.u32 %v1335, 4294901760
        %1337 = vmatpush1.msra.mxu0 %v1336
        %1338 = vmatprep.subr.mxu0 0.0
        %1339 = vmatpush1.msra.mxu0 0.0
        %1340 = vmatprep.subr.mxu0 0.0
        %1341 = vmatpush1.msra.mxu0 0.0
        %1342 = vmatprep.subr.mxu0 0.0
        %1343 = vmatpush1.msra.mxu0 0.0
        %1344 = vmatprep.subr.mxu0 0.0
        %1345 = vmatpush1.msra.mxu0 0.0
        %1346 = vmatprep.subr.mxu0 0.0
        %1347 = vmatpush1.msra.mxu0 0.0
        %1348 = vmatprep.subr.mxu0 0.0
        %1349 = vmatpush1.msra.mxu0 0.0
        %1350 = vmatprep.subr.mxu0 0.0
        %1351 = vmatpush1.msra.mxu0 0.0
        %1352 = vmatprep.subr.mxu0 0.0
        %1353 = vmatpush1.msra.mxu0 0.0
        %1354 = vmatprep.subr.mxu0 0.0
        %1355 = vmatpush1.msra.mxu0 0.0
        %1356 = vmatprep.subr.mxu0 0.0
        %1357 = vmatpush1.msra.mxu0 0.0
        %1358 = vmatprep.subr.mxu0 0.0
        %1359 = vmatpush1.msra.mxu0 0.0
        %1360 = vmatprep.subr.mxu0 0.0
        %1361 = vmatpush1.msra.mxu0 0.0
        %1362 = vmatprep.subr.mxu0 0.0
        %1363 = vmatpush1.msra.mxu0 0.0
        %1364 = vmatprep.subr.mxu0 0.0
        %1365 = vmatpush1.msra.mxu0 0.0
        %1366 = vmatprep.subr.mxu0 0.0
        %1367 = vmatpush1.msra.mxu0 0.0
        %1368 = vmatprep.subr.mxu0 0.0
        %1369 = vmatpush1.msra.mxu0 0.0
        %1370 = vmatprep.subr.mxu0 0.0
        %1371 = vmatpush1.msra.mxu0 0.0
        %1372 = vmatprep.subr.mxu0 0.0
        %1373 = vmatpush1.msra.mxu0 0.0
        %1374 = vmatprep.subr.mxu0 0.0
        %1375 = vmatpush1.msra.mxu0 0.0
        %1376 = vmatprep.subr.mxu0 0.0
        %1377 = vmatpush1.msra.mxu0 0.0
        %1378 = vmatprep.subr.mxu0 0.0
        %1379 = vmatpush1.msra.mxu0 0.0
        %1380 = vmatprep.subr.mxu0 0.0
        %1381 = vmatpush1.msra.mxu0 0.0
        %1382 = vmatprep.subr.mxu0 0.0
        %1383 = vmatpush1.msra.mxu0 0.0
        %1384 = vmatprep.subr.mxu0 0.0
        %1385 = vmatpush1.msra.mxu0 0.0
        %1386 = vmatprep.subr.mxu0 0.0
        %1387 = vmatpush1.msra.mxu0 0.0
        %1388 = vmatprep.subr.mxu0 0.0
        %1389 = vmatpush1.msra.mxu0 0.0
        %1390 = vmatprep.subr.mxu0 0.0
        %1391 = vmatpush1.msra.mxu0 0.0
        %1392 = vmatprep.subr.mxu0 0.0
        %1393 = vmatpush1.msra.mxu0 0.0
        %1394 = vmatprep.mubr.f32.mxu0 0.0
        %v1395 = vand.u32 %v955, 4294901760
        %1396 = vmatmul.mubr.f32.gmra.mrb[0].mxu0 %v1395
        %v1397 = vpop.f32.mrb[0].mxu0
        %v1398 = vadd.f32 %v1307, %v1397
        %v1399 = vpop.f32.mrb[0].mxu0
        %1400 = vmatprep.mubr.f32.mxu0 0.0
        %v1401 = vand.u32 %v958, 4294901760
        %1402 = vmatmul.mubr.f32.gmra.mrb[0].mxu0 %v1401
        %v1403 = vpop.f32.mrb[0].mxu0
        %v1404 = vadd.f32 %v1315, %v1403
        %v1405 = vpop.f32.mrb[0].mxu0
        %1406 = vdwg.mxu0
        %1407 = vmatprep.subr.mxu0 0.0
        %v1408 = vand.u32 %v950, 4294901760
        %1409 = vmatpush1.msra.mxu0 %v1408
        %1410 = vmatprep.subr.mxu0 0.0
        %v1411 = vand.u32 %v951, 4294901760
        %1412 = vmatpush1.msra.mxu0 %v1411
        %1413 = vmatprep.subr.mxu0 0.0
        %v1414 = vand.u32 %v952, 4294901760
        %1415 = vmatpush1.msra.mxu0 %v1414
        %1416 = vmatprep.subr.mxu0 0.0
        %v1417 = vand.u32 %v953, 4294901760
        %1418 = vmatpush1.msra.mxu0 %v1417
        %1419 = vmatprep.subr.mxu0 0.0
        %1420 = vmatpush1.msra.mxu0 0.0
        %1421 = vmatprep.subr.mxu0 0.0
        %1422 = vmatpush1.msra.mxu0 0.0
        %1423 = vmatprep.subr.mxu0 0.0
        %1424 = vmatpush1.msra.mxu0 0.0
        %1425 = vmatprep.subr.mxu0 0.0
        %1426 = vmatpush1.msra.mxu0 0.0
        %1427 = vmatprep.subr.mxu0 0.0
        %1428 = vmatpush1.msra.mxu0 0.0
        %1429 = vmatprep.subr.mxu0 0.0
        %1430 = vmatpush1.msra.mxu0 0.0
        %1431 = vmatprep.subr.mxu0 0.0
        %1432 = vmatpush1.msra.mxu0 0.0
        %1433 = vmatprep.subr.mxu0 0.0
        %1434 = vmatpush1.msra.mxu0 0.0
        %1435 = vmatprep.subr.mxu0 0.0
        %1436 = vmatpush1.msra.mxu0 0.0
        %1437 = vmatprep.subr.mxu0 0.0
        %1438 = vmatpush1.msra.mxu0 0.0
        %1439 = vmatprep.subr.mxu0 0.0
        %1440 = vmatpush1.msra.mxu0 0.0
        %1441 = vmatprep.subr.mxu0 0.0
        %1442 = vmatpush1.msra.mxu0 0.0
        %1443 = vmatprep.subr.mxu0 0.0
        %1444 = vmatpush1.msra.mxu0 0.0
        %1445 = vmatprep.subr.mxu0 0.0
        %1446 = vmatpush1.msra.mxu0 0.0
        %1447 = vmatprep.subr.mxu0 0.0
        %1448 = vmatpush1.msra.mxu0 0.0
        %1449 = vmatprep.subr.mxu0 0.0
        %1450 = vmatpush1.msra.mxu0 0.0
        %1451 = vmatprep.subr.mxu0 0.0
        %1452 = vmatpush1.msra.mxu0 0.0
        %1453 = vmatprep.subr.mxu0 0.0
        %1454 = vmatpush1.msra.mxu0 0.0
        %1455 = vmatprep.subr.mxu0 0.0
        %1456 = vmatpush1.msra.mxu0 0.0
        %1457 = vmatprep.subr.mxu0 0.0
        %1458 = vmatpush1.msra.mxu0 0.0
        %1459 = vmatprep.subr.mxu0 0.0
        %1460 = vmatpush1.msra.mxu0 0.0
        %1461 = vmatprep.subr.mxu0 0.0
        %1462 = vmatpush1.msra.mxu0 0.0
        %1463 = vmatprep.subr.mxu0 0.0
        %1464 = vmatpush1.msra.mxu0 0.0
        %1465 = vmatprep.subr.mxu0 0.0
        %1466 = vmatpush1.msra.mxu0 0.0
        %1467 = vmatprep.subr.mxu0 0.0
        %1468 = vmatpush1.msra.mxu0 0.0
        %1469 = vmatprep.subr.mxu0 0.0
        %1470 = vmatpush1.msra.mxu0 0.0
        %1471 = vmatprep.subr.mxu0 0.0
        %1472 = vmatpush1.msra.mxu0 0.0
        %1473 = vmatprep.subr.mxu0 0.0
        %1474 = vmatpush1.msra.mxu0 0.0
        %1475 = vmatprep.mubr.f32.mxu0 0.0
        %v1476 = vand.u32 %v955, 4294901760
        %1477 = vmatmul.mubr.f32.gmra.mrb[0].mxu0 %v1476
        %v1478 = vpop.f32.mrb[0].mxu0
        %v1479 = vadd.f32 %v1398, %v1478
        %v1480 = vpop.f32.mrb[0].mxu0
        %1481 = vmatprep.mubr.f32.mxu0 0.0
        %v1482 = vand.u32 %v958, 4294901760
        %1483 = vmatmul.mubr.f32.gmra.mrb[0].mxu0 %v1482
        %v1484 = vpop.f32.mrb[0].mxu0
        %v1485 = vadd.f32 %v1404, %v1484
        %v1486 = vpop.f32.mrb[0].mxu0
        %1487 = vdwg.mxu0
        %1490 = vrot.lane.b32.xlu0 %v1479, 120
        %v1491 = vpop.permute.xlu0 %1490
        %1492 = vrot.lane.b32.xlu0 %v1485, 120
        %v1493 = vpop.permute.xlu0 %1492
        %1494 = vrot.lane.b32.xlu0 %v1479, 112
        %v1495 = vpop.permute.xlu0 %1494
        %1496 = vrot.lane.b32.xlu0 %v1485, 112
        %v1497 = vpop.permute.xlu0 %1496
        %1498 = vrot.lane.b32.xlu0 %v1479, 104
        %v1499 = vpop.permute.xlu0 %1498
        %1500 = vrot.lane.b32.xlu0 %v1485, 104
        %v1501 = vpop.permute.xlu0 %1500
        %1502 = vrot.lane.b32.xlu0 %v1479, 96
        %v1503 = vpop.permute.xlu0 %1502
        %1504 = vrot.lane.b32.xlu0 %v1485, 96
        %v1505 = vpop.permute.xlu0 %1504
        %vm1506 = vcmask 64512
        %v1507 = vsel %vm1506, %v1479, 0
        %v1509 = vsel %vm1506, %v1485, 0
        %v1511 = vsel %vm1506, %v1503, 0
        %v1513 = vsel %vm1506, %v1505, 0
        %1515 = vmatprep.subr.mxu0 0.0
        %v1516 = vand.u32 %v1511, 4294901760
        %1517 = vmatpush1.xpose.msra.mxu0 %v1516
        %1518 = vmatprep.subr.mxu0 0.0
        %v1519 = vand.u32 %v1513, 4294901760
        %1520 = vmatpush1.xpose.msra.mxu0 %v1519
        %1521 = vmatprep.subr.mxu0 0.0
        %1522 = vmatpush1.xpose.msra.mxu0 0.0
        %1523 = vmatprep.subr.mxu0 0.0
        %1524 = vmatpush1.xpose.msra.mxu0 0.0
        %1525 = vmatprep.subr.mxu0 0.0
        %1526 = vmatpush1.xpose.msra.mxu0 0.0
        %1527 = vmatprep.subr.mxu0 0.0
        %1528 = vmatpush1.xpose.msra.mxu0 0.0
        %1529 = vmatprep.subr.mxu0 0.0
        %1530 = vmatpush1.xpose.msra.mxu0 0.0
        %1531 = vmatprep.subr.mxu0 0.0
        %1532 = vmatpush1.xpose.msra.mxu0 0.0
        %1533 = vmatprep.subr.mxu0 0.0
        %1534 = vmatpush1.xpose.msra.mxu0 0.0
        %1535 = vmatprep.subr.mxu0 0.0
        %1536 = vmatpush1.xpose.msra.mxu0 0.0
        %1537 = vmatprep.subr.mxu0 0.0
        %1538 = vmatpush1.xpose.msra.mxu0 0.0
        %1539 = vmatprep.subr.mxu0 0.0
        %1540 = vmatpush1.xpose.msra.mxu0 0.0
        %1541 = vmatprep.subr.mxu0 0.0
        %1542 = vmatpush1.xpose.msra.mxu0 0.0
        %1543 = vmatprep.subr.mxu0 0.0
        %1544 = vmatpush1.xpose.msra.mxu0 0.0
        %1545 = vmatprep.subr.mxu0 0.0
        %1546 = vmatpush1.xpose.msra.mxu0 0.0
        %1547 = vmatprep.subr.mxu0 0.0
        %1548 = vmatpush1.xpose.msra.mxu0 0.0
        %1549 = vmatprep.subr.mxu0 0.0
        %1550 = vmatpush1.xpose.msra.mxu0 0.0
        %1551 = vmatprep.subr.mxu0 0.0
        %1552 = vmatpush1.xpose.msra.mxu0 0.0
        %1553 = vmatprep.subr.mxu0 0.0
        %1554 = vmatpush1.xpose.msra.mxu0 0.0
        %1555 = vmatprep.subr.mxu0 0.0
        %1556 = vmatpush1.xpose.msra.mxu0 0.0
        %1557 = vmatprep.subr.mxu0 0.0
        %1558 = vmatpush1.xpose.msra.mxu0 0.0
        %1559 = vmatprep.subr.mxu0 0.0
        %1560 = vmatpush1.xpose.msra.mxu0 0.0
        %1561 = vmatprep.subr.mxu0 0.0
        %1562 = vmatpush1.xpose.msra.mxu0 0.0
        %1563 = vmatprep.subr.mxu0 0.0
        %1564 = vmatpush1.xpose.msra.mxu0 0.0
        %1565 = vmatprep.subr.mxu0 0.0
        %1566 = vmatpush1.xpose.msra.mxu0 0.0
        %1567 = vmatprep.subr.mxu0 0.0
        %1568 = vmatpush1.xpose.msra.mxu0 0.0
        %1569 = vmatprep.subr.mxu0 0.0
        %1570 = vmatpush1.xpose.msra.mxu0 0.0
        %1571 = vmatprep.subr.mxu0 0.0
        %1572 = vmatpush1.xpose.msra.mxu0 0.0
        %1573 = vmatprep.subr.mxu0 0.0
        %1574 = vmatpush1.xpose.msra.mxu0 0.0
        %1575 = vmatprep.subr.mxu0 0.0
        %1576 = vmatpush1.xpose.msra.mxu0 0.0
        %1577 = vmatprep.subr.mxu0 0.0
        %1578 = vmatpush1.xpose.msra.mxu0 0.0
        %1579 = vmatprep.subr.mxu0 0.0
        %1580 = vmatpush1.xpose.msra.mxu0 0.0
        %1581 = vmatprep.mubr.f32.mxu0 0.0
        %v1582 = vand.u32 %v1507, 4294901760
        %v1583 = vsub.f32 %v1507, %v1582
        %v1584 = vand.u32 %v1583, 4294901760
        %v1585 = vsub.f32 %v1583, %v1584
        %v1586 = vand.u32 %v1585, 4294901760
        %1587 = vmatmul.mubr.f32.gmra.mrb[0].mxu0 %v1586
        %v1588 = vpop.f32.mrb[0].mxu0
        %v1589 = vadd.f32 0.0, %v1588
        %v1590 = vpop.f32.mrb[0].mxu0
        %1591 = vmatprep.mubr.f32.mxu0 0.0
        %v1592 = vand.u32 %v1509, 4294901760
        %v1593 = vsub.f32 %v1509, %v1592
        %v1594 = vand.u32 %v1593, 4294901760
        %v1595 = vsub.f32 %v1593, %v1594
        %v1596 = vand.u32 %v1595, 4294901760
        %1597 = vmatmul.mubr.f32.gmra.mrb[0].mxu0 %v1596
        %v1598 = vpop.f32.mrb[0].mxu0
        %v1599 = vadd.f32 0.0, %v1598
        %v1600 = vpop.f32.mrb[0].mxu0
        %1601 = vdwg.mxu0
        %1602 = vmatprep.subr.mxu0 0.0
        %v1603 = vand.u32 %v1511, 4294901760
        %v1604 = vsub.f32 %v1511, %v1603
        %v1605 = vand.u32 %v1604, 4294901760
        %v1606 = vsub.f32 %v1604, %v1605
        %v1607 = vand.u32 %v1606, 4294901760
        %1608 = vmatpush1.xpose.msra.mxu0 %v1607
        %1609 = vmatprep.subr.mxu0 0.0
        %v1610 = vand.u32 %v1513, 4294901760
        %v1611 = vsub.f32 %v1513, %v1610
        %v1612 = vand.u32 %v1611, 4294901760
        %v1613 = vsub.f32 %v1611, %v1612
        %v1614 = vand.u32 %v1613, 4294901760
        %1615 = vmatpush1.xpose.msra.mxu0 %v1614
        %1616 = vmatprep.subr.mxu0 0.0
        %1617 = vmatpush1.xpose.msra.mxu0 0.0
        %1618 = vmatprep.subr.mxu0 0.0
        %1619 = vmatpush1.xpose.msra.mxu0 0.0
        %1620 = vmatprep.subr.mxu0 0.0
        %1621 = vmatpush1.xpose.msra.mxu0 0.0
        %1622 = vmatprep.subr.mxu0 0.0
        %1623 = vmatpush1.xpose.msra.mxu0 0.0
        %1624 = vmatprep.subr.mxu0 0.0
        %1625 = vmatpush1.xpose.msra.mxu0 0.0
        %1626 = vmatprep.subr.mxu0 0.0
        %1627 = vmatpush1.xpose.msra.mxu0 0.0
        %1628 = vmatprep.subr.mxu0 0.0
        %1629 = vmatpush1.xpose.msra.mxu0 0.0
        %1630 = vmatprep.subr.mxu0 0.0
        %1631 = vmatpush1.xpose.msra.mxu0 0.0
        %1632 = vmatprep.subr.mxu0 0.0
        %1633 = vmatpush1.xpose.msra.mxu0 0.0
        %1634 = vmatprep.subr.mxu0 0.0
        %1635 = vmatpush1.xpose.msra.mxu0 0.0
        %1636 = vmatprep.subr.mxu0 0.0
        %1637 = vmatpush1.xpose.msra.mxu0 0.0
        %1638 = vmatprep.subr.mxu0 0.0
        %1639 = vmatpush1.xpose.msra.mxu0 0.0
        %1640 = vmatprep.subr.mxu0 0.0
        %1641 = vmatpush1.xpose.msra.mxu0 0.0
        %1642 = vmatprep.subr.mxu0 0.0
        %1643 = vmatpush1.xpose.msra.mxu0 0.0
        %1644 = vmatprep.subr.mxu0 0.0
        %1645 = vmatpush1.xpose.msra.mxu0 0.0
        %1646 = vmatprep.subr.mxu0 0.0
        %1647 = vmatpush1.xpose.msra.mxu0 0.0
        %1648 = vmatprep.subr.mxu0 0.0
        %1649 = vmatpush1.xpose.msra.mxu0 0.0
        %1650 = vmatprep.subr.mxu0 0.0
        %1651 = vmatpush1.xpose.msra.mxu0 0.0
        %1652 = vmatprep.subr.mxu0 0.0
        %1653 = vmatpush1.xpose.msra.mxu0 0.0
        %1654 = vmatprep.subr.mxu0 0.0
        %1655 = vmatpush1.xpose.msra.mxu0 0.0
        %1656 = vmatprep.subr.mxu0 0.0
        %1657 = vmatpush1.xpose.msra.mxu0 0.0
        %1658 = vmatprep.subr.mxu0 0.0
        %1659 = vmatpush1.xpose.msra.mxu0 0.0
        %1660 = vmatprep.subr.mxu0 0.0
        %1661 = vmatpush1.xpose.msra.mxu0 0.0
        %1662 = vmatprep.subr.mxu0 0.0
        %1663 = vmatpush1.xpose.msra.mxu0 0.0
        %1664 = vmatprep.subr.mxu0 0.0
        %1665 = vmatpush1.xpose.msra.mxu0 0.0
        %1666 = vmatprep.subr.mxu0 0.0
        %1667 = vmatpush1.xpose.msra.mxu0 0.0
        %1668 = vmatprep.subr.mxu0 0.0
        %1669 = vmatpush1.xpose.msra.mxu0 0.0
        %1670 = vmatprep.subr.mxu0 0.0
        %1671 = vmatpush1.xpose.msra.mxu0 0.0
        %1672 = vmatprep.subr.mxu0 0.0
        %1673 = vmatpush1.xpose.msra.mxu0 0.0
        %1674 = vmatprep.subr.mxu0 0.0
        %1675 = vmatpush1.xpose.msra.mxu0 0.0
        %1676 = vmatprep.mubr.f32.mxu0 0.0
        %v1677 = vand.u32 %v1507, 4294901760
        %1678 = vmatmul.mubr.f32.gmra.mrb[0].mxu0 %v1677
        %v1679 = vpop.f32.mrb[0].mxu0
        %v1680 = vadd.f32 %v1589, %v1679
        %v1681 = vpop.f32.mrb[0].mxu0
        %1682 = vmatprep.mubr.f32.mxu0 0.0
        %v1683 = vand.u32 %v1509, 4294901760
        %1684 = vmatmul.mubr.f32.gmra.mrb[0].mxu0 %v1683
        %v1685 = vpop.f32.mrb[0].mxu0
        %v1686 = vadd.f32 %v1599, %v1685
        %v1687 = vpop.f32.mrb[0].mxu0
        %1688 = vdwg.mxu0
        %1689 = vmatprep.subr.mxu0 0.0
        %v1690 = vand.u32 %v1511, 4294901760
        %v1691 = vsub.f32 %v1511, %v1690
        %1692 = vmatpush1.xpose.msra.mxu0 %v1691
        %1693 = vmatprep.subr.mxu0 0.0
        %v1694 = vand.u32 %v1513, 4294901760
        %v1695 = vsub.f32 %v1513, %v1694
        %1696 = vmatpush1.xpose.msra.mxu0 %v1695
        %1697 = vmatprep.subr.mxu0 0.0
        %1698 = vmatpush1.xpose.msra.mxu0 0.0
        %1699 = vmatprep.subr.mxu0 0.0
        %1700 = vmatpush1.xpose.msra.mxu0 0.0
        %1701 = vmatprep.subr.mxu0 0.0
        %1702 = vmatpush1.xpose.msra.mxu0 0.0
        %1703 = vmatprep.subr.mxu0 0.0
        %1704 = vmatpush1.xpose.msra.mxu0 0.0
        %1705 = vmatprep.subr.mxu0 0.0
        %1706 = vmatpush1.xpose.msra.mxu0 0.0
        %1707 = vmatprep.subr.mxu0 0.0
        %1708 = vmatpush1.xpose.msra.mxu0 0.0
        %1709 = vmatprep.subr.mxu0 0.0
        %1710 = vmatpush1.xpose.msra.mxu0 0.0
        %1711 = vmatprep.subr.mxu0 0.0
        %1712 = vmatpush1.xpose.msra.mxu0 0.0
        %1713 = vmatprep.subr.mxu0 0.0
        %1714 = vmatpush1.xpose.msra.mxu0 0.0
        %1715 = vmatprep.subr.mxu0 0.0
        %1716 = vmatpush1.xpose.msra.mxu0 0.0
        %1717 = vmatprep.subr.mxu0 0.0
        %1718 = vmatpush1.xpose.msra.mxu0 0.0
        %1719 = vmatprep.subr.mxu0 0.0
        %1720 = vmatpush1.xpose.msra.mxu0 0.0
        %1721 = vmatprep.subr.mxu0 0.0
        %1722 = vmatpush1.xpose.msra.mxu0 0.0
        %1723 = vmatprep.subr.mxu0 0.0
        %1724 = vmatpush1.xpose.msra.mxu0 0.0
        %1725 = vmatprep.subr.mxu0 0.0
        %1726 = vmatpush1.xpose.msra.mxu0 0.0
        %1727 = vmatprep.subr.mxu0 0.0
        %1728 = vmatpush1.xpose.msra.mxu0 0.0
        %1729 = vmatprep.subr.mxu0 0.0
        %1730 = vmatpush1.xpose.msra.mxu0 0.0
        %1731 = vmatprep.subr.mxu0 0.0
        %1732 = vmatpush1.xpose.msra.mxu0 0.0
        %1733 = vmatprep.subr.mxu0 0.0
        %1734 = vmatpush1.xpose.msra.mxu0 0.0
        %1735 = vmatprep.subr.mxu0 0.0
        %1736 = vmatpush1.xpose.msra.mxu0 0.0
        %1737 = vmatprep.subr.mxu0 0.0
        %1738 = vmatpush1.xpose.msra.mxu0 0.0
        %1739 = vmatprep.subr.mxu0 0.0
        %1740 = vmatpush1.xpose.msra.mxu0 0.0
        %1741 = vmatprep.subr.mxu0 0.0
        %1742 = vmatpush1.xpose.msra.mxu0 0.0
        %1743 = vmatprep.subr.mxu0 0.0
        %1744 = vmatpush1.xpose.msra.mxu0 0.0
        %1745 = vmatprep.subr.mxu0 0.0
        %1746 = vmatpush1.xpose.msra.mxu0 0.0
        %1747 = vmatprep.subr.mxu0 0.0
        %1748 = vmatpush1.xpose.msra.mxu0 0.0
        %1749 = vmatprep.subr.mxu0 0.0
        %1750 = vmatpush1.xpose.msra.mxu0 0.0
        %1751 = vmatprep.subr.mxu0 0.0
        %1752 = vmatpush1.xpose.msra.mxu0 0.0
        %1753 = vmatprep.subr.mxu0 0.0
        %1754 = vmatpush1.xpose.msra.mxu0 0.0
        %1755 = vmatprep.subr.mxu0 0.0
        %1756 = vmatpush1.xpose.msra.mxu0 0.0
        %1757 = vmatprep.mubr.f32.mxu0 0.0
        %v1758 = vand.u32 %v1507, 4294901760
        %v1759 = vsub.f32 %v1507, %v1758
        %1760 = vmatmul.mubr.f32.gmra.mrb[0].mxu0 %v1759
        %v1761 = vpop.f32.mrb[0].mxu0
        %v1762 = vadd.f32 %v1680, %v1761
        %v1763 = vpop.f32.mrb[0].mxu0
        %1764 = vmatprep.mubr.f32.mxu0 0.0
        %v1765 = vand.u32 %v1509, 4294901760
        %v1766 = vsub.f32 %v1509, %v1765
        %1767 = vmatmul.mubr.f32.gmra.mrb[0].mxu0 %v1766
        %v1768 = vpop.f32.mrb[0].mxu0
        %v1769 = vadd.f32 %v1686, %v1768
        %v1770 = vpop.f32.mrb[0].mxu0
        %1771 = vdwg.mxu0
        %1772 = vmatprep.subr.mxu0 0.0
        %v1773 = vand.u32 %v1511, 4294901760
        %1774 = vmatpush1.xpose.msra.mxu0 %v1773
        %1775 = vmatprep.subr.mxu0 0.0
        %v1776 = vand.u32 %v1513, 4294901760
        %1777 = vmatpush1.xpose.msra.mxu0 %v1776
        %1778 = vmatprep.subr.mxu0 0.0
        %1779 = vmatpush1.xpose.msra.mxu0 0.0
        %1780 = vmatprep.subr.mxu0 0.0
        %1781 = vmatpush1.xpose.msra.mxu0 0.0
        %1782 = vmatprep.subr.mxu0 0.0
        %1783 = vmatpush1.xpose.msra.mxu0 0.0
        %1784 = vmatprep.subr.mxu0 0.0
        %1785 = vmatpush1.xpose.msra.mxu0 0.0
        %1786 = vmatprep.subr.mxu0 0.0
        %1787 = vmatpush1.xpose.msra.mxu0 0.0
        %1788 = vmatprep.subr.mxu0 0.0
        %1789 = vmatpush1.xpose.msra.mxu0 0.0
        %1790 = vmatprep.subr.mxu0 0.0
        %1791 = vmatpush1.xpose.msra.mxu0 0.0
        %1792 = vmatprep.subr.mxu0 0.0
        %1793 = vmatpush1.xpose.msra.mxu0 0.0
        %1794 = vmatprep.subr.mxu0 0.0
        %1795 = vmatpush1.xpose.msra.mxu0 0.0
        %1796 = vmatprep.subr.mxu0 0.0
        %1797 = vmatpush1.xpose.msra.mxu0 0.0
        %1798 = vmatprep.subr.mxu0 0.0
        %1799 = vmatpush1.xpose.msra.mxu0 0.0
        %1800 = vmatprep.subr.mxu0 0.0
        %1801 = vmatpush1.xpose.msra.mxu0 0.0
        %1802 = vmatprep.subr.mxu0 0.0
        %1803 = vmatpush1.xpose.msra.mxu0 0.0
        %1804 = vmatprep.subr.mxu0 0.0
        %1805 = vmatpush1.xpose.msra.mxu0 0.0
        %1806 = vmatprep.subr.mxu0 0.0
        %1807 = vmatpush1.xpose.msra.mxu0 0.0
        %1808 = vmatprep.subr.mxu0 0.0
        %1809 = vmatpush1.xpose.msra.mxu0 0.0
        %1810 = vmatprep.subr.mxu0 0.0
        %1811 = vmatpush1.xpose.msra.mxu0 0.0
        %1812 = vmatprep.subr.mxu0 0.0
        %1813 = vmatpush1.xpose.msra.mxu0 0.0
        %1814 = vmatprep.subr.mxu0 0.0
        %1815 = vmatpush1.xpose.msra.mxu0 0.0
        %1816 = vmatprep.subr.mxu0 0.0
        %1817 = vmatpush1.xpose.msra.mxu0 0.0
        %1818 = vmatprep.subr.mxu0 0.0
        %1819 = vmatpush1.xpose.msra.mxu0 0.0
        %1820 = vmatprep.subr.mxu0 0.0
        %1821 = vmatpush1.xpose.msra.mxu0 0.0
        %1822 = vmatprep.subr.mxu0 0.0
        %1823 = vmatpush1.xpose.msra.mxu0 0.0
        %1824 = vmatprep.subr.mxu0 0.0
        %1825 = vmatpush1.xpose.msra.mxu0 0.0
        %1826 = vmatprep.subr.mxu0 0.0
        %1827 = vmatpush1.xpose.msra.mxu0 0.0
        %1828 = vmatprep.subr.mxu0 0.0
        %1829 = vmatpush1.xpose.msra.mxu0 0.0
        %1830 = vmatprep.subr.mxu0 0.0
        %1831 = vmatpush1.xpose.msra.mxu0 0.0
        %1832 = vmatprep.subr.mxu0 0.0
        %1833 = vmatpush1.xpose.msra.mxu0 0.0
        %1834 = vmatprep.subr.mxu0 0.0
        %1835 = vmatpush1.xpose.msra.mxu0 0.0
        %1836 = vmatprep.subr.mxu0 0.0
        %1837 = vmatpush1.xpose.msra.mxu0 0.0
        %1838 = vmatprep.mubr.f32.mxu0 0.0
        %v1839 = vand.u32 %v1507, 4294901760
        %v1840 = vsub.f32 %v1507, %v1839
        %v1841 = vand.u32 %v1840, 4294901760
        %1842 = vmatmul.mubr.f32.gmra.mrb[0].mxu0 %v1841
        %v1843 = vpop.f32.mrb[0].mxu0
        %v1844 = vadd.f32 %v1762, %v1843
        %v1845 = vpop.f32.mrb[0].mxu0
        %1846 = vmatprep.mubr.f32.mxu0 0.0
        %v1847 = vand.u32 %v1509, 4294901760
        %v1848 = vsub.f32 %v1509, %v1847
        %v1849 = vand.u32 %v1848, 4294901760
        %1850 = vmatmul.mubr.f32.gmra.mrb[0].mxu0 %v1849
        %v1851 = vpop.f32.mrb[0].mxu0
        %v1852 = vadd.f32 %v1769, %v1851
        %v1853 = vpop.f32.mrb[0].mxu0
        %1854 = vdwg.mxu0
        %1855 = vmatprep.subr.mxu0 0.0
        %v1856 = vand.u32 %v1511, 4294901760
        %v1857 = vsub.f32 %v1511, %v1856
        %v1858 = vand.u32 %v1857, 4294901760
        %1859 = vmatpush1.xpose.msra.mxu0 %v1858
        %1860 = vmatprep.subr.mxu0 0.0
        %v1861 = vand.u32 %v1513, 4294901760
        %v1862 = vsub.f32 %v1513, %v1861
        %v1863 = vand.u32 %v1862, 4294901760
        %1864 = vmatpush1.xpose.msra.mxu0 %v1863
        %1865 = vmatprep.subr.mxu0 0.0
        %1866 = vmatpush1.xpose.msra.mxu0 0.0
        %1867 = vmatprep.subr.mxu0 0.0
        %1868 = vmatpush1.xpose.msra.mxu0 0.0
        %1869 = vmatprep.subr.mxu0 0.0
        %1870 = vmatpush1.xpose.msra.mxu0 0.0
        %1871 = vmatprep.subr.mxu0 0.0
        %1872 = vmatpush1.xpose.msra.mxu0 0.0
        %1873 = vmatprep.subr.mxu0 0.0
        %1874 = vmatpush1.xpose.msra.mxu0 0.0
        %1875 = vmatprep.subr.mxu0 0.0
        %1876 = vmatpush1.xpose.msra.mxu0 0.0
        %1877 = vmatprep.subr.mxu0 0.0
        %1878 = vmatpush1.xpose.msra.mxu0 0.0
        %1879 = vmatprep.subr.mxu0 0.0
        %1880 = vmatpush1.xpose.msra.mxu0 0.0
        %1881 = vmatprep.subr.mxu0 0.0
        %1882 = vmatpush1.xpose.msra.mxu0 0.0
        %1883 = vmatprep.subr.mxu0 0.0
        %1884 = vmatpush1.xpose.msra.mxu0 0.0
        %1885 = vmatprep.subr.mxu0 0.0
        %1886 = vmatpush1.xpose.msra.mxu0 0.0
        %1887 = vmatprep.subr.mxu0 0.0
        %1888 = vmatpush1.xpose.msra.mxu0 0.0
        %1889 = vmatprep.subr.mxu0 0.0
        %1890 = vmatpush1.xpose.msra.mxu0 0.0
        %1891 = vmatprep.subr.mxu0 0.0
        %1892 = vmatpush1.xpose.msra.mxu0 0.0
        %1893 = vmatprep.subr.mxu0 0.0
        %1894 = vmatpush1.xpose.msra.mxu0 0.0
        %1895 = vmatprep.subr.mxu0 0.0
        %1896 = vmatpush1.xpose.msra.mxu0 0.0
        %1897 = vmatprep.subr.mxu0 0.0
        %1898 = vmatpush1.xpose.msra.mxu0 0.0
        %1899 = vmatprep.subr.mxu0 0.0
        %1900 = vmatpush1.xpose.msra.mxu0 0.0
        %1901 = vmatprep.subr.mxu0 0.0
        %1902 = vmatpush1.xpose.msra.mxu0 0.0
        %1903 = vmatprep.subr.mxu0 0.0
        %1904 = vmatpush1.xpose.msra.mxu0 0.0
        %1905 = vmatprep.subr.mxu0 0.0
        %1906 = vmatpush1.xpose.msra.mxu0 0.0
        %1907 = vmatprep.subr.mxu0 0.0
        %1908 = vmatpush1.xpose.msra.mxu0 0.0
        %1909 = vmatprep.subr.mxu0 0.0
        %1910 = vmatpush1.xpose.msra.mxu0 0.0
        %1911 = vmatprep.subr.mxu0 0.0
        %1912 = vmatpush1.xpose.msra.mxu0 0.0
        %1913 = vmatprep.subr.mxu0 0.0
        %1914 = vmatpush1.xpose.msra.mxu0 0.0
        %1915 = vmatprep.subr.mxu0 0.0
        %1916 = vmatpush1.xpose.msra.mxu0 0.0
        %1917 = vmatprep.subr.mxu0 0.0
        %1918 = vmatpush1.xpose.msra.mxu0 0.0
        %1919 = vmatprep.subr.mxu0 0.0
        %1920 = vmatpush1.xpose.msra.mxu0 0.0
        %1921 = vmatprep.subr.mxu0 0.0
        %1922 = vmatpush1.xpose.msra.mxu0 0.0
        %1923 = vmatprep.subr.mxu0 0.0
        %1924 = vmatpush1.xpose.msra.mxu0 0.0
        %1925 = vmatprep.mubr.f32.mxu0 0.0
        %v1926 = vand.u32 %v1507, 4294901760
        %1927 = vmatmul.mubr.f32.gmra.mrb[0].mxu0 %v1926
        %v1928 = vpop.f32.mrb[0].mxu0
        %v1929 = vadd.f32 %v1844, %v1928
        %v1930 = vpop.f32.mrb[0].mxu0
        %1931 = vmatprep.mubr.f32.mxu0 0.0
        %v1932 = vand.u32 %v1509, 4294901760
        %1933 = vmatmul.mubr.f32.gmra.mrb[0].mxu0 %v1932
        %v1934 = vpop.f32.mrb[0].mxu0
        %v1935 = vadd.f32 %v1852, %v1934
        %v1936 = vpop.f32.mrb[0].mxu0
        %1937 = vdwg.mxu0
        %1938 = vmatprep.subr.mxu0 0.0
        %v1939 = vand.u32 %v1511, 4294901760
        %1940 = vmatpush1.xpose.msra.mxu0 %v1939
        %1941 = vmatprep.subr.mxu0 0.0
        %v1942 = vand.u32 %v1513, 4294901760
        %1943 = vmatpush1.xpose.msra.mxu0 %v1942
        %1944 = vmatprep.subr.mxu0 0.0
        %1945 = vmatpush1.xpose.msra.mxu0 0.0
        %1946 = vmatprep.subr.mxu0 0.0
        %1947 = vmatpush1.xpose.msra.mxu0 0.0
        %1948 = vmatprep.subr.mxu0 0.0
        %1949 = vmatpush1.xpose.msra.mxu0 0.0
        %1950 = vmatprep.subr.mxu0 0.0
        %1951 = vmatpush1.xpose.msra.mxu0 0.0
        %1952 = vmatprep.subr.mxu0 0.0
        %1953 = vmatpush1.xpose.msra.mxu0 0.0
        %1954 = vmatprep.subr.mxu0 0.0
        %1955 = vmatpush1.xpose.msra.mxu0 0.0
        %1956 = vmatprep.subr.mxu0 0.0
        %1957 = vmatpush1.xpose.msra.mxu0 0.0
        %1958 = vmatprep.subr.mxu0 0.0
        %1959 = vmatpush1.xpose.msra.mxu0 0.0
        %1960 = vmatprep.subr.mxu0 0.0
        %1961 = vmatpush1.xpose.msra.mxu0 0.0
        %1962 = vmatprep.subr.mxu0 0.0
        %1963 = vmatpush1.xpose.msra.mxu0 0.0
        %1964 = vmatprep.subr.mxu0 0.0
        %1965 = vmatpush1.xpose.msra.mxu0 0.0
        %1966 = vmatprep.subr.mxu0 0.0
        %1967 = vmatpush1.xpose.msra.mxu0 0.0
        %1968 = vmatprep.subr.mxu0 0.0
        %1969 = vmatpush1.xpose.msra.mxu0 0.0
        %1970 = vmatprep.subr.mxu0 0.0
        %1971 = vmatpush1.xpose.msra.mxu0 0.0
        %1972 = vmatprep.subr.mxu0 0.0
        %1973 = vmatpush1.xpose.msra.mxu0 0.0
        %1974 = vmatprep.subr.mxu0 0.0
        %1975 = vmatpush1.xpose.msra.mxu0 0.0
        %1976 = vmatprep.subr.mxu0 0.0
        %1977 = vmatpush1.xpose.msra.mxu0 0.0
        %1978 = vmatprep.subr.mxu0 0.0
        %1979 = vmatpush1.xpose.msra.mxu0 0.0
        %1980 = vmatprep.subr.mxu0 0.0
        %1981 = vmatpush1.xpose.msra.mxu0 0.0
        %1982 = vmatprep.subr.mxu0 0.0
        %1983 = vmatpush1.xpose.msra.mxu0 0.0
        %1984 = vmatprep.subr.mxu0 0.0
        %1985 = vmatpush1.xpose.msra.mxu0 0.0
        %1986 = vmatprep.subr.mxu0 0.0
        %1987 = vmatpush1.xpose.msra.mxu0 0.0
        %1988 = vmatprep.subr.mxu0 0.0
        %1989 = vmatpush1.xpose.msra.mxu0 0.0
        %1990 = vmatprep.subr.mxu0 0.0
        %1991 = vmatpush1.xpose.msra.mxu0 0.0
        %1992 = vmatprep.subr.mxu0 0.0
        %1993 = vmatpush1.xpose.msra.mxu0 0.0
        %1994 = vmatprep.subr.mxu0 0.0
        %1995 = vmatpush1.xpose.msra.mxu0 0.0
        %1996 = vmatprep.subr.mxu0 0.0
        %1997 = vmatpush1.xpose.msra.mxu0 0.0
        %1998 = vmatprep.subr.mxu0 0.0
        %1999 = vmatpush1.xpose.msra.mxu0 0.0
        %2000 = vmatprep.subr.mxu0 0.0
        %2001 = vmatpush1.xpose.msra.mxu0 0.0
        %2002 = vmatprep.subr.mxu0 0.0
        %2003 = vmatpush1.xpose.msra.mxu0 0.0
        %2004 = vmatprep.mubr.f32.mxu0 0.0
        %v2005 = vand.u32 %v1507, 4294901760
        %2006 = vmatmul.mubr.f32.gmra.mrb[0].mxu0 %v2005
        %v2007 = vpop.f32.mrb[0].mxu0
        %v2008 = vadd.f32 %v1929, %v2007
        %v2009 = vpop.f32.mrb[0].mxu0
        %2010 = vmatprep.mubr.f32.mxu0 0.0
        %v2011 = vand.u32 %v1509, 4294901760
        %2012 = vmatmul.mubr.f32.gmra.mrb[0].mxu0 %v2011
        %v2013 = vpop.f32.mrb[0].mxu0
        %v2014 = vadd.f32 %v1935, %v2013
        %v2015 = vpop.f32.mrb[0].mxu0
        %2016 = vdwg.mxu0
        %2017 = vrot.lane.b32.xlu0 %v1491, 96
        %v2018 = vpop.permute.xlu0 %2017
        %2019 = vrot.lane.b32.xlu0 %v1493, 96
        %v2020 = vpop.permute.xlu0 %2019
        %v2021 = vsel %vm1506, %v1491, 0
        %v2023 = vsel %vm1506, %v1493, 0
        %v2025 = vsel %vm1506, %v2018, 0
        %v2027 = vsel %vm1506, %v2020, 0
        %2029 = vmatprep.subr.mxu0 0.0
        %v2030 = vand.u32 %v2025, 4294901760
        %2031 = vmatpush1.xpose.msra.mxu0 %v2030
        %2032 = vmatprep.subr.mxu0 0.0
        %v2033 = vand.u32 %v2027, 4294901760
        %2034 = vmatpush1.xpose.msra.mxu0 %v2033
        %2035 = vmatprep.subr.mxu0 0.0
        %2036 = vmatpush1.xpose.msra.mxu0 0.0
        %2037 = vmatprep.subr.mxu0 0.0
        %2038 = vmatpush1.xpose.msra.mxu0 0.0
        %2039 = vmatprep.subr.mxu0 0.0
        %2040 = vmatpush1.xpose.msra.mxu0 0.0
        %2041 = vmatprep.subr.mxu0 0.0
        %2042 = vmatpush1.xpose.msra.mxu0 0.0
        %2043 = vmatprep.subr.mxu0 0.0
        %2044 = vmatpush1.xpose.msra.mxu0 0.0
        %2045 = vmatprep.subr.mxu0 0.0
        %2046 = vmatpush1.xpose.msra.mxu0 0.0
        %2047 = vmatprep.subr.mxu0 0.0
        %2048 = vmatpush1.xpose.msra.mxu0 0.0
        %2049 = vmatprep.subr.mxu0 0.0
        %2050 = vmatpush1.xpose.msra.mxu0 0.0
        %2051 = vmatprep.subr.mxu0 0.0
        %2052 = vmatpush1.xpose.msra.mxu0 0.0
        %2053 = vmatprep.subr.mxu0 0.0
        %2054 = vmatpush1.xpose.msra.mxu0 0.0
        %2055 = vmatprep.subr.mxu0 0.0
        %2056 = vmatpush1.xpose.msra.mxu0 0.0
        %2057 = vmatprep.subr.mxu0 0.0
        %2058 = vmatpush1.xpose.msra.mxu0 0.0
        %2059 = vmatprep.subr.mxu0 0.0
        %2060 = vmatpush1.xpose.msra.mxu0 0.0
        %2061 = vmatprep.subr.mxu0 0.0
        %2062 = vmatpush1.xpose.msra.mxu0 0.0
        %2063 = vmatprep.subr.mxu0 0.0
        %2064 = vmatpush1.xpose.msra.mxu0 0.0
        %2065 = vmatprep.subr.mxu0 0.0
        %2066 = vmatpush1.xpose.msra.mxu0 0.0
        %2067 = vmatprep.subr.mxu0 0.0
        %2068 = vmatpush1.xpose.msra.mxu0 0.0
        %2069 = vmatprep.subr.mxu0 0.0
        %2070 = vmatpush1.xpose.msra.mxu0 0.0
        %2071 = vmatprep.subr.mxu0 0.0
        %2072 = vmatpush1.xpose.msra.mxu0 0.0
        %2073 = vmatprep.subr.mxu0 0.0
        %2074 = vmatpush1.xpose.msra.mxu0 0.0
        %2075 = vmatprep.subr.mxu0 0.0
        %2076 = vmatpush1.xpose.msra.mxu0 0.0
        %2077 = vmatprep.subr.mxu0 0.0
        %2078 = vmatpush1.xpose.msra.mxu0 0.0
        %2079 = vmatprep.subr.mxu0 0.0
        %2080 = vmatpush1.xpose.msra.mxu0 0.0
        %2081 = vmatprep.subr.mxu0 0.0
        %2082 = vmatpush1.xpose.msra.mxu0 0.0
        %2083 = vmatprep.subr.mxu0 0.0
        %2084 = vmatpush1.xpose.msra.mxu0 0.0
        %2085 = vmatprep.subr.mxu0 0.0
        %2086 = vmatpush1.xpose.msra.mxu0 0.0
        %2087 = vmatprep.subr.mxu0 0.0
        %2088 = vmatpush1.xpose.msra.mxu0 0.0
        %2089 = vmatprep.subr.mxu0 0.0
        %2090 = vmatpush1.xpose.msra.mxu0 0.0
        %2091 = vmatprep.subr.mxu0 0.0
        %2092 = vmatpush1.xpose.msra.mxu0 0.0
        %2093 = vmatprep.subr.mxu0 0.0
        %2094 = vmatpush1.xpose.msra.mxu0 0.0
        %2095 = vmatprep.mubr.f32.mxu0 0.0
        %v2096 = vand.u32 %v2021, 4294901760
        %v2097 = vsub.f32 %v2021, %v2096
        %v2098 = vand.u32 %v2097, 4294901760
        %v2099 = vsub.f32 %v2097, %v2098
        %v2100 = vand.u32 %v2099, 4294901760
        %2101 = vmatmul.mubr.f32.gmra.mrb[0].mxu0 %v2100
        %v2102 = vpop.f32.mrb[0].mxu0
        %v2103 = vadd.f32 0.0, %v2102
        %v2104 = vpop.f32.mrb[0].mxu0
        %2105 = vmatprep.mubr.f32.mxu0 0.0
        %v2106 = vand.u32 %v2023, 4294901760
        %v2107 = vsub.f32 %v2023, %v2106
        %v2108 = vand.u32 %v2107, 4294901760
        %v2109 = vsub.f32 %v2107, %v2108
        %v2110 = vand.u32 %v2109, 4294901760
        %2111 = vmatmul.mubr.f32.gmra.mrb[0].mxu0 %v2110
        %v2112 = vpop.f32.mrb[0].mxu0
        %v2113 = vadd.f32 0.0, %v2112
        %v2114 = vpop.f32.mrb[0].mxu0
        %2115 = vdwg.mxu0
        %2116 = vmatprep.subr.mxu0 0.0
        %v2117 = vand.u32 %v2025, 4294901760
        %v2118 = vsub.f32 %v2025, %v2117
        %v2119 = vand.u32 %v2118, 4294901760
        %v2120 = vsub.f32 %v2118, %v2119
        %v2121 = vand.u32 %v2120, 4294901760
        %2122 = vmatpush1.xpose.msra.mxu0 %v2121
        %2123 = vmatprep.subr.mxu0 0.0
        %v2124 = vand.u32 %v2027, 4294901760
        %v2125 = vsub.f32 %v2027, %v2124
        %v2126 = vand.u32 %v2125, 4294901760
        %v2127 = vsub.f32 %v2125, %v2126
        %v2128 = vand.u32 %v2127, 4294901760
        %2129 = vmatpush1.xpose.msra.mxu0 %v2128
        %2130 = vmatprep.subr.mxu0 0.0
        %2131 = vmatpush1.xpose.msra.mxu0 0.0
        %2132 = vmatprep.subr.mxu0 0.0
        %2133 = vmatpush1.xpose.msra.mxu0 0.0
        %2134 = vmatprep.subr.mxu0 0.0
        %2135 = vmatpush1.xpose.msra.mxu0 0.0
        %2136 = vmatprep.subr.mxu0 0.0
        %2137 = vmatpush1.xpose.msra.mxu0 0.0
        %2138 = vmatprep.subr.mxu0 0.0
        %2139 = vmatpush1.xpose.msra.mxu0 0.0
        %2140 = vmatprep.subr.mxu0 0.0
        %2141 = vmatpush1.xpose.msra.mxu0 0.0
        %2142 = vmatprep.subr.mxu0 0.0
        %2143 = vmatpush1.xpose.msra.mxu0 0.0
        %2144 = vmatprep.subr.mxu0 0.0
        %2145 = vmatpush1.xpose.msra.mxu0 0.0
        %2146 = vmatprep.subr.mxu0 0.0
        %2147 = vmatpush1.xpose.msra.mxu0 0.0
        %2148 = vmatprep.subr.mxu0 0.0
        %2149 = vmatpush1.xpose.msra.mxu0 0.0
        %2150 = vmatprep.subr.mxu0 0.0
        %2151 = vmatpush1.xpose.msra.mxu0 0.0
        %2152 = vmatprep.subr.mxu0 0.0
        %2153 = vmatpush1.xpose.msra.mxu0 0.0
        %2154 = vmatprep.subr.mxu0 0.0
        %2155 = vmatpush1.xpose.msra.mxu0 0.0
        %2156 = vmatprep.subr.mxu0 0.0
        %2157 = vmatpush1.xpose.msra.mxu0 0.0
        %2158 = vmatprep.subr.mxu0 0.0
        %2159 = vmatpush1.xpose.msra.mxu0 0.0
        %2160 = vmatprep.subr.mxu0 0.0
        %2161 = vmatpush1.xpose.msra.mxu0 0.0
        %2162 = vmatprep.subr.mxu0 0.0
        %2163 = vmatpush1.xpose.msra.mxu0 0.0
        %2164 = vmatprep.subr.mxu0 0.0
        %2165 = vmatpush1.xpose.msra.mxu0 0.0
        %2166 = vmatprep.subr.mxu0 0.0
        %2167 = vmatpush1.xpose.msra.mxu0 0.0
        %2168 = vmatprep.subr.mxu0 0.0
        %2169 = vmatpush1.xpose.msra.mxu0 0.0
        %2170 = vmatprep.subr.mxu0 0.0
        %2171 = vmatpush1.xpose.msra.mxu0 0.0
        %2172 = vmatprep.subr.mxu0 0.0
        %2173 = vmatpush1.xpose.msra.mxu0 0.0
        %2174 = vmatprep.subr.mxu0 0.0
        %2175 = vmatpush1.xpose.msra.mxu0 0.0
        %2176 = vmatprep.subr.mxu0 0.0
        %2177 = vmatpush1.xpose.msra.mxu0 0.0
        %2178 = vmatprep.subr.mxu0 0.0
        %2179 = vmatpush1.xpose.msra.mxu0 0.0
        %2180 = vmatprep.subr.mxu0 0.0
        %2181 = vmatpush1.xpose.msra.mxu0 0.0
        %2182 = vmatprep.subr.mxu0 0.0
        %2183 = vmatpush1.xpose.msra.mxu0 0.0
        %2184 = vmatprep.subr.mxu0 0.0
        %2185 = vmatpush1.xpose.msra.mxu0 0.0
        %2186 = vmatprep.subr.mxu0 0.0
        %2187 = vmatpush1.xpose.msra.mxu0 0.0
        %2188 = vmatprep.subr.mxu0 0.0
        %2189 = vmatpush1.xpose.msra.mxu0 0.0
        %2190 = vmatprep.mubr.f32.mxu0 0.0
        %v2191 = vand.u32 %v2021, 4294901760
        %2192 = vmatmul.mubr.f32.gmra.mrb[0].mxu0 %v2191
        %v2193 = vpop.f32.mrb[0].mxu0
        %v2194 = vadd.f32 %v2103, %v2193
        %v2195 = vpop.f32.mrb[0].mxu0
        %2196 = vmatprep.mubr.f32.mxu0 0.0
        %v2197 = vand.u32 %v2023, 4294901760
        %2198 = vmatmul.mubr.f32.gmra.mrb[0].mxu0 %v2197
        %v2199 = vpop.f32.mrb[0].mxu0
        %v2200 = vadd.f32 %v2113, %v2199
        %v2201 = vpop.f32.mrb[0].mxu0
        %2202 = vdwg.mxu0
        %2203 = vmatprep.subr.mxu0 0.0
        %v2204 = vand.u32 %v2025, 4294901760
        %v2205 = vsub.f32 %v2025, %v2204
        %2206 = vmatpush1.xpose.msra.mxu0 %v2205
        %2207 = vmatprep.subr.mxu0 0.0
        %v2208 = vand.u32 %v2027, 4294901760
        %v2209 = vsub.f32 %v2027, %v2208
        %2210 = vmatpush1.xpose.msra.mxu0 %v2209
        %2211 = vmatprep.subr.mxu0 0.0
        %2212 = vmatpush1.xpose.msra.mxu0 0.0
        %2213 = vmatprep.subr.mxu0 0.0
        %2214 = vmatpush1.xpose.msra.mxu0 0.0
        %2215 = vmatprep.subr.mxu0 0.0
        %2216 = vmatpush1.xpose.msra.mxu0 0.0
        %2217 = vmatprep.subr.mxu0 0.0
        %2218 = vmatpush1.xpose.msra.mxu0 0.0
        %2219 = vmatprep.subr.mxu0 0.0
        %2220 = vmatpush1.xpose.msra.mxu0 0.0
        %2221 = vmatprep.subr.mxu0 0.0
        %2222 = vmatpush1.xpose.msra.mxu0 0.0
        %2223 = vmatprep.subr.mxu0 0.0
        %2224 = vmatpush1.xpose.msra.mxu0 0.0
        %2225 = vmatprep.subr.mxu0 0.0
        %2226 = vmatpush1.xpose.msra.mxu0 0.0
        %2227 = vmatprep.subr.mxu0 0.0
        %2228 = vmatpush1.xpose.msra.mxu0 0.0
        %2229 = vmatprep.subr.mxu0 0.0
        %2230 = vmatpush1.xpose.msra.mxu0 0.0
        %2231 = vmatprep.subr.mxu0 0.0
        %2232 = vmatpush1.xpose.msra.mxu0 0.0
        %2233 = vmatprep.subr.mxu0 0.0
        %2234 = vmatpush1.xpose.msra.mxu0 0.0
        %2235 = vmatprep.subr.mxu0 0.0
        %2236 = vmatpush1.xpose.msra.mxu0 0.0
        %2237 = vmatprep.subr.mxu0 0.0
        %2238 = vmatpush1.xpose.msra.mxu0 0.0
        %2239 = vmatprep.subr.mxu0 0.0
        %2240 = vmatpush1.xpose.msra.mxu0 0.0
        %2241 = vmatprep.subr.mxu0 0.0
        %2242 = vmatpush1.xpose.msra.mxu0 0.0
        %2243 = vmatprep.subr.mxu0 0.0
        %2244 = vmatpush1.xpose.msra.mxu0 0.0
        %2245 = vmatprep.subr.mxu0 0.0
        %2246 = vmatpush1.xpose.msra.mxu0 0.0
        %2247 = vmatprep.subr.mxu0 0.0
        %2248 = vmatpush1.xpose.msra.mxu0 0.0
        %2249 = vmatprep.subr.mxu0 0.0
        %2250 = vmatpush1.xpose.msra.mxu0 0.0
        %2251 = vmatprep.subr.mxu0 0.0
        %2252 = vmatpush1.xpose.msra.mxu0 0.0
        %2253 = vmatprep.subr.mxu0 0.0
        %2254 = vmatpush1.xpose.msra.mxu0 0.0
        %2255 = vmatprep.subr.mxu0 0.0
        %2256 = vmatpush1.xpose.msra.mxu0 0.0
        %2257 = vmatprep.subr.mxu0 0.0
        %2258 = vmatpush1.xpose.msra.mxu0 0.0
        %2259 = vmatprep.subr.mxu0 0.0
        %2260 = vmatpush1.xpose.msra.mxu0 0.0
        %2261 = vmatprep.subr.mxu0 0.0
        %2262 = vmatpush1.xpose.msra.mxu0 0.0
        %2263 = vmatprep.subr.mxu0 0.0
        %2264 = vmatpush1.xpose.msra.mxu0 0.0
        %2265 = vmatprep.subr.mxu0 0.0
        %2266 = vmatpush1.xpose.msra.mxu0 0.0
        %2267 = vmatprep.subr.mxu0 0.0
        %2268 = vmatpush1.xpose.msra.mxu0 0.0
        %2269 = vmatprep.subr.mxu0 0.0
        %2270 = vmatpush1.xpose.msra.mxu0 0.0
        %2271 = vmatprep.mubr.f32.mxu0 0.0
        %v2272 = vand.u32 %v2021, 4294901760
        %v2273 = vsub.f32 %v2021, %v2272
        %2274 = vmatmul.mubr.f32.gmra.mrb[0].mxu0 %v2273
        %v2275 = vpop.f32.mrb[0].mxu0
        %v2276 = vadd.f32 %v2194, %v2275
        %v2277 = vpop.f32.mrb[0].mxu0
        %2278 = vmatprep.mubr.f32.mxu0 0.0
        %v2279 = vand.u32 %v2023, 4294901760
        %v2280 = vsub.f32 %v2023, %v2279
        %2281 = vmatmul.mubr.f32.gmra.mrb[0].mxu0 %v2280
        %v2282 = vpop.f32.mrb[0].mxu0
        %v2283 = vadd.f32 %v2200, %v2282
        %v2284 = vpop.f32.mrb[0].mxu0
        %2285 = vdwg.mxu0
        %2286 = vmatprep.subr.mxu0 0.0
        %v2287 = vand.u32 %v2025, 4294901760
        %2288 = vmatpush1.xpose.msra.mxu0 %v2287
        %2289 = vmatprep.subr.mxu0 0.0
        %v2290 = vand.u32 %v2027, 4294901760
        %2291 = vmatpush1.xpose.msra.mxu0 %v2290
        %2292 = vmatprep.subr.mxu0 0.0
        %2293 = vmatpush1.xpose.msra.mxu0 0.0
        %2294 = vmatprep.subr.mxu0 0.0
        %2295 = vmatpush1.xpose.msra.mxu0 0.0
        %2296 = vmatprep.subr.mxu0 0.0
        %2297 = vmatpush1.xpose.msra.mxu0 0.0
        %2298 = vmatprep.subr.mxu0 0.0
        %2299 = vmatpush1.xpose.msra.mxu0 0.0
        %2300 = vmatprep.subr.mxu0 0.0
        %2301 = vmatpush1.xpose.msra.mxu0 0.0
        %2302 = vmatprep.subr.mxu0 0.0
        %2303 = vmatpush1.xpose.msra.mxu0 0.0
        %2304 = vmatprep.subr.mxu0 0.0
        %2305 = vmatpush1.xpose.msra.mxu0 0.0
        %2306 = vmatprep.subr.mxu0 0.0
        %2307 = vmatpush1.xpose.msra.mxu0 0.0
        %2308 = vmatprep.subr.mxu0 0.0
        %2309 = vmatpush1.xpose.msra.mxu0 0.0
        %2310 = vmatprep.subr.mxu0 0.0
        %2311 = vmatpush1.xpose.msra.mxu0 0.0
        %2312 = vmatprep.subr.mxu0 0.0
        %2313 = vmatpush1.xpose.msra.mxu0 0.0
        %2314 = vmatprep.subr.mxu0 0.0
        %2315 = vmatpush1.xpose.msra.mxu0 0.0
        %2316 = vmatprep.subr.mxu0 0.0
        %2317 = vmatpush1.xpose.msra.mxu0 0.0
        %2318 = vmatprep.subr.mxu0 0.0
        %2319 = vmatpush1.xpose.msra.mxu0 0.0
        %2320 = vmatprep.subr.mxu0 0.0
        %2321 = vmatpush1.xpose.msra.mxu0 0.0
        %2322 = vmatprep.subr.mxu0 0.0
        %2323 = vmatpush1.xpose.msra.mxu0 0.0
        %2324 = vmatprep.subr.mxu0 0.0
        %2325 = vmatpush1.xpose.msra.mxu0 0.0
        %2326 = vmatprep.subr.mxu0 0.0
        %2327 = vmatpush1.xpose.msra.mxu0 0.0
        %2328 = vmatprep.subr.mxu0 0.0
        %2329 = vmatpush1.xpose.msra.mxu0 0.0
        %2330 = vmatprep.subr.mxu0 0.0
        %2331 = vmatpush1.xpose.msra.mxu0 0.0
        %2332 = vmatprep.subr.mxu0 0.0
        %2333 = vmatpush1.xpose.msra.mxu0 0.0
        %2334 = vmatprep.subr.mxu0 0.0
        %2335 = vmatpush1.xpose.msra.mxu0 0.0
        %2336 = vmatprep.subr.mxu0 0.0
        %2337 = vmatpush1.xpose.msra.mxu0 0.0
        %2338 = vmatprep.subr.mxu0 0.0
        %2339 = vmatpush1.xpose.msra.mxu0 0.0
        %2340 = vmatprep.subr.mxu0 0.0
        %2341 = vmatpush1.xpose.msra.mxu0 0.0
        %2342 = vmatprep.subr.mxu0 0.0
        %2343 = vmatpush1.xpose.msra.mxu0 0.0
        %2344 = vmatprep.subr.mxu0 0.0
        %2345 = vmatpush1.xpose.msra.mxu0 0.0
        %2346 = vmatprep.subr.mxu0 0.0
        %2347 = vmatpush1.xpose.msra.mxu0 0.0
        %2348 = vmatprep.subr.mxu0 0.0
        %2349 = vmatpush1.xpose.msra.mxu0 0.0
        %2350 = vmatprep.subr.mxu0 0.0
        %2351 = vmatpush1.xpose.msra.mxu0 0.0
        %2352 = vmatprep.mubr.f32.mxu0 0.0
        %v2353 = vand.u32 %v2021, 4294901760
        %v2354 = vsub.f32 %v2021, %v2353
        %v2355 = vand.u32 %v2354, 4294901760
        %2356 = vmatmul.mubr.f32.gmra.mrb[0].mxu0 %v2355
        %v2357 = vpop.f32.mrb[0].mxu0
        %v2358 = vadd.f32 %v2276, %v2357
        %v2359 = vpop.f32.mrb[0].mxu0
        %2360 = vmatprep.mubr.f32.mxu0 0.0
        %v2361 = vand.u32 %v2023, 4294901760
        %v2362 = vsub.f32 %v2023, %v2361
        %v2363 = vand.u32 %v2362, 4294901760
        %2364 = vmatmul.mubr.f32.gmra.mrb[0].mxu0 %v2363
        %v2365 = vpop.f32.mrb[0].mxu0
        %v2366 = vadd.f32 %v2283, %v2365
        %v2367 = vpop.f32.mrb[0].mxu0
        %2368 = vdwg.mxu0
        %2369 = vmatprep.subr.mxu0 0.0
        %v2370 = vand.u32 %v2025, 4294901760
        %v2371 = vsub.f32 %v2025, %v2370
        %v2372 = vand.u32 %v2371, 4294901760
        %2373 = vmatpush1.xpose.msra.mxu0 %v2372
        %2374 = vmatprep.subr.mxu0 0.0
        %v2375 = vand.u32 %v2027, 4294901760
        %v2376 = vsub.f32 %v2027, %v2375
        %v2377 = vand.u32 %v2376, 4294901760
        %2378 = vmatpush1.xpose.msra.mxu0 %v2377
        %2379 = vmatprep.subr.mxu0 0.0
        %2380 = vmatpush1.xpose.msra.mxu0 0.0
        %2381 = vmatprep.subr.mxu0 0.0
        %2382 = vmatpush1.xpose.msra.mxu0 0.0
        %2383 = vmatprep.subr.mxu0 0.0
        %2384 = vmatpush1.xpose.msra.mxu0 0.0
        %2385 = vmatprep.subr.mxu0 0.0
        %2386 = vmatpush1.xpose.msra.mxu0 0.0
        %2387 = vmatprep.subr.mxu0 0.0
        %2388 = vmatpush1.xpose.msra.mxu0 0.0
        %2389 = vmatprep.subr.mxu0 0.0
        %2390 = vmatpush1.xpose.msra.mxu0 0.0
        %2391 = vmatprep.subr.mxu0 0.0
        %2392 = vmatpush1.xpose.msra.mxu0 0.0
        %2393 = vmatprep.subr.mxu0 0.0
        %2394 = vmatpush1.xpose.msra.mxu0 0.0
        %2395 = vmatprep.subr.mxu0 0.0
        %2396 = vmatpush1.xpose.msra.mxu0 0.0
        %2397 = vmatprep.subr.mxu0 0.0
        %2398 = vmatpush1.xpose.msra.mxu0 0.0
        %2399 = vmatprep.subr.mxu0 0.0
        %2400 = vmatpush1.xpose.msra.mxu0 0.0
        %2401 = vmatprep.subr.mxu0 0.0
        %2402 = vmatpush1.xpose.msra.mxu0 0.0
        %2403 = vmatprep.subr.mxu0 0.0
        %2404 = vmatpush1.xpose.msra.mxu0 0.0
        %2405 = vmatprep.subr.mxu0 0.0
        %2406 = vmatpush1.xpose.msra.mxu0 0.0
        %2407 = vmatprep.subr.mxu0 0.0
        %2408 = vmatpush1.xpose.msra.mxu0 0.0
        %2409 = vmatprep.subr.mxu0 0.0
        %2410 = vmatpush1.xpose.msra.mxu0 0.0
        %2411 = vmatprep.subr.mxu0 0.0
        %2412 = vmatpush1.xpose.msra.mxu0 0.0
        %2413 = vmatprep.subr.mxu0 0.0
        %2414 = vmatpush1.xpose.msra.mxu0 0.0
        %2415 = vmatprep.subr.mxu0 0.0
        %2416 = vmatpush1.xpose.msra.mxu0 0.0
        %2417 = vmatprep.subr.mxu0 0.0
        %2418 = vmatpush1.xpose.msra.mxu0 0.0
        %2419 = vmatprep.subr.mxu0 0.0
        %2420 = vmatpush1.xpose.msra.mxu0 0.0
        %2421 = vmatprep.subr.mxu0 0.0
        %2422 = vmatpush1.xpose.msra.mxu0 0.0
        %2423 = vmatprep.subr.mxu0 0.0
        %2424 = vmatpush1.xpose.msra.mxu0 0.0
        %2425 = vmatprep.subr.mxu0 0.0
        %2426 = vmatpush1.xpose.msra.mxu0 0.0
        %2427 = vmatprep.subr.mxu0 0.0
        %2428 = vmatpush1.xpose.msra.mxu0 0.0
        %2429 = vmatprep.subr.mxu0 0.0
        %2430 = vmatpush1.xpose.msra.mxu0 0.0
        %2431 = vmatprep.subr.mxu0 0.0
        %2432 = vmatpush1.xpose.msra.mxu0 0.0
        %2433 = vmatprep.subr.mxu0 0.0
        %2434 = vmatpush1.xpose.msra.mxu0 0.0
        %2435 = vmatprep.subr.mxu0 0.0
        %2436 = vmatpush1.xpose.msra.mxu0 0.0
        %2437 = vmatprep.subr.mxu0 0.0
        %2438 = vmatpush1.xpose.msra.mxu0 0.0
        %2439 = vmatprep.mubr.f32.mxu0 0.0
        %v2440 = vand.u32 %v2021, 4294901760
        %2441 = vmatmul.mubr.f32.gmra.mrb[0].mxu0 %v2440
        %v2442 = vpop.f32.mrb[0].mxu0
        %v2443 = vadd.f32 %v2358, %v2442
        %v2444 = vpop.f32.mrb[0].mxu0
        %2445 = vmatprep.mubr.f32.mxu0 0.0
        %v2446 = vand.u32 %v2023, 4294901760
        %2447 = vmatmul.mubr.f32.gmra.mrb[0].mxu0 %v2446
        %v2448 = vpop.f32.mrb[0].mxu0
        %v2449 = vadd.f32 %v2366, %v2448
        %v2450 = vpop.f32.mrb[0].mxu0
        %2451 = vdwg.mxu0
        %2452 = vmatprep.subr.mxu0 0.0
        %v2453 = vand.u32 %v2025, 4294901760
        %2454 = vmatpush1.xpose.msra.mxu0 %v2453
        %2455 = vmatprep.subr.mxu0 0.0
        %v2456 = vand.u32 %v2027, 4294901760
        %2457 = vmatpush1.xpose.msra.mxu0 %v2456
        %2458 = vmatprep.subr.mxu0 0.0
        %2459 = vmatpush1.xpose.msra.mxu0 0.0
        %2460 = vmatprep.subr.mxu0 0.0
        %2461 = vmatpush1.xpose.msra.mxu0 0.0
        %2462 = vmatprep.subr.mxu0 0.0
        %2463 = vmatpush1.xpose.msra.mxu0 0.0
        %2464 = vmatprep.subr.mxu0 0.0
        %2465 = vmatpush1.xpose.msra.mxu0 0.0
        %2466 = vmatprep.subr.mxu0 0.0
        %2467 = vmatpush1.xpose.msra.mxu0 0.0
        %2468 = vmatprep.subr.mxu0 0.0
        %2469 = vmatpush1.xpose.msra.mxu0 0.0
        %2470 = vmatprep.subr.mxu0 0.0
        %2471 = vmatpush1.xpose.msra.mxu0 0.0
        %2472 = vmatprep.subr.mxu0 0.0
        %2473 = vmatpush1.xpose.msra.mxu0 0.0
        %2474 = vmatprep.subr.mxu0 0.0
        %2475 = vmatpush1.xpose.msra.mxu0 0.0
        %2476 = vmatprep.subr.mxu0 0.0
        %2477 = vmatpush1.xpose.msra.mxu0 0.0
        %2478 = vmatprep.subr.mxu0 0.0
        %2479 = vmatpush1.xpose.msra.mxu0 0.0
        %2480 = vmatprep.subr.mxu0 0.0
        %2481 = vmatpush1.xpose.msra.mxu0 0.0
        %2482 = vmatprep.subr.mxu0 0.0
        %2483 = vmatpush1.xpose.msra.mxu0 0.0
        %2484 = vmatprep.subr.mxu0 0.0
        %2485 = vmatpush1.xpose.msra.mxu0 0.0
        %2486 = vmatprep.subr.mxu0 0.0
        %2487 = vmatpush1.xpose.msra.mxu0 0.0
        %2488 = vmatprep.subr.mxu0 0.0
        %2489 = vmatpush1.xpose.msra.mxu0 0.0
        %2490 = vmatprep.subr.mxu0 0.0
        %2491 = vmatpush1.xpose.msra.mxu0 0.0
        %2492 = vmatprep.subr.mxu0 0.0
        %2493 = vmatpush1.xpose.msra.mxu0 0.0
        %2494 = vmatprep.subr.mxu0 0.0
        %2495 = vmatpush1.xpose.msra.mxu0 0.0
        %2496 = vmatprep.subr.mxu0 0.0
        %2497 = vmatpush1.xpose.msra.mxu0 0.0
        %2498 = vmatprep.subr.mxu0 0.0
        %2499 = vmatpush1.xpose.msra.mxu0 0.0
        %2500 = vmatprep.subr.mxu0 0.0
        %2501 = vmatpush1.xpose.msra.mxu0 0.0
        %2502 = vmatprep.subr.mxu0 0.0
        %2503 = vmatpush1.xpose.msra.mxu0 0.0
        %2504 = vmatprep.subr.mxu0 0.0
        %2505 = vmatpush1.xpose.msra.mxu0 0.0
        %2506 = vmatprep.subr.mxu0 0.0
        %2507 = vmatpush1.xpose.msra.mxu0 0.0
        %2508 = vmatprep.subr.mxu0 0.0
        %2509 = vmatpush1.xpose.msra.mxu0 0.0
        %2510 = vmatprep.subr.mxu0 0.0
        %2511 = vmatpush1.xpose.msra.mxu0 0.0
        %2512 = vmatprep.subr.mxu0 0.0
        %2513 = vmatpush1.xpose.msra.mxu0 0.0
        %2514 = vmatprep.subr.mxu0 0.0
        %2515 = vmatpush1.xpose.msra.mxu0 0.0
        %2516 = vmatprep.subr.mxu0 0.0
        %2517 = vmatpush1.xpose.msra.mxu0 0.0
        %2518 = vmatprep.mubr.f32.mxu0 0.0
        %v2519 = vand.u32 %v2021, 4294901760
        %2520 = vmatmul.mubr.f32.gmra.mrb[0].mxu0 %v2519
        %v2521 = vpop.f32.mrb[0].mxu0
        %v2522 = vadd.f32 %v2443, %v2521
        %v2523 = vpop.f32.mrb[0].mxu0
        %2524 = vmatprep.mubr.f32.mxu0 0.0
        %v2525 = vand.u32 %v2023, 4294901760
        %2526 = vmatmul.mubr.f32.gmra.mrb[0].mxu0 %v2525
        %v2527 = vpop.f32.mrb[0].mxu0
        %v2528 = vadd.f32 %v2449, %v2527
        %v2529 = vpop.f32.mrb[0].mxu0
        %2530 = vdwg.mxu0
        %2531 = vrot.lane.b32.xlu0 %v1495, 96
        %v2532 = vpop.permute.xlu0 %2531
        %2533 = vrot.lane.b32.xlu0 %v1497, 96
        %v2534 = vpop.permute.xlu0 %2533
        %v2535 = vsel %vm1506, %v1495, 0
        %v2537 = vsel %vm1506, %v1497, 0
        %v2539 = vsel %vm1506, %v2532, 0
        %v2541 = vsel %vm1506, %v2534, 0
        %2543 = vmatprep.subr.mxu0 0.0
        %v2544 = vand.u32 %v2539, 4294901760
        %2545 = vmatpush1.xpose.msra.mxu0 %v2544
        %2546 = vmatprep.subr.mxu0 0.0
        %v2547 = vand.u32 %v2541, 4294901760
        %2548 = vmatpush1.xpose.msra.mxu0 %v2547
        %2549 = vmatprep.subr.mxu0 0.0
        %2550 = vmatpush1.xpose.msra.mxu0 0.0
        %2551 = vmatprep.subr.mxu0 0.0
        %2552 = vmatpush1.xpose.msra.mxu0 0.0
        %2553 = vmatprep.subr.mxu0 0.0
        %2554 = vmatpush1.xpose.msra.mxu0 0.0
        %2555 = vmatprep.subr.mxu0 0.0
        %2556 = vmatpush1.xpose.msra.mxu0 0.0
        %2557 = vmatprep.subr.mxu0 0.0
        %2558 = vmatpush1.xpose.msra.mxu0 0.0
        %2559 = vmatprep.subr.mxu0 0.0
        %2560 = vmatpush1.xpose.msra.mxu0 0.0
        %2561 = vmatprep.subr.mxu0 0.0
        %2562 = vmatpush1.xpose.msra.mxu0 0.0
        %2563 = vmatprep.subr.mxu0 0.0
        %2564 = vmatpush1.xpose.msra.mxu0 0.0
        %2565 = vmatprep.subr.mxu0 0.0
        %2566 = vmatpush1.xpose.msra.mxu0 0.0
        %2567 = vmatprep.subr.mxu0 0.0
        %2568 = vmatpush1.xpose.msra.mxu0 0.0
        %2569 = vmatprep.subr.mxu0 0.0
        %2570 = vmatpush1.xpose.msra.mxu0 0.0
        %2571 = vmatprep.subr.mxu0 0.0
        %2572 = vmatpush1.xpose.msra.mxu0 0.0
        %2573 = vmatprep.subr.mxu0 0.0
        %2574 = vmatpush1.xpose.msra.mxu0 0.0
        %2575 = vmatprep.subr.mxu0 0.0
        %2576 = vmatpush1.xpose.msra.mxu0 0.0
        %2577 = vmatprep.subr.mxu0 0.0
        %2578 = vmatpush1.xpose.msra.mxu0 0.0
        %2579 = vmatprep.subr.mxu0 0.0
        %2580 = vmatpush1.xpose.msra.mxu0 0.0
        %2581 = vmatprep.subr.mxu0 0.0
        %2582 = vmatpush1.xpose.msra.mxu0 0.0
        %2583 = vmatprep.subr.mxu0 0.0
        %2584 = vmatpush1.xpose.msra.mxu0 0.0
        %2585 = vmatprep.subr.mxu0 0.0
        %2586 = vmatpush1.xpose.msra.mxu0 0.0
        %2587 = vmatprep.subr.mxu0 0.0
        %2588 = vmatpush1.xpose.msra.mxu0 0.0
        %2589 = vmatprep.subr.mxu0 0.0
        %2590 = vmatpush1.xpose.msra.mxu0 0.0
        %2591 = vmatprep.subr.mxu0 0.0
        %2592 = vmatpush1.xpose.msra.mxu0 0.0
        %2593 = vmatprep.subr.mxu0 0.0
        %2594 = vmatpush1.xpose.msra.mxu0 0.0
        %2595 = vmatprep.subr.mxu0 0.0
        %2596 = vmatpush1.xpose.msra.mxu0 0.0
        %2597 = vmatprep.subr.mxu0 0.0
        %2598 = vmatpush1.xpose.msra.mxu0 0.0
        %2599 = vmatprep.subr.mxu0 0.0
        %2600 = vmatpush1.xpose.msra.mxu0 0.0
        %2601 = vmatprep.subr.mxu0 0.0
        %2602 = vmatpush1.xpose.msra.mxu0 0.0
        %2603 = vmatprep.subr.mxu0 0.0
        %2604 = vmatpush1.xpose.msra.mxu0 0.0
        %2605 = vmatprep.subr.mxu0 0.0
        %2606 = vmatpush1.xpose.msra.mxu0 0.0
        %2607 = vmatprep.subr.mxu0 0.0
        %2608 = vmatpush1.xpose.msra.mxu0 0.0
        %2609 = vmatprep.mubr.f32.mxu0 0.0
        %v2610 = vand.u32 %v2535, 4294901760
        %v2611 = vsub.f32 %v2535, %v2610
        %v2612 = vand.u32 %v2611, 4294901760
        %v2613 = vsub.f32 %v2611, %v2612
        %v2614 = vand.u32 %v2613, 4294901760
        %2615 = vmatmul.mubr.f32.gmra.mrb[0].mxu0 %v2614
        %v2616 = vpop.f32.mrb[0].mxu0
        %v2617 = vadd.f32 0.0, %v2616
        %v2618 = vpop.f32.mrb[0].mxu0
        %2619 = vmatprep.mubr.f32.mxu0 0.0
        %v2620 = vand.u32 %v2537, 4294901760
        %v2621 = vsub.f32 %v2537, %v2620
        %v2622 = vand.u32 %v2621, 4294901760
        %v2623 = vsub.f32 %v2621, %v2622
        %v2624 = vand.u32 %v2623, 4294901760
        %2625 = vmatmul.mubr.f32.gmra.mrb[0].mxu0 %v2624
        %v2626 = vpop.f32.mrb[0].mxu0
        %v2627 = vadd.f32 0.0, %v2626
        %v2628 = vpop.f32.mrb[0].mxu0
        %2629 = vdwg.mxu0
        %2630 = vmatprep.subr.mxu0 0.0
        %v2631 = vand.u32 %v2539, 4294901760
        %v2632 = vsub.f32 %v2539, %v2631
        %v2633 = vand.u32 %v2632, 4294901760
        %v2634 = vsub.f32 %v2632, %v2633
        %v2635 = vand.u32 %v2634, 4294901760
        %2636 = vmatpush1.xpose.msra.mxu0 %v2635
        %2637 = vmatprep.subr.mxu0 0.0
        %v2638 = vand.u32 %v2541, 4294901760
        %v2639 = vsub.f32 %v2541, %v2638
        %v2640 = vand.u32 %v2639, 4294901760
        %v2641 = vsub.f32 %v2639, %v2640
        %v2642 = vand.u32 %v2641, 4294901760
        %2643 = vmatpush1.xpose.msra.mxu0 %v2642
        %2644 = vmatprep.subr.mxu0 0.0
        %2645 = vmatpush1.xpose.msra.mxu0 0.0
        %2646 = vmatprep.subr.mxu0 0.0
        %2647 = vmatpush1.xpose.msra.mxu0 0.0
        %2648 = vmatprep.subr.mxu0 0.0
        %2649 = vmatpush1.xpose.msra.mxu0 0.0
        %2650 = vmatprep.subr.mxu0 0.0
        %2651 = vmatpush1.xpose.msra.mxu0 0.0
        %2652 = vmatprep.subr.mxu0 0.0
        %2653 = vmatpush1.xpose.msra.mxu0 0.0
        %2654 = vmatprep.subr.mxu0 0.0
        %2655 = vmatpush1.xpose.msra.mxu0 0.0
        %2656 = vmatprep.subr.mxu0 0.0
        %2657 = vmatpush1.xpose.msra.mxu0 0.0
        %2658 = vmatprep.subr.mxu0 0.0
        %2659 = vmatpush1.xpose.msra.mxu0 0.0
        %2660 = vmatprep.subr.mxu0 0.0
        %2661 = vmatpush1.xpose.msra.mxu0 0.0
        %2662 = vmatprep.subr.mxu0 0.0
        %2663 = vmatpush1.xpose.msra.mxu0 0.0
        %2664 = vmatprep.subr.mxu0 0.0
        %2665 = vmatpush1.xpose.msra.mxu0 0.0
        %2666 = vmatprep.subr.mxu0 0.0
        %2667 = vmatpush1.xpose.msra.mxu0 0.0
        %2668 = vmatprep.subr.mxu0 0.0
        %2669 = vmatpush1.xpose.msra.mxu0 0.0
        %2670 = vmatprep.subr.mxu0 0.0
        %2671 = vmatpush1.xpose.msra.mxu0 0.0
        %2672 = vmatprep.subr.mxu0 0.0
        %2673 = vmatpush1.xpose.msra.mxu0 0.0
        %2674 = vmatprep.subr.mxu0 0.0
        %2675 = vmatpush1.xpose.msra.mxu0 0.0
        %2676 = vmatprep.subr.mxu0 0.0
        %2677 = vmatpush1.xpose.msra.mxu0 0.0
        %2678 = vmatprep.subr.mxu0 0.0
        %2679 = vmatpush1.xpose.msra.mxu0 0.0
        %2680 = vmatprep.subr.mxu0 0.0
        %2681 = vmatpush1.xpose.msra.mxu0 0.0
        %2682 = vmatprep.subr.mxu0 0.0
        %2683 = vmatpush1.xpose.msra.mxu0 0.0
        %2684 = vmatprep.subr.mxu0 0.0
        %2685 = vmatpush1.xpose.msra.mxu0 0.0
        %2686 = vmatprep.subr.mxu0 0.0
        %2687 = vmatpush1.xpose.msra.mxu0 0.0
        %2688 = vmatprep.subr.mxu0 0.0
        %2689 = vmatpush1.xpose.msra.mxu0 0.0
        %2690 = vmatprep.subr.mxu0 0.0
        %2691 = vmatpush1.xpose.msra.mxu0 0.0
        %2692 = vmatprep.subr.mxu0 0.0
        %2693 = vmatpush1.xpose.msra.mxu0 0.0
        %2694 = vmatprep.subr.mxu0 0.0
        %2695 = vmatpush1.xpose.msra.mxu0 0.0
        %2696 = vmatprep.subr.mxu0 0.0
        %2697 = vmatpush1.xpose.msra.mxu0 0.0
        %2698 = vmatprep.subr.mxu0 0.0
        %2699 = vmatpush1.xpose.msra.mxu0 0.0
        %2700 = vmatprep.subr.mxu0 0.0
        %2701 = vmatpush1.xpose.msra.mxu0 0.0
        %2702 = vmatprep.subr.mxu0 0.0
        %2703 = vmatpush1.xpose.msra.mxu0 0.0
        %2704 = vmatprep.mubr.f32.mxu0 0.0
        %v2705 = vand.u32 %v2535, 4294901760
        %2706 = vmatmul.mubr.f32.gmra.mrb[0].mxu0 %v2705
        %v2707 = vpop.f32.mrb[0].mxu0
        %v2708 = vadd.f32 %v2617, %v2707
        %v2709 = vpop.f32.mrb[0].mxu0
        %2710 = vmatprep.mubr.f32.mxu0 0.0
        %v2711 = vand.u32 %v2537, 4294901760
        %2712 = vmatmul.mubr.f32.gmra.mrb[0].mxu0 %v2711
        %v2713 = vpop.f32.mrb[0].mxu0
        %v2714 = vadd.f32 %v2627, %v2713
        %v2715 = vpop.f32.mrb[0].mxu0
        %2716 = vdwg.mxu0
        %2717 = vmatprep.subr.mxu0 0.0
        %v2718 = vand.u32 %v2539, 4294901760
        %v2719 = vsub.f32 %v2539, %v2718
        %2720 = vmatpush1.xpose.msra.mxu0 %v2719
        %2721 = vmatprep.subr.mxu0 0.0
        %v2722 = vand.u32 %v2541, 4294901760
        %v2723 = vsub.f32 %v2541, %v2722
        %2724 = vmatpush1.xpose.msra.mxu0 %v2723
        %2725 = vmatprep.subr.mxu0 0.0
        %2726 = vmatpush1.xpose.msra.mxu0 0.0
        %2727 = vmatprep.subr.mxu0 0.0
        %2728 = vmatpush1.xpose.msra.mxu0 0.0
        %2729 = vmatprep.subr.mxu0 0.0
        %2730 = vmatpush1.xpose.msra.mxu0 0.0
        %2731 = vmatprep.subr.mxu0 0.0
        %2732 = vmatpush1.xpose.msra.mxu0 0.0
        %2733 = vmatprep.subr.mxu0 0.0
        %2734 = vmatpush1.xpose.msra.mxu0 0.0
        %2735 = vmatprep.subr.mxu0 0.0
        %2736 = vmatpush1.xpose.msra.mxu0 0.0
        %2737 = vmatprep.subr.mxu0 0.0
        %2738 = vmatpush1.xpose.msra.mxu0 0.0
        %2739 = vmatprep.subr.mxu0 0.0
        %2740 = vmatpush1.xpose.msra.mxu0 0.0
        %2741 = vmatprep.subr.mxu0 0.0
        %2742 = vmatpush1.xpose.msra.mxu0 0.0
        %2743 = vmatprep.subr.mxu0 0.0
        %2744 = vmatpush1.xpose.msra.mxu0 0.0
        %2745 = vmatprep.subr.mxu0 0.0
        %2746 = vmatpush1.xpose.msra.mxu0 0.0
        %2747 = vmatprep.subr.mxu0 0.0
        %2748 = vmatpush1.xpose.msra.mxu0 0.0
        %2749 = vmatprep.subr.mxu0 0.0
        %2750 = vmatpush1.xpose.msra.mxu0 0.0
        %2751 = vmatprep.subr.mxu0 0.0
        %2752 = vmatpush1.xpose.msra.mxu0 0.0
        %2753 = vmatprep.subr.mxu0 0.0
        %2754 = vmatpush1.xpose.msra.mxu0 0.0
        %2755 = vmatprep.subr.mxu0 0.0
        %2756 = vmatpush1.xpose.msra.mxu0 0.0
        %2757 = vmatprep.subr.mxu0 0.0
        %2758 = vmatpush1.xpose.msra.mxu0 0.0
        %2759 = vmatprep.subr.mxu0 0.0
        %2760 = vmatpush1.xpose.msra.mxu0 0.0
        %2761 = vmatprep.subr.mxu0 0.0
        %2762 = vmatpush1.xpose.msra.mxu0 0.0
        %2763 = vmatprep.subr.mxu0 0.0
        %2764 = vmatpush1.xpose.msra.mxu0 0.0
        %2765 = vmatprep.subr.mxu0 0.0
        %2766 = vmatpush1.xpose.msra.mxu0 0.0
        %2767 = vmatprep.subr.mxu0 0.0
        %2768 = vmatpush1.xpose.msra.mxu0 0.0
        %2769 = vmatprep.subr.mxu0 0.0
        %2770 = vmatpush1.xpose.msra.mxu0 0.0
        %2771 = vmatprep.subr.mxu0 0.0
        %2772 = vmatpush1.xpose.msra.mxu0 0.0
        %2773 = vmatprep.subr.mxu0 0.0
        %2774 = vmatpush1.xpose.msra.mxu0 0.0
        %2775 = vmatprep.subr.mxu0 0.0
        %2776 = vmatpush1.xpose.msra.mxu0 0.0
        %2777 = vmatprep.subr.mxu0 0.0
        %2778 = vmatpush1.xpose.msra.mxu0 0.0
        %2779 = vmatprep.subr.mxu0 0.0
        %2780 = vmatpush1.xpose.msra.mxu0 0.0
        %2781 = vmatprep.subr.mxu0 0.0
        %2782 = vmatpush1.xpose.msra.mxu0 0.0
        %2783 = vmatprep.subr.mxu0 0.0
        %2784 = vmatpush1.xpose.msra.mxu0 0.0
        %2785 = vmatprep.mubr.f32.mxu0 0.0
        %v2786 = vand.u32 %v2535, 4294901760
        %v2787 = vsub.f32 %v2535, %v2786
        %2788 = vmatmul.mubr.f32.gmra.mrb[0].mxu0 %v2787
        %v2789 = vpop.f32.mrb[0].mxu0
        %v2790 = vadd.f32 %v2708, %v2789
        %v2791 = vpop.f32.mrb[0].mxu0
        %2792 = vmatprep.mubr.f32.mxu0 0.0
        %v2793 = vand.u32 %v2537, 4294901760
        %v2794 = vsub.f32 %v2537, %v2793
        %2795 = vmatmul.mubr.f32.gmra.mrb[0].mxu0 %v2794
        %v2796 = vpop.f32.mrb[0].mxu0
        %v2797 = vadd.f32 %v2714, %v2796
        %v2798 = vpop.f32.mrb[0].mxu0
        %2799 = vdwg.mxu0
        %2800 = vmatprep.subr.mxu0 0.0
        %v2801 = vand.u32 %v2539, 4294901760
        %2802 = vmatpush1.xpose.msra.mxu0 %v2801
        %2803 = vmatprep.subr.mxu0 0.0
        %v2804 = vand.u32 %v2541, 4294901760
        %2805 = vmatpush1.xpose.msra.mxu0 %v2804
        %2806 = vmatprep.subr.mxu0 0.0
        %2807 = vmatpush1.xpose.msra.mxu0 0.0
        %2808 = vmatprep.subr.mxu0 0.0
        %2809 = vmatpush1.xpose.msra.mxu0 0.0
        %2810 = vmatprep.subr.mxu0 0.0
        %2811 = vmatpush1.xpose.msra.mxu0 0.0
        %2812 = vmatprep.subr.mxu0 0.0
        %2813 = vmatpush1.xpose.msra.mxu0 0.0
        %2814 = vmatprep.subr.mxu0 0.0
        %2815 = vmatpush1.xpose.msra.mxu0 0.0
        %2816 = vmatprep.subr.mxu0 0.0
        %2817 = vmatpush1.xpose.msra.mxu0 0.0
        %2818 = vmatprep.subr.mxu0 0.0
        %2819 = vmatpush1.xpose.msra.mxu0 0.0
        %2820 = vmatprep.subr.mxu0 0.0
        %2821 = vmatpush1.xpose.msra.mxu0 0.0
        %2822 = vmatprep.subr.mxu0 0.0
        %2823 = vmatpush1.xpose.msra.mxu0 0.0
        %2824 = vmatprep.subr.mxu0 0.0
        %2825 = vmatpush1.xpose.msra.mxu0 0.0
        %2826 = vmatprep.subr.mxu0 0.0
        %2827 = vmatpush1.xpose.msra.mxu0 0.0
        %2828 = vmatprep.subr.mxu0 0.0
        %2829 = vmatpush1.xpose.msra.mxu0 0.0
        %2830 = vmatprep.subr.mxu0 0.0
        %2831 = vmatpush1.xpose.msra.mxu0 0.0
        %2832 = vmatprep.subr.mxu0 0.0
        %2833 = vmatpush1.xpose.msra.mxu0 0.0
        %2834 = vmatprep.subr.mxu0 0.0
        %2835 = vmatpush1.xpose.msra.mxu0 0.0
        %2836 = vmatprep.subr.mxu0 0.0
        %2837 = vmatpush1.xpose.msra.mxu0 0.0
        %2838 = vmatprep.subr.mxu0 0.0
        %2839 = vmatpush1.xpose.msra.mxu0 0.0
        %2840 = vmatprep.subr.mxu0 0.0
        %2841 = vmatpush1.xpose.msra.mxu0 0.0
        %2842 = vmatprep.subr.mxu0 0.0
        %2843 = vmatpush1.xpose.msra.mxu0 0.0
        %2844 = vmatprep.subr.mxu0 0.0
        %2845 = vmatpush1.xpose.msra.mxu0 0.0
        %2846 = vmatprep.subr.mxu0 0.0
        %2847 = vmatpush1.xpose.msra.mxu0 0.0
        %2848 = vmatprep.subr.mxu0 0.0
        %2849 = vmatpush1.xpose.msra.mxu0 0.0
        %2850 = vmatprep.subr.mxu0 0.0
        %2851 = vmatpush1.xpose.msra.mxu0 0.0
        %2852 = vmatprep.subr.mxu0 0.0
        %2853 = vmatpush1.xpose.msra.mxu0 0.0
        %2854 = vmatprep.subr.mxu0 0.0
        %2855 = vmatpush1.xpose.msra.mxu0 0.0
        %2856 = vmatprep.subr.mxu0 0.0
        %2857 = vmatpush1.xpose.msra.mxu0 0.0
        %2858 = vmatprep.subr.mxu0 0.0
        %2859 = vmatpush1.xpose.msra.mxu0 0.0
        %2860 = vmatprep.subr.mxu0 0.0
        %2861 = vmatpush1.xpose.msra.mxu0 0.0
        %2862 = vmatprep.subr.mxu0 0.0
        %2863 = vmatpush1.xpose.msra.mxu0 0.0
        %2864 = vmatprep.subr.mxu0 0.0
        %2865 = vmatpush1.xpose.msra.mxu0 0.0
        %2866 = vmatprep.mubr.f32.mxu0 0.0
        %v2867 = vand.u32 %v2535, 4294901760
        %v2868 = vsub.f32 %v2535, %v2867
        %v2869 = vand.u32 %v2868, 4294901760
        %2870 = vmatmul.mubr.f32.gmra.mrb[0].mxu0 %v2869
        %v2871 = vpop.f32.mrb[0].mxu0
        %v2872 = vadd.f32 %v2790, %v2871
        %v2873 = vpop.f32.mrb[0].mxu0
        %2874 = vmatprep.mubr.f32.mxu0 0.0
        %v2875 = vand.u32 %v2537, 4294901760
        %v2876 = vsub.f32 %v2537, %v2875
        %v2877 = vand.u32 %v2876, 4294901760
        %2878 = vmatmul.mubr.f32.gmra.mrb[0].mxu0 %v2877
        %v2879 = vpop.f32.mrb[0].mxu0
        %v2880 = vadd.f32 %v2797, %v2879
        %v2881 = vpop.f32.mrb[0].mxu0
        %2882 = vdwg.mxu0
        %2883 = vmatprep.subr.mxu0 0.0
        %v2884 = vand.u32 %v2539, 4294901760
        %v2885 = vsub.f32 %v2539, %v2884
        %v2886 = vand.u32 %v2885, 4294901760
        %2887 = vmatpush1.xpose.msra.mxu0 %v2886
        %2888 = vmatprep.subr.mxu0 0.0
        %v2889 = vand.u32 %v2541, 4294901760
        %v2890 = vsub.f32 %v2541, %v2889
        %v2891 = vand.u32 %v2890, 4294901760
        %2892 = vmatpush1.xpose.msra.mxu0 %v2891
        %2893 = vmatprep.subr.mxu0 0.0
        %2894 = vmatpush1.xpose.msra.mxu0 0.0
        %2895 = vmatprep.subr.mxu0 0.0
        %2896 = vmatpush1.xpose.msra.mxu0 0.0
        %2897 = vmatprep.subr.mxu0 0.0
        %2898 = vmatpush1.xpose.msra.mxu0 0.0
        %2899 = vmatprep.subr.mxu0 0.0
        %2900 = vmatpush1.xpose.msra.mxu0 0.0
        %2901 = vmatprep.subr.mxu0 0.0
        %2902 = vmatpush1.xpose.msra.mxu0 0.0
        %2903 = vmatprep.subr.mxu0 0.0
        %2904 = vmatpush1.xpose.msra.mxu0 0.0
        %2905 = vmatprep.subr.mxu0 0.0
        %2906 = vmatpush1.xpose.msra.mxu0 0.0
        %2907 = vmatprep.subr.mxu0 0.0
        %2908 = vmatpush1.xpose.msra.mxu0 0.0
        %2909 = vmatprep.subr.mxu0 0.0
        %2910 = vmatpush1.xpose.msra.mxu0 0.0
        %2911 = vmatprep.subr.mxu0 0.0
        %2912 = vmatpush1.xpose.msra.mxu0 0.0
        %2913 = vmatprep.subr.mxu0 0.0
        %2914 = vmatpush1.xpose.msra.mxu0 0.0
        %2915 = vmatprep.subr.mxu0 0.0
        %2916 = vmatpush1.xpose.msra.mxu0 0.0
        %2917 = vmatprep.subr.mxu0 0.0
        %2918 = vmatpush1.xpose.msra.mxu0 0.0
        %2919 = vmatprep.subr.mxu0 0.0
        %2920 = vmatpush1.xpose.msra.mxu0 0.0
        %2921 = vmatprep.subr.mxu0 0.0
        %2922 = vmatpush1.xpose.msra.mxu0 0.0
        %2923 = vmatprep.subr.mxu0 0.0
        %2924 = vmatpush1.xpose.msra.mxu0 0.0
        %2925 = vmatprep.subr.mxu0 0.0
        %2926 = vmatpush1.xpose.msra.mxu0 0.0
        %2927 = vmatprep.subr.mxu0 0.0
        %2928 = vmatpush1.xpose.msra.mxu0 0.0
        %2929 = vmatprep.subr.mxu0 0.0
        %2930 = vmatpush1.xpose.msra.mxu0 0.0
        %2931 = vmatprep.subr.mxu0 0.0
        %2932 = vmatpush1.xpose.msra.mxu0 0.0
        %2933 = vmatprep.subr.mxu0 0.0
        %2934 = vmatpush1.xpose.msra.mxu0 0.0
        %2935 = vmatprep.subr.mxu0 0.0
        %2936 = vmatpush1.xpose.msra.mxu0 0.0
        %2937 = vmatprep.subr.mxu0 0.0
        %2938 = vmatpush1.xpose.msra.mxu0 0.0
        %2939 = vmatprep.subr.mxu0 0.0
        %2940 = vmatpush1.xpose.msra.mxu0 0.0
        %2941 = vmatprep.subr.mxu0 0.0
        %2942 = vmatpush1.xpose.msra.mxu0 0.0
        %2943 = vmatprep.subr.mxu0 0.0
        %2944 = vmatpush1.xpose.msra.mxu0 0.0
        %2945 = vmatprep.subr.mxu0 0.0
        %2946 = vmatpush1.xpose.msra.mxu0 0.0
        %2947 = vmatprep.subr.mxu0 0.0
        %2948 = vmatpush1.xpose.msra.mxu0 0.0
        %2949 = vmatprep.subr.mxu0 0.0
        %2950 = vmatpush1.xpose.msra.mxu0 0.0
        %2951 = vmatprep.subr.mxu0 0.0
        %2952 = vmatpush1.xpose.msra.mxu0 0.0
        %2953 = vmatprep.mubr.f32.mxu0 0.0
        %v2954 = vand.u32 %v2535, 4294901760
        %2955 = vmatmul.mubr.f32.gmra.mrb[0].mxu0 %v2954
        %v2956 = vpop.f32.mrb[0].mxu0
        %v2957 = vadd.f32 %v2872, %v2956
        %v2958 = vpop.f32.mrb[0].mxu0
        %2959 = vmatprep.mubr.f32.mxu0 0.0
        %v2960 = vand.u32 %v2537, 4294901760
        %2961 = vmatmul.mubr.f32.gmra.mrb[0].mxu0 %v2960
        %v2962 = vpop.f32.mrb[0].mxu0
        %v2963 = vadd.f32 %v2880, %v2962
        %v2964 = vpop.f32.mrb[0].mxu0
        %2965 = vdwg.mxu0
        %2966 = vmatprep.subr.mxu0 0.0
        %v2967 = vand.u32 %v2539, 4294901760
        %2968 = vmatpush1.xpose.msra.mxu0 %v2967
        %2969 = vmatprep.subr.mxu0 0.0
        %v2970 = vand.u32 %v2541, 4294901760
        %2971 = vmatpush1.xpose.msra.mxu0 %v2970
        %2972 = vmatprep.subr.mxu0 0.0
        %2973 = vmatpush1.xpose.msra.mxu0 0.0
        %2974 = vmatprep.subr.mxu0 0.0
        %2975 = vmatpush1.xpose.msra.mxu0 0.0
        %2976 = vmatprep.subr.mxu0 0.0
        %2977 = vmatpush1.xpose.msra.mxu0 0.0
        %2978 = vmatprep.subr.mxu0 0.0
        %2979 = vmatpush1.xpose.msra.mxu0 0.0
        %2980 = vmatprep.subr.mxu0 0.0
        %2981 = vmatpush1.xpose.msra.mxu0 0.0
        %2982 = vmatprep.subr.mxu0 0.0
        %2983 = vmatpush1.xpose.msra.mxu0 0.0
        %2984 = vmatprep.subr.mxu0 0.0
        %2985 = vmatpush1.xpose.msra.mxu0 0.0
        %2986 = vmatprep.subr.mxu0 0.0
        %2987 = vmatpush1.xpose.msra.mxu0 0.0
        %2988 = vmatprep.subr.mxu0 0.0
        %2989 = vmatpush1.xpose.msra.mxu0 0.0
        %2990 = vmatprep.subr.mxu0 0.0
        %2991 = vmatpush1.xpose.msra.mxu0 0.0
        %2992 = vmatprep.subr.mxu0 0.0
        %2993 = vmatpush1.xpose.msra.mxu0 0.0
        %2994 = vmatprep.subr.mxu0 0.0
        %2995 = vmatpush1.xpose.msra.mxu0 0.0
        %2996 = vmatprep.subr.mxu0 0.0
        %2997 = vmatpush1.xpose.msra.mxu0 0.0
        %2998 = vmatprep.subr.mxu0 0.0
        %2999 = vmatpush1.xpose.msra.mxu0 0.0
        %3000 = vmatprep.subr.mxu0 0.0
        %3001 = vmatpush1.xpose.msra.mxu0 0.0
        %3002 = vmatprep.subr.mxu0 0.0
        %3003 = vmatpush1.xpose.msra.mxu0 0.0
        %3004 = vmatprep.subr.mxu0 0.0
        %3005 = vmatpush1.xpose.msra.mxu0 0.0
        %3006 = vmatprep.subr.mxu0 0.0
        %3007 = vmatpush1.xpose.msra.mxu0 0.0
        %3008 = vmatprep.subr.mxu0 0.0
        %3009 = vmatpush1.xpose.msra.mxu0 0.0
        %3010 = vmatprep.subr.mxu0 0.0
        %3011 = vmatpush1.xpose.msra.mxu0 0.0
        %3012 = vmatprep.subr.mxu0 0.0
        %3013 = vmatpush1.xpose.msra.mxu0 0.0
        %3014 = vmatprep.subr.mxu0 0.0
        %3015 = vmatpush1.xpose.msra.mxu0 0.0
        %3016 = vmatprep.subr.mxu0 0.0
        %3017 = vmatpush1.xpose.msra.mxu0 0.0
        %3018 = vmatprep.subr.mxu0 0.0
        %3019 = vmatpush1.xpose.msra.mxu0 0.0
        %3020 = vmatprep.subr.mxu0 0.0
        %3021 = vmatpush1.xpose.msra.mxu0 0.0
        %3022 = vmatprep.subr.mxu0 0.0
        %3023 = vmatpush1.xpose.msra.mxu0 0.0
        %3024 = vmatprep.subr.mxu0 0.0
        %3025 = vmatpush1.xpose.msra.mxu0 0.0
        %3026 = vmatprep.subr.mxu0 0.0
        %3027 = vmatpush1.xpose.msra.mxu0 0.0
        %3028 = vmatprep.subr.mxu0 0.0
        %3029 = vmatpush1.xpose.msra.mxu0 0.0
        %3030 = vmatprep.subr.mxu0 0.0
        %3031 = vmatpush1.xpose.msra.mxu0 0.0
        %3032 = vmatprep.mubr.f32.mxu0 0.0
        %v3033 = vand.u32 %v2535, 4294901760
        %3034 = vmatmul.mubr.f32.gmra.mrb[0].mxu0 %v3033
        %v3035 = vpop.f32.mrb[0].mxu0
        %v3036 = vadd.f32 %v2957, %v3035
        %v3037 = vpop.f32.mrb[0].mxu0
        %3038 = vmatprep.mubr.f32.mxu0 0.0
        %v3039 = vand.u32 %v2537, 4294901760
        %3040 = vmatmul.mubr.f32.gmra.mrb[0].mxu0 %v3039
        %v3041 = vpop.f32.mrb[0].mxu0
        %v3042 = vadd.f32 %v2963, %v3041
        %v3043 = vpop.f32.mrb[0].mxu0
        %3044 = vdwg.mxu0
        %3045 = vrot.lane.b32.xlu0 %v1499, 96
        %v3046 = vpop.permute.xlu0 %3045
        %3047 = vrot.lane.b32.xlu0 %v1501, 96
        %v3048 = vpop.permute.xlu0 %3047
        %v3049 = vsel %vm1506, %v1499, 0
        %v3051 = vsel %vm1506, %v1501, 0
        %v3053 = vsel %vm1506, %v3046, 0
        %v3055 = vsel %vm1506, %v3048, 0
        %3057 = vmatprep.subr.mxu0 0.0
        %v3058 = vand.u32 %v3053, 4294901760
        %3059 = vmatpush1.xpose.msra.mxu0 %v3058
        %3060 = vmatprep.subr.mxu0 0.0
        %v3061 = vand.u32 %v3055, 4294901760
        %3062 = vmatpush1.xpose.msra.mxu0 %v3061
        %3063 = vmatprep.subr.mxu0 0.0
        %3064 = vmatpush1.xpose.msra.mxu0 0.0
        %3065 = vmatprep.subr.mxu0 0.0
        %3066 = vmatpush1.xpose.msra.mxu0 0.0
        %3067 = vmatprep.subr.mxu0 0.0
        %3068 = vmatpush1.xpose.msra.mxu0 0.0
        %3069 = vmatprep.subr.mxu0 0.0
        %3070 = vmatpush1.xpose.msra.mxu0 0.0
        %3071 = vmatprep.subr.mxu0 0.0
        %3072 = vmatpush1.xpose.msra.mxu0 0.0
        %3073 = vmatprep.subr.mxu0 0.0
        %3074 = vmatpush1.xpose.msra.mxu0 0.0
        %3075 = vmatprep.subr.mxu0 0.0
        %3076 = vmatpush1.xpose.msra.mxu0 0.0
        %3077 = vmatprep.subr.mxu0 0.0
        %3078 = vmatpush1.xpose.msra.mxu0 0.0
        %3079 = vmatprep.subr.mxu0 0.0
        %3080 = vmatpush1.xpose.msra.mxu0 0.0
        %3081 = vmatprep.subr.mxu0 0.0
        %3082 = vmatpush1.xpose.msra.mxu0 0.0
        %3083 = vmatprep.subr.mxu0 0.0
        %3084 = vmatpush1.xpose.msra.mxu0 0.0
        %3085 = vmatprep.subr.mxu0 0.0
        %3086 = vmatpush1.xpose.msra.mxu0 0.0
        %3087 = vmatprep.subr.mxu0 0.0
        %3088 = vmatpush1.xpose.msra.mxu0 0.0
        %3089 = vmatprep.subr.mxu0 0.0
        %3090 = vmatpush1.xpose.msra.mxu0 0.0
        %3091 = vmatprep.subr.mxu0 0.0
        %3092 = vmatpush1.xpose.msra.mxu0 0.0
        %3093 = vmatprep.subr.mxu0 0.0
        %3094 = vmatpush1.xpose.msra.mxu0 0.0
        %3095 = vmatprep.subr.mxu0 0.0
        %3096 = vmatpush1.xpose.msra.mxu0 0.0
        %3097 = vmatprep.subr.mxu0 0.0
        %3098 = vmatpush1.xpose.msra.mxu0 0.0
        %3099 = vmatprep.subr.mxu0 0.0
        %3100 = vmatpush1.xpose.msra.mxu0 0.0
        %3101 = vmatprep.subr.mxu0 0.0
        %3102 = vmatpush1.xpose.msra.mxu0 0.0
        %3103 = vmatprep.subr.mxu0 0.0
        %3104 = vmatpush1.xpose.msra.mxu0 0.0
        %3105 = vmatprep.subr.mxu0 0.0
        %3106 = vmatpush1.xpose.msra.mxu0 0.0
        %3107 = vmatprep.subr.mxu0 0.0
        %3108 = vmatpush1.xpose.msra.mxu0 0.0
        %3109 = vmatprep.subr.mxu0 0.0
        %3110 = vmatpush1.xpose.msra.mxu0 0.0
        %3111 = vmatprep.subr.mxu0 0.0
        %3112 = vmatpush1.xpose.msra.mxu0 0.0
        %3113 = vmatprep.subr.mxu0 0.0
        %3114 = vmatpush1.xpose.msra.mxu0 0.0
        %3115 = vmatprep.subr.mxu0 0.0
        %3116 = vmatpush1.xpose.msra.mxu0 0.0
        %3117 = vmatprep.subr.mxu0 0.0
        %3118 = vmatpush1.xpose.msra.mxu0 0.0
        %3119 = vmatprep.subr.mxu0 0.0
        %3120 = vmatpush1.xpose.msra.mxu0 0.0
        %3121 = vmatprep.subr.mxu0 0.0
        %3122 = vmatpush1.xpose.msra.mxu0 0.0
        %3123 = vmatprep.mubr.f32.mxu0 0.0
        %v3124 = vand.u32 %v3049, 4294901760
        %v3125 = vsub.f32 %v3049, %v3124
        %v3126 = vand.u32 %v3125, 4294901760
        %v3127 = vsub.f32 %v3125, %v3126
        %v3128 = vand.u32 %v3127, 4294901760
        %3129 = vmatmul.mubr.f32.gmra.mrb[0].mxu0 %v3128
        %v3130 = vpop.f32.mrb[0].mxu0
        %v3131 = vadd.f32 0.0, %v3130
        %v3132 = vpop.f32.mrb[0].mxu0
        %3133 = vmatprep.mubr.f32.mxu0 0.0
        %v3134 = vand.u32 %v3051, 4294901760
        %v3135 = vsub.f32 %v3051, %v3134
        %v3136 = vand.u32 %v3135, 4294901760
        %v3137 = vsub.f32 %v3135, %v3136
        %v3138 = vand.u32 %v3137, 4294901760
        %3139 = vmatmul.mubr.f32.gmra.mrb[0].mxu0 %v3138
        %v3140 = vpop.f32.mrb[0].mxu0
        %v3141 = vadd.f32 0.0, %v3140
        %v3142 = vpop.f32.mrb[0].mxu0
        %3143 = vdwg.mxu0
        %3144 = vmatprep.subr.mxu0 0.0
        %v3145 = vand.u32 %v3053, 4294901760
        %v3146 = vsub.f32 %v3053, %v3145
        %v3147 = vand.u32 %v3146, 4294901760
        %v3148 = vsub.f32 %v3146, %v3147
        %v3149 = vand.u32 %v3148, 4294901760
        %3150 = vmatpush1.xpose.msra.mxu0 %v3149
        %3151 = vmatprep.subr.mxu0 0.0
        %v3152 = vand.u32 %v3055, 4294901760
        %v3153 = vsub.f32 %v3055, %v3152
        %v3154 = vand.u32 %v3153, 4294901760
        %v3155 = vsub.f32 %v3153, %v3154
        %v3156 = vand.u32 %v3155, 4294901760
        %3157 = vmatpush1.xpose.msra.mxu0 %v3156
        %3158 = vmatprep.subr.mxu0 0.0
        %3159 = vmatpush1.xpose.msra.mxu0 0.0
        %3160 = vmatprep.subr.mxu0 0.0
        %3161 = vmatpush1.xpose.msra.mxu0 0.0
        %3162 = vmatprep.subr.mxu0 0.0
        %3163 = vmatpush1.xpose.msra.mxu0 0.0
        %3164 = vmatprep.subr.mxu0 0.0
        %3165 = vmatpush1.xpose.msra.mxu0 0.0
        %3166 = vmatprep.subr.mxu0 0.0
        %3167 = vmatpush1.xpose.msra.mxu0 0.0
        %3168 = vmatprep.subr.mxu0 0.0
        %3169 = vmatpush1.xpose.msra.mxu0 0.0
        %3170 = vmatprep.subr.mxu0 0.0
        %3171 = vmatpush1.xpose.msra.mxu0 0.0
        %3172 = vmatprep.subr.mxu0 0.0
        %3173 = vmatpush1.xpose.msra.mxu0 0.0
        %3174 = vmatprep.subr.mxu0 0.0
        %3175 = vmatpush1.xpose.msra.mxu0 0.0
        %3176 = vmatprep.subr.mxu0 0.0
        %3177 = vmatpush1.xpose.msra.mxu0 0.0
        %3178 = vmatprep.subr.mxu0 0.0
        %3179 = vmatpush1.xpose.msra.mxu0 0.0
        %3180 = vmatprep.subr.mxu0 0.0
        %3181 = vmatpush1.xpose.msra.mxu0 0.0
        %3182 = vmatprep.subr.mxu0 0.0
        %3183 = vmatpush1.xpose.msra.mxu0 0.0
        %3184 = vmatprep.subr.mxu0 0.0
        %3185 = vmatpush1.xpose.msra.mxu0 0.0
        %3186 = vmatprep.subr.mxu0 0.0
        %3187 = vmatpush1.xpose.msra.mxu0 0.0
        %3188 = vmatprep.subr.mxu0 0.0
        %3189 = vmatpush1.xpose.msra.mxu0 0.0
        %3190 = vmatprep.subr.mxu0 0.0
        %3191 = vmatpush1.xpose.msra.mxu0 0.0
        %3192 = vmatprep.subr.mxu0 0.0
        %3193 = vmatpush1.xpose.msra.mxu0 0.0
        %3194 = vmatprep.subr.mxu0 0.0
        %3195 = vmatpush1.xpose.msra.mxu0 0.0
        %3196 = vmatprep.subr.mxu0 0.0
        %3197 = vmatpush1.xpose.msra.mxu0 0.0
        %3198 = vmatprep.subr.mxu0 0.0
        %3199 = vmatpush1.xpose.msra.mxu0 0.0
        %3200 = vmatprep.subr.mxu0 0.0
        %3201 = vmatpush1.xpose.msra.mxu0 0.0
        %3202 = vmatprep.subr.mxu0 0.0
        %3203 = vmatpush1.xpose.msra.mxu0 0.0
        %3204 = vmatprep.subr.mxu0 0.0
        %3205 = vmatpush1.xpose.msra.mxu0 0.0
        %3206 = vmatprep.subr.mxu0 0.0
        %3207 = vmatpush1.xpose.msra.mxu0 0.0
        %3208 = vmatprep.subr.mxu0 0.0
        %3209 = vmatpush1.xpose.msra.mxu0 0.0
        %3210 = vmatprep.subr.mxu0 0.0
        %3211 = vmatpush1.xpose.msra.mxu0 0.0
        %3212 = vmatprep.subr.mxu0 0.0
        %3213 = vmatpush1.xpose.msra.mxu0 0.0
        %3214 = vmatprep.subr.mxu0 0.0
        %3215 = vmatpush1.xpose.msra.mxu0 0.0
        %3216 = vmatprep.subr.mxu0 0.0
        %3217 = vmatpush1.xpose.msra.mxu0 0.0
        %3218 = vmatprep.mubr.f32.mxu0 0.0
        %v3219 = vand.u32 %v3049, 4294901760
        %3220 = vmatmul.mubr.f32.gmra.mrb[0].mxu0 %v3219
        %v3221 = vpop.f32.mrb[0].mxu0
        %v3222 = vadd.f32 %v3131, %v3221
        %v3223 = vpop.f32.mrb[0].mxu0
        %3224 = vmatprep.mubr.f32.mxu0 0.0
        %v3225 = vand.u32 %v3051, 4294901760
        %3226 = vmatmul.mubr.f32.gmra.mrb[0].mxu0 %v3225
        %v3227 = vpop.f32.mrb[0].mxu0
        %v3228 = vadd.f32 %v3141, %v3227
        %v3229 = vpop.f32.mrb[0].mxu0
        %3230 = vdwg.mxu0
        %3231 = vmatprep.subr.mxu0 0.0
        %v3232 = vand.u32 %v3053, 4294901760
        %v3233 = vsub.f32 %v3053, %v3232
        %3234 = vmatpush1.xpose.msra.mxu0 %v3233
        %3235 = vmatprep.subr.mxu0 0.0
        %v3236 = vand.u32 %v3055, 4294901760
        %v3237 = vsub.f32 %v3055, %v3236
        %3238 = vmatpush1.xpose.msra.mxu0 %v3237
        %3239 = vmatprep.subr.mxu0 0.0
        %3240 = vmatpush1.xpose.msra.mxu0 0.0
        %3241 = vmatprep.subr.mxu0 0.0
        %3242 = vmatpush1.xpose.msra.mxu0 0.0
        %3243 = vmatprep.subr.mxu0 0.0
        %3244 = vmatpush1.xpose.msra.mxu0 0.0
        %3245 = vmatprep.subr.mxu0 0.0
        %3246 = vmatpush1.xpose.msra.mxu0 0.0
        %3247 = vmatprep.subr.mxu0 0.0
        %3248 = vmatpush1.xpose.msra.mxu0 0.0
        %3249 = vmatprep.subr.mxu0 0.0
        %3250 = vmatpush1.xpose.msra.mxu0 0.0
        %3251 = vmatprep.subr.mxu0 0.0
        %3252 = vmatpush1.xpose.msra.mxu0 0.0
        %3253 = vmatprep.subr.mxu0 0.0
        %3254 = vmatpush1.xpose.msra.mxu0 0.0
        %3255 = vmatprep.subr.mxu0 0.0
        %3256 = vmatpush1.xpose.msra.mxu0 0.0
        %3257 = vmatprep.subr.mxu0 0.0
        %3258 = vmatpush1.xpose.msra.mxu0 0.0
        %3259 = vmatprep.subr.mxu0 0.0
        %3260 = vmatpush1.xpose.msra.mxu0 0.0
        %3261 = vmatprep.subr.mxu0 0.0
        %3262 = vmatpush1.xpose.msra.mxu0 0.0
        %3263 = vmatprep.subr.mxu0 0.0
        %3264 = vmatpush1.xpose.msra.mxu0 0.0
        %3265 = vmatprep.subr.mxu0 0.0
        %3266 = vmatpush1.xpose.msra.mxu0 0.0
        %3267 = vmatprep.subr.mxu0 0.0
        %3268 = vmatpush1.xpose.msra.mxu0 0.0
        %3269 = vmatprep.subr.mxu0 0.0
        %3270 = vmatpush1.xpose.msra.mxu0 0.0
        %3271 = vmatprep.subr.mxu0 0.0
        %3272 = vmatpush1.xpose.msra.mxu0 0.0
        %3273 = vmatprep.subr.mxu0 0.0
        %3274 = vmatpush1.xpose.msra.mxu0 0.0
        %3275 = vmatprep.subr.mxu0 0.0
        %3276 = vmatpush1.xpose.msra.mxu0 0.0
        %3277 = vmatprep.subr.mxu0 0.0
        %3278 = vmatpush1.xpose.msra.mxu0 0.0
        %3279 = vmatprep.subr.mxu0 0.0
        %3280 = vmatpush1.xpose.msra.mxu0 0.0
        %3281 = vmatprep.subr.mxu0 0.0
        %3282 = vmatpush1.xpose.msra.mxu0 0.0
        %3283 = vmatprep.subr.mxu0 0.0
        %3284 = vmatpush1.xpose.msra.mxu0 0.0
        %3285 = vmatprep.subr.mxu0 0.0
        %3286 = vmatpush1.xpose.msra.mxu0 0.0
        %3287 = vmatprep.subr.mxu0 0.0
        %3288 = vmatpush1.xpose.msra.mxu0 0.0
        %3289 = vmatprep.subr.mxu0 0.0
        %3290 = vmatpush1.xpose.msra.mxu0 0.0
        %3291 = vmatprep.subr.mxu0 0.0
        %3292 = vmatpush1.xpose.msra.mxu0 0.0
        %3293 = vmatprep.subr.mxu0 0.0
        %3294 = vmatpush1.xpose.msra.mxu0 0.0
        %3295 = vmatprep.subr.mxu0 0.0
        %3296 = vmatpush1.xpose.msra.mxu0 0.0
        %3297 = vmatprep.subr.mxu0 0.0
        %3298 = vmatpush1.xpose.msra.mxu0 0.0
        %3299 = vmatprep.mubr.f32.mxu0 0.0
        %v3300 = vand.u32 %v3049, 4294901760
        %v3301 = vsub.f32 %v3049, %v3300
        %3302 = vmatmul.mubr.f32.gmra.mrb[0].mxu0 %v3301
        %v3303 = vpop.f32.mrb[0].mxu0
        %v3304 = vadd.f32 %v3222, %v3303
        %v3305 = vpop.f32.mrb[0].mxu0
        %3306 = vmatprep.mubr.f32.mxu0 0.0
        %v3307 = vand.u32 %v3051, 4294901760
        %v3308 = vsub.f32 %v3051, %v3307
        %3309 = vmatmul.mubr.f32.gmra.mrb[0].mxu0 %v3308
        %v3310 = vpop.f32.mrb[0].mxu0
        %v3311 = vadd.f32 %v3228, %v3310
        %v3312 = vpop.f32.mrb[0].mxu0
        %3313 = vdwg.mxu0
        %3314 = vmatprep.subr.mxu0 0.0
        %v3315 = vand.u32 %v3053, 4294901760
        %3316 = vmatpush1.xpose.msra.mxu0 %v3315
        %3317 = vmatprep.subr.mxu0 0.0
        %v3318 = vand.u32 %v3055, 4294901760
        %3319 = vmatpush1.xpose.msra.mxu0 %v3318
        %3320 = vmatprep.subr.mxu0 0.0
        %3321 = vmatpush1.xpose.msra.mxu0 0.0
        %3322 = vmatprep.subr.mxu0 0.0
        %3323 = vmatpush1.xpose.msra.mxu0 0.0
        %3324 = vmatprep.subr.mxu0 0.0
        %3325 = vmatpush1.xpose.msra.mxu0 0.0
        %3326 = vmatprep.subr.mxu0 0.0
        %3327 = vmatpush1.xpose.msra.mxu0 0.0
        %3328 = vmatprep.subr.mxu0 0.0
        %3329 = vmatpush1.xpose.msra.mxu0 0.0
        %3330 = vmatprep.subr.mxu0 0.0
        %3331 = vmatpush1.xpose.msra.mxu0 0.0
        %3332 = vmatprep.subr.mxu0 0.0
        %3333 = vmatpush1.xpose.msra.mxu0 0.0
        %3334 = vmatprep.subr.mxu0 0.0
        %3335 = vmatpush1.xpose.msra.mxu0 0.0
        %3336 = vmatprep.subr.mxu0 0.0
        %3337 = vmatpush1.xpose.msra.mxu0 0.0
        %3338 = vmatprep.subr.mxu0 0.0
        %3339 = vmatpush1.xpose.msra.mxu0 0.0
        %3340 = vmatprep.subr.mxu0 0.0
        %3341 = vmatpush1.xpose.msra.mxu0 0.0
        %3342 = vmatprep.subr.mxu0 0.0
        %3343 = vmatpush1.xpose.msra.mxu0 0.0
        %3344 = vmatprep.subr.mxu0 0.0
        %3345 = vmatpush1.xpose.msra.mxu0 0.0
        %3346 = vmatprep.subr.mxu0 0.0
        %3347 = vmatpush1.xpose.msra.mxu0 0.0
        %3348 = vmatprep.subr.mxu0 0.0
        %3349 = vmatpush1.xpose.msra.mxu0 0.0
        %3350 = vmatprep.subr.mxu0 0.0
        %3351 = vmatpush1.xpose.msra.mxu0 0.0
        %3352 = vmatprep.subr.mxu0 0.0
        %3353 = vmatpush1.xpose.msra.mxu0 0.0
        %3354 = vmatprep.subr.mxu0 0.0
        %3355 = vmatpush1.xpose.msra.mxu0 0.0
        %3356 = vmatprep.subr.mxu0 0.0
        %3357 = vmatpush1.xpose.msra.mxu0 0.0
        %3358 = vmatprep.subr.mxu0 0.0
        %3359 = vmatpush1.xpose.msra.mxu0 0.0
        %3360 = vmatprep.subr.mxu0 0.0
        %3361 = vmatpush1.xpose.msra.mxu0 0.0
        %3362 = vmatprep.subr.mxu0 0.0
        %3363 = vmatpush1.xpose.msra.mxu0 0.0
        %3364 = vmatprep.subr.mxu0 0.0
        %3365 = vmatpush1.xpose.msra.mxu0 0.0
        %3366 = vmatprep.subr.mxu0 0.0
        %3367 = vmatpush1.xpose.msra.mxu0 0.0
        %3368 = vmatprep.subr.mxu0 0.0
        %3369 = vmatpush1.xpose.msra.mxu0 0.0
        %3370 = vmatprep.subr.mxu0 0.0
        %3371 = vmatpush1.xpose.msra.mxu0 0.0
        %3372 = vmatprep.subr.mxu0 0.0
        %3373 = vmatpush1.xpose.msra.mxu0 0.0
        %3374 = vmatprep.subr.mxu0 0.0
        %3375 = vmatpush1.xpose.msra.mxu0 0.0
        %3376 = vmatprep.subr.mxu0 0.0
        %3377 = vmatpush1.xpose.msra.mxu0 0.0
        %3378 = vmatprep.subr.mxu0 0.0
        %3379 = vmatpush1.xpose.msra.mxu0 0.0
        %3380 = vmatprep.mubr.f32.mxu0 0.0
        %v3381 = vand.u32 %v3049, 4294901760
        %v3382 = vsub.f32 %v3049, %v3381
        %v3383 = vand.u32 %v3382, 4294901760
        %3384 = vmatmul.mubr.f32.gmra.mrb[0].mxu0 %v3383
        %v3385 = vpop.f32.mrb[0].mxu0
        %v3386 = vadd.f32 %v3304, %v3385
        %v3387 = vpop.f32.mrb[0].mxu0
        %3388 = vmatprep.mubr.f32.mxu0 0.0
        %v3389 = vand.u32 %v3051, 4294901760
        %v3390 = vsub.f32 %v3051, %v3389
        %v3391 = vand.u32 %v3390, 4294901760
        %3392 = vmatmul.mubr.f32.gmra.mrb[0].mxu0 %v3391
        %v3393 = vpop.f32.mrb[0].mxu0
        %v3394 = vadd.f32 %v3311, %v3393
        %v3395 = vpop.f32.mrb[0].mxu0
        %3396 = vdwg.mxu0
        %3397 = vmatprep.subr.mxu0 0.0
        %v3398 = vand.u32 %v3053, 4294901760
        %v3399 = vsub.f32 %v3053, %v3398
        %v3400 = vand.u32 %v3399, 4294901760
        %3401 = vmatpush1.xpose.msra.mxu0 %v3400
        %3402 = vmatprep.subr.mxu0 0.0
        %v3403 = vand.u32 %v3055, 4294901760
        %v3404 = vsub.f32 %v3055, %v3403
        %v3405 = vand.u32 %v3404, 4294901760
        %3406 = vmatpush1.xpose.msra.mxu0 %v3405
        %3407 = vmatprep.subr.mxu0 0.0
        %3408 = vmatpush1.xpose.msra.mxu0 0.0
        %3409 = vmatprep.subr.mxu0 0.0
        %3410 = vmatpush1.xpose.msra.mxu0 0.0
        %3411 = vmatprep.subr.mxu0 0.0
        %3412 = vmatpush1.xpose.msra.mxu0 0.0
        %3413 = vmatprep.subr.mxu0 0.0
        %3414 = vmatpush1.xpose.msra.mxu0 0.0
        %3415 = vmatprep.subr.mxu0 0.0
        %3416 = vmatpush1.xpose.msra.mxu0 0.0
        %3417 = vmatprep.subr.mxu0 0.0
        %3418 = vmatpush1.xpose.msra.mxu0 0.0
        %3419 = vmatprep.subr.mxu0 0.0
        %3420 = vmatpush1.xpose.msra.mxu0 0.0
        %3421 = vmatprep.subr.mxu0 0.0
        %3422 = vmatpush1.xpose.msra.mxu0 0.0
        %3423 = vmatprep.subr.mxu0 0.0
        %3424 = vmatpush1.xpose.msra.mxu0 0.0
        %3425 = vmatprep.subr.mxu0 0.0
        %3426 = vmatpush1.xpose.msra.mxu0 0.0
        %3427 = vmatprep.subr.mxu0 0.0
        %3428 = vmatpush1.xpose.msra.mxu0 0.0
        %3429 = vmatprep.subr.mxu0 0.0
        %3430 = vmatpush1.xpose.msra.mxu0 0.0
        %3431 = vmatprep.subr.mxu0 0.0
        %3432 = vmatpush1.xpose.msra.mxu0 0.0
        %3433 = vmatprep.subr.mxu0 0.0
        %3434 = vmatpush1.xpose.msra.mxu0 0.0
        %3435 = vmatprep.subr.mxu0 0.0
        %3436 = vmatpush1.xpose.msra.mxu0 0.0
        %3437 = vmatprep.subr.mxu0 0.0
        %3438 = vmatpush1.xpose.msra.mxu0 0.0
        %3439 = vmatprep.subr.mxu0 0.0
        %3440 = vmatpush1.xpose.msra.mxu0 0.0
        %3441 = vmatprep.subr.mxu0 0.0
        %3442 = vmatpush1.xpose.msra.mxu0 0.0
        %3443 = vmatprep.subr.mxu0 0.0
        %3444 = vmatpush1.xpose.msra.mxu0 0.0
        %3445 = vmatprep.subr.mxu0 0.0
        %3446 = vmatpush1.xpose.msra.mxu0 0.0
        %3447 = vmatprep.subr.mxu0 0.0
        %3448 = vmatpush1.xpose.msra.mxu0 0.0
        %3449 = vmatprep.subr.mxu0 0.0
        %3450 = vmatpush1.xpose.msra.mxu0 0.0
        %3451 = vmatprep.subr.mxu0 0.0
        %3452 = vmatpush1.xpose.msra.mxu0 0.0
        %3453 = vmatprep.subr.mxu0 0.0
        %3454 = vmatpush1.xpose.msra.mxu0 0.0
        %3455 = vmatprep.subr.mxu0 0.0
        %3456 = vmatpush1.xpose.msra.mxu0 0.0
        %3457 = vmatprep.subr.mxu0 0.0
        %3458 = vmatpush1.xpose.msra.mxu0 0.0
        %3459 = vmatprep.subr.mxu0 0.0
        %3460 = vmatpush1.xpose.msra.mxu0 0.0
        %3461 = vmatprep.subr.mxu0 0.0
        %3462 = vmatpush1.xpose.msra.mxu0 0.0
        %3463 = vmatprep.subr.mxu0 0.0
        %3464 = vmatpush1.xpose.msra.mxu0 0.0
        %3465 = vmatprep.subr.mxu0 0.0
        %3466 = vmatpush1.xpose.msra.mxu0 0.0
        %3467 = vmatprep.mubr.f32.mxu0 0.0
        %v3468 = vand.u32 %v3049, 4294901760
        %3469 = vmatmul.mubr.f32.gmra.mrb[0].mxu0 %v3468
        %v3470 = vpop.f32.mrb[0].mxu0
        %v3471 = vadd.f32 %v3386, %v3470
        %v3472 = vpop.f32.mrb[0].mxu0
        %3473 = vmatprep.mubr.f32.mxu0 0.0
        %v3474 = vand.u32 %v3051, 4294901760
        %3475 = vmatmul.mubr.f32.gmra.mrb[0].mxu0 %v3474
        %v3476 = vpop.f32.mrb[0].mxu0
        %v3477 = vadd.f32 %v3394, %v3476
        %v3478 = vpop.f32.mrb[0].mxu0
        %3479 = vdwg.mxu0
        %3480 = vmatprep.subr.mxu0 0.0
        %v3481 = vand.u32 %v3053, 4294901760
        %3482 = vmatpush1.xpose.msra.mxu0 %v3481
        %3483 = vmatprep.subr.mxu0 0.0
        %v3484 = vand.u32 %v3055, 4294901760
        %3485 = vmatpush1.xpose.msra.mxu0 %v3484
        %3486 = vmatprep.subr.mxu0 0.0
        %3487 = vmatpush1.xpose.msra.mxu0 0.0
        %3488 = vmatprep.subr.mxu0 0.0
        %3489 = vmatpush1.xpose.msra.mxu0 0.0
        %3490 = vmatprep.subr.mxu0 0.0
        %3491 = vmatpush1.xpose.msra.mxu0 0.0
        %3492 = vmatprep.subr.mxu0 0.0
        %3493 = vmatpush1.xpose.msra.mxu0 0.0
        %3494 = vmatprep.subr.mxu0 0.0
        %3495 = vmatpush1.xpose.msra.mxu0 0.0
        %3496 = vmatprep.subr.mxu0 0.0
        %3497 = vmatpush1.xpose.msra.mxu0 0.0
        %3498 = vmatprep.subr.mxu0 0.0
        %3499 = vmatpush1.xpose.msra.mxu0 0.0
        %3500 = vmatprep.subr.mxu0 0.0
        %3501 = vmatpush1.xpose.msra.mxu0 0.0
        %3502 = vmatprep.subr.mxu0 0.0
        %3503 = vmatpush1.xpose.msra.mxu0 0.0
        %3504 = vmatprep.subr.mxu0 0.0
        %3505 = vmatpush1.xpose.msra.mxu0 0.0
        %3506 = vmatprep.subr.mxu0 0.0
        %3507 = vmatpush1.xpose.msra.mxu0 0.0
        %3508 = vmatprep.subr.mxu0 0.0
        %3509 = vmatpush1.xpose.msra.mxu0 0.0
        %3510 = vmatprep.subr.mxu0 0.0
        %3511 = vmatpush1.xpose.msra.mxu0 0.0
        %3512 = vmatprep.subr.mxu0 0.0
        %3513 = vmatpush1.xpose.msra.mxu0 0.0
        %3514 = vmatprep.subr.mxu0 0.0
        %3515 = vmatpush1.xpose.msra.mxu0 0.0
        %3516 = vmatprep.subr.mxu0 0.0
        %3517 = vmatpush1.xpose.msra.mxu0 0.0
        %3518 = vmatprep.subr.mxu0 0.0
        %3519 = vmatpush1.xpose.msra.mxu0 0.0
        %3520 = vmatprep.subr.mxu0 0.0
        %3521 = vmatpush1.xpose.msra.mxu0 0.0
        %3522 = vmatprep.subr.mxu0 0.0
        %3523 = vmatpush1.xpose.msra.mxu0 0.0
        %3524 = vmatprep.subr.mxu0 0.0
        %3525 = vmatpush1.xpose.msra.mxu0 0.0
        %3526 = vmatprep.subr.mxu0 0.0
        %3527 = vmatpush1.xpose.msra.mxu0 0.0
        %3528 = vmatprep.subr.mxu0 0.0
        %3529 = vmatpush1.xpose.msra.mxu0 0.0
        %3530 = vmatprep.subr.mxu0 0.0
        %3531 = vmatpush1.xpose.msra.mxu0 0.0
        %3532 = vmatprep.subr.mxu0 0.0
        %3533 = vmatpush1.xpose.msra.mxu0 0.0
        %3534 = vmatprep.subr.mxu0 0.0
        %3535 = vmatpush1.xpose.msra.mxu0 0.0
        %3536 = vmatprep.subr.mxu0 0.0
        %3537 = vmatpush1.xpose.msra.mxu0 0.0
        %3538 = vmatprep.subr.mxu0 0.0
        %3539 = vmatpush1.xpose.msra.mxu0 0.0
        %3540 = vmatprep.subr.mxu0 0.0
        %3541 = vmatpush1.xpose.msra.mxu0 0.0
        %3542 = vmatprep.subr.mxu0 0.0
        %3543 = vmatpush1.xpose.msra.mxu0 0.0
        %3544 = vmatprep.subr.mxu0 0.0
        %3545 = vmatpush1.xpose.msra.mxu0 0.0
        %3546 = vmatprep.mubr.f32.mxu0 0.0
        %v3547 = vand.u32 %v3049, 4294901760
        %3548 = vmatmul.mubr.f32.gmra.mrb[0].mxu0 %v3547
        %v3549 = vpop.f32.mrb[0].mxu0
        %v3550 = vadd.f32 %v3471, %v3549
        %v3551 = vpop.f32.mrb[0].mxu0
        %3552 = vmatprep.mubr.f32.mxu0 0.0
        %v3553 = vand.u32 %v3051, 4294901760
        %3554 = vmatmul.mubr.f32.gmra.mrb[0].mxu0 %v3553
        %v3555 = vpop.f32.mrb[0].mxu0
        %v3556 = vadd.f32 %v3477, %v3555
        %v3557 = vpop.f32.mrb[0].mxu0
        %3558 = vdwg.mxu0
        %vm3559 = vcmask 97280
        %v3560 = vsel %vm3559, %v2008, -inf
        %3561 = vmax.xlane.f32.xlu0 %v3560
        %v3562 = vpop.xlane.xlu0 %3561
        %vm3563 = vcmask 93184
        %v3564 = vsel %vm3563, %v2014, -inf
        %3565 = vmax.xlane.f32.xlu0 %v3564
        %v3566 = vpop.xlane.xlu0 %3565
        %v3567 = vsel %vm3559, %v2522, -inf
        %3568 = vmax.xlane.f32.xlu0 %v3567
        %v3569 = vpop.xlane.xlu0 %3568
        %v3570 = vsel %vm3563, %v2528, -inf
        %3571 = vmax.xlane.f32.xlu0 %v3570
        %v3572 = vpop.xlane.xlu0 %3571
        %v3573 = vsel %vm3559, %v3036, -inf
        %3574 = vmax.xlane.f32.xlu0 %v3573
        %v3575 = vpop.xlane.xlu0 %3574
        %v3576 = vsel %vm3563, %v3042, -inf
        %3577 = vmax.xlane.f32.xlu0 %v3576
        %v3578 = vpop.xlane.xlu0 %3577
        %v3579 = vsel %vm3559, %v3550, -inf
        %3580 = vmax.xlane.f32.xlu0 %v3579
        %v3581 = vpop.xlane.xlu0 %3580
        %v3582 = vsel %vm3563, %v3556, -inf
        %3583 = vmax.xlane.f32.xlu0 %v3582
        %v3584 = vpop.xlane.xlu0 %3583
        %v3585 = vsub.f32 %v2008, %v3562
        %v3586 = vsub.f32 %v2014, %v3566
        %v3587 = vsub.f32 %v2522, %v3569
        %v3588 = vsub.f32 %v2528, %v3572
        %v3589 = vsub.f32 %v3036, %v3575
        %v3590 = vsub.f32 %v3042, %v3578
        %v3591 = vsub.f32 %v3550, %v3581
        %v3592 = vsub.f32 %v3556, %v3584
        %v3593 = vmul.f32 %v3585, 1.442695
        %v3594 = vpow.pop %v3593
        %v3595 = vmul.f32 %v3586, 1.442695
        %v3596 = vpow.pop %v3595
        %v3597 = vmul.f32 %v3587, 1.442695
        %v3598 = vpow.pop %v3597
        %v3599 = vmul.f32 %v3588, 1.442695
        %v3600 = vpow.pop %v3599
        %v3601 = vmul.f32 %v3589, 1.442695
        %v3602 = vpow.pop %v3601
        %v3603 = vmul.f32 %v3590, 1.442695
        %v3604 = vpow.pop %v3603
        %v3605 = vmul.f32 %v3591, 1.442695
        %v3606 = vpow.pop %v3605
        %v3607 = vmul.f32 %v3592, 1.442695
        %v3608 = vpow.pop %v3607
        %v3609 = vsel %vm3559, %v3594, 0.0
        %3610 = vadd.xlane.f32.xlu0 %v3609
        %v3611 = vpop.xlane.xlu0 %3610
        %v3612 = vsel %vm3563, %v3596, 0.0
        %3613 = vadd.xlane.f32.xlu0 %v3612
        %v3614 = vpop.xlane.xlu0 %3613
        %v3615 = vsel %vm3559, %v3598, 0.0
        %3616 = vadd.xlane.f32.xlu0 %v3615
        %v3617 = vpop.xlane.xlu0 %3616
        %v3618 = vsel %vm3563, %v3600, 0.0
        %3619 = vadd.xlane.f32.xlu0 %v3618
        %v3620 = vpop.xlane.xlu0 %3619
        %v3621 = vsel %vm3559, %v3602, 0.0
        %3622 = vadd.xlane.f32.xlu0 %v3621
        %v3623 = vpop.xlane.xlu0 %3622
        %v3624 = vsel %vm3563, %v3604, 0.0
        %3625 = vadd.xlane.f32.xlu0 %v3624
        %v3626 = vpop.xlane.xlu0 %3625
        %v3627 = vsel %vm3559, %v3606, 0.0
        %3628 = vadd.xlane.f32.xlu0 %v3627
        %v3629 = vpop.xlane.xlu0 %3628
        %v3630 = vsel %vm3563, %v3608, 0.0
        %3631 = vadd.xlane.f32.xlu0 %v3630
        %v3632 = vpop.xlane.xlu0 %3631
        %3633 = vrot.lane.b32.xlu0 %v1479, 64
        %v3634 = vpop.permute.xlu0 %3633
        %3635 = vrot.lane.b32.xlu0 %v1485, 64
        %v3636 = vpop.permute.xlu0 %3635
        %v3639 = vsel %vm3559, %v3594, 0
        %v3642 = vsel %vm3559, %v3596, 0
        %vm3644 = vcmask 1043456
        %v3645 = vsel %vm3644, %v3636, 0
        %3647 = vmatprep.subr.mxu0 0.0
        %v3648 = vand.u32 %v3634, 4294901760
        %3649 = vmatpush1.msra.mxu0 %v3648
        %3650 = vmatprep.subr.mxu0 0.0
        %v3651 = vand.u32 %v3645, 4294901760
        %3652 = vmatpush1.msra.mxu0 %v3651
        %3653 = vmatprep.subr.mxu0 0.0
        %3654 = vmatpush1.msra.mxu0 0.0
        %3655 = vmatprep.subr.mxu0 0.0
        %3656 = vmatpush1.msra.mxu0 0.0
        %3657 = vmatprep.subr.mxu0 0.0
        %3658 = vmatpush1.msra.mxu0 0.0
        %3659 = vmatprep.subr.mxu0 0.0
        %3660 = vmatpush1.msra.mxu0 0.0
        %3661 = vmatprep.subr.mxu0 0.0
        %3662 = vmatpush1.msra.mxu0 0.0
        %3663 = vmatprep.subr.mxu0 0.0
        %3664 = vmatpush1.msra.mxu0 0.0
        %3665 = vmatprep.subr.mxu0 0.0
        %3666 = vmatpush1.msra.mxu0 0.0
        %3667 = vmatprep.subr.mxu0 0.0
        %3668 = vmatpush1.msra.mxu0 0.0
        %3669 = vmatprep.subr.mxu0 0.0
        %3670 = vmatpush1.msra.mxu0 0.0
        %3671 = vmatprep.subr.mxu0 0.0
        %3672 = vmatpush1.msra.mxu0 0.0
        %3673 = vmatprep.subr.mxu0 0.0
        %3674 = vmatpush1.msra.mxu0 0.0
        %3675 = vmatprep.subr.mxu0 0.0
        %3676 = vmatpush1.msra.mxu0 0.0
        %3677 = vmatprep.subr.mxu0 0.0
        %3678 = vmatpush1.msra.mxu0 0.0
        %3679 = vmatprep.subr.mxu0 0.0
        %3680 = vmatpush1.msra.mxu0 0.0
        %3681 = vmatprep.subr.mxu0 0.0
        %3682 = vmatpush1.msra.mxu0 0.0
        %3683 = vmatprep.subr.mxu0 0.0
        %3684 = vmatpush1.msra.mxu0 0.0
        %3685 = vmatprep.subr.mxu0 0.0
        %3686 = vmatpush1.msra.mxu0 0.0
        %3687 = vmatprep.subr.mxu0 0.0
        %3688 = vmatpush1.msra.mxu0 0.0
        %3689 = vmatprep.subr.mxu0 0.0
        %3690 = vmatpush1.msra.mxu0 0.0
        %3691 = vmatprep.subr.mxu0 0.0
        %3692 = vmatpush1.msra.mxu0 0.0
        %3693 = vmatprep.subr.mxu0 0.0
        %3694 = vmatpush1.msra.mxu0 0.0
        %3695 = vmatprep.subr.mxu0 0.0
        %3696 = vmatpush1.msra.mxu0 0.0
        %3697 = vmatprep.subr.mxu0 0.0
        %3698 = vmatpush1.msra.mxu0 0.0
        %3699 = vmatprep.subr.mxu0 0.0
        %3700 = vmatpush1.msra.mxu0 0.0
        %3701 = vmatprep.subr.mxu0 0.0
        %3702 = vmatpush1.msra.mxu0 0.0
        %3703 = vmatprep.subr.mxu0 0.0
        %3704 = vmatpush1.msra.mxu0 0.0
        %3705 = vmatprep.subr.mxu0 0.0
        %3706 = vmatpush1.msra.mxu0 0.0
        %3707 = vmatprep.subr.mxu0 0.0
        %3708 = vmatpush1.msra.mxu0 0.0
        %3709 = vmatprep.subr.mxu0 0.0
        %3710 = vmatpush1.msra.mxu0 0.0
        %3711 = vmatprep.subr.mxu0 0.0
        %3712 = vmatpush1.msra.mxu0 0.0
        %3713 = vmatprep.mubr.f32.mxu0 0.0
        %v3714 = vand.u32 %v3639, 4294901760
        %v3715 = vsub.f32 %v3639, %v3714
        %v3716 = vand.u32 %v3715, 4294901760
        %v3717 = vsub.f32 %v3715, %v3716
        %v3718 = vand.u32 %v3717, 4294901760
        %3719 = vmatmul.mubr.f32.gmra.mrb[0].mxu0 %v3718
        %v3720 = vpop.f32.mrb[0].mxu0
        %v3721 = vadd.f32 0.0, %v3720
        %v3722 = vpop.f32.mrb[0].mxu0
        %3723 = vmatprep.mubr.f32.mxu0 0.0
        %v3724 = vand.u32 %v3642, 4294901760
        %v3725 = vsub.f32 %v3642, %v3724
        %v3726 = vand.u32 %v3725, 4294901760
        %v3727 = vsub.f32 %v3725, %v3726
        %v3728 = vand.u32 %v3727, 4294901760
        %3729 = vmatmul.mubr.f32.gmra.mrb[0].mxu0 %v3728
        %v3730 = vpop.f32.mrb[0].mxu0
        %v3731 = vadd.f32 0.0, %v3730
        %v3732 = vpop.f32.mrb[0].mxu0
        %3733 = vdwg.mxu0
        %3734 = vmatprep.subr.mxu0 0.0
        %v3735 = vand.u32 %v3634, 4294901760
        %v3736 = vsub.f32 %v3634, %v3735
        %v3737 = vand.u32 %v3736, 4294901760
        %v3738 = vsub.f32 %v3736, %v3737
        %v3739 = vand.u32 %v3738, 4294901760
        %3740 = vmatpush1.msra.mxu0 %v3739
        %3741 = vmatprep.subr.mxu0 0.0
        %v3742 = vand.u32 %v3645, 4294901760
        %v3743 = vsub.f32 %v3645, %v3742
        %v3744 = vand.u32 %v3743, 4294901760
        %v3745 = vsub.f32 %v3743, %v3744
        %v3746 = vand.u32 %v3745, 4294901760
        %3747 = vmatpush1.msra.mxu0 %v3746
        %3748 = vmatprep.subr.mxu0 0.0
        %3749 = vmatpush1.msra.mxu0 0.0
        %3750 = vmatprep.subr.mxu0 0.0
        %3751 = vmatpush1.msra.mxu0 0.0
        %3752 = vmatprep.subr.mxu0 0.0
        %3753 = vmatpush1.msra.mxu0 0.0
        %3754 = vmatprep.subr.mxu0 0.0
        %3755 = vmatpush1.msra.mxu0 0.0
        %3756 = vmatprep.subr.mxu0 0.0
        %3757 = vmatpush1.msra.mxu0 0.0
        %3758 = vmatprep.subr.mxu0 0.0
        %3759 = vmatpush1.msra.mxu0 0.0
        %3760 = vmatprep.subr.mxu0 0.0
        %3761 = vmatpush1.msra.mxu0 0.0
        %3762 = vmatprep.subr.mxu0 0.0
        %3763 = vmatpush1.msra.mxu0 0.0
        %3764 = vmatprep.subr.mxu0 0.0
        %3765 = vmatpush1.msra.mxu0 0.0
        %3766 = vmatprep.subr.mxu0 0.0
        %3767 = vmatpush1.msra.mxu0 0.0
        %3768 = vmatprep.subr.mxu0 0.0
        %3769 = vmatpush1.msra.mxu0 0.0
        %3770 = vmatprep.subr.mxu0 0.0
        %3771 = vmatpush1.msra.mxu0 0.0
        %3772 = vmatprep.subr.mxu0 0.0
        %3773 = vmatpush1.msra.mxu0 0.0
        %3774 = vmatprep.subr.mxu0 0.0
        %3775 = vmatpush1.msra.mxu0 0.0
        %3776 = vmatprep.subr.mxu0 0.0
        %3777 = vmatpush1.msra.mxu0 0.0
        %3778 = vmatprep.subr.mxu0 0.0
        %3779 = vmatpush1.msra.mxu0 0.0
        %3780 = vmatprep.subr.mxu0 0.0
        %3781 = vmatpush1.msra.mxu0 0.0
        %3782 = vmatprep.subr.mxu0 0.0
        %3783 = vmatpush1.msra.mxu0 0.0
        %3784 = vmatprep.subr.mxu0 0.0
        %3785 = vmatpush1.msra.mxu0 0.0
        %3786 = vmatprep.subr.mxu0 0.0
        %3787 = vmatpush1.msra.mxu0 0.0
        %3788 = vmatprep.subr.mxu0 0.0
        %3789 = vmatpush1.msra.mxu0 0.0
        %3790 = vmatprep.subr.mxu0 0.0
        %3791 = vmatpush1.msra.mxu0 0.0
        %3792 = vmatprep.subr.mxu0 0.0
        %3793 = vmatpush1.msra.mxu0 0.0
        %3794 = vmatprep.subr.mxu0 0.0
        %3795 = vmatpush1.msra.mxu0 0.0
        %3796 = vmatprep.subr.mxu0 0.0
        %3797 = vmatpush1.msra.mxu0 0.0
        %3798 = vmatprep.subr.mxu0 0.0
        %3799 = vmatpush1.msra.mxu0 0.0
        %3800 = vmatprep.subr.mxu0 0.0
        %3801 = vmatpush1.msra.mxu0 0.0
        %3802 = vmatprep.subr.mxu0 0.0
        %3803 = vmatpush1.msra.mxu0 0.0
        %3804 = vmatprep.subr.mxu0 0.0
        %3805 = vmatpush1.msra.mxu0 0.0
        %3806 = vmatprep.subr.mxu0 0.0
        %3807 = vmatpush1.msra.mxu0 0.0
        %3808 = vmatprep.mubr.f32.mxu0 0.0
        %v3809 = vand.u32 %v3639, 4294901760
        %3810 = vmatmul.mubr.f32.gmra.mrb[0].mxu0 %v3809
        %v3811 = vpop.f32.mrb[0].mxu0
        %v3812 = vadd.f32 %v3721, %v3811
        %v3813 = vpop.f32.mrb[0].mxu0
        %3814 = vmatprep.mubr.f32.mxu0 0.0
        %v3815 = vand.u32 %v3642, 4294901760
        %3816 = vmatmul.mubr.f32.gmra.mrb[0].mxu0 %v3815
        %v3817 = vpop.f32.mrb[0].mxu0
        %v3818 = vadd.f32 %v3731, %v3817
        %v3819 = vpop.f32.mrb[0].mxu0
        %3820 = vdwg.mxu0
        %3821 = vmatprep.subr.mxu0 0.0
        %v3822 = vand.u32 %v3634, 4294901760
        %v3823 = vsub.f32 %v3634, %v3822
        %3824 = vmatpush1.msra.mxu0 %v3823
        %3825 = vmatprep.subr.mxu0 0.0
        %v3826 = vand.u32 %v3645, 4294901760
        %v3827 = vsub.f32 %v3645, %v3826
        %3828 = vmatpush1.msra.mxu0 %v3827
        %3829 = vmatprep.subr.mxu0 0.0
        %3830 = vmatpush1.msra.mxu0 0.0
        %3831 = vmatprep.subr.mxu0 0.0
        %3832 = vmatpush1.msra.mxu0 0.0
        %3833 = vmatprep.subr.mxu0 0.0
        %3834 = vmatpush1.msra.mxu0 0.0
        %3835 = vmatprep.subr.mxu0 0.0
        %3836 = vmatpush1.msra.mxu0 0.0
        %3837 = vmatprep.subr.mxu0 0.0
        %3838 = vmatpush1.msra.mxu0 0.0
        %3839 = vmatprep.subr.mxu0 0.0
        %3840 = vmatpush1.msra.mxu0 0.0
        %3841 = vmatprep.subr.mxu0 0.0
        %3842 = vmatpush1.msra.mxu0 0.0
        %3843 = vmatprep.subr.mxu0 0.0
        %3844 = vmatpush1.msra.mxu0 0.0
        %3845 = vmatprep.subr.mxu0 0.0
        %3846 = vmatpush1.msra.mxu0 0.0
        %3847 = vmatprep.subr.mxu0 0.0
        %3848 = vmatpush1.msra.mxu0 0.0
        %3849 = vmatprep.subr.mxu0 0.0
        %3850 = vmatpush1.msra.mxu0 0.0
        %3851 = vmatprep.subr.mxu0 0.0
        %3852 = vmatpush1.msra.mxu0 0.0
        %3853 = vmatprep.subr.mxu0 0.0
        %3854 = vmatpush1.msra.mxu0 0.0
        %3855 = vmatprep.subr.mxu0 0.0
        %3856 = vmatpush1.msra.mxu0 0.0
        %3857 = vmatprep.subr.mxu0 0.0
        %3858 = vmatpush1.msra.mxu0 0.0
        %3859 = vmatprep.subr.mxu0 0.0
        %3860 = vmatpush1.msra.mxu0 0.0
        %3861 = vmatprep.subr.mxu0 0.0
        %3862 = vmatpush1.msra.mxu0 0.0
        %3863 = vmatprep.subr.mxu0 0.0
        %3864 = vmatpush1.msra.mxu0 0.0
        %3865 = vmatprep.subr.mxu0 0.0
        %3866 = vmatpush1.msra.mxu0 0.0
        %3867 = vmatprep.subr.mxu0 0.0
        %3868 = vmatpush1.msra.mxu0 0.0
        %3869 = vmatprep.subr.mxu0 0.0
        %3870 = vmatpush1.msra.mxu0 0.0
        %3871 = vmatprep.subr.mxu0 0.0
        %3872 = vmatpush1.msra.mxu0 0.0
        %3873 = vmatprep.subr.mxu0 0.0
        %3874 = vmatpush1.msra.mxu0 0.0
        %3875 = vmatprep.subr.mxu0 0.0
        %3876 = vmatpush1.msra.mxu0 0.0
        %3877 = vmatprep.subr.mxu0 0.0
        %3878 = vmatpush1.msra.mxu0 0.0
        %3879 = vmatprep.subr.mxu0 0.0
        %3880 = vmatpush1.msra.mxu0 0.0
        %3881 = vmatprep.subr.mxu0 0.0
        %3882 = vmatpush1.msra.mxu0 0.0
        %3883 = vmatprep.subr.mxu0 0.0
        %3884 = vmatpush1.msra.mxu0 0.0
        %3885 = vmatprep.subr.mxu0 0.0
        %3886 = vmatpush1.msra.mxu0 0.0
        %3887 = vmatprep.subr.mxu0 0.0
        %3888 = vmatpush1.msra.mxu0 0.0
        %3889 = vmatprep.mubr.f32.mxu0 0.0
        %v3890 = vand.u32 %v3639, 4294901760
        %v3891 = vsub.f32 %v3639, %v3890
        %3892 = vmatmul.mubr.f32.gmra.mrb[0].mxu0 %v3891
        %v3893 = vpop.f32.mrb[0].mxu0
        %v3894 = vadd.f32 %v3812, %v3893
        %v3895 = vpop.f32.mrb[0].mxu0
        %3896 = vmatprep.mubr.f32.mxu0 0.0
        %v3897 = vand.u32 %v3642, 4294901760
        %v3898 = vsub.f32 %v3642, %v3897
        %3899 = vmatmul.mubr.f32.gmra.mrb[0].mxu0 %v3898
        %v3900 = vpop.f32.mrb[0].mxu0
        %v3901 = vadd.f32 %v3818, %v3900
        %v3902 = vpop.f32.mrb[0].mxu0
        %3903 = vdwg.mxu0
        %3904 = vmatprep.subr.mxu0 0.0
        %v3905 = vand.u32 %v3634, 4294901760
        %3906 = vmatpush1.msra.mxu0 %v3905
        %3907 = vmatprep.subr.mxu0 0.0
        %v3908 = vand.u32 %v3645, 4294901760
        %3909 = vmatpush1.msra.mxu0 %v3908
        %3910 = vmatprep.subr.mxu0 0.0
        %3911 = vmatpush1.msra.mxu0 0.0
        %3912 = vmatprep.subr.mxu0 0.0
        %3913 = vmatpush1.msra.mxu0 0.0
        %3914 = vmatprep.subr.mxu0 0.0
        %3915 = vmatpush1.msra.mxu0 0.0
        %3916 = vmatprep.subr.mxu0 0.0
        %3917 = vmatpush1.msra.mxu0 0.0
        %3918 = vmatprep.subr.mxu0 0.0
        %3919 = vmatpush1.msra.mxu0 0.0
        %3920 = vmatprep.subr.mxu0 0.0
        %3921 = vmatpush1.msra.mxu0 0.0
        %3922 = vmatprep.subr.mxu0 0.0
        %3923 = vmatpush1.msra.mxu0 0.0
        %3924 = vmatprep.subr.mxu0 0.0
        %3925 = vmatpush1.msra.mxu0 0.0
        %3926 = vmatprep.subr.mxu0 0.0
        %3927 = vmatpush1.msra.mxu0 0.0
        %3928 = vmatprep.subr.mxu0 0.0
        %3929 = vmatpush1.msra.mxu0 0.0
        %3930 = vmatprep.subr.mxu0 0.0
        %3931 = vmatpush1.msra.mxu0 0.0
        %3932 = vmatprep.subr.mxu0 0.0
        %3933 = vmatpush1.msra.mxu0 0.0
        %3934 = vmatprep.subr.mxu0 0.0
        %3935 = vmatpush1.msra.mxu0 0.0
        %3936 = vmatprep.subr.mxu0 0.0
        %3937 = vmatpush1.msra.mxu0 0.0
        %3938 = vmatprep.subr.mxu0 0.0
        %3939 = vmatpush1.msra.mxu0 0.0
        %3940 = vmatprep.subr.mxu0 0.0
        %3941 = vmatpush1.msra.mxu0 0.0
        %3942 = vmatprep.subr.mxu0 0.0
        %3943 = vmatpush1.msra.mxu0 0.0
        %3944 = vmatprep.subr.mxu0 0.0
        %3945 = vmatpush1.msra.mxu0 0.0
        %3946 = vmatprep.subr.mxu0 0.0
        %3947 = vmatpush1.msra.mxu0 0.0
        %3948 = vmatprep.subr.mxu0 0.0
        %3949 = vmatpush1.msra.mxu0 0.0
        %3950 = vmatprep.subr.mxu0 0.0
        %3951 = vmatpush1.msra.mxu0 0.0
        %3952 = vmatprep.subr.mxu0 0.0
        %3953 = vmatpush1.msra.mxu0 0.0
        %3954 = vmatprep.subr.mxu0 0.0
        %3955 = vmatpush1.msra.mxu0 0.0
        %3956 = vmatprep.subr.mxu0 0.0
        %3957 = vmatpush1.msra.mxu0 0.0
        %3958 = vmatprep.subr.mxu0 0.0
        %3959 = vmatpush1.msra.mxu0 0.0
        %3960 = vmatprep.subr.mxu0 0.0
        %3961 = vmatpush1.msra.mxu0 0.0
        %3962 = vmatprep.subr.mxu0 0.0
        %3963 = vmatpush1.msra.mxu0 0.0
        %3964 = vmatprep.subr.mxu0 0.0
        %3965 = vmatpush1.msra.mxu0 0.0
        %3966 = vmatprep.subr.mxu0 0.0
        %3967 = vmatpush1.msra.mxu0 0.0
        %3968 = vmatprep.subr.mxu0 0.0
        %3969 = vmatpush1.msra.mxu0 0.0
        %3970 = vmatprep.mubr.f32.mxu0 0.0
        %v3971 = vand.u32 %v3639, 4294901760
        %v3972 = vsub.f32 %v3639, %v3971
        %v3973 = vand.u32 %v3972, 4294901760
        %3974 = vmatmul.mubr.f32.gmra.mrb[0].mxu0 %v3973
        %v3975 = vpop.f32.mrb[0].mxu0
        %v3976 = vadd.f32 %v3894, %v3975
        %v3977 = vpop.f32.mrb[0].mxu0
        %3978 = vmatprep.mubr.f32.mxu0 0.0
        %v3979 = vand.u32 %v3642, 4294901760
        %v3980 = vsub.f32 %v3642, %v3979
        %v3981 = vand.u32 %v3980, 4294901760
        %3982 = vmatmul.mubr.f32.gmra.mrb[0].mxu0 %v3981
        %v3983 = vpop.f32.mrb[0].mxu0
        %v3984 = vadd.f32 %v3901, %v3983
        %v3985 = vpop.f32.mrb[0].mxu0
        %3986 = vdwg.mxu0
        %3987 = vmatprep.subr.mxu0 0.0
        %v3988 = vand.u32 %v3634, 4294901760
        %v3989 = vsub.f32 %v3634, %v3988
        %v3990 = vand.u32 %v3989, 4294901760
        %3991 = vmatpush1.msra.mxu0 %v3990
        %3992 = vmatprep.subr.mxu0 0.0
        %v3993 = vand.u32 %v3645, 4294901760
        %v3994 = vsub.f32 %v3645, %v3993
        %v3995 = vand.u32 %v3994, 4294901760
        %3996 = vmatpush1.msra.mxu0 %v3995
        %3997 = vmatprep.subr.mxu0 0.0
        %3998 = vmatpush1.msra.mxu0 0.0
        %3999 = vmatprep.subr.mxu0 0.0
        %4000 = vmatpush1.msra.mxu0 0.0
        %4001 = vmatprep.subr.mxu0 0.0
        %4002 = vmatpush1.msra.mxu0 0.0
        %4003 = vmatprep.subr.mxu0 0.0
        %4004 = vmatpush1.msra.mxu0 0.0
        %4005 = vmatprep.subr.mxu0 0.0
        %4006 = vmatpush1.msra.mxu0 0.0
        %4007 = vmatprep.subr.mxu0 0.0
        %4008 = vmatpush1.msra.mxu0 0.0
        %4009 = vmatprep.subr.mxu0 0.0
        %4010 = vmatpush1.msra.mxu0 0.0
        %4011 = vmatprep.subr.mxu0 0.0
        %4012 = vmatpush1.msra.mxu0 0.0
        %4013 = vmatprep.subr.mxu0 0.0
        %4014 = vmatpush1.msra.mxu0 0.0
        %4015 = vmatprep.subr.mxu0 0.0
        %4016 = vmatpush1.msra.mxu0 0.0
        %4017 = vmatprep.subr.mxu0 0.0
        %4018 = vmatpush1.msra.mxu0 0.0
        %4019 = vmatprep.subr.mxu0 0.0
        %4020 = vmatpush1.msra.mxu0 0.0
        %4021 = vmatprep.subr.mxu0 0.0
        %4022 = vmatpush1.msra.mxu0 0.0
        %4023 = vmatprep.subr.mxu0 0.0
        %4024 = vmatpush1.msra.mxu0 0.0
        %4025 = vmatprep.subr.mxu0 0.0
        %4026 = vmatpush1.msra.mxu0 0.0
        %4027 = vmatprep.subr.mxu0 0.0
        %4028 = vmatpush1.msra.mxu0 0.0
        %4029 = vmatprep.subr.mxu0 0.0
        %4030 = vmatpush1.msra.mxu0 0.0
        %4031 = vmatprep.subr.mxu0 0.0
        %4032 = vmatpush1.msra.mxu0 0.0
        %4033 = vmatprep.subr.mxu0 0.0
        %4034 = vmatpush1.msra.mxu0 0.0
        %4035 = vmatprep.subr.mxu0 0.0
        %4036 = vmatpush1.msra.mxu0 0.0
        %4037 = vmatprep.subr.mxu0 0.0
        %4038 = vmatpush1.msra.mxu0 0.0
        %4039 = vmatprep.subr.mxu0 0.0
        %4040 = vmatpush1.msra.mxu0 0.0
        %4041 = vmatprep.subr.mxu0 0.0
        %4042 = vmatpush1.msra.mxu0 0.0
        %4043 = vmatprep.subr.mxu0 0.0
        %4044 = vmatpush1.msra.mxu0 0.0
        %4045 = vmatprep.subr.mxu0 0.0
        %4046 = vmatpush1.msra.mxu0 0.0
        %4047 = vmatprep.subr.mxu0 0.0
        %4048 = vmatpush1.msra.mxu0 0.0
        %4049 = vmatprep.subr.mxu0 0.0
        %4050 = vmatpush1.msra.mxu0 0.0
        %4051 = vmatprep.subr.mxu0 0.0
        %4052 = vmatpush1.msra.mxu0 0.0
        %4053 = vmatprep.subr.mxu0 0.0
        %4054 = vmatpush1.msra.mxu0 0.0
        %4055 = vmatprep.subr.mxu0 0.0
        %4056 = vmatpush1.msra.mxu0 0.0
        %4057 = vmatprep.mubr.f32.mxu0 0.0
        %v4058 = vand.u32 %v3639, 4294901760
        %4059 = vmatmul.mubr.f32.gmra.mrb[0].mxu0 %v4058
        %v4060 = vpop.f32.mrb[0].mxu0
        %v4061 = vadd.f32 %v3976, %v4060
        %v4062 = vpop.f32.mrb[0].mxu0
        %4063 = vmatprep.mubr.f32.mxu0 0.0
        %v4064 = vand.u32 %v3642, 4294901760
        %4065 = vmatmul.mubr.f32.gmra.mrb[0].mxu0 %v4064
        %v4066 = vpop.f32.mrb[0].mxu0
        %v4067 = vadd.f32 %v3984, %v4066
        %v4068 = vpop.f32.mrb[0].mxu0
        %4069 = vdwg.mxu0
        %4070 = vmatprep.subr.mxu0 0.0
        %v4071 = vand.u32 %v3634, 4294901760
        %4072 = vmatpush1.msra.mxu0 %v4071
        %4073 = vmatprep.subr.mxu0 0.0
        %v4074 = vand.u32 %v3645, 4294901760
        %4075 = vmatpush1.msra.mxu0 %v4074
        %4076 = vmatprep.subr.mxu0 0.0
        %4077 = vmatpush1.msra.mxu0 0.0
        %4078 = vmatprep.subr.mxu0 0.0
        %4079 = vmatpush1.msra.mxu0 0.0
        %4080 = vmatprep.subr.mxu0 0.0
        %4081 = vmatpush1.msra.mxu0 0.0
        %4082 = vmatprep.subr.mxu0 0.0
        %4083 = vmatpush1.msra.mxu0 0.0
        %4084 = vmatprep.subr.mxu0 0.0
        %4085 = vmatpush1.msra.mxu0 0.0
        %4086 = vmatprep.subr.mxu0 0.0
        %4087 = vmatpush1.msra.mxu0 0.0
        %4088 = vmatprep.subr.mxu0 0.0
        %4089 = vmatpush1.msra.mxu0 0.0
        %4090 = vmatprep.subr.mxu0 0.0
        %4091 = vmatpush1.msra.mxu0 0.0
        %4092 = vmatprep.subr.mxu0 0.0
        %4093 = vmatpush1.msra.mxu0 0.0
        %4094 = vmatprep.subr.mxu0 0.0
        %4095 = vmatpush1.msra.mxu0 0.0
        %4096 = vmatprep.subr.mxu0 0.0
        %4097 = vmatpush1.msra.mxu0 0.0
        %4098 = vmatprep.subr.mxu0 0.0
        %4099 = vmatpush1.msra.mxu0 0.0
        %4100 = vmatprep.subr.mxu0 0.0
        %4101 = vmatpush1.msra.mxu0 0.0
        %4102 = vmatprep.subr.mxu0 0.0
        %4103 = vmatpush1.msra.mxu0 0.0
        %4104 = vmatprep.subr.mxu0 0.0
        %4105 = vmatpush1.msra.mxu0 0.0
        %4106 = vmatprep.subr.mxu0 0.0
        %4107 = vmatpush1.msra.mxu0 0.0
        %4108 = vmatprep.subr.mxu0 0.0
        %4109 = vmatpush1.msra.mxu0 0.0
        %4110 = vmatprep.subr.mxu0 0.0
        %4111 = vmatpush1.msra.mxu0 0.0
        %4112 = vmatprep.subr.mxu0 0.0
        %4113 = vmatpush1.msra.mxu0 0.0
        %4114 = vmatprep.subr.mxu0 0.0
        %4115 = vmatpush1.msra.mxu0 0.0
        %4116 = vmatprep.subr.mxu0 0.0
        %4117 = vmatpush1.msra.mxu0 0.0
        %4118 = vmatprep.subr.mxu0 0.0
        %4119 = vmatpush1.msra.mxu0 0.0
        %4120 = vmatprep.subr.mxu0 0.0
        %4121 = vmatpush1.msra.mxu0 0.0
        %4122 = vmatprep.subr.mxu0 0.0
        %4123 = vmatpush1.msra.mxu0 0.0
        %4124 = vmatprep.subr.mxu0 0.0
        %4125 = vmatpush1.msra.mxu0 0.0
        %4126 = vmatprep.subr.mxu0 0.0
        %4127 = vmatpush1.msra.mxu0 0.0
        %4128 = vmatprep.subr.mxu0 0.0
        %4129 = vmatpush1.msra.mxu0 0.0
        %4130 = vmatprep.subr.mxu0 0.0
        %4131 = vmatpush1.msra.mxu0 0.0
        %4132 = vmatprep.subr.mxu0 0.0
        %4133 = vmatpush1.msra.mxu0 0.0
        %4134 = vmatprep.subr.mxu0 0.0
        %4135 = vmatpush1.msra.mxu0 0.0
        %4136 = vmatprep.mubr.f32.mxu0 0.0
        %v4137 = vand.u32 %v3639, 4294901760
        %4138 = vmatmul.mubr.f32.gmra.mrb[0].mxu0 %v4137
        %v4139 = vpop.f32.mrb[0].mxu0
        %v4140 = vadd.f32 %v4061, %v4139
        %v4141 = vpop.f32.mrb[0].mxu0
        %4142 = vmatprep.mubr.f32.mxu0 0.0
        %v4143 = vand.u32 %v3642, 4294901760
        %4144 = vmatmul.mubr.f32.gmra.mrb[0].mxu0 %v4143
        %v4145 = vpop.f32.mrb[0].mxu0
        %v4146 = vadd.f32 %v4067, %v4145
        %v4147 = vpop.f32.mrb[0].mxu0
        %4148 = vdwg.mxu0
        %4149 = vrot.lane.b32.xlu0 %v1491, 64
        %v4150 = vpop.permute.xlu0 %4149
        %4151 = vrot.lane.b32.xlu0 %v1493, 64
        %v4152 = vpop.permute.xlu0 %4151
        %v4155 = vsel %vm3559, %v3598, 0
        %v4158 = vsel %vm3559, %v3600, 0
        %v4160 = vsel %vm3644, %v4152, 0
        %4162 = vmatprep.subr.mxu0 0.0
        %v4163 = vand.u32 %v4150, 4294901760
        %4164 = vmatpush1.msra.mxu0 %v4163
        %4165 = vmatprep.subr.mxu0 0.0
        %v4166 = vand.u32 %v4160, 4294901760
        %4167 = vmatpush1.msra.mxu0 %v4166
        %4168 = vmatprep.subr.mxu0 0.0
        %4169 = vmatpush1.msra.mxu0 0.0
        %4170 = vmatprep.subr.mxu0 0.0
        %4171 = vmatpush1.msra.mxu0 0.0
        %4172 = vmatprep.subr.mxu0 0.0
        %4173 = vmatpush1.msra.mxu0 0.0
        %4174 = vmatprep.subr.mxu0 0.0
        %4175 = vmatpush1.msra.mxu0 0.0
        %4176 = vmatprep.subr.mxu0 0.0
        %4177 = vmatpush1.msra.mxu0 0.0
        %4178 = vmatprep.subr.mxu0 0.0
        %4179 = vmatpush1.msra.mxu0 0.0
        %4180 = vmatprep.subr.mxu0 0.0
        %4181 = vmatpush1.msra.mxu0 0.0
        %4182 = vmatprep.subr.mxu0 0.0
        %4183 = vmatpush1.msra.mxu0 0.0
        %4184 = vmatprep.subr.mxu0 0.0
        %4185 = vmatpush1.msra.mxu0 0.0
        %4186 = vmatprep.subr.mxu0 0.0
        %4187 = vmatpush1.msra.mxu0 0.0
        %4188 = vmatprep.subr.mxu0 0.0
        %4189 = vmatpush1.msra.mxu0 0.0
        %4190 = vmatprep.subr.mxu0 0.0
        %4191 = vmatpush1.msra.mxu0 0.0
        %4192 = vmatprep.subr.mxu0 0.0
        %4193 = vmatpush1.msra.mxu0 0.0
        %4194 = vmatprep.subr.mxu0 0.0
        %4195 = vmatpush1.msra.mxu0 0.0
        %4196 = vmatprep.subr.mxu0 0.0
        %4197 = vmatpush1.msra.mxu0 0.0
        %4198 = vmatprep.subr.mxu0 0.0
        %4199 = vmatpush1.msra.mxu0 0.0
        %4200 = vmatprep.subr.mxu0 0.0
        %4201 = vmatpush1.msra.mxu0 0.0
        %4202 = vmatprep.subr.mxu0 0.0
        %4203 = vmatpush1.msra.mxu0 0.0
        %4204 = vmatprep.subr.mxu0 0.0
        %4205 = vmatpush1.msra.mxu0 0.0
        %4206 = vmatprep.subr.mxu0 0.0
        %4207 = vmatpush1.msra.mxu0 0.0
        %4208 = vmatprep.subr.mxu0 0.0
        %4209 = vmatpush1.msra.mxu0 0.0
        %4210 = vmatprep.subr.mxu0 0.0
        %4211 = vmatpush1.msra.mxu0 0.0
        %4212 = vmatprep.subr.mxu0 0.0
        %4213 = vmatpush1.msra.mxu0 0.0
        %4214 = vmatprep.subr.mxu0 0.0
        %4215 = vmatpush1.msra.mxu0 0.0
        %4216 = vmatprep.subr.mxu0 0.0
        %4217 = vmatpush1.msra.mxu0 0.0
        %4218 = vmatprep.subr.mxu0 0.0
        %4219 = vmatpush1.msra.mxu0 0.0
        %4220 = vmatprep.subr.mxu0 0.0
        %4221 = vmatpush1.msra.mxu0 0.0
        %4222 = vmatprep.subr.mxu0 0.0
        %4223 = vmatpush1.msra.mxu0 0.0
        %4224 = vmatprep.subr.mxu0 0.0
        %4225 = vmatpush1.msra.mxu0 0.0
        %4226 = vmatprep.subr.mxu0 0.0
        %4227 = vmatpush1.msra.mxu0 0.0
        %4228 = vmatprep.mubr.f32.mxu0 0.0
        %v4229 = vand.u32 %v4155, 4294901760
        %v4230 = vsub.f32 %v4155, %v4229
        %v4231 = vand.u32 %v4230, 4294901760
        %v4232 = vsub.f32 %v4230, %v4231
        %v4233 = vand.u32 %v4232, 4294901760
        %4234 = vmatmul.mubr.f32.gmra.mrb[0].mxu0 %v4233
        %v4235 = vpop.f32.mrb[0].mxu0
        %v4236 = vadd.f32 0.0, %v4235
        %v4237 = vpop.f32.mrb[0].mxu0
        %4238 = vmatprep.mubr.f32.mxu0 0.0
        %v4239 = vand.u32 %v4158, 4294901760
        %v4240 = vsub.f32 %v4158, %v4239
        %v4241 = vand.u32 %v4240, 4294901760
        %v4242 = vsub.f32 %v4240, %v4241
        %v4243 = vand.u32 %v4242, 4294901760
        %4244 = vmatmul.mubr.f32.gmra.mrb[0].mxu0 %v4243
        %v4245 = vpop.f32.mrb[0].mxu0
        %v4246 = vadd.f32 0.0, %v4245
        %v4247 = vpop.f32.mrb[0].mxu0
        %4248 = vdwg.mxu0
        %4249 = vmatprep.subr.mxu0 0.0
        %v4250 = vand.u32 %v4150, 4294901760
        %v4251 = vsub.f32 %v4150, %v4250
        %v4252 = vand.u32 %v4251, 4294901760
        %v4253 = vsub.f32 %v4251, %v4252
        %v4254 = vand.u32 %v4253, 4294901760
        %4255 = vmatpush1.msra.mxu0 %v4254
        %4256 = vmatprep.subr.mxu0 0.0
        %v4257 = vand.u32 %v4160, 4294901760
        %v4258 = vsub.f32 %v4160, %v4257
        %v4259 = vand.u32 %v4258, 4294901760
        %v4260 = vsub.f32 %v4258, %v4259
        %v4261 = vand.u32 %v4260, 4294901760
        %4262 = vmatpush1.msra.mxu0 %v4261
        %4263 = vmatprep.subr.mxu0 0.0
        %4264 = vmatpush1.msra.mxu0 0.0
        %4265 = vmatprep.subr.mxu0 0.0
        %4266 = vmatpush1.msra.mxu0 0.0
        %4267 = vmatprep.subr.mxu0 0.0
        %4268 = vmatpush1.msra.mxu0 0.0
        %4269 = vmatprep.subr.mxu0 0.0
        %4270 = vmatpush1.msra.mxu0 0.0
        %4271 = vmatprep.subr.mxu0 0.0
        %4272 = vmatpush1.msra.mxu0 0.0
        %4273 = vmatprep.subr.mxu0 0.0
        %4274 = vmatpush1.msra.mxu0 0.0
        %4275 = vmatprep.subr.mxu0 0.0
        %4276 = vmatpush1.msra.mxu0 0.0
        %4277 = vmatprep.subr.mxu0 0.0
        %4278 = vmatpush1.msra.mxu0 0.0
        %4279 = vmatprep.subr.mxu0 0.0
        %4280 = vmatpush1.msra.mxu0 0.0
        %4281 = vmatprep.subr.mxu0 0.0
        %4282 = vmatpush1.msra.mxu0 0.0
        %4283 = vmatprep.subr.mxu0 0.0
        %4284 = vmatpush1.msra.mxu0 0.0
        %4285 = vmatprep.subr.mxu0 0.0
        %4286 = vmatpush1.msra.mxu0 0.0
        %4287 = vmatprep.subr.mxu0 0.0
        %4288 = vmatpush1.msra.mxu0 0.0
        %4289 = vmatprep.subr.mxu0 0.0
        %4290 = vmatpush1.msra.mxu0 0.0
        %4291 = vmatprep.subr.mxu0 0.0
        %4292 = vmatpush1.msra.mxu0 0.0
        %4293 = vmatprep.subr.mxu0 0.0
        %4294 = vmatpush1.msra.mxu0 0.0
        %4295 = vmatprep.subr.mxu0 0.0
        %4296 = vmatpush1.msra.mxu0 0.0
        %4297 = vmatprep.subr.mxu0 0.0
        %4298 = vmatpush1.msra.mxu0 0.0
        %4299 = vmatprep.subr.mxu0 0.0
        %4300 = vmatpush1.msra.mxu0 0.0
        %4301 = vmatprep.subr.mxu0 0.0
        %4302 = vmatpush1.msra.mxu0 0.0
        %4303 = vmatprep.subr.mxu0 0.0
        %4304 = vmatpush1.msra.mxu0 0.0
        %4305 = vmatprep.subr.mxu0 0.0
        %4306 = vmatpush1.msra.mxu0 0.0
        %4307 = vmatprep.subr.mxu0 0.0
        %4308 = vmatpush1.msra.mxu0 0.0
        %4309 = vmatprep.subr.mxu0 0.0
        %4310 = vmatpush1.msra.mxu0 0.0
        %4311 = vmatprep.subr.mxu0 0.0
        %4312 = vmatpush1.msra.mxu0 0.0
        %4313 = vmatprep.subr.mxu0 0.0
        %4314 = vmatpush1.msra.mxu0 0.0
        %4315 = vmatprep.subr.mxu0 0.0
        %4316 = vmatpush1.msra.mxu0 0.0
        %4317 = vmatprep.subr.mxu0 0.0
        %4318 = vmatpush1.msra.mxu0 0.0
        %4319 = vmatprep.subr.mxu0 0.0
        %4320 = vmatpush1.msra.mxu0 0.0
        %4321 = vmatprep.subr.mxu0 0.0
        %4322 = vmatpush1.msra.mxu0 0.0
        %4323 = vmatprep.mubr.f32.mxu0 0.0
        %v4324 = vand.u32 %v4155, 4294901760
        %4325 = vmatmul.mubr.f32.gmra.mrb[0].mxu0 %v4324
        %v4326 = vpop.f32.mrb[0].mxu0
        %v4327 = vadd.f32 %v4236, %v4326
        %v4328 = vpop.f32.mrb[0].mxu0
        %4329 = vmatprep.mubr.f32.mxu0 0.0
        %v4330 = vand.u32 %v4158, 4294901760
        %4331 = vmatmul.mubr.f32.gmra.mrb[0].mxu0 %v4330
        %v4332 = vpop.f32.mrb[0].mxu0
        %v4333 = vadd.f32 %v4246, %v4332
        %v4334 = vpop.f32.mrb[0].mxu0
        %4335 = vdwg.mxu0
        %4336 = vmatprep.subr.mxu0 0.0
        %v4337 = vand.u32 %v4150, 4294901760
        %v4338 = vsub.f32 %v4150, %v4337
        %4339 = vmatpush1.msra.mxu0 %v4338
        %4340 = vmatprep.subr.mxu0 0.0
        %v4341 = vand.u32 %v4160, 4294901760
        %v4342 = vsub.f32 %v4160, %v4341
        %4343 = vmatpush1.msra.mxu0 %v4342
        %4344 = vmatprep.subr.mxu0 0.0
        %4345 = vmatpush1.msra.mxu0 0.0
        %4346 = vmatprep.subr.mxu0 0.0
        %4347 = vmatpush1.msra.mxu0 0.0
        %4348 = vmatprep.subr.mxu0 0.0
        %4349 = vmatpush1.msra.mxu0 0.0
        %4350 = vmatprep.subr.mxu0 0.0
        %4351 = vmatpush1.msra.mxu0 0.0
        %4352 = vmatprep.subr.mxu0 0.0
        %4353 = vmatpush1.msra.mxu0 0.0
        %4354 = vmatprep.subr.mxu0 0.0
        %4355 = vmatpush1.msra.mxu0 0.0
        %4356 = vmatprep.subr.mxu0 0.0
        %4357 = vmatpush1.msra.mxu0 0.0
        %4358 = vmatprep.subr.mxu0 0.0
        %4359 = vmatpush1.msra.mxu0 0.0
        %4360 = vmatprep.subr.mxu0 0.0
        %4361 = vmatpush1.msra.mxu0 0.0
        %4362 = vmatprep.subr.mxu0 0.0
        %4363 = vmatpush1.msra.mxu0 0.0
        %4364 = vmatprep.subr.mxu0 0.0
        %4365 = vmatpush1.msra.mxu0 0.0
        %4366 = vmatprep.subr.mxu0 0.0
        %4367 = vmatpush1.msra.mxu0 0.0
        %4368 = vmatprep.subr.mxu0 0.0
        %4369 = vmatpush1.msra.mxu0 0.0
        %4370 = vmatprep.subr.mxu0 0.0
        %4371 = vmatpush1.msra.mxu0 0.0
        %4372 = vmatprep.subr.mxu0 0.0
        %4373 = vmatpush1.msra.mxu0 0.0
        %4374 = vmatprep.subr.mxu0 0.0
        %4375 = vmatpush1.msra.mxu0 0.0
        %4376 = vmatprep.subr.mxu0 0.0
        %4377 = vmatpush1.msra.mxu0 0.0
        %4378 = vmatprep.subr.mxu0 0.0
        %4379 = vmatpush1.msra.mxu0 0.0
        %4380 = vmatprep.subr.mxu0 0.0
        %4381 = vmatpush1.msra.mxu0 0.0
        %4382 = vmatprep.subr.mxu0 0.0
        %4383 = vmatpush1.msra.mxu0 0.0
        %4384 = vmatprep.subr.mxu0 0.0
        %4385 = vmatpush1.msra.mxu0 0.0
        %4386 = vmatprep.subr.mxu0 0.0
        %4387 = vmatpush1.msra.mxu0 0.0
        %4388 = vmatprep.subr.mxu0 0.0
        %4389 = vmatpush1.msra.mxu0 0.0
        %4390 = vmatprep.subr.mxu0 0.0
        %4391 = vmatpush1.msra.mxu0 0.0
        %4392 = vmatprep.subr.mxu0 0.0
        %4393 = vmatpush1.msra.mxu0 0.0
        %4394 = vmatprep.subr.mxu0 0.0
        %4395 = vmatpush1.msra.mxu0 0.0
        %4396 = vmatprep.subr.mxu0 0.0
        %4397 = vmatpush1.msra.mxu0 0.0
        %4398 = vmatprep.subr.mxu0 0.0
        %4399 = vmatpush1.msra.mxu0 0.0
        %4400 = vmatprep.subr.mxu0 0.0
        %4401 = vmatpush1.msra.mxu0 0.0
        %4402 = vmatprep.subr.mxu0 0.0
        %4403 = vmatpush1.msra.mxu0 0.0
        %4404 = vmatprep.mubr.f32.mxu0 0.0
        %v4405 = vand.u32 %v4155, 4294901760
        %v4406 = vsub.f32 %v4155, %v4405
        %4407 = vmatmul.mubr.f32.gmra.mrb[0].mxu0 %v4406
        %v4408 = vpop.f32.mrb[0].mxu0
        %v4409 = vadd.f32 %v4327, %v4408
        %v4410 = vpop.f32.mrb[0].mxu0
        %4411 = vmatprep.mubr.f32.mxu0 0.0
        %v4412 = vand.u32 %v4158, 4294901760
        %v4413 = vsub.f32 %v4158, %v4412
        %4414 = vmatmul.mubr.f32.gmra.mrb[0].mxu0 %v4413
        %v4415 = vpop.f32.mrb[0].mxu0
        %v4416 = vadd.f32 %v4333, %v4415
        %v4417 = vpop.f32.mrb[0].mxu0
        %4418 = vdwg.mxu0
        %4419 = vmatprep.subr.mxu0 0.0
        %v4420 = vand.u32 %v4150, 4294901760
        %4421 = vmatpush1.msra.mxu0 %v4420
        %4422 = vmatprep.subr.mxu0 0.0
        %v4423 = vand.u32 %v4160, 4294901760
        %4424 = vmatpush1.msra.mxu0 %v4423
        %4425 = vmatprep.subr.mxu0 0.0
        %4426 = vmatpush1.msra.mxu0 0.0
        %4427 = vmatprep.subr.mxu0 0.0
        %4428 = vmatpush1.msra.mxu0 0.0
        %4429 = vmatprep.subr.mxu0 0.0
        %4430 = vmatpush1.msra.mxu0 0.0
        %4431 = vmatprep.subr.mxu0 0.0
        %4432 = vmatpush1.msra.mxu0 0.0
        %4433 = vmatprep.subr.mxu0 0.0
        %4434 = vmatpush1.msra.mxu0 0.0
        %4435 = vmatprep.subr.mxu0 0.0
        %4436 = vmatpush1.msra.mxu0 0.0
        %4437 = vmatprep.subr.mxu0 0.0
        %4438 = vmatpush1.msra.mxu0 0.0
        %4439 = vmatprep.subr.mxu0 0.0
        %4440 = vmatpush1.msra.mxu0 0.0
        %4441 = vmatprep.subr.mxu0 0.0
        %4442 = vmatpush1.msra.mxu0 0.0
        %4443 = vmatprep.subr.mxu0 0.0
        %4444 = vmatpush1.msra.mxu0 0.0
        %4445 = vmatprep.subr.mxu0 0.0
        %4446 = vmatpush1.msra.mxu0 0.0
        %4447 = vmatprep.subr.mxu0 0.0
        %4448 = vmatpush1.msra.mxu0 0.0
        %4449 = vmatprep.subr.mxu0 0.0
        %4450 = vmatpush1.msra.mxu0 0.0
        %4451 = vmatprep.subr.mxu0 0.0
        %4452 = vmatpush1.msra.mxu0 0.0
        %4453 = vmatprep.subr.mxu0 0.0
        %4454 = vmatpush1.msra.mxu0 0.0
        %4455 = vmatprep.subr.mxu0 0.0
        %4456 = vmatpush1.msra.mxu0 0.0
        %4457 = vmatprep.subr.mxu0 0.0
        %4458 = vmatpush1.msra.mxu0 0.0
        %4459 = vmatprep.subr.mxu0 0.0
        %4460 = vmatpush1.msra.mxu0 0.0
        %4461 = vmatprep.subr.mxu0 0.0
        %4462 = vmatpush1.msra.mxu0 0.0
        %4463 = vmatprep.subr.mxu0 0.0
        %4464 = vmatpush1.msra.mxu0 0.0
        %4465 = vmatprep.subr.mxu0 0.0
        %4466 = vmatpush1.msra.mxu0 0.0
        %4467 = vmatprep.subr.mxu0 0.0
        %4468 = vmatpush1.msra.mxu0 0.0
        %4469 = vmatprep.subr.mxu0 0.0
        %4470 = vmatpush1.msra.mxu0 0.0
        %4471 = vmatprep.subr.mxu0 0.0
        %4472 = vmatpush1.msra.mxu0 0.0
        %4473 = vmatprep.subr.mxu0 0.0
        %4474 = vmatpush1.msra.mxu0 0.0
        %4475 = vmatprep.subr.mxu0 0.0
        %4476 = vmatpush1.msra.mxu0 0.0
        %4477 = vmatprep.subr.mxu0 0.0
        %4478 = vmatpush1.msra.mxu0 0.0
        %4479 = vmatprep.subr.mxu0 0.0
        %4480 = vmatpush1.msra.mxu0 0.0
        %4481 = vmatprep.subr.mxu0 0.0
        %4482 = vmatpush1.msra.mxu0 0.0
        %4483 = vmatprep.subr.mxu0 0.0
        %4484 = vmatpush1.msra.mxu0 0.0
        %4485 = vmatprep.mubr.f32.mxu0 0.0
        %v4486 = vand.u32 %v4155, 4294901760
        %v4487 = vsub.f32 %v4155, %v4486
        %v4488 = vand.u32 %v4487, 4294901760
        %4489 = vmatmul.mubr.f32.gmra.mrb[0].mxu0 %v4488
        %v4490 = vpop.f32.mrb[0].mxu0
        %v4491 = vadd.f32 %v4409, %v4490
        %v4492 = vpop.f32.mrb[0].mxu0
        %4493 = vmatprep.mubr.f32.mxu0 0.0
        %v4494 = vand.u32 %v4158, 4294901760
        %v4495 = vsub.f32 %v4158, %v4494
        %v4496 = vand.u32 %v4495, 4294901760
        %4497 = vmatmul.mubr.f32.gmra.mrb[0].mxu0 %v4496
        %v4498 = vpop.f32.mrb[0].mxu0
        %v4499 = vadd.f32 %v4416, %v4498
        %v4500 = vpop.f32.mrb[0].mxu0
        %4501 = vdwg.mxu0
        %4502 = vmatprep.subr.mxu0 0.0
        %v4503 = vand.u32 %v4150, 4294901760
        %v4504 = vsub.f32 %v4150, %v4503
        %v4505 = vand.u32 %v4504, 4294901760
        %4506 = vmatpush1.msra.mxu0 %v4505
        %4507 = vmatprep.subr.mxu0 0.0
        %v4508 = vand.u32 %v4160, 4294901760
        %v4509 = vsub.f32 %v4160, %v4508
        %v4510 = vand.u32 %v4509, 4294901760
        %4511 = vmatpush1.msra.mxu0 %v4510
        %4512 = vmatprep.subr.mxu0 0.0
        %4513 = vmatpush1.msra.mxu0 0.0
        %4514 = vmatprep.subr.mxu0 0.0
        %4515 = vmatpush1.msra.mxu0 0.0
        %4516 = vmatprep.subr.mxu0 0.0
        %4517 = vmatpush1.msra.mxu0 0.0
        %4518 = vmatprep.subr.mxu0 0.0
        %4519 = vmatpush1.msra.mxu0 0.0
        %4520 = vmatprep.subr.mxu0 0.0
        %4521 = vmatpush1.msra.mxu0 0.0
        %4522 = vmatprep.subr.mxu0 0.0
        %4523 = vmatpush1.msra.mxu0 0.0
        %4524 = vmatprep.subr.mxu0 0.0
        %4525 = vmatpush1.msra.mxu0 0.0
        %4526 = vmatprep.subr.mxu0 0.0
        %4527 = vmatpush1.msra.mxu0 0.0
        %4528 = vmatprep.subr.mxu0 0.0
        %4529 = vmatpush1.msra.mxu0 0.0
        %4530 = vmatprep.subr.mxu0 0.0
        %4531 = vmatpush1.msra.mxu0 0.0
        %4532 = vmatprep.subr.mxu0 0.0
        %4533 = vmatpush1.msra.mxu0 0.0
        %4534 = vmatprep.subr.mxu0 0.0
        %4535 = vmatpush1.msra.mxu0 0.0
        %4536 = vmatprep.subr.mxu0 0.0
        %4537 = vmatpush1.msra.mxu0 0.0
        %4538 = vmatprep.subr.mxu0 0.0
        %4539 = vmatpush1.msra.mxu0 0.0
        %4540 = vmatprep.subr.mxu0 0.0
        %4541 = vmatpush1.msra.mxu0 0.0
        %4542 = vmatprep.subr.mxu0 0.0
        %4543 = vmatpush1.msra.mxu0 0.0
        %4544 = vmatprep.subr.mxu0 0.0
        %4545 = vmatpush1.msra.mxu0 0.0
        %4546 = vmatprep.subr.mxu0 0.0
        %4547 = vmatpush1.msra.mxu0 0.0
        %4548 = vmatprep.subr.mxu0 0.0
        %4549 = vmatpush1.msra.mxu0 0.0
        %4550 = vmatprep.subr.mxu0 0.0
        %4551 = vmatpush1.msra.mxu0 0.0
        %4552 = vmatprep.subr.mxu0 0.0
        %4553 = vmatpush1.msra.mxu0 0.0
        %4554 = vmatprep.subr.mxu0 0.0
        %4555 = vmatpush1.msra.mxu0 0.0
        %4556 = vmatprep.subr.mxu0 0.0
        %4557 = vmatpush1.msra.mxu0 0.0
        %4558 = vmatprep.subr.mxu0 0.0
        %4559 = vmatpush1.msra.mxu0 0.0
        %4560 = vmatprep.subr.mxu0 0.0
        %4561 = vmatpush1.msra.mxu0 0.0
        %4562 = vmatprep.subr.mxu0 0.0
        %4563 = vmatpush1.msra.mxu0 0.0
        %4564 = vmatprep.subr.mxu0 0.0
        %4565 = vmatpush1.msra.mxu0 0.0
        %4566 = vmatprep.subr.mxu0 0.0
        %4567 = vmatpush1.msra.mxu0 0.0
        %4568 = vmatprep.subr.mxu0 0.0
        %4569 = vmatpush1.msra.mxu0 0.0
        %4570 = vmatprep.subr.mxu0 0.0
        %4571 = vmatpush1.msra.mxu0 0.0
        %4572 = vmatprep.mubr.f32.mxu0 0.0
        %v4573 = vand.u32 %v4155, 4294901760
        %4574 = vmatmul.mubr.f32.gmra.mrb[0].mxu0 %v4573
        %v4575 = vpop.f32.mrb[0].mxu0
        %v4576 = vadd.f32 %v4491, %v4575
        %v4577 = vpop.f32.mrb[0].mxu0
        %4578 = vmatprep.mubr.f32.mxu0 0.0
        %v4579 = vand.u32 %v4158, 4294901760
        %4580 = vmatmul.mubr.f32.gmra.mrb[0].mxu0 %v4579
        %v4581 = vpop.f32.mrb[0].mxu0
        %v4582 = vadd.f32 %v4499, %v4581
        %v4583 = vpop.f32.mrb[0].mxu0
        %4584 = vdwg.mxu0
        %4585 = vmatprep.subr.mxu0 0.0
        %v4586 = vand.u32 %v4150, 4294901760
        %4587 = vmatpush1.msra.mxu0 %v4586
        %4588 = vmatprep.subr.mxu0 0.0
        %v4589 = vand.u32 %v4160, 4294901760
        %4590 = vmatpush1.msra.mxu0 %v4589
        %4591 = vmatprep.subr.mxu0 0.0
        %4592 = vmatpush1.msra.mxu0 0.0
        %4593 = vmatprep.subr.mxu0 0.0
        %4594 = vmatpush1.msra.mxu0 0.0
        %4595 = vmatprep.subr.mxu0 0.0
        %4596 = vmatpush1.msra.mxu0 0.0
        %4597 = vmatprep.subr.mxu0 0.0
        %4598 = vmatpush1.msra.mxu0 0.0
        %4599 = vmatprep.subr.mxu0 0.0
        %4600 = vmatpush1.msra.mxu0 0.0
        %4601 = vmatprep.subr.mxu0 0.0
        %4602 = vmatpush1.msra.mxu0 0.0
        %4603 = vmatprep.subr.mxu0 0.0
        %4604 = vmatpush1.msra.mxu0 0.0
        %4605 = vmatprep.subr.mxu0 0.0
        %4606 = vmatpush1.msra.mxu0 0.0
        %4607 = vmatprep.subr.mxu0 0.0
        %4608 = vmatpush1.msra.mxu0 0.0
        %4609 = vmatprep.subr.mxu0 0.0
        %4610 = vmatpush1.msra.mxu0 0.0
        %4611 = vmatprep.subr.mxu0 0.0
        %4612 = vmatpush1.msra.mxu0 0.0
        %4613 = vmatprep.subr.mxu0 0.0
        %4614 = vmatpush1.msra.mxu0 0.0
        %4615 = vmatprep.subr.mxu0 0.0
        %4616 = vmatpush1.msra.mxu0 0.0
        %4617 = vmatprep.subr.mxu0 0.0
        %4618 = vmatpush1.msra.mxu0 0.0
        %4619 = vmatprep.subr.mxu0 0.0
        %4620 = vmatpush1.msra.mxu0 0.0
        %4621 = vmatprep.subr.mxu0 0.0
        %4622 = vmatpush1.msra.mxu0 0.0
        %4623 = vmatprep.subr.mxu0 0.0
        %4624 = vmatpush1.msra.mxu0 0.0
        %4625 = vmatprep.subr.mxu0 0.0
        %4626 = vmatpush1.msra.mxu0 0.0
        %4627 = vmatprep.subr.mxu0 0.0
        %4628 = vmatpush1.msra.mxu0 0.0
        %4629 = vmatprep.subr.mxu0 0.0
        %4630 = vmatpush1.msra.mxu0 0.0
        %4631 = vmatprep.subr.mxu0 0.0
        %4632 = vmatpush1.msra.mxu0 0.0
        %4633 = vmatprep.subr.mxu0 0.0
        %4634 = vmatpush1.msra.mxu0 0.0
        %4635 = vmatprep.subr.mxu0 0.0
        %4636 = vmatpush1.msra.mxu0 0.0
        %4637 = vmatprep.subr.mxu0 0.0
        %4638 = vmatpush1.msra.mxu0 0.0
        %4639 = vmatprep.subr.mxu0 0.0
        %4640 = vmatpush1.msra.mxu0 0.0
        %4641 = vmatprep.subr.mxu0 0.0
        %4642 = vmatpush1.msra.mxu0 0.0
        %4643 = vmatprep.subr.mxu0 0.0
        %4644 = vmatpush1.msra.mxu0 0.0
        %4645 = vmatprep.subr.mxu0 0.0
        %4646 = vmatpush1.msra.mxu0 0.0
        %4647 = vmatprep.subr.mxu0 0.0
        %4648 = vmatpush1.msra.mxu0 0.0
        %4649 = vmatprep.subr.mxu0 0.0
        %4650 = vmatpush1.msra.mxu0 0.0
        %4651 = vmatprep.mubr.f32.mxu0 0.0
        %v4652 = vand.u32 %v4155, 4294901760
        %4653 = vmatmul.mubr.f32.gmra.mrb[0].mxu0 %v4652
        %v4654 = vpop.f32.mrb[0].mxu0
        %v4655 = vadd.f32 %v4576, %v4654
        %v4656 = vpop.f32.mrb[0].mxu0
        %4657 = vmatprep.mubr.f32.mxu0 0.0
        %v4658 = vand.u32 %v4158, 4294901760
        %4659 = vmatmul.mubr.f32.gmra.mrb[0].mxu0 %v4658
        %v4660 = vpop.f32.mrb[0].mxu0
        %v4661 = vadd.f32 %v4582, %v4660
        %v4662 = vpop.f32.mrb[0].mxu0
        %4663 = vdwg.mxu0
        %4664 = vrot.lane.b32.xlu0 %v1495, 64
        %v4665 = vpop.permute.xlu0 %4664
        %4666 = vrot.lane.b32.xlu0 %v1497, 64
        %v4667 = vpop.permute.xlu0 %4666
        %v4670 = vsel %vm3559, %v3602, 0
        %v4673 = vsel %vm3559, %v3604, 0
        %v4675 = vsel %vm3644, %v4667, 0
        %4677 = vmatprep.subr.mxu0 0.0
        %v4678 = vand.u32 %v4665, 4294901760
        %4679 = vmatpush1.msra.mxu0 %v4678
        %4680 = vmatprep.subr.mxu0 0.0
        %v4681 = vand.u32 %v4675, 4294901760
        %4682 = vmatpush1.msra.mxu0 %v4681
        %4683 = vmatprep.subr.mxu0 0.0
        %4684 = vmatpush1.msra.mxu0 0.0
        %4685 = vmatprep.subr.mxu0 0.0
        %4686 = vmatpush1.msra.mxu0 0.0
        %4687 = vmatprep.subr.mxu0 0.0
        %4688 = vmatpush1.msra.mxu0 0.0
        %4689 = vmatprep.subr.mxu0 0.0
        %4690 = vmatpush1.msra.mxu0 0.0
        %4691 = vmatprep.subr.mxu0 0.0
        %4692 = vmatpush1.msra.mxu0 0.0
        %4693 = vmatprep.subr.mxu0 0.0
        %4694 = vmatpush1.msra.mxu0 0.0
        %4695 = vmatprep.subr.mxu0 0.0
        %4696 = vmatpush1.msra.mxu0 0.0
        %4697 = vmatprep.subr.mxu0 0.0
        %4698 = vmatpush1.msra.mxu0 0.0
        %4699 = vmatprep.subr.mxu0 0.0
        %4700 = vmatpush1.msra.mxu0 0.0
        %4701 = vmatprep.subr.mxu0 0.0
        %4702 = vmatpush1.msra.mxu0 0.0
        %4703 = vmatprep.subr.mxu0 0.0
        %4704 = vmatpush1.msra.mxu0 0.0
        %4705 = vmatprep.subr.mxu0 0.0
        %4706 = vmatpush1.msra.mxu0 0.0
        %4707 = vmatprep.subr.mxu0 0.0
        %4708 = vmatpush1.msra.mxu0 0.0
        %4709 = vmatprep.subr.mxu0 0.0
        %4710 = vmatpush1.msra.mxu0 0.0
        %4711 = vmatprep.subr.mxu0 0.0
        %4712 = vmatpush1.msra.mxu0 0.0
        %4713 = vmatprep.subr.mxu0 0.0
        %4714 = vmatpush1.msra.mxu0 0.0
        %4715 = vmatprep.subr.mxu0 0.0
        %4716 = vmatpush1.msra.mxu0 0.0
        %4717 = vmatprep.subr.mxu0 0.0
        %4718 = vmatpush1.msra.mxu0 0.0
        %4719 = vmatprep.subr.mxu0 0.0
        %4720 = vmatpush1.msra.mxu0 0.0
        %4721 = vmatprep.subr.mxu0 0.0
        %4722 = vmatpush1.msra.mxu0 0.0
        %4723 = vmatprep.subr.mxu0 0.0
        %4724 = vmatpush1.msra.mxu0 0.0
        %4725 = vmatprep.subr.mxu0 0.0
        %4726 = vmatpush1.msra.mxu0 0.0
        %4727 = vmatprep.subr.mxu0 0.0
        %4728 = vmatpush1.msra.mxu0 0.0
        %4729 = vmatprep.subr.mxu0 0.0
        %4730 = vmatpush1.msra.mxu0 0.0
        %4731 = vmatprep.subr.mxu0 0.0
        %4732 = vmatpush1.msra.mxu0 0.0
        %4733 = vmatprep.subr.mxu0 0.0
        %4734 = vmatpush1.msra.mxu0 0.0
        %4735 = vmatprep.subr.mxu0 0.0
        %4736 = vmatpush1.msra.mxu0 0.0
        %4737 = vmatprep.subr.mxu0 0.0
        %4738 = vmatpush1.msra.mxu0 0.0
        %4739 = vmatprep.subr.mxu0 0.0
        %4740 = vmatpush1.msra.mxu0 0.0
        %4741 = vmatprep.subr.mxu0 0.0
        %4742 = vmatpush1.msra.mxu0 0.0
        %4743 = vmatprep.mubr.f32.mxu0 0.0
        %v4744 = vand.u32 %v4670, 4294901760
        %v4745 = vsub.f32 %v4670, %v4744
        %v4746 = vand.u32 %v4745, 4294901760
        %v4747 = vsub.f32 %v4745, %v4746
        %v4748 = vand.u32 %v4747, 4294901760
        %4749 = vmatmul.mubr.f32.gmra.mrb[0].mxu0 %v4748
        %v4750 = vpop.f32.mrb[0].mxu0
        %v4751 = vadd.f32 0.0, %v4750
        %v4752 = vpop.f32.mrb[0].mxu0
        %4753 = vmatprep.mubr.f32.mxu0 0.0
        %v4754 = vand.u32 %v4673, 4294901760
        %v4755 = vsub.f32 %v4673, %v4754
        %v4756 = vand.u32 %v4755, 4294901760
        %v4757 = vsub.f32 %v4755, %v4756
        %v4758 = vand.u32 %v4757, 4294901760
        %4759 = vmatmul.mubr.f32.gmra.mrb[0].mxu0 %v4758
        %v4760 = vpop.f32.mrb[0].mxu0
        %v4761 = vadd.f32 0.0, %v4760
        %v4762 = vpop.f32.mrb[0].mxu0
        %4763 = vdwg.mxu0
        %4764 = vmatprep.subr.mxu0 0.0
        %v4765 = vand.u32 %v4665, 4294901760
        %v4766 = vsub.f32 %v4665, %v4765
        %v4767 = vand.u32 %v4766, 4294901760
        %v4768 = vsub.f32 %v4766, %v4767
        %v4769 = vand.u32 %v4768, 4294901760
        %4770 = vmatpush1.msra.mxu0 %v4769
        %4771 = vmatprep.subr.mxu0 0.0
        %v4772 = vand.u32 %v4675, 4294901760
        %v4773 = vsub.f32 %v4675, %v4772
        %v4774 = vand.u32 %v4773, 4294901760
        %v4775 = vsub.f32 %v4773, %v4774
        %v4776 = vand.u32 %v4775, 4294901760
        %4777 = vmatpush1.msra.mxu0 %v4776
        %4778 = vmatprep.subr.mxu0 0.0
        %4779 = vmatpush1.msra.mxu0 0.0
        %4780 = vmatprep.subr.mxu0 0.0
        %4781 = vmatpush1.msra.mxu0 0.0
        %4782 = vmatprep.subr.mxu0 0.0
        %4783 = vmatpush1.msra.mxu0 0.0
        %4784 = vmatprep.subr.mxu0 0.0
        %4785 = vmatpush1.msra.mxu0 0.0
        %4786 = vmatprep.subr.mxu0 0.0
        %4787 = vmatpush1.msra.mxu0 0.0
        %4788 = vmatprep.subr.mxu0 0.0
        %4789 = vmatpush1.msra.mxu0 0.0
        %4790 = vmatprep.subr.mxu0 0.0
        %4791 = vmatpush1.msra.mxu0 0.0
        %4792 = vmatprep.subr.mxu0 0.0
        %4793 = vmatpush1.msra.mxu0 0.0
        %4794 = vmatprep.subr.mxu0 0.0
        %4795 = vmatpush1.msra.mxu0 0.0
        %4796 = vmatprep.subr.mxu0 0.0
        %4797 = vmatpush1.msra.mxu0 0.0
        %4798 = vmatprep.subr.mxu0 0.0
        %4799 = vmatpush1.msra.mxu0 0.0
        %4800 = vmatprep.subr.mxu0 0.0
        %4801 = vmatpush1.msra.mxu0 0.0
        %4802 = vmatprep.subr.mxu0 0.0
        %4803 = vmatpush1.msra.mxu0 0.0
        %4804 = vmatprep.subr.mxu0 0.0
        %4805 = vmatpush1.msra.mxu0 0.0
        %4806 = vmatprep.subr.mxu0 0.0
        %4807 = vmatpush1.msra.mxu0 0.0
        %4808 = vmatprep.subr.mxu0 0.0
        %4809 = vmatpush1.msra.mxu0 0.0
        %4810 = vmatprep.subr.mxu0 0.0
        %4811 = vmatpush1.msra.mxu0 0.0
        %4812 = vmatprep.subr.mxu0 0.0
        %4813 = vmatpush1.msra.mxu0 0.0
        %4814 = vmatprep.subr.mxu0 0.0
        %4815 = vmatpush1.msra.mxu0 0.0
        %4816 = vmatprep.subr.mxu0 0.0
        %4817 = vmatpush1.msra.mxu0 0.0
        %4818 = vmatprep.subr.mxu0 0.0
        %4819 = vmatpush1.msra.mxu0 0.0
        %4820 = vmatprep.subr.mxu0 0.0
        %4821 = vmatpush1.msra.mxu0 0.0
        %4822 = vmatprep.subr.mxu0 0.0
        %4823 = vmatpush1.msra.mxu0 0.0
        %4824 = vmatprep.subr.mxu0 0.0
        %4825 = vmatpush1.msra.mxu0 0.0
        %4826 = vmatprep.subr.mxu0 0.0
        %4827 = vmatpush1.msra.mxu0 0.0
        %4828 = vmatprep.subr.mxu0 0.0
        %4829 = vmatpush1.msra.mxu0 0.0
        %4830 = vmatprep.subr.mxu0 0.0
        %4831 = vmatpush1.msra.mxu0 0.0
        %4832 = vmatprep.subr.mxu0 0.0
        %4833 = vmatpush1.msra.mxu0 0.0
        %4834 = vmatprep.subr.mxu0 0.0
        %4835 = vmatpush1.msra.mxu0 0.0
        %4836 = vmatprep.subr.mxu0 0.0
        %4837 = vmatpush1.msra.mxu0 0.0
        %4838 = vmatprep.mubr.f32.mxu0 0.0
        %v4839 = vand.u32 %v4670, 4294901760
        %4840 = vmatmul.mubr.f32.gmra.mrb[0].mxu0 %v4839
        %v4841 = vpop.f32.mrb[0].mxu0
        %v4842 = vadd.f32 %v4751, %v4841
        %v4843 = vpop.f32.mrb[0].mxu0
        %4844 = vmatprep.mubr.f32.mxu0 0.0
        %v4845 = vand.u32 %v4673, 4294901760
        %4846 = vmatmul.mubr.f32.gmra.mrb[0].mxu0 %v4845
        %v4847 = vpop.f32.mrb[0].mxu0
        %v4848 = vadd.f32 %v4761, %v4847
        %v4849 = vpop.f32.mrb[0].mxu0
        %4850 = vdwg.mxu0
        %4851 = vmatprep.subr.mxu0 0.0
        %v4852 = vand.u32 %v4665, 4294901760
        %v4853 = vsub.f32 %v4665, %v4852
        %4854 = vmatpush1.msra.mxu0 %v4853
        %4855 = vmatprep.subr.mxu0 0.0
        %v4856 = vand.u32 %v4675, 4294901760
        %v4857 = vsub.f32 %v4675, %v4856
        %4858 = vmatpush1.msra.mxu0 %v4857
        %4859 = vmatprep.subr.mxu0 0.0
        %4860 = vmatpush1.msra.mxu0 0.0
        %4861 = vmatprep.subr.mxu0 0.0
        %4862 = vmatpush1.msra.mxu0 0.0
        %4863 = vmatprep.subr.mxu0 0.0
        %4864 = vmatpush1.msra.mxu0 0.0
        %4865 = vmatprep.subr.mxu0 0.0
        %4866 = vmatpush1.msra.mxu0 0.0
        %4867 = vmatprep.subr.mxu0 0.0
        %4868 = vmatpush1.msra.mxu0 0.0
        %4869 = vmatprep.subr.mxu0 0.0
        %4870 = vmatpush1.msra.mxu0 0.0
        %4871 = vmatprep.subr.mxu0 0.0
        %4872 = vmatpush1.msra.mxu0 0.0
        %4873 = vmatprep.subr.mxu0 0.0
        %4874 = vmatpush1.msra.mxu0 0.0
        %4875 = vmatprep.subr.mxu0 0.0
        %4876 = vmatpush1.msra.mxu0 0.0
        %4877 = vmatprep.subr.mxu0 0.0
        %4878 = vmatpush1.msra.mxu0 0.0
        %4879 = vmatprep.subr.mxu0 0.0
        %4880 = vmatpush1.msra.mxu0 0.0
        %4881 = vmatprep.subr.mxu0 0.0
        %4882 = vmatpush1.msra.mxu0 0.0
        %4883 = vmatprep.subr.mxu0 0.0
        %4884 = vmatpush1.msra.mxu0 0.0
        %4885 = vmatprep.subr.mxu0 0.0
        %4886 = vmatpush1.msra.mxu0 0.0
        %4887 = vmatprep.subr.mxu0 0.0
        %4888 = vmatpush1.msra.mxu0 0.0
        %4889 = vmatprep.subr.mxu0 0.0
        %4890 = vmatpush1.msra.mxu0 0.0
        %4891 = vmatprep.subr.mxu0 0.0
        %4892 = vmatpush1.msra.mxu0 0.0
        %4893 = vmatprep.subr.mxu0 0.0
        %4894 = vmatpush1.msra.mxu0 0.0
        %4895 = vmatprep.subr.mxu0 0.0
        %4896 = vmatpush1.msra.mxu0 0.0
        %4897 = vmatprep.subr.mxu0 0.0
        %4898 = vmatpush1.msra.mxu0 0.0
        %4899 = vmatprep.subr.mxu0 0.0
        %4900 = vmatpush1.msra.mxu0 0.0
        %4901 = vmatprep.subr.mxu0 0.0
        %4902 = vmatpush1.msra.mxu0 0.0
        %4903 = vmatprep.subr.mxu0 0.0
        %4904 = vmatpush1.msra.mxu0 0.0
        %4905 = vmatprep.subr.mxu0 0.0
        %4906 = vmatpush1.msra.mxu0 0.0
        %4907 = vmatprep.subr.mxu0 0.0
        %4908 = vmatpush1.msra.mxu0 0.0
        %4909 = vmatprep.subr.mxu0 0.0
        %4910 = vmatpush1.msra.mxu0 0.0
        %4911 = vmatprep.subr.mxu0 0.0
        %4912 = vmatpush1.msra.mxu0 0.0
        %4913 = vmatprep.subr.mxu0 0.0
        %4914 = vmatpush1.msra.mxu0 0.0
        %4915 = vmatprep.subr.mxu0 0.0
        %4916 = vmatpush1.msra.mxu0 0.0
        %4917 = vmatprep.subr.mxu0 0.0
        %4918 = vmatpush1.msra.mxu0 0.0
        %4919 = vmatprep.mubr.f32.mxu0 0.0
        %v4920 = vand.u32 %v4670, 4294901760
        %v4921 = vsub.f32 %v4670, %v4920
        %4922 = vmatmul.mubr.f32.gmra.mrb[0].mxu0 %v4921
        %v4923 = vpop.f32.mrb[0].mxu0
        %v4924 = vadd.f32 %v4842, %v4923
        %v4925 = vpop.f32.mrb[0].mxu0
        %4926 = vmatprep.mubr.f32.mxu0 0.0
        %v4927 = vand.u32 %v4673, 4294901760
        %v4928 = vsub.f32 %v4673, %v4927
        %4929 = vmatmul.mubr.f32.gmra.mrb[0].mxu0 %v4928
        %v4930 = vpop.f32.mrb[0].mxu0
        %v4931 = vadd.f32 %v4848, %v4930
        %v4932 = vpop.f32.mrb[0].mxu0
        %4933 = vdwg.mxu0
        %4934 = vmatprep.subr.mxu0 0.0
        %v4935 = vand.u32 %v4665, 4294901760
        %4936 = vmatpush1.msra.mxu0 %v4935
        %4937 = vmatprep.subr.mxu0 0.0
        %v4938 = vand.u32 %v4675, 4294901760
        %4939 = vmatpush1.msra.mxu0 %v4938
        %4940 = vmatprep.subr.mxu0 0.0
        %4941 = vmatpush1.msra.mxu0 0.0
        %4942 = vmatprep.subr.mxu0 0.0
        %4943 = vmatpush1.msra.mxu0 0.0
        %4944 = vmatprep.subr.mxu0 0.0
        %4945 = vmatpush1.msra.mxu0 0.0
        %4946 = vmatprep.subr.mxu0 0.0
        %4947 = vmatpush1.msra.mxu0 0.0
        %4948 = vmatprep.subr.mxu0 0.0
        %4949 = vmatpush1.msra.mxu0 0.0
        %4950 = vmatprep.subr.mxu0 0.0
        %4951 = vmatpush1.msra.mxu0 0.0
        %4952 = vmatprep.subr.mxu0 0.0
        %4953 = vmatpush1.msra.mxu0 0.0
        %4954 = vmatprep.subr.mxu0 0.0
        %4955 = vmatpush1.msra.mxu0 0.0
        %4956 = vmatprep.subr.mxu0 0.0
        %4957 = vmatpush1.msra.mxu0 0.0
        %4958 = vmatprep.subr.mxu0 0.0
        %4959 = vmatpush1.msra.mxu0 0.0
        %4960 = vmatprep.subr.mxu0 0.0
        %4961 = vmatpush1.msra.mxu0 0.0
        %4962 = vmatprep.subr.mxu0 0.0
        %4963 = vmatpush1.msra.mxu0 0.0
        %4964 = vmatprep.subr.mxu0 0.0
        %4965 = vmatpush1.msra.mxu0 0.0
        %4966 = vmatprep.subr.mxu0 0.0
        %4967 = vmatpush1.msra.mxu0 0.0
        %4968 = vmatprep.subr.mxu0 0.0
        %4969 = vmatpush1.msra.mxu0 0.0
        %4970 = vmatprep.subr.mxu0 0.0
        %4971 = vmatpush1.msra.mxu0 0.0
        %4972 = vmatprep.subr.mxu0 0.0
        %4973 = vmatpush1.msra.mxu0 0.0
        %4974 = vmatprep.subr.mxu0 0.0
        %4975 = vmatpush1.msra.mxu0 0.0
        %4976 = vmatprep.subr.mxu0 0.0
        %4977 = vmatpush1.msra.mxu0 0.0
        %4978 = vmatprep.subr.mxu0 0.0
        %4979 = vmatpush1.msra.mxu0 0.0
        %4980 = vmatprep.subr.mxu0 0.0
        %4981 = vmatpush1.msra.mxu0 0.0
        %4982 = vmatprep.subr.mxu0 0.0
        %4983 = vmatpush1.msra.mxu0 0.0
        %4984 = vmatprep.subr.mxu0 0.0
        %4985 = vmatpush1.msra.mxu0 0.0
        %4986 = vmatprep.subr.mxu0 0.0
        %4987 = vmatpush1.msra.mxu0 0.0
        %4988 = vmatprep.subr.mxu0 0.0
        %4989 = vmatpush1.msra.mxu0 0.0
        %4990 = vmatprep.subr.mxu0 0.0
        %4991 = vmatpush1.msra.mxu0 0.0
        %4992 = vmatprep.subr.mxu0 0.0
        %4993 = vmatpush1.msra.mxu0 0.0
        %4994 = vmatprep.subr.mxu0 0.0
        %4995 = vmatpush1.msra.mxu0 0.0
        %4996 = vmatprep.subr.mxu0 0.0
        %4997 = vmatpush1.msra.mxu0 0.0
        %4998 = vmatprep.subr.mxu0 0.0
        %4999 = vmatpush1.msra.mxu0 0.0
        %5000 = vmatprep.mubr.f32.mxu0 0.0
        %v5001 = vand.u32 %v4670, 4294901760
        %v5002 = vsub.f32 %v4670, %v5001
        %v5003 = vand.u32 %v5002, 4294901760
        %5004 = vmatmul.mubr.f32.gmra.mrb[0].mxu0 %v5003
        %v5005 = vpop.f32.mrb[0].mxu0
        %v5006 = vadd.f32 %v4924, %v5005
        %v5007 = vpop.f32.mrb[0].mxu0
        %5008 = vmatprep.mubr.f32.mxu0 0.0
        %v5009 = vand.u32 %v4673, 4294901760
        %v5010 = vsub.f32 %v4673, %v5009
        %v5011 = vand.u32 %v5010, 4294901760
        %5012 = vmatmul.mubr.f32.gmra.mrb[0].mxu0 %v5011
        %v5013 = vpop.f32.mrb[0].mxu0
        %v5014 = vadd.f32 %v4931, %v5013
        %v5015 = vpop.f32.mrb[0].mxu0
        %5016 = vdwg.mxu0
        %5017 = vmatprep.subr.mxu0 0.0
        %v5018 = vand.u32 %v4665, 4294901760
        %v5019 = vsub.f32 %v4665, %v5018
        %v5020 = vand.u32 %v5019, 4294901760
        %5021 = vmatpush1.msra.mxu0 %v5020
        %5022 = vmatprep.subr.mxu0 0.0
        %v5023 = vand.u32 %v4675, 4294901760
        %v5024 = vsub.f32 %v4675, %v5023
        %v5025 = vand.u32 %v5024, 4294901760
        %5026 = vmatpush1.msra.mxu0 %v5025
        %5027 = vmatprep.subr.mxu0 0.0
        %5028 = vmatpush1.msra.mxu0 0.0
        %5029 = vmatprep.subr.mxu0 0.0
        %5030 = vmatpush1.msra.mxu0 0.0
        %5031 = vmatprep.subr.mxu0 0.0
        %5032 = vmatpush1.msra.mxu0 0.0
        %5033 = vmatprep.subr.mxu0 0.0
        %5034 = vmatpush1.msra.mxu0 0.0
        %5035 = vmatprep.subr.mxu0 0.0
        %5036 = vmatpush1.msra.mxu0 0.0
        %5037 = vmatprep.subr.mxu0 0.0
        %5038 = vmatpush1.msra.mxu0 0.0
        %5039 = vmatprep.subr.mxu0 0.0
        %5040 = vmatpush1.msra.mxu0 0.0
        %5041 = vmatprep.subr.mxu0 0.0
        %5042 = vmatpush1.msra.mxu0 0.0
        %5043 = vmatprep.subr.mxu0 0.0
        %5044 = vmatpush1.msra.mxu0 0.0
        %5045 = vmatprep.subr.mxu0 0.0
        %5046 = vmatpush1.msra.mxu0 0.0
        %5047 = vmatprep.subr.mxu0 0.0
        %5048 = vmatpush1.msra.mxu0 0.0
        %5049 = vmatprep.subr.mxu0 0.0
        %5050 = vmatpush1.msra.mxu0 0.0
        %5051 = vmatprep.subr.mxu0 0.0
        %5052 = vmatpush1.msra.mxu0 0.0
        %5053 = vmatprep.subr.mxu0 0.0
        %5054 = vmatpush1.msra.mxu0 0.0
        %5055 = vmatprep.subr.mxu0 0.0
        %5056 = vmatpush1.msra.mxu0 0.0
        %5057 = vmatprep.subr.mxu0 0.0
        %5058 = vmatpush1.msra.mxu0 0.0
        %5059 = vmatprep.subr.mxu0 0.0
        %5060 = vmatpush1.msra.mxu0 0.0
        %5061 = vmatprep.subr.mxu0 0.0
        %5062 = vmatpush1.msra.mxu0 0.0
        %5063 = vmatprep.subr.mxu0 0.0
        %5064 = vmatpush1.msra.mxu0 0.0
        %5065 = vmatprep.subr.mxu0 0.0
        %5066 = vmatpush1.msra.mxu0 0.0
        %5067 = vmatprep.subr.mxu0 0.0
        %5068 = vmatpush1.msra.mxu0 0.0
        %5069 = vmatprep.subr.mxu0 0.0
        %5070 = vmatpush1.msra.mxu0 0.0
        %5071 = vmatprep.subr.mxu0 0.0
        %5072 = vmatpush1.msra.mxu0 0.0
        %5073 = vmatprep.subr.mxu0 0.0
        %5074 = vmatpush1.msra.mxu0 0.0
        %5075 = vmatprep.subr.mxu0 0.0
        %5076 = vmatpush1.msra.mxu0 0.0
        %5077 = vmatprep.subr.mxu0 0.0
        %5078 = vmatpush1.msra.mxu0 0.0
        %5079 = vmatprep.subr.mxu0 0.0
        %5080 = vmatpush1.msra.mxu0 0.0
        %5081 = vmatprep.subr.mxu0 0.0
        %5082 = vmatpush1.msra.mxu0 0.0
        %5083 = vmatprep.subr.mxu0 0.0
        %5084 = vmatpush1.msra.mxu0 0.0
        %5085 = vmatprep.subr.mxu0 0.0
        %5086 = vmatpush1.msra.mxu0 0.0
        %5087 = vmatprep.mubr.f32.mxu0 0.0
        %v5088 = vand.u32 %v4670, 4294901760
        %5089 = vmatmul.mubr.f32.gmra.mrb[0].mxu0 %v5088
        %v5090 = vpop.f32.mrb[0].mxu0
        %v5091 = vadd.f32 %v5006, %v5090
        %v5092 = vpop.f32.mrb[0].mxu0
        %5093 = vmatprep.mubr.f32.mxu0 0.0
        %v5094 = vand.u32 %v4673, 4294901760
        %5095 = vmatmul.mubr.f32.gmra.mrb[0].mxu0 %v5094
        %v5096 = vpop.f32.mrb[0].mxu0
        %v5097 = vadd.f32 %v5014, %v5096
        %v5098 = vpop.f32.mrb[0].mxu0
        %5099 = vdwg.mxu0
        %5100 = vmatprep.subr.mxu0 0.0
        %v5101 = vand.u32 %v4665, 4294901760
        %5102 = vmatpush1.msra.mxu0 %v5101
        %5103 = vmatprep.subr.mxu0 0.0
        %v5104 = vand.u32 %v4675, 4294901760
        %5105 = vmatpush1.msra.mxu0 %v5104
        %5106 = vmatprep.subr.mxu0 0.0
        %5107 = vmatpush1.msra.mxu0 0.0
        %5108 = vmatprep.subr.mxu0 0.0
        %5109 = vmatpush1.msra.mxu0 0.0
        %5110 = vmatprep.subr.mxu0 0.0
        %5111 = vmatpush1.msra.mxu0 0.0
        %5112 = vmatprep.subr.mxu0 0.0
        %5113 = vmatpush1.msra.mxu0 0.0
        %5114 = vmatprep.subr.mxu0 0.0
        %5115 = vmatpush1.msra.mxu0 0.0
        %5116 = vmatprep.subr.mxu0 0.0
        %5117 = vmatpush1.msra.mxu0 0.0
        %5118 = vmatprep.subr.mxu0 0.0
        %5119 = vmatpush1.msra.mxu0 0.0
        %5120 = vmatprep.subr.mxu0 0.0
        %5121 = vmatpush1.msra.mxu0 0.0
        %5122 = vmatprep.subr.mxu0 0.0
        %5123 = vmatpush1.msra.mxu0 0.0
        %5124 = vmatprep.subr.mxu0 0.0
        %5125 = vmatpush1.msra.mxu0 0.0
        %5126 = vmatprep.subr.mxu0 0.0
        %5127 = vmatpush1.msra.mxu0 0.0
        %5128 = vmatprep.subr.mxu0 0.0
        %5129 = vmatpush1.msra.mxu0 0.0
        %5130 = vmatprep.subr.mxu0 0.0
        %5131 = vmatpush1.msra.mxu0 0.0
        %5132 = vmatprep.subr.mxu0 0.0
        %5133 = vmatpush1.msra.mxu0 0.0
        %5134 = vmatprep.subr.mxu0 0.0
        %5135 = vmatpush1.msra.mxu0 0.0
        %5136 = vmatprep.subr.mxu0 0.0
        %5137 = vmatpush1.msra.mxu0 0.0
        %5138 = vmatprep.subr.mxu0 0.0
        %5139 = vmatpush1.msra.mxu0 0.0
        %5140 = vmatprep.subr.mxu0 0.0
        %5141 = vmatpush1.msra.mxu0 0.0
        %5142 = vmatprep.subr.mxu0 0.0
        %5143 = vmatpush1.msra.mxu0 0.0
        %5144 = vmatprep.subr.mxu0 0.0
        %5145 = vmatpush1.msra.mxu0 0.0
        %5146 = vmatprep.subr.mxu0 0.0
        %5147 = vmatpush1.msra.mxu0 0.0
        %5148 = vmatprep.subr.mxu0 0.0
        %5149 = vmatpush1.msra.mxu0 0.0
        %5150 = vmatprep.subr.mxu0 0.0
        %5151 = vmatpush1.msra.mxu0 0.0
        %5152 = vmatprep.subr.mxu0 0.0
        %5153 = vmatpush1.msra.mxu0 0.0
        %5154 = vmatprep.subr.mxu0 0.0
        %5155 = vmatpush1.msra.mxu0 0.0
        %5156 = vmatprep.subr.mxu0 0.0
        %5157 = vmatpush1.msra.mxu0 0.0
        %5158 = vmatprep.subr.mxu0 0.0
        %5159 = vmatpush1.msra.mxu0 0.0
        %5160 = vmatprep.subr.mxu0 0.0
        %5161 = vmatpush1.msra.mxu0 0.0
        %5162 = vmatprep.subr.mxu0 0.0
        %5163 = vmatpush1.msra.mxu0 0.0
        %5164 = vmatprep.subr.mxu0 0.0
        %5165 = vmatpush1.msra.mxu0 0.0
        %5166 = vmatprep.mubr.f32.mxu0 0.0
        %v5167 = vand.u32 %v4670, 4294901760
        %5168 = vmatmul.mubr.f32.gmra.mrb[0].mxu0 %v5167
        %v5169 = vpop.f32.mrb[0].mxu0
        %v5170 = vadd.f32 %v5091, %v5169
        %v5171 = vpop.f32.mrb[0].mxu0
        %5172 = vmatprep.mubr.f32.mxu0 0.0
        %v5173 = vand.u32 %v4673, 4294901760
        %5174 = vmatmul.mubr.f32.gmra.mrb[0].mxu0 %v5173
        %v5175 = vpop.f32.mrb[0].mxu0
        %v5176 = vadd.f32 %v5097, %v5175
        %v5177 = vpop.f32.mrb[0].mxu0
        %5178 = vdwg.mxu0
        %5179 = vrot.lane.b32.xlu0 %v1499, 64
        %v5180 = vpop.permute.xlu0 %5179
        %5181 = vrot.lane.b32.xlu0 %v1501, 64
        %v5182 = vpop.permute.xlu0 %5181
        %v5185 = vsel %vm3559, %v3606, 0
        %v5188 = vsel %vm3559, %v3608, 0
        %v5190 = vsel %vm3644, %v5182, 0
        %5192 = vmatprep.subr.mxu0 0.0
        %v5193 = vand.u32 %v5180, 4294901760
        %5194 = vmatpush1.msra.mxu0 %v5193
        %5195 = vmatprep.subr.mxu0 0.0
        %v5196 = vand.u32 %v5190, 4294901760
        %5197 = vmatpush1.msra.mxu0 %v5196
        %5198 = vmatprep.subr.mxu0 0.0
        %5199 = vmatpush1.msra.mxu0 0.0
        %5200 = vmatprep.subr.mxu0 0.0
        %5201 = vmatpush1.msra.mxu0 0.0
        %5202 = vmatprep.subr.mxu0 0.0
        %5203 = vmatpush1.msra.mxu0 0.0
        %5204 = vmatprep.subr.mxu0 0.0
        %5205 = vmatpush1.msra.mxu0 0.0
        %5206 = vmatprep.subr.mxu0 0.0
        %5207 = vmatpush1.msra.mxu0 0.0
        %5208 = vmatprep.subr.mxu0 0.0
        %5209 = vmatpush1.msra.mxu0 0.0
        %5210 = vmatprep.subr.mxu0 0.0
        %5211 = vmatpush1.msra.mxu0 0.0
        %5212 = vmatprep.subr.mxu0 0.0
        %5213 = vmatpush1.msra.mxu0 0.0
        %5214 = vmatprep.subr.mxu0 0.0
        %5215 = vmatpush1.msra.mxu0 0.0
        %5216 = vmatprep.subr.mxu0 0.0
        %5217 = vmatpush1.msra.mxu0 0.0
        %5218 = vmatprep.subr.mxu0 0.0
        %5219 = vmatpush1.msra.mxu0 0.0
        %5220 = vmatprep.subr.mxu0 0.0
        %5221 = vmatpush1.msra.mxu0 0.0
        %5222 = vmatprep.subr.mxu0 0.0
        %5223 = vmatpush1.msra.mxu0 0.0
        %5224 = vmatprep.subr.mxu0 0.0
        %5225 = vmatpush1.msra.mxu0 0.0
        %5226 = vmatprep.subr.mxu0 0.0
        %5227 = vmatpush1.msra.mxu0 0.0
        %5228 = vmatprep.subr.mxu0 0.0
        %5229 = vmatpush1.msra.mxu0 0.0
        %5230 = vmatprep.subr.mxu0 0.0
        %5231 = vmatpush1.msra.mxu0 0.0
        %5232 = vmatprep.subr.mxu0 0.0
        %5233 = vmatpush1.msra.mxu0 0.0
        %5234 = vmatprep.subr.mxu0 0.0
        %5235 = vmatpush1.msra.mxu0 0.0
        %5236 = vmatprep.subr.mxu0 0.0
        %5237 = vmatpush1.msra.mxu0 0.0
        %5238 = vmatprep.subr.mxu0 0.0
        %5239 = vmatpush1.msra.mxu0 0.0
        %5240 = vmatprep.subr.mxu0 0.0
        %5241 = vmatpush1.msra.mxu0 0.0
        %5242 = vmatprep.subr.mxu0 0.0
        %5243 = vmatpush1.msra.mxu0 0.0
        %5244 = vmatprep.subr.mxu0 0.0
        %5245 = vmatpush1.msra.mxu0 0.0
        %5246 = vmatprep.subr.mxu0 0.0
        %5247 = vmatpush1.msra.mxu0 0.0
        %5248 = vmatprep.subr.mxu0 0.0
        %5249 = vmatpush1.msra.mxu0 0.0
        %5250 = vmatprep.subr.mxu0 0.0
        %5251 = vmatpush1.msra.mxu0 0.0
        %5252 = vmatprep.subr.mxu0 0.0
        %5253 = vmatpush1.msra.mxu0 0.0
        %5254 = vmatprep.subr.mxu0 0.0
        %5255 = vmatpush1.msra.mxu0 0.0
        %5256 = vmatprep.subr.mxu0 0.0
        %5257 = vmatpush1.msra.mxu0 0.0
        %5258 = vmatprep.mubr.f32.mxu0 0.0
        %v5259 = vand.u32 %v5185, 4294901760
        %v5260 = vsub.f32 %v5185, %v5259
        %v5261 = vand.u32 %v5260, 4294901760
        %v5262 = vsub.f32 %v5260, %v5261
        %v5263 = vand.u32 %v5262, 4294901760
        %5264 = vmatmul.mubr.f32.gmra.mrb[0].mxu0 %v5263
        %v5265 = vpop.f32.mrb[0].mxu0
        %v5266 = vadd.f32 0.0, %v5265
        %v5267 = vpop.f32.mrb[0].mxu0
        %5268 = vmatprep.mubr.f32.mxu0 0.0
        %v5269 = vand.u32 %v5188, 4294901760
        %v5270 = vsub.f32 %v5188, %v5269
        %v5271 = vand.u32 %v5270, 4294901760
        %v5272 = vsub.f32 %v5270, %v5271
        %v5273 = vand.u32 %v5272, 4294901760
        %5274 = vmatmul.mubr.f32.gmra.mrb[0].mxu0 %v5273
        %v5275 = vpop.f32.mrb[0].mxu0
        %v5276 = vadd.f32 0.0, %v5275
        %v5277 = vpop.f32.mrb[0].mxu0
        %5278 = vdwg.mxu0
        %5279 = vmatprep.subr.mxu0 0.0
        %v5280 = vand.u32 %v5180, 4294901760
        %v5281 = vsub.f32 %v5180, %v5280
        %v5282 = vand.u32 %v5281, 4294901760
        %v5283 = vsub.f32 %v5281, %v5282
        %v5284 = vand.u32 %v5283, 4294901760
        %5285 = vmatpush1.msra.mxu0 %v5284
        %5286 = vmatprep.subr.mxu0 0.0
        %v5287 = vand.u32 %v5190, 4294901760
        %v5288 = vsub.f32 %v5190, %v5287
        %v5289 = vand.u32 %v5288, 4294901760
        %v5290 = vsub.f32 %v5288, %v5289
        %v5291 = vand.u32 %v5290, 4294901760
        %5292 = vmatpush1.msra.mxu0 %v5291
        %5293 = vmatprep.subr.mxu0 0.0
        %5294 = vmatpush1.msra.mxu0 0.0
        %5295 = vmatprep.subr.mxu0 0.0
        %5296 = vmatpush1.msra.mxu0 0.0
        %5297 = vmatprep.subr.mxu0 0.0
        %5298 = vmatpush1.msra.mxu0 0.0
        %5299 = vmatprep.subr.mxu0 0.0
        %5300 = vmatpush1.msra.mxu0 0.0
        %5301 = vmatprep.subr.mxu0 0.0
        %5302 = vmatpush1.msra.mxu0 0.0
        %5303 = vmatprep.subr.mxu0 0.0
        %5304 = vmatpush1.msra.mxu0 0.0
        %5305 = vmatprep.subr.mxu0 0.0
        %5306 = vmatpush1.msra.mxu0 0.0
        %5307 = vmatprep.subr.mxu0 0.0
        %5308 = vmatpush1.msra.mxu0 0.0
        %5309 = vmatprep.subr.mxu0 0.0
        %5310 = vmatpush1.msra.mxu0 0.0
        %5311 = vmatprep.subr.mxu0 0.0
        %5312 = vmatpush1.msra.mxu0 0.0
        %5313 = vmatprep.subr.mxu0 0.0
        %5314 = vmatpush1.msra.mxu0 0.0
        %5315 = vmatprep.subr.mxu0 0.0
        %5316 = vmatpush1.msra.mxu0 0.0
        %5317 = vmatprep.subr.mxu0 0.0
        %5318 = vmatpush1.msra.mxu0 0.0
        %5319 = vmatprep.subr.mxu0 0.0
        %5320 = vmatpush1.msra.mxu0 0.0
        %5321 = vmatprep.subr.mxu0 0.0
        %5322 = vmatpush1.msra.mxu0 0.0
        %5323 = vmatprep.subr.mxu0 0.0
        %5324 = vmatpush1.msra.mxu0 0.0
        %5325 = vmatprep.subr.mxu0 0.0
        %5326 = vmatpush1.msra.mxu0 0.0
        %5327 = vmatprep.subr.mxu0 0.0
        %5328 = vmatpush1.msra.mxu0 0.0
        %5329 = vmatprep.subr.mxu0 0.0
        %5330 = vmatpush1.msra.mxu0 0.0
        %5331 = vmatprep.subr.mxu0 0.0
        %5332 = vmatpush1.msra.mxu0 0.0
        %5333 = vmatprep.subr.mxu0 0.0
        %5334 = vmatpush1.msra.mxu0 0.0
        %5335 = vmatprep.subr.mxu0 0.0
        %5336 = vmatpush1.msra.mxu0 0.0
        %5337 = vmatprep.subr.mxu0 0.0
        %5338 = vmatpush1.msra.mxu0 0.0
        %5339 = vmatprep.subr.mxu0 0.0
        %5340 = vmatpush1.msra.mxu0 0.0
        %5341 = vmatprep.subr.mxu0 0.0
        %5342 = vmatpush1.msra.mxu0 0.0
        %5343 = vmatprep.subr.mxu0 0.0
        %5344 = vmatpush1.msra.mxu0 0.0
        %5345 = vmatprep.subr.mxu0 0.0
        %5346 = vmatpush1.msra.mxu0 0.0
        %5347 = vmatprep.subr.mxu0 0.0
        %5348 = vmatpush1.msra.mxu0 0.0
        %5349 = vmatprep.subr.mxu0 0.0
        %5350 = vmatpush1.msra.mxu0 0.0
        %5351 = vmatprep.subr.mxu0 0.0
        %5352 = vmatpush1.msra.mxu0 0.0
        %5353 = vmatprep.mubr.f32.mxu0 0.0
        %v5354 = vand.u32 %v5185, 4294901760
        %5355 = vmatmul.mubr.f32.gmra.mrb[0].mxu0 %v5354
        %v5356 = vpop.f32.mrb[0].mxu0
        %v5357 = vadd.f32 %v5266, %v5356
        %v5358 = vpop.f32.mrb[0].mxu0
        %5359 = vmatprep.mubr.f32.mxu0 0.0
        %v5360 = vand.u32 %v5188, 4294901760
        %5361 = vmatmul.mubr.f32.gmra.mrb[0].mxu0 %v5360
        %v5362 = vpop.f32.mrb[0].mxu0
        %v5363 = vadd.f32 %v5276, %v5362
        %v5364 = vpop.f32.mrb[0].mxu0
        %5365 = vdwg.mxu0
        %5366 = vmatprep.subr.mxu0 0.0
        %v5367 = vand.u32 %v5180, 4294901760
        %v5368 = vsub.f32 %v5180, %v5367
        %5369 = vmatpush1.msra.mxu0 %v5368
        %5370 = vmatprep.subr.mxu0 0.0
        %v5371 = vand.u32 %v5190, 4294901760
        %v5372 = vsub.f32 %v5190, %v5371
        %5373 = vmatpush1.msra.mxu0 %v5372
        %5374 = vmatprep.subr.mxu0 0.0
        %5375 = vmatpush1.msra.mxu0 0.0
        %5376 = vmatprep.subr.mxu0 0.0
        %5377 = vmatpush1.msra.mxu0 0.0
        %5378 = vmatprep.subr.mxu0 0.0
        %5379 = vmatpush1.msra.mxu0 0.0
        %5380 = vmatprep.subr.mxu0 0.0
        %5381 = vmatpush1.msra.mxu0 0.0
        %5382 = vmatprep.subr.mxu0 0.0
        %5383 = vmatpush1.msra.mxu0 0.0
        %5384 = vmatprep.subr.mxu0 0.0
        %5385 = vmatpush1.msra.mxu0 0.0
        %5386 = vmatprep.subr.mxu0 0.0
        %5387 = vmatpush1.msra.mxu0 0.0
        %5388 = vmatprep.subr.mxu0 0.0
        %5389 = vmatpush1.msra.mxu0 0.0
        %5390 = vmatprep.subr.mxu0 0.0
        %5391 = vmatpush1.msra.mxu0 0.0
        %5392 = vmatprep.subr.mxu0 0.0
        %5393 = vmatpush1.msra.mxu0 0.0
        %5394 = vmatprep.subr.mxu0 0.0
        %5395 = vmatpush1.msra.mxu0 0.0
        %5396 = vmatprep.subr.mxu0 0.0
        %5397 = vmatpush1.msra.mxu0 0.0
        %5398 = vmatprep.subr.mxu0 0.0
        %5399 = vmatpush1.msra.mxu0 0.0
        %5400 = vmatprep.subr.mxu0 0.0
        %5401 = vmatpush1.msra.mxu0 0.0
        %5402 = vmatprep.subr.mxu0 0.0
        %5403 = vmatpush1.msra.mxu0 0.0
        %5404 = vmatprep.subr.mxu0 0.0
        %5405 = vmatpush1.msra.mxu0 0.0
        %5406 = vmatprep.subr.mxu0 0.0
        %5407 = vmatpush1.msra.mxu0 0.0
        %5408 = vmatprep.subr.mxu0 0.0
        %5409 = vmatpush1.msra.mxu0 0.0
        %5410 = vmatprep.subr.mxu0 0.0
        %5411 = vmatpush1.msra.mxu0 0.0
        %5412 = vmatprep.subr.mxu0 0.0
        %5413 = vmatpush1.msra.mxu0 0.0
        %5414 = vmatprep.subr.mxu0 0.0
        %5415 = vmatpush1.msra.mxu0 0.0
        %5416 = vmatprep.subr.mxu0 0.0
        %5417 = vmatpush1.msra.mxu0 0.0
        %5418 = vmatprep.subr.mxu0 0.0
        %5419 = vmatpush1.msra.mxu0 0.0
        %5420 = vmatprep.subr.mxu0 0.0
        %5421 = vmatpush1.msra.mxu0 0.0
        %5422 = vmatprep.subr.mxu0 0.0
        %5423 = vmatpush1.msra.mxu0 0.0
        %5424 = vmatprep.subr.mxu0 0.0
        %5425 = vmatpush1.msra.mxu0 0.0
        %5426 = vmatprep.subr.mxu0 0.0
        %5427 = vmatpush1.msra.mxu0 0.0
        %5428 = vmatprep.subr.mxu0 0.0
        %5429 = vmatpush1.msra.mxu0 0.0
        %5430 = vmatprep.subr.mxu0 0.0
        %5431 = vmatpush1.msra.mxu0 0.0
        %5432 = vmatprep.subr.mxu0 0.0
        %5433 = vmatpush1.msra.mxu0 0.0
        %5434 = vmatprep.mubr.f32.mxu0 0.0
        %v5435 = vand.u32 %v5185, 4294901760
        %v5436 = vsub.f32 %v5185, %v5435
        %5437 = vmatmul.mubr.f32.gmra.mrb[0].mxu0 %v5436
        %v5438 = vpop.f32.mrb[0].mxu0
        %v5439 = vadd.f32 %v5357, %v5438
        %v5440 = vpop.f32.mrb[0].mxu0
        %5441 = vmatprep.mubr.f32.mxu0 0.0
        %v5442 = vand.u32 %v5188, 4294901760
        %v5443 = vsub.f32 %v5188, %v5442
        %5444 = vmatmul.mubr.f32.gmra.mrb[0].mxu0 %v5443
        %v5445 = vpop.f32.mrb[0].mxu0
        %v5446 = vadd.f32 %v5363, %v5445
        %v5447 = vpop.f32.mrb[0].mxu0
        %5448 = vdwg.mxu0
        %5449 = vmatprep.subr.mxu0 0.0
        %v5450 = vand.u32 %v5180, 4294901760
        %5451 = vmatpush1.msra.mxu0 %v5450
        %5452 = vmatprep.subr.mxu0 0.0
        %v5453 = vand.u32 %v5190, 4294901760
        %5454 = vmatpush1.msra.mxu0 %v5453
        %5455 = vmatprep.subr.mxu0 0.0
        %5456 = vmatpush1.msra.mxu0 0.0
        %5457 = vmatprep.subr.mxu0 0.0
        %5458 = vmatpush1.msra.mxu0 0.0
        %5459 = vmatprep.subr.mxu0 0.0
        %5460 = vmatpush1.msra.mxu0 0.0
        %5461 = vmatprep.subr.mxu0 0.0
        %5462 = vmatpush1.msra.mxu0 0.0
        %5463 = vmatprep.subr.mxu0 0.0
        %5464 = vmatpush1.msra.mxu0 0.0
        %5465 = vmatprep.subr.mxu0 0.0
        %5466 = vmatpush1.msra.mxu0 0.0
        %5467 = vmatprep.subr.mxu0 0.0
        %5468 = vmatpush1.msra.mxu0 0.0
        %5469 = vmatprep.subr.mxu0 0.0
        %5470 = vmatpush1.msra.mxu0 0.0
        %5471 = vmatprep.subr.mxu0 0.0
        %5472 = vmatpush1.msra.mxu0 0.0
        %5473 = vmatprep.subr.mxu0 0.0
        %5474 = vmatpush1.msra.mxu0 0.0
        %5475 = vmatprep.subr.mxu0 0.0
        %5476 = vmatpush1.msra.mxu0 0.0
        %5477 = vmatprep.subr.mxu0 0.0
        %5478 = vmatpush1.msra.mxu0 0.0
        %5479 = vmatprep.subr.mxu0 0.0
        %5480 = vmatpush1.msra.mxu0 0.0
        %5481 = vmatprep.subr.mxu0 0.0
        %5482 = vmatpush1.msra.mxu0 0.0
        %5483 = vmatprep.subr.mxu0 0.0
        %5484 = vmatpush1.msra.mxu0 0.0
        %5485 = vmatprep.subr.mxu0 0.0
        %5486 = vmatpush1.msra.mxu0 0.0
        %5487 = vmatprep.subr.mxu0 0.0
        %5488 = vmatpush1.msra.mxu0 0.0
        %5489 = vmatprep.subr.mxu0 0.0
        %5490 = vmatpush1.msra.mxu0 0.0
        %5491 = vmatprep.subr.mxu0 0.0
        %5492 = vmatpush1.msra.mxu0 0.0
        %5493 = vmatprep.subr.mxu0 0.0
        %5494 = vmatpush1.msra.mxu0 0.0
        %5495 = vmatprep.subr.mxu0 0.0
        %5496 = vmatpush1.msra.mxu0 0.0
        %5497 = vmatprep.subr.mxu0 0.0
        %5498 = vmatpush1.msra.mxu0 0.0
        %5499 = vmatprep.subr.mxu0 0.0
        %5500 = vmatpush1.msra.mxu0 0.0
        %5501 = vmatprep.subr.mxu0 0.0
        %5502 = vmatpush1.msra.mxu0 0.0
        %5503 = vmatprep.subr.mxu0 0.0
        %5504 = vmatpush1.msra.mxu0 0.0
        %5505 = vmatprep.subr.mxu0 0.0
        %5506 = vmatpush1.msra.mxu0 0.0
        %5507 = vmatprep.subr.mxu0 0.0
        %5508 = vmatpush1.msra.mxu0 0.0
        %5509 = vmatprep.subr.mxu0 0.0
        %5510 = vmatpush1.msra.mxu0 0.0
        %5511 = vmatprep.subr.mxu0 0.0
        %5512 = vmatpush1.msra.mxu0 0.0
        %5513 = vmatprep.subr.mxu0 0.0
        %5514 = vmatpush1.msra.mxu0 0.0
        %5515 = vmatprep.mubr.f32.mxu0 0.0
        %v5516 = vand.u32 %v5185, 4294901760
        %v5517 = vsub.f32 %v5185, %v5516
        %v5518 = vand.u32 %v5517, 4294901760
        %5519 = vmatmul.mubr.f32.gmra.mrb[0].mxu0 %v5518
        %v5520 = vpop.f32.mrb[0].mxu0
        %v5521 = vadd.f32 %v5439, %v5520
        %v5522 = vpop.f32.mrb[0].mxu0
        %5523 = vmatprep.mubr.f32.mxu0 0.0
        %v5524 = vand.u32 %v5188, 4294901760
        %v5525 = vsub.f32 %v5188, %v5524
        %v5526 = vand.u32 %v5525, 4294901760
        %5527 = vmatmul.mubr.f32.gmra.mrb[0].mxu0 %v5526
        %v5528 = vpop.f32.mrb[0].mxu0
        %v5529 = vadd.f32 %v5446, %v5528
        %v5530 = vpop.f32.mrb[0].mxu0
        %5531 = vdwg.mxu0
        %5532 = vmatprep.subr.mxu0 0.0
        %v5533 = vand.u32 %v5180, 4294901760
        %v5534 = vsub.f32 %v5180, %v5533
        %v5535 = vand.u32 %v5534, 4294901760
        %5536 = vmatpush1.msra.mxu0 %v5535
        %5537 = vmatprep.subr.mxu0 0.0
        %v5538 = vand.u32 %v5190, 4294901760
        %v5539 = vsub.f32 %v5190, %v5538
        %v5540 = vand.u32 %v5539, 4294901760
        %5541 = vmatpush1.msra.mxu0 %v5540
        %5542 = vmatprep.subr.mxu0 0.0
        %5543 = vmatpush1.msra.mxu0 0.0
        %5544 = vmatprep.subr.mxu0 0.0
        %5545 = vmatpush1.msra.mxu0 0.0
        %5546 = vmatprep.subr.mxu0 0.0
        %5547 = vmatpush1.msra.mxu0 0.0
        %5548 = vmatprep.subr.mxu0 0.0
        %5549 = vmatpush1.msra.mxu0 0.0
        %5550 = vmatprep.subr.mxu0 0.0
        %5551 = vmatpush1.msra.mxu0 0.0
        %5552 = vmatprep.subr.mxu0 0.0
        %5553 = vmatpush1.msra.mxu0 0.0
        %5554 = vmatprep.subr.mxu0 0.0
        %5555 = vmatpush1.msra.mxu0 0.0
        %5556 = vmatprep.subr.mxu0 0.0
        %5557 = vmatpush1.msra.mxu0 0.0
        %5558 = vmatprep.subr.mxu0 0.0
        %5559 = vmatpush1.msra.mxu0 0.0
        %5560 = vmatprep.subr.mxu0 0.0
        %5561 = vmatpush1.msra.mxu0 0.0
        %5562 = vmatprep.subr.mxu0 0.0
        %5563 = vmatpush1.msra.mxu0 0.0
        %5564 = vmatprep.subr.mxu0 0.0
        %5565 = vmatpush1.msra.mxu0 0.0
        %5566 = vmatprep.subr.mxu0 0.0
        %5567 = vmatpush1.msra.mxu0 0.0
        %5568 = vmatprep.subr.mxu0 0.0
        %5569 = vmatpush1.msra.mxu0 0.0
        %5570 = vmatprep.subr.mxu0 0.0
        %5571 = vmatpush1.msra.mxu0 0.0
        %5572 = vmatprep.subr.mxu0 0.0
        %5573 = vmatpush1.msra.mxu0 0.0
        %5574 = vmatprep.subr.mxu0 0.0
        %5575 = vmatpush1.msra.mxu0 0.0
        %5576 = vmatprep.subr.mxu0 0.0
        %5577 = vmatpush1.msra.mxu0 0.0
        %5578 = vmatprep.subr.mxu0 0.0
        %5579 = vmatpush1.msra.mxu0 0.0
        %5580 = vmatprep.subr.mxu0 0.0
        %5581 = vmatpush1.msra.mxu0 0.0
        %5582 = vmatprep.subr.mxu0 0.0
        %5583 = vmatpush1.msra.mxu0 0.0
        %5584 = vmatprep.subr.mxu0 0.0
        %5585 = vmatpush1.msra.mxu0 0.0
        %5586 = vmatprep.subr.mxu0 0.0
        %5587 = vmatpush1.msra.mxu0 0.0
        %5588 = vmatprep.subr.mxu0 0.0
        %5589 = vmatpush1.msra.mxu0 0.0
        %5590 = vmatprep.subr.mxu0 0.0
        %5591 = vmatpush1.msra.mxu0 0.0
        %5592 = vmatprep.subr.mxu0 0.0
        %5593 = vmatpush1.msra.mxu0 0.0
        %5594 = vmatprep.subr.mxu0 0.0
        %5595 = vmatpush1.msra.mxu0 0.0
        %5596 = vmatprep.subr.mxu0 0.0
        %5597 = vmatpush1.msra.mxu0 0.0
        %5598 = vmatprep.subr.mxu0 0.0
        %5599 = vmatpush1.msra.mxu0 0.0
        %5600 = vmatprep.subr.mxu0 0.0
        %5601 = vmatpush1.msra.mxu0 0.0
        %5602 = vmatprep.mubr.f32.mxu0 0.0
        %v5603 = vand.u32 %v5185, 4294901760
        %5604 = vmatmul.mubr.f32.gmra.mrb[0].mxu0 %v5603
        %v5605 = vpop.f32.mrb[0].mxu0
        %v5606 = vadd.f32 %v5521, %v5605
        %v5607 = vpop.f32.mrb[0].mxu0
        %5608 = vmatprep.mubr.f32.mxu0 0.0
        %v5609 = vand.u32 %v5188, 4294901760
        %5610 = vmatmul.mubr.f32.gmra.mrb[0].mxu0 %v5609
        %v5611 = vpop.f32.mrb[0].mxu0
        %v5612 = vadd.f32 %v5529, %v5611
        %v5613 = vpop.f32.mrb[0].mxu0
        %5614 = vdwg.mxu0
        %5615 = vmatprep.subr.mxu0 0.0
        %v5616 = vand.u32 %v5180, 4294901760
        %5617 = vmatpush1.msra.mxu0 %v5616
        %5618 = vmatprep.subr.mxu0 0.0
        %v5619 = vand.u32 %v5190, 4294901760
        %5620 = vmatpush1.msra.mxu0 %v5619
        %5621 = vmatprep.subr.mxu0 0.0
        %5622 = vmatpush1.msra.mxu0 0.0
        %5623 = vmatprep.subr.mxu0 0.0
        %5624 = vmatpush1.msra.mxu0 0.0
        %5625 = vmatprep.subr.mxu0 0.0
        %5626 = vmatpush1.msra.mxu0 0.0
        %5627 = vmatprep.subr.mxu0 0.0
        %5628 = vmatpush1.msra.mxu0 0.0
        %5629 = vmatprep.subr.mxu0 0.0
        %5630 = vmatpush1.msra.mxu0 0.0
        %5631 = vmatprep.subr.mxu0 0.0
        %5632 = vmatpush1.msra.mxu0 0.0
        %5633 = vmatprep.subr.mxu0 0.0
        %5634 = vmatpush1.msra.mxu0 0.0
        %5635 = vmatprep.subr.mxu0 0.0
        %5636 = vmatpush1.msra.mxu0 0.0
        %5637 = vmatprep.subr.mxu0 0.0
        %5638 = vmatpush1.msra.mxu0 0.0
        %5639 = vmatprep.subr.mxu0 0.0
        %5640 = vmatpush1.msra.mxu0 0.0
        %5641 = vmatprep.subr.mxu0 0.0
        %5642 = vmatpush1.msra.mxu0 0.0
        %5643 = vmatprep.subr.mxu0 0.0
        %5644 = vmatpush1.msra.mxu0 0.0
        %5645 = vmatprep.subr.mxu0 0.0
        %5646 = vmatpush1.msra.mxu0 0.0
        %5647 = vmatprep.subr.mxu0 0.0
        %5648 = vmatpush1.msra.mxu0 0.0
        %5649 = vmatprep.subr.mxu0 0.0
        %5650 = vmatpush1.msra.mxu0 0.0
        %5651 = vmatprep.subr.mxu0 0.0
        %5652 = vmatpush1.msra.mxu0 0.0
        %5653 = vmatprep.subr.mxu0 0.0
        %5654 = vmatpush1.msra.mxu0 0.0
        %5655 = vmatprep.subr.mxu0 0.0
        %5656 = vmatpush1.msra.mxu0 0.0
        %5657 = vmatprep.subr.mxu0 0.0
        %5658 = vmatpush1.msra.mxu0 0.0
        %5659 = vmatprep.subr.mxu0 0.0
        %5660 = vmatpush1.msra.mxu0 0.0
        %5661 = vmatprep.subr.mxu0 0.0
        %5662 = vmatpush1.msra.mxu0 0.0
        %5663 = vmatprep.subr.mxu0 0.0
        %5664 = vmatpush1.msra.mxu0 0.0
        %5665 = vmatprep.subr.mxu0 0.0
        %5666 = vmatpush1.msra.mxu0 0.0
        %5667 = vmatprep.subr.mxu0 0.0
        %5668 = vmatpush1.msra.mxu0 0.0
        %5669 = vmatprep.subr.mxu0 0.0
        %5670 = vmatpush1.msra.mxu0 0.0
        %5671 = vmatprep.subr.mxu0 0.0
        %5672 = vmatpush1.msra.mxu0 0.0
        %5673 = vmatprep.subr.mxu0 0.0
        %5674 = vmatpush1.msra.mxu0 0.0
        %5675 = vmatprep.subr.mxu0 0.0
        %5676 = vmatpush1.msra.mxu0 0.0
        %5677 = vmatprep.subr.mxu0 0.0
        %5678 = vmatpush1.msra.mxu0 0.0
        %5679 = vmatprep.subr.mxu0 0.0
        %5680 = vmatpush1.msra.mxu0 0.0
        %5681 = vmatprep.mubr.f32.mxu0 0.0
        %v5682 = vand.u32 %v5185, 4294901760
        %5683 = vmatmul.mubr.f32.gmra.mrb[0].mxu0 %v5682
        %v5684 = vpop.f32.mrb[0].mxu0
        %v5685 = vadd.f32 %v5606, %v5684
        %v5686 = vpop.f32.mrb[0].mxu0
        %5687 = vmatprep.mubr.f32.mxu0 0.0
        %v5688 = vand.u32 %v5188, 4294901760
        %5689 = vmatmul.mubr.f32.gmra.mrb[0].mxu0 %v5688
        %v5690 = vpop.f32.mrb[0].mxu0
        %v5691 = vadd.f32 %v5612, %v5690
        %v5692 = vpop.f32.mrb[0].mxu0
        %5693 = vdwg.mxu0
        %v5694 = vrcp.pop %v3611
        %v5695 = vrcp.pop %v3614
        %v5696 = vrcp.pop %v3617
        %v5697 = vrcp.pop %v3620
        %v5698 = vrcp.pop %v3623
        %v5699 = vrcp.pop %v3626
        %v5700 = vrcp.pop %v3629
        %v5701 = vrcp.pop %v3632
        %v5702 = vmul.f32 %v4140, %v5694
        %v5703 = vmul.f32 %v4146, %v5695
        %v5704 = vmul.f32 %v4655, %v5696
        %v5705 = vmul.f32 %v4661, %v5697
        %v5706 = vmul.f32 %v5170, %v5698
        %v5707 = vmul.f32 %v5176, %v5699
        %v5708 = vmul.f32 %v5685, %v5700
        %v5709 = vmul.f32 %v5691, %v5701
        %5712 = vrot.lane.b32.xlu0 %v5704, 8
        %v5713 = vpop.permute.xlu0 %5712
        %5714 = vrot.lane.b32.xlu0 %v5705, 8
        %v5715 = vpop.permute.xlu0 %5714
        %5720 = vrot.lane.b32.xlu0 %v5706, 16
        %v5721 = vpop.permute.xlu0 %5720
        %5722 = vrot.lane.b32.xlu0 %v5707, 16
        %v5723 = vpop.permute.xlu0 %5722
        %5728 = vrot.lane.b32.xlu0 %v5708, 24
        %v5729 = vpop.permute.xlu0 %5728
        %5730 = vrot.lane.b32.xlu0 %v5709, 24
        %v5731 = vpop.permute.xlu0 %5730
        %v5734 = vsel %vm1506, %v5702, %v5713
        %v5735 = vsel %vm1506, %v5703, %v5715
        %vm5736 = vcmask 130048
        %v5737 = vsel %vm5736, %v5734, %v5721
        %v5738 = vsel %vm5736, %v5735, %v5723
        %vm5739 = vcmask 195584
        %v5740 = vsel %vm5739, %v5737, %v5729
        %v5741 = vsel %vm5739, %v5738, %v5731
        %v5742 = vld [vmem:[%s814] sm:$0xff]
        %v5743 = vld [vmem:[%s814 + $0x8] sm:$0xff]
        %v5744 = vld [vmem:[%s814 + $0x10] sm:$0xff]
        %v5745 = vld [vmem:[%s814 + $0x18] sm:$0xff]
        %v5746 = vld [vmem:[%s817] sm:$0x1]
        %v5748 = vlaneseq
        %v5749 = vshrl.u32 %v5748, 7
        %v5750 = vsub.s32 0, %v5749
        %v5751 = vrot.slane %v5746, %v5750
        %v5754 = vsel %vm905, %v5740, 0
        %v5757 = vsel %vm905, %v5741, 0
        %5759 = vmatprep.subr.mxu0 0.0
        %v5760 = vand.u32 %v5742, 4294901760
        %5761 = vmatpush1.msra.mxu0 %v5760
        %5762 = vmatprep.subr.mxu0 0.0
        %v5763 = vand.u32 %v5743, 4294901760
        %5764 = vmatpush1.msra.mxu0 %v5763
        %5765 = vmatprep.subr.mxu0 0.0
        %v5766 = vand.u32 %v5744, 4294901760
        %5767 = vmatpush1.msra.mxu0 %v5766
        %5768 = vmatprep.subr.mxu0 0.0
        %v5769 = vand.u32 %v5745, 4294901760
        %5770 = vmatpush1.msra.mxu0 %v5769
        %5771 = vmatprep.subr.mxu0 0.0
        %5772 = vmatpush1.msra.mxu0 0.0
        %5773 = vmatprep.subr.mxu0 0.0
        %5774 = vmatpush1.msra.mxu0 0.0
        %5775 = vmatprep.subr.mxu0 0.0
        %5776 = vmatpush1.msra.mxu0 0.0
        %5777 = vmatprep.subr.mxu0 0.0
        %5778 = vmatpush1.msra.mxu0 0.0
        %5779 = vmatprep.subr.mxu0 0.0
        %5780 = vmatpush1.msra.mxu0 0.0
        %5781 = vmatprep.subr.mxu0 0.0
        %5782 = vmatpush1.msra.mxu0 0.0
        %5783 = vmatprep.subr.mxu0 0.0
        %5784 = vmatpush1.msra.mxu0 0.0
        %5785 = vmatprep.subr.mxu0 0.0
        %5786 = vmatpush1.msra.mxu0 0.0
        %5787 = vmatprep.subr.mxu0 0.0
        %5788 = vmatpush1.msra.mxu0 0.0
        %5789 = vmatprep.subr.mxu0 0.0
        %5790 = vmatpush1.msra.mxu0 0.0
        %5791 = vmatprep.subr.mxu0 0.0
        %5792 = vmatpush1.msra.mxu0 0.0
        %5793 = vmatprep.subr.mxu0 0.0
        %5794 = vmatpush1.msra.mxu0 0.0
        %5795 = vmatprep.subr.mxu0 0.0
        %5796 = vmatpush1.msra.mxu0 0.0
        %5797 = vmatprep.subr.mxu0 0.0
        %5798 = vmatpush1.msra.mxu0 0.0
        %5799 = vmatprep.subr.mxu0 0.0
        %5800 = vmatpush1.msra.mxu0 0.0
        %5801 = vmatprep.subr.mxu0 0.0
        %5802 = vmatpush1.msra.mxu0 0.0
        %5803 = vmatprep.subr.mxu0 0.0
        %5804 = vmatpush1.msra.mxu0 0.0
        %5805 = vmatprep.subr.mxu0 0.0
        %5806 = vmatpush1.msra.mxu0 0.0
        %5807 = vmatprep.subr.mxu0 0.0
        %5808 = vmatpush1.msra.mxu0 0.0
        %5809 = vmatprep.subr.mxu0 0.0
        %5810 = vmatpush1.msra.mxu0 0.0
        %5811 = vmatprep.subr.mxu0 0.0
        %5812 = vmatpush1.msra.mxu0 0.0
        %5813 = vmatprep.subr.mxu0 0.0
        %5814 = vmatpush1.msra.mxu0 0.0
        %5815 = vmatprep.subr.mxu0 0.0
        %5816 = vmatpush1.msra.mxu0 0.0
        %5817 = vmatprep.subr.mxu0 0.0
        %5818 = vmatpush1.msra.mxu0 0.0
        %5819 = vmatprep.subr.mxu0 0.0
        %5820 = vmatpush1.msra.mxu0 0.0
        %5821 = vmatprep.subr.mxu0 0.0
        %5822 = vmatpush1.msra.mxu0 0.0
        %5823 = vmatprep.subr.mxu0 0.0
        %5824 = vmatpush1.msra.mxu0 0.0
        %5825 = vmatprep.subr.mxu0 0.0
        %5826 = vmatpush1.msra.mxu0 0.0
        %5827 = vmatprep.mubr.f32.mxu0 0.0
        %v5828 = vand.u32 %v5754, 4294901760
        %v5829 = vsub.f32 %v5754, %v5828
        %v5830 = vand.u32 %v5829, 4294901760
        %v5831 = vsub.f32 %v5829, %v5830
        %v5832 = vand.u32 %v5831, 4294901760
        %5833 = vmatmul.mubr.f32.gmra.mrb[0].mxu0 %v5832
        %v5834 = vpop.f32.mrb[0].mxu0
        %v5835 = vadd.f32 %v5751, %v5834
        %v5836 = vpop.f32.mrb[0].mxu0
        %5837 = vmatprep.mubr.f32.mxu0 0.0
        %v5838 = vand.u32 %v5757, 4294901760
        %v5839 = vsub.f32 %v5757, %v5838
        %v5840 = vand.u32 %v5839, 4294901760
        %v5841 = vsub.f32 %v5839, %v5840
        %v5842 = vand.u32 %v5841, 4294901760
        %5843 = vmatmul.mubr.f32.gmra.mrb[0].mxu0 %v5842
        %v5844 = vpop.f32.mrb[0].mxu0
        %v5845 = vadd.f32 %v5751, %v5844
        %v5846 = vpop.f32.mrb[0].mxu0
        %5847 = vdwg.mxu0
        %5848 = vmatprep.subr.mxu0 0.0
        %v5849 = vand.u32 %v5742, 4294901760
        %v5850 = vsub.f32 %v5742, %v5849
        %v5851 = vand.u32 %v5850, 4294901760
        %v5852 = vsub.f32 %v5850, %v5851
        %v5853 = vand.u32 %v5852, 4294901760
        %5854 = vmatpush1.msra.mxu0 %v5853
        %5855 = vmatprep.subr.mxu0 0.0
        %v5856 = vand.u32 %v5743, 4294901760
        %v5857 = vsub.f32 %v5743, %v5856
        %v5858 = vand.u32 %v5857, 4294901760
        %v5859 = vsub.f32 %v5857, %v5858
        %v5860 = vand.u32 %v5859, 4294901760
        %5861 = vmatpush1.msra.mxu0 %v5860
        %5862 = vmatprep.subr.mxu0 0.0
        %v5863 = vand.u32 %v5744, 4294901760
        %v5864 = vsub.f32 %v5744, %v5863
        %v5865 = vand.u32 %v5864, 4294901760
        %v5866 = vsub.f32 %v5864, %v5865
        %v5867 = vand.u32 %v5866, 4294901760
        %5868 = vmatpush1.msra.mxu0 %v5867
        %5869 = vmatprep.subr.mxu0 0.0
        %v5870 = vand.u32 %v5745, 4294901760
        %v5871 = vsub.f32 %v5745, %v5870
        %v5872 = vand.u32 %v5871, 4294901760
        %v5873 = vsub.f32 %v5871, %v5872
        %v5874 = vand.u32 %v5873, 4294901760
        %5875 = vmatpush1.msra.mxu0 %v5874
        %5876 = vmatprep.subr.mxu0 0.0
        %5877 = vmatpush1.msra.mxu0 0.0
        %5878 = vmatprep.subr.mxu0 0.0
        %5879 = vmatpush1.msra.mxu0 0.0
        %5880 = vmatprep.subr.mxu0 0.0
        %5881 = vmatpush1.msra.mxu0 0.0
        %5882 = vmatprep.subr.mxu0 0.0
        %5883 = vmatpush1.msra.mxu0 0.0
        %5884 = vmatprep.subr.mxu0 0.0
        %5885 = vmatpush1.msra.mxu0 0.0
        %5886 = vmatprep.subr.mxu0 0.0
        %5887 = vmatpush1.msra.mxu0 0.0
        %5888 = vmatprep.subr.mxu0 0.0
        %5889 = vmatpush1.msra.mxu0 0.0
        %5890 = vmatprep.subr.mxu0 0.0
        %5891 = vmatpush1.msra.mxu0 0.0
        %5892 = vmatprep.subr.mxu0 0.0
        %5893 = vmatpush1.msra.mxu0 0.0
        %5894 = vmatprep.subr.mxu0 0.0
        %5895 = vmatpush1.msra.mxu0 0.0
        %5896 = vmatprep.subr.mxu0 0.0
        %5897 = vmatpush1.msra.mxu0 0.0
        %5898 = vmatprep.subr.mxu0 0.0
        %5899 = vmatpush1.msra.mxu0 0.0
        %5900 = vmatprep.subr.mxu0 0.0
        %5901 = vmatpush1.msra.mxu0 0.0
        %5902 = vmatprep.subr.mxu0 0.0
        %5903 = vmatpush1.msra.mxu0 0.0
        %5904 = vmatprep.subr.mxu0 0.0
        %5905 = vmatpush1.msra.mxu0 0.0
        %5906 = vmatprep.subr.mxu0 0.0
        %5907 = vmatpush1.msra.mxu0 0.0
        %5908 = vmatprep.subr.mxu0 0.0
        %5909 = vmatpush1.msra.mxu0 0.0
        %5910 = vmatprep.subr.mxu0 0.0
        %5911 = vmatpush1.msra.mxu0 0.0
        %5912 = vmatprep.subr.mxu0 0.0
        %5913 = vmatpush1.msra.mxu0 0.0
        %5914 = vmatprep.subr.mxu0 0.0
        %5915 = vmatpush1.msra.mxu0 0.0
        %5916 = vmatprep.subr.mxu0 0.0
        %5917 = vmatpush1.msra.mxu0 0.0
        %5918 = vmatprep.subr.mxu0 0.0
        %5919 = vmatpush1.msra.mxu0 0.0
        %5920 = vmatprep.subr.mxu0 0.0
        %5921 = vmatpush1.msra.mxu0 0.0
        %5922 = vmatprep.subr.mxu0 0.0
        %5923 = vmatpush1.msra.mxu0 0.0
        %5924 = vmatprep.subr.mxu0 0.0
        %5925 = vmatpush1.msra.mxu0 0.0
        %5926 = vmatprep.subr.mxu0 0.0
        %5927 = vmatpush1.msra.mxu0 0.0
        %5928 = vmatprep.subr.mxu0 0.0
        %5929 = vmatpush1.msra.mxu0 0.0
        %5930 = vmatprep.subr.mxu0 0.0
        %5931 = vmatpush1.msra.mxu0 0.0
        %5932 = vmatprep.mubr.f32.mxu0 0.0
        %v5933 = vand.u32 %v5754, 4294901760
        %5934 = vmatmul.mubr.f32.gmra.mrb[0].mxu0 %v5933
        %v5935 = vpop.f32.mrb[0].mxu0
        %v5936 = vadd.f32 %v5835, %v5935
        %v5937 = vpop.f32.mrb[0].mxu0
        %5938 = vmatprep.mubr.f32.mxu0 0.0
        %v5939 = vand.u32 %v5757, 4294901760
        %5940 = vmatmul.mubr.f32.gmra.mrb[0].mxu0 %v5939
        %v5941 = vpop.f32.mrb[0].mxu0
        %v5942 = vadd.f32 %v5845, %v5941
        %v5943 = vpop.f32.mrb[0].mxu0
        %5944 = vdwg.mxu0
        %5945 = vmatprep.subr.mxu0 0.0
        %v5946 = vand.u32 %v5742, 4294901760
        %v5947 = vsub.f32 %v5742, %v5946
        %5948 = vmatpush1.msra.mxu0 %v5947
        %5949 = vmatprep.subr.mxu0 0.0
        %v5950 = vand.u32 %v5743, 4294901760
        %v5951 = vsub.f32 %v5743, %v5950
        %5952 = vmatpush1.msra.mxu0 %v5951
        %5953 = vmatprep.subr.mxu0 0.0
        %v5954 = vand.u32 %v5744, 4294901760
        %v5955 = vsub.f32 %v5744, %v5954
        %5956 = vmatpush1.msra.mxu0 %v5955
        %5957 = vmatprep.subr.mxu0 0.0
        %v5958 = vand.u32 %v5745, 4294901760
        %v5959 = vsub.f32 %v5745, %v5958
        %5960 = vmatpush1.msra.mxu0 %v5959
        %5961 = vmatprep.subr.mxu0 0.0
        %5962 = vmatpush1.msra.mxu0 0.0
        %5963 = vmatprep.subr.mxu0 0.0
        %5964 = vmatpush1.msra.mxu0 0.0
        %5965 = vmatprep.subr.mxu0 0.0
        %5966 = vmatpush1.msra.mxu0 0.0
        %5967 = vmatprep.subr.mxu0 0.0
        %5968 = vmatpush1.msra.mxu0 0.0
        %5969 = vmatprep.subr.mxu0 0.0
        %5970 = vmatpush1.msra.mxu0 0.0
        %5971 = vmatprep.subr.mxu0 0.0
        %5972 = vmatpush1.msra.mxu0 0.0
        %5973 = vmatprep.subr.mxu0 0.0
        %5974 = vmatpush1.msra.mxu0 0.0
        %5975 = vmatprep.subr.mxu0 0.0
        %5976 = vmatpush1.msra.mxu0 0.0
        %5977 = vmatprep.subr.mxu0 0.0
        %5978 = vmatpush1.msra.mxu0 0.0
        %5979 = vmatprep.subr.mxu0 0.0
        %5980 = vmatpush1.msra.mxu0 0.0
        %5981 = vmatprep.subr.mxu0 0.0
        %5982 = vmatpush1.msra.mxu0 0.0
        %5983 = vmatprep.subr.mxu0 0.0
        %5984 = vmatpush1.msra.mxu0 0.0
        %5985 = vmatprep.subr.mxu0 0.0
        %5986 = vmatpush1.msra.mxu0 0.0
        %5987 = vmatprep.subr.mxu0 0.0
        %5988 = vmatpush1.msra.mxu0 0.0
        %5989 = vmatprep.subr.mxu0 0.0
        %5990 = vmatpush1.msra.mxu0 0.0
        %5991 = vmatprep.subr.mxu0 0.0
        %5992 = vmatpush1.msra.mxu0 0.0
        %5993 = vmatprep.subr.mxu0 0.0
        %5994 = vmatpush1.msra.mxu0 0.0
        %5995 = vmatprep.subr.mxu0 0.0
        %5996 = vmatpush1.msra.mxu0 0.0
        %5997 = vmatprep.subr.mxu0 0.0
        %5998 = vmatpush1.msra.mxu0 0.0
        %5999 = vmatprep.subr.mxu0 0.0
        %6000 = vmatpush1.msra.mxu0 0.0
        %6001 = vmatprep.subr.mxu0 0.0
        %6002 = vmatpush1.msra.mxu0 0.0
        %6003 = vmatprep.subr.mxu0 0.0
        %6004 = vmatpush1.msra.mxu0 0.0
        %6005 = vmatprep.subr.mxu0 0.0
        %6006 = vmatpush1.msra.mxu0 0.0
        %6007 = vmatprep.subr.mxu0 0.0
        %6008 = vmatpush1.msra.mxu0 0.0
        %6009 = vmatprep.subr.mxu0 0.0
        %6010 = vmatpush1.msra.mxu0 0.0
        %6011 = vmatprep.subr.mxu0 0.0
        %6012 = vmatpush1.msra.mxu0 0.0
        %6013 = vmatprep.subr.mxu0 0.0
        %6014 = vmatpush1.msra.mxu0 0.0
        %6015 = vmatprep.subr.mxu0 0.0
        %6016 = vmatpush1.msra.mxu0 0.0
        %6017 = vmatprep.mubr.f32.mxu0 0.0
        %v6018 = vand.u32 %v5754, 4294901760
        %v6019 = vsub.f32 %v5754, %v6018
        %6020 = vmatmul.mubr.f32.gmra.mrb[0].mxu0 %v6019
        %v6021 = vpop.f32.mrb[0].mxu0
        %v6022 = vadd.f32 %v5936, %v6021
        %v6023 = vpop.f32.mrb[0].mxu0
        %6024 = vmatprep.mubr.f32.mxu0 0.0
        %v6025 = vand.u32 %v5757, 4294901760
        %v6026 = vsub.f32 %v5757, %v6025
        %6027 = vmatmul.mubr.f32.gmra.mrb[0].mxu0 %v6026
        %v6028 = vpop.f32.mrb[0].mxu0
        %v6029 = vadd.f32 %v5942, %v6028
        %v6030 = vpop.f32.mrb[0].mxu0
        %6031 = vdwg.mxu0
        %6032 = vmatprep.subr.mxu0 0.0
        %v6033 = vand.u32 %v5742, 4294901760
        %6034 = vmatpush1.msra.mxu0 %v6033
        %6035 = vmatprep.subr.mxu0 0.0
        %v6036 = vand.u32 %v5743, 4294901760
        %6037 = vmatpush1.msra.mxu0 %v6036
        %6038 = vmatprep.subr.mxu0 0.0
        %v6039 = vand.u32 %v5744, 4294901760
        %6040 = vmatpush1.msra.mxu0 %v6039
        %6041 = vmatprep.subr.mxu0 0.0
        %v6042 = vand.u32 %v5745, 4294901760
        %6043 = vmatpush1.msra.mxu0 %v6042
        %6044 = vmatprep.subr.mxu0 0.0
        %6045 = vmatpush1.msra.mxu0 0.0
        %6046 = vmatprep.subr.mxu0 0.0
        %6047 = vmatpush1.msra.mxu0 0.0
        %6048 = vmatprep.subr.mxu0 0.0
        %6049 = vmatpush1.msra.mxu0 0.0
        %6050 = vmatprep.subr.mxu0 0.0
        %6051 = vmatpush1.msra.mxu0 0.0
        %6052 = vmatprep.subr.mxu0 0.0
        %6053 = vmatpush1.msra.mxu0 0.0
        %6054 = vmatprep.subr.mxu0 0.0
        %6055 = vmatpush1.msra.mxu0 0.0
        %6056 = vmatprep.subr.mxu0 0.0
        %6057 = vmatpush1.msra.mxu0 0.0
        %6058 = vmatprep.subr.mxu0 0.0
        %6059 = vmatpush1.msra.mxu0 0.0
        %6060 = vmatprep.subr.mxu0 0.0
        %6061 = vmatpush1.msra.mxu0 0.0
        %6062 = vmatprep.subr.mxu0 0.0
        %6063 = vmatpush1.msra.mxu0 0.0
        %6064 = vmatprep.subr.mxu0 0.0
        %6065 = vmatpush1.msra.mxu0 0.0
        %6066 = vmatprep.subr.mxu0 0.0
        %6067 = vmatpush1.msra.mxu0 0.0
        %6068 = vmatprep.subr.mxu0 0.0
        %6069 = vmatpush1.msra.mxu0 0.0
        %6070 = vmatprep.subr.mxu0 0.0
        %6071 = vmatpush1.msra.mxu0 0.0
        %6072 = vmatprep.subr.mxu0 0.0
        %6073 = vmatpush1.msra.mxu0 0.0
        %6074 = vmatprep.subr.mxu0 0.0
        %6075 = vmatpush1.msra.mxu0 0.0
        %6076 = vmatprep.subr.mxu0 0.0
        %6077 = vmatpush1.msra.mxu0 0.0
        %6078 = vmatprep.subr.mxu0 0.0
        %6079 = vmatpush1.msra.mxu0 0.0
        %6080 = vmatprep.subr.mxu0 0.0
        %6081 = vmatpush1.msra.mxu0 0.0
        %6082 = vmatprep.subr.mxu0 0.0
        %6083 = vmatpush1.msra.mxu0 0.0
        %6084 = vmatprep.subr.mxu0 0.0
        %6085 = vmatpush1.msra.mxu0 0.0
        %6086 = vmatprep.subr.mxu0 0.0
        %6087 = vmatpush1.msra.mxu0 0.0
        %6088 = vmatprep.subr.mxu0 0.0
        %6089 = vmatpush1.msra.mxu0 0.0
        %6090 = vmatprep.subr.mxu0 0.0
        %6091 = vmatpush1.msra.mxu0 0.0
        %6092 = vmatprep.subr.mxu0 0.0
        %6093 = vmatpush1.msra.mxu0 0.0
        %6094 = vmatprep.subr.mxu0 0.0
        %6095 = vmatpush1.msra.mxu0 0.0
        %6096 = vmatprep.subr.mxu0 0.0
        %6097 = vmatpush1.msra.mxu0 0.0
        %6098 = vmatprep.subr.mxu0 0.0
        %6099 = vmatpush1.msra.mxu0 0.0
        %6100 = vmatprep.mubr.f32.mxu0 0.0
        %v6101 = vand.u32 %v5754, 4294901760
        %v6102 = vsub.f32 %v5754, %v6101
        %v6103 = vand.u32 %v6102, 4294901760
        %6104 = vmatmul.mubr.f32.gmra.mrb[0].mxu0 %v6103
        %v6105 = vpop.f32.mrb[0].mxu0
        %v6106 = vadd.f32 %v6022, %v6105
        %v6107 = vpop.f32.mrb[0].mxu0
        %6108 = vmatprep.mubr.f32.mxu0 0.0
        %v6109 = vand.u32 %v5757, 4294901760
        %v6110 = vsub.f32 %v5757, %v6109
        %v6111 = vand.u32 %v6110, 4294901760
        %6112 = vmatmul.mubr.f32.gmra.mrb[0].mxu0 %v6111
        %v6113 = vpop.f32.mrb[0].mxu0
        %v6114 = vadd.f32 %v6029, %v6113
        %v6115 = vpop.f32.mrb[0].mxu0
        %6116 = vdwg.mxu0
        %6117 = vmatprep.subr.mxu0 0.0
        %v6118 = vand.u32 %v5742, 4294901760
        %v6119 = vsub.f32 %v5742, %v6118
        %v6120 = vand.u32 %v6119, 4294901760
        %6121 = vmatpush1.msra.mxu0 %v6120
        %6122 = vmatprep.subr.mxu0 0.0
        %v6123 = vand.u32 %v5743, 4294901760
        %v6124 = vsub.f32 %v5743, %v6123
        %v6125 = vand.u32 %v6124, 4294901760
        %6126 = vmatpush1.msra.mxu0 %v6125
        %6127 = vmatprep.subr.mxu0 0.0
        %v6128 = vand.u32 %v5744, 4294901760
        %v6129 = vsub.f32 %v5744, %v6128
        %v6130 = vand.u32 %v6129, 4294901760
        %6131 = vmatpush1.msra.mxu0 %v6130
        %6132 = vmatprep.subr.mxu0 0.0
        %v6133 = vand.u32 %v5745, 4294901760
        %v6134 = vsub.f32 %v5745, %v6133
        %v6135 = vand.u32 %v6134, 4294901760
        %6136 = vmatpush1.msra.mxu0 %v6135
        %6137 = vmatprep.subr.mxu0 0.0
        %6138 = vmatpush1.msra.mxu0 0.0
        %6139 = vmatprep.subr.mxu0 0.0
        %6140 = vmatpush1.msra.mxu0 0.0
        %6141 = vmatprep.subr.mxu0 0.0
        %6142 = vmatpush1.msra.mxu0 0.0
        %6143 = vmatprep.subr.mxu0 0.0
        %6144 = vmatpush1.msra.mxu0 0.0
        %6145 = vmatprep.subr.mxu0 0.0
        %6146 = vmatpush1.msra.mxu0 0.0
        %6147 = vmatprep.subr.mxu0 0.0
        %6148 = vmatpush1.msra.mxu0 0.0
        %6149 = vmatprep.subr.mxu0 0.0
        %6150 = vmatpush1.msra.mxu0 0.0
        %6151 = vmatprep.subr.mxu0 0.0
        %6152 = vmatpush1.msra.mxu0 0.0
        %6153 = vmatprep.subr.mxu0 0.0
        %6154 = vmatpush1.msra.mxu0 0.0
        %6155 = vmatprep.subr.mxu0 0.0
        %6156 = vmatpush1.msra.mxu0 0.0
        %6157 = vmatprep.subr.mxu0 0.0
        %6158 = vmatpush1.msra.mxu0 0.0
        %6159 = vmatprep.subr.mxu0 0.0
        %6160 = vmatpush1.msra.mxu0 0.0
        %6161 = vmatprep.subr.mxu0 0.0
        %6162 = vmatpush1.msra.mxu0 0.0
        %6163 = vmatprep.subr.mxu0 0.0
        %6164 = vmatpush1.msra.mxu0 0.0
        %6165 = vmatprep.subr.mxu0 0.0
        %6166 = vmatpush1.msra.mxu0 0.0
        %6167 = vmatprep.subr.mxu0 0.0
        %6168 = vmatpush1.msra.mxu0 0.0
        %6169 = vmatprep.subr.mxu0 0.0
        %6170 = vmatpush1.msra.mxu0 0.0
        %6171 = vmatprep.subr.mxu0 0.0
        %6172 = vmatpush1.msra.mxu0 0.0
        %6173 = vmatprep.subr.mxu0 0.0
        %6174 = vmatpush1.msra.mxu0 0.0
        %6175 = vmatprep.subr.mxu0 0.0
        %6176 = vmatpush1.msra.mxu0 0.0
        %6177 = vmatprep.subr.mxu0 0.0
        %6178 = vmatpush1.msra.mxu0 0.0
        %6179 = vmatprep.subr.mxu0 0.0
        %6180 = vmatpush1.msra.mxu0 0.0
        %6181 = vmatprep.subr.mxu0 0.0
        %6182 = vmatpush1.msra.mxu0 0.0
        %6183 = vmatprep.subr.mxu0 0.0
        %6184 = vmatpush1.msra.mxu0 0.0
        %6185 = vmatprep.subr.mxu0 0.0
        %6186 = vmatpush1.msra.mxu0 0.0
        %6187 = vmatprep.subr.mxu0 0.0
        %6188 = vmatpush1.msra.mxu0 0.0
        %6189 = vmatprep.subr.mxu0 0.0
        %6190 = vmatpush1.msra.mxu0 0.0
        %6191 = vmatprep.subr.mxu0 0.0
        %6192 = vmatpush1.msra.mxu0 0.0
        %6193 = vmatprep.mubr.f32.mxu0 0.0
        %v6194 = vand.u32 %v5754, 4294901760
        %6195 = vmatmul.mubr.f32.gmra.mrb[0].mxu0 %v6194
        %v6196 = vpop.f32.mrb[0].mxu0
        %v6197 = vadd.f32 %v6106, %v6196
        %v6198 = vpop.f32.mrb[0].mxu0
        %6199 = vmatprep.mubr.f32.mxu0 0.0
        %v6200 = vand.u32 %v5757, 4294901760
        %6201 = vmatmul.mubr.f32.gmra.mrb[0].mxu0 %v6200
        %v6202 = vpop.f32.mrb[0].mxu0
        %v6203 = vadd.f32 %v6114, %v6202
        %v6204 = vpop.f32.mrb[0].mxu0
        %6205 = vdwg.mxu0
        %6206 = vmatprep.subr.mxu0 0.0
        %v6207 = vand.u32 %v5742, 4294901760
        %6208 = vmatpush1.msra.mxu0 %v6207
        %6209 = vmatprep.subr.mxu0 0.0
        %v6210 = vand.u32 %v5743, 4294901760
        %6211 = vmatpush1.msra.mxu0 %v6210
        %6212 = vmatprep.subr.mxu0 0.0
        %v6213 = vand.u32 %v5744, 4294901760
        %6214 = vmatpush1.msra.mxu0 %v6213
        %6215 = vmatprep.subr.mxu0 0.0
        %v6216 = vand.u32 %v5745, 4294901760
        %6217 = vmatpush1.msra.mxu0 %v6216
        %6218 = vmatprep.subr.mxu0 0.0
        %6219 = vmatpush1.msra.mxu0 0.0
        %6220 = vmatprep.subr.mxu0 0.0
        %6221 = vmatpush1.msra.mxu0 0.0
        %6222 = vmatprep.subr.mxu0 0.0
        %6223 = vmatpush1.msra.mxu0 0.0
        %6224 = vmatprep.subr.mxu0 0.0
        %6225 = vmatpush1.msra.mxu0 0.0
        %6226 = vmatprep.subr.mxu0 0.0
        %6227 = vmatpush1.msra.mxu0 0.0
        %6228 = vmatprep.subr.mxu0 0.0
        %6229 = vmatpush1.msra.mxu0 0.0
        %6230 = vmatprep.subr.mxu0 0.0
        %6231 = vmatpush1.msra.mxu0 0.0
        %6232 = vmatprep.subr.mxu0 0.0
        %6233 = vmatpush1.msra.mxu0 0.0
        %6234 = vmatprep.subr.mxu0 0.0
        %6235 = vmatpush1.msra.mxu0 0.0
        %6236 = vmatprep.subr.mxu0 0.0
        %6237 = vmatpush1.msra.mxu0 0.0
        %6238 = vmatprep.subr.mxu0 0.0
        %6239 = vmatpush1.msra.mxu0 0.0
        %6240 = vmatprep.subr.mxu0 0.0
        %6241 = vmatpush1.msra.mxu0 0.0
        %6242 = vmatprep.subr.mxu0 0.0
        %6243 = vmatpush1.msra.mxu0 0.0
        %6244 = vmatprep.subr.mxu0 0.0
        %6245 = vmatpush1.msra.mxu0 0.0
        %6246 = vmatprep.subr.mxu0 0.0
        %6247 = vmatpush1.msra.mxu0 0.0
        %6248 = vmatprep.subr.mxu0 0.0
        %6249 = vmatpush1.msra.mxu0 0.0
        %6250 = vmatprep.subr.mxu0 0.0
        %6251 = vmatpush1.msra.mxu0 0.0
        %6252 = vmatprep.subr.mxu0 0.0
        %6253 = vmatpush1.msra.mxu0 0.0
        %6254 = vmatprep.subr.mxu0 0.0
        %6255 = vmatpush1.msra.mxu0 0.0
        %6256 = vmatprep.subr.mxu0 0.0
        %6257 = vmatpush1.msra.mxu0 0.0
        %6258 = vmatprep.subr.mxu0 0.0
        %6259 = vmatpush1.msra.mxu0 0.0
        %6260 = vmatprep.subr.mxu0 0.0
        %6261 = vmatpush1.msra.mxu0 0.0
        %6262 = vmatprep.subr.mxu0 0.0
        %6263 = vmatpush1.msra.mxu0 0.0
        %6264 = vmatprep.subr.mxu0 0.0
        %6265 = vmatpush1.msra.mxu0 0.0
        %6266 = vmatprep.subr.mxu0 0.0
        %6267 = vmatpush1.msra.mxu0 0.0
        %6268 = vmatprep.subr.mxu0 0.0
        %6269 = vmatpush1.msra.mxu0 0.0
        %6270 = vmatprep.subr.mxu0 0.0
        %6271 = vmatpush1.msra.mxu0 0.0
        %6272 = vmatprep.subr.mxu0 0.0
        %6273 = vmatpush1.msra.mxu0 0.0
        %6274 = vmatprep.mubr.f32.mxu0 0.0
        %v6275 = vand.u32 %v5754, 4294901760
        %6276 = vmatmul.mubr.f32.gmra.mrb[0].mxu0 %v6275
        %v6277 = vpop.f32.mrb[0].mxu0
        %v6278 = vadd.f32 %v6197, %v6277
        %v6279 = vpop.f32.mrb[0].mxu0
        %6280 = vmatprep.mubr.f32.mxu0 0.0
        %v6281 = vand.u32 %v5757, 4294901760
        %6282 = vmatmul.mubr.f32.gmra.mrb[0].mxu0 %v6281
        %v6283 = vpop.f32.mrb[0].mxu0
        %v6284 = vadd.f32 %v6203, %v6283
        %v6285 = vpop.f32.mrb[0].mxu0
        %6286 = vdwg.mxu0
        %v6287 = vld [vmem:[%s820] sm:$0x1]
        %v6289 = vlaneseq
        %v6290 = vshrl.u32 %v6289, 7
        %v6291 = vsub.s32 0, %v6290
        %v6292 = vrot.slane %v6287, %v6291
        %v6294 = vmul.f32 %v6292, %v6278
        %v6295 = vmul.f32 %v6292, %v6284
        %v6296 = vadd.f32 %v901, %v6294
        %v6297 = vadd.f32 %v902, %v6295
        %v6298 = vld [vmem:[%s823] sm:$0x1]
        %v6299 = vld [vmem:[%s826] sm:$0x1]
        %v6300 = vsel %vm905, %v6296, 0.0
        %6301 = vadd.xlane.f32.xlu0 %v6300
        %v6302 = vpop.xlane.xlu0 %6301
        %v6303 = vsel %vm909, %v6297, 0.0
        %6304 = vadd.xlane.f32.xlu0 %v6303
        %v6305 = vpop.xlane.xlu0 %6304
        %v6306 = vmul.f32 %v6302, %v913
        %v6307 = vmul.f32 %v6305, %v913
        %v6308 = vsub.f32 %v6296, %v6306
        %v6309 = vsub.f32 %v6297, %v6307
        %v6310 = vmul.f32 %v6308, %v6308
        %v6311 = vmul.f32 %v6309, %v6309
        %v6312 = vsel %vm905, %v6310, 0.0
        %6313 = vadd.xlane.f32.xlu0 %v6312
        %v6314 = vpop.xlane.xlu0 %6313
        %v6315 = vsel %vm909, %v6311, 0.0
        %6316 = vadd.xlane.f32.xlu0 %v6315
        %v6317 = vpop.xlane.xlu0 %6316
        %v6318 = vmul.f32 %v6314, %v913
        %v6319 = vmul.f32 %v6317, %v913
        %v6320 = vadd.f32 %v6318, 1e-05
        %v6321 = vadd.f32 %v6319, 1e-05
        %v6322 = vrsqrt.pop %v6320
        %v6323 = vrsqrt.pop %v6321
        %v6324 = vmul.f32 %v6308, %v6322
        %v6325 = vmul.f32 %v6309, %v6323
        %v6327 = vlaneseq
        %v6328 = vshrl.u32 %v6327, 7
        %v6329 = vsub.s32 0, %v6328
        %v6330 = vrot.slane %v6298, %v6329
        %v6332 = vmul.f32 %v6324, %v6330
        %v6333 = vmul.f32 %v6325, %v6330
        %v6335 = vlaneseq
        %v6336 = vshrl.u32 %v6335, 7
        %v6337 = vsub.s32 0, %v6336
        %v6338 = vrot.slane %v6299, %v6337
        %v6340 = vadd.f32 %v6332, %v6338
        %v6341 = vadd.f32 %v6333, %v6338
        %v6342 = vld [vmem:[%s831] sm:$0xff]
        %v6343 = vld [vmem:[%s831 + $0x8] sm:$0xff]
        %v6344 = vld [vmem:[%s831 + $0x10] sm:$0xff]
        %v6345 = vld [vmem:[%s831 + $0x18] sm:$0xff]
        %v6346 = vld [vmem:[%s834] sm:$0x1]
        %v6348 = vlaneseq
        %v6349 = vshrl.u32 %v6348, 7
        %v6350 = vsub.s32 0, %v6349
        %v6351 = vrot.slane %v6346, %v6350
        %v6354 = vsel %vm905, %v6340, 0
        %v6357 = vsel %vm905, %v6341, 0
        %6359 = vmatprep.subr.mxu0 0.0
        %v6360 = vand.u32 %v6342, 4294901760
        %6361 = vmatpush1.msra.mxu0 %v6360
        %6362 = vmatprep.subr.mxu0 0.0
        %v6363 = vand.u32 %v6343, 4294901760
        %6364 = vmatpush1.msra.mxu0 %v6363
        %6365 = vmatprep.subr.mxu0 0.0
        %v6366 = vand.u32 %v6344, 4294901760
        %6367 = vmatpush1.msra.mxu0 %v6366
        %6368 = vmatprep.subr.mxu0 0.0
        %v6369 = vand.u32 %v6345, 4294901760
        %6370 = vmatpush1.msra.mxu0 %v6369
        %6371 = vmatprep.subr.mxu0 0.0
        %6372 = vmatpush1.msra.mxu0 0.0
        %6373 = vmatprep.subr.mxu0 0.0
        %6374 = vmatpush1.msra.mxu0 0.0
        %6375 = vmatprep.subr.mxu0 0.0
        %6376 = vmatpush1.msra.mxu0 0.0
        %6377 = vmatprep.subr.mxu0 0.0
        %6378 = vmatpush1.msra.mxu0 0.0
        %6379 = vmatprep.subr.mxu0 0.0
        %6380 = vmatpush1.msra.mxu0 0.0
        %6381 = vmatprep.subr.mxu0 0.0
        %6382 = vmatpush1.msra.mxu0 0.0
        %6383 = vmatprep.subr.mxu0 0.0
        %6384 = vmatpush1.msra.mxu0 0.0
        %6385 = vmatprep.subr.mxu0 0.0
        %6386 = vmatpush1.msra.mxu0 0.0
        %6387 = vmatprep.subr.mxu0 0.0
        %6388 = vmatpush1.msra.mxu0 0.0
        %6389 = vmatprep.subr.mxu0 0.0
        %6390 = vmatpush1.msra.mxu0 0.0
        %6391 = vmatprep.subr.mxu0 0.0
        %6392 = vmatpush1.msra.mxu0 0.0
        %6393 = vmatprep.subr.mxu0 0.0
        %6394 = vmatpush1.msra.mxu0 0.0
        %6395 = vmatprep.subr.mxu0 0.0
        %6396 = vmatpush1.msra.mxu0 0.0
        %6397 = vmatprep.subr.mxu0 0.0
        %6398 = vmatpush1.msra.mxu0 0.0
        %6399 = vmatprep.subr.mxu0 0.0
        %6400 = vmatpush1.msra.mxu0 0.0
        %6401 = vmatprep.subr.mxu0 0.0
        %6402 = vmatpush1.msra.mxu0 0.0
        %6403 = vmatprep.subr.mxu0 0.0
        %6404 = vmatpush1.msra.mxu0 0.0
        %6405 = vmatprep.subr.mxu0 0.0
        %6406 = vmatpush1.msra.mxu0 0.0
        %6407 = vmatprep.subr.mxu0 0.0
        %6408 = vmatpush1.msra.mxu0 0.0
        %6409 = vmatprep.subr.mxu0 0.0
        %6410 = vmatpush1.msra.mxu0 0.0
        %6411 = vmatprep.subr.mxu0 0.0
        %6412 = vmatpush1.msra.mxu0 0.0
        %6413 = vmatprep.subr.mxu0 0.0
        %6414 = vmatpush1.msra.mxu0 0.0
        %6415 = vmatprep.subr.mxu0 0.0
        %6416 = vmatpush1.msra.mxu0 0.0
        %6417 = vmatprep.subr.mxu0 0.0
        %6418 = vmatpush1.msra.mxu0 0.0
        %6419 = vmatprep.subr.mxu0 0.0
        %6420 = vmatpush1.msra.mxu0 0.0
        %6421 = vmatprep.subr.mxu0 0.0
        %6422 = vmatpush1.msra.mxu0 0.0
        %6423 = vmatprep.subr.mxu0 0.0
        %6424 = vmatpush1.msra.mxu0 0.0
        %6425 = vmatprep.subr.mxu0 0.0
        %6426 = vmatpush1.msra.mxu0 0.0
        %6427 = vmatprep.mubr.f32.mxu0 0.0
        %v6428 = vand.u32 %v6354, 4294901760
        %v6429 = vsub.f32 %v6354, %v6428
        %v6430 = vand.u32 %v6429, 4294901760
        %v6431 = vsub.f32 %v6429, %v6430
        %v6432 = vand.u32 %v6431, 4294901760
        %6433 = vmatmul.mubr.f32.gmra.mrb[0].mxu0 %v6432
        %v6434 = vpop.f32.mrb[0].mxu0
        %v6435 = vadd.f32 %v6351, %v6434
        %v6436 = vpop.f32.mrb[0].mxu0
        %6437 = vmatprep.mubr.f32.mxu0 0.0
        %v6438 = vand.u32 %v6357, 4294901760
        %v6439 = vsub.f32 %v6357, %v6438
        %v6440 = vand.u32 %v6439, 4294901760
        %v6441 = vsub.f32 %v6439, %v6440
        %v6442 = vand.u32 %v6441, 4294901760
        %6443 = vmatmul.mubr.f32.gmra.mrb[0].mxu0 %v6442
        %v6444 = vpop.f32.mrb[0].mxu0
        %v6445 = vadd.f32 %v6351, %v6444
        %v6446 = vpop.f32.mrb[0].mxu0
        %6447 = vdwg.mxu0
        %6448 = vmatprep.subr.mxu0 0.0
        %v6449 = vand.u32 %v6342, 4294901760
        %v6450 = vsub.f32 %v6342, %v6449
        %v6451 = vand.u32 %v6450, 4294901760
        %v6452 = vsub.f32 %v6450, %v6451
        %v6453 = vand.u32 %v6452, 4294901760
        %6454 = vmatpush1.msra.mxu0 %v6453
        %6455 = vmatprep.subr.mxu0 0.0
        %v6456 = vand.u32 %v6343, 4294901760
        %v6457 = vsub.f32 %v6343, %v6456
        %v6458 = vand.u32 %v6457, 4294901760
        %v6459 = vsub.f32 %v6457, %v6458
        %v6460 = vand.u32 %v6459, 4294901760
        %6461 = vmatpush1.msra.mxu0 %v6460
        %6462 = vmatprep.subr.mxu0 0.0
        %v6463 = vand.u32 %v6344, 4294901760
        %v6464 = vsub.f32 %v6344, %v6463
        %v6465 = vand.u32 %v6464, 4294901760
        %v6466 = vsub.f32 %v6464, %v6465
        %v6467 = vand.u32 %v6466, 4294901760
        %6468 = vmatpush1.msra.mxu0 %v6467
        %6469 = vmatprep.subr.mxu0 0.0
        %v6470 = vand.u32 %v6345, 4294901760
        %v6471 = vsub.f32 %v6345, %v6470
        %v6472 = vand.u32 %v6471, 4294901760
        %v6473 = vsub.f32 %v6471, %v6472
        %v6474 = vand.u32 %v6473, 4294901760
        %6475 = vmatpush1.msra.mxu0 %v6474
        %6476 = vmatprep.subr.mxu0 0.0
        %6477 = vmatpush1.msra.mxu0 0.0
        %6478 = vmatprep.subr.mxu0 0.0
        %6479 = vmatpush1.msra.mxu0 0.0
        %6480 = vmatprep.subr.mxu0 0.0
        %6481 = vmatpush1.msra.mxu0 0.0
        %6482 = vmatprep.subr.mxu0 0.0
        %6483 = vmatpush1.msra.mxu0 0.0
        %6484 = vmatprep.subr.mxu0 0.0
        %6485 = vmatpush1.msra.mxu0 0.0
        %6486 = vmatprep.subr.mxu0 0.0
        %6487 = vmatpush1.msra.mxu0 0.0
        %6488 = vmatprep.subr.mxu0 0.0
        %6489 = vmatpush1.msra.mxu0 0.0
        %6490 = vmatprep.subr.mxu0 0.0
        %6491 = vmatpush1.msra.mxu0 0.0
        %6492 = vmatprep.subr.mxu0 0.0
        %6493 = vmatpush1.msra.mxu0 0.0
        %6494 = vmatprep.subr.mxu0 0.0
        %6495 = vmatpush1.msra.mxu0 0.0
        %6496 = vmatprep.subr.mxu0 0.0
        %6497 = vmatpush1.msra.mxu0 0.0
        %6498 = vmatprep.subr.mxu0 0.0
        %6499 = vmatpush1.msra.mxu0 0.0
        %6500 = vmatprep.subr.mxu0 0.0
        %6501 = vmatpush1.msra.mxu0 0.0
        %6502 = vmatprep.subr.mxu0 0.0
        %6503 = vmatpush1.msra.mxu0 0.0
        %6504 = vmatprep.subr.mxu0 0.0
        %6505 = vmatpush1.msra.mxu0 0.0
        %6506 = vmatprep.subr.mxu0 0.0
        %6507 = vmatpush1.msra.mxu0 0.0
        %6508 = vmatprep.subr.mxu0 0.0
        %6509 = vmatpush1.msra.mxu0 0.0
        %6510 = vmatprep.subr.mxu0 0.0
        %6511 = vmatpush1.msra.mxu0 0.0
        %6512 = vmatprep.subr.mxu0 0.0
        %6513 = vmatpush1.msra.mxu0 0.0
        %6514 = vmatprep.subr.mxu0 0.0
        %6515 = vmatpush1.msra.mxu0 0.0
        %6516 = vmatprep.subr.mxu0 0.0
        %6517 = vmatpush1.msra.mxu0 0.0
        %6518 = vmatprep.subr.mxu0 0.0
        %6519 = vmatpush1.msra.mxu0 0.0
        %6520 = vmatprep.subr.mxu0 0.0
        %6521 = vmatpush1.msra.mxu0 0.0
        %6522 = vmatprep.subr.mxu0 0.0
        %6523 = vmatpush1.msra.mxu0 0.0
        %6524 = vmatprep.subr.mxu0 0.0
        %6525 = vmatpush1.msra.mxu0 0.0
        %6526 = vmatprep.subr.mxu0 0.0
        %6527 = vmatpush1.msra.mxu0 0.0
        %6528 = vmatprep.subr.mxu0 0.0
        %6529 = vmatpush1.msra.mxu0 0.0
        %6530 = vmatprep.subr.mxu0 0.0
        %6531 = vmatpush1.msra.mxu0 0.0
        %6532 = vmatprep.mubr.f32.mxu0 0.0
        %v6533 = vand.u32 %v6354, 4294901760
        %6534 = vmatmul.mubr.f32.gmra.mrb[0].mxu0 %v6533
        %v6535 = vpop.f32.mrb[0].mxu0
        %v6536 = vadd.f32 %v6435, %v6535
        %v6537 = vpop.f32.mrb[0].mxu0
        %6538 = vmatprep.mubr.f32.mxu0 0.0
        %v6539 = vand.u32 %v6357, 4294901760
        %6540 = vmatmul.mubr.f32.gmra.mrb[0].mxu0 %v6539
        %v6541 = vpop.f32.mrb[0].mxu0
        %v6542 = vadd.f32 %v6445, %v6541
        %v6543 = vpop.f32.mrb[0].mxu0
        %6544 = vdwg.mxu0
        %6545 = vmatprep.subr.mxu0 0.0
        %v6546 = vand.u32 %v6342, 4294901760
        %v6547 = vsub.f32 %v6342, %v6546
        %6548 = vmatpush1.msra.mxu0 %v6547
        %6549 = vmatprep.subr.mxu0 0.0
        %v6550 = vand.u32 %v6343, 4294901760
        %v6551 = vsub.f32 %v6343, %v6550
        %6552 = vmatpush1.msra.mxu0 %v6551
        %6553 = vmatprep.subr.mxu0 0.0
        %v6554 = vand.u32 %v6344, 4294901760
        %v6555 = vsub.f32 %v6344, %v6554
        %6556 = vmatpush1.msra.mxu0 %v6555
        %6557 = vmatprep.subr.mxu0 0.0
        %v6558 = vand.u32 %v6345, 4294901760
        %v6559 = vsub.f32 %v6345, %v6558
        %6560 = vmatpush1.msra.mxu0 %v6559
        %6561 = vmatprep.subr.mxu0 0.0
        %6562 = vmatpush1.msra.mxu0 0.0
        %6563 = vmatprep.subr.mxu0 0.0
        %6564 = vmatpush1.msra.mxu0 0.0
        %6565 = vmatprep.subr.mxu0 0.0
        %6566 = vmatpush1.msra.mxu0 0.0
        %6567 = vmatprep.subr.mxu0 0.0
        %6568 = vmatpush1.msra.mxu0 0.0
        %6569 = vmatprep.subr.mxu0 0.0
        %6570 = vmatpush1.msra.mxu0 0.0
        %6571 = vmatprep.subr.mxu0 0.0
        %6572 = vmatpush1.msra.mxu0 0.0
        %6573 = vmatprep.subr.mxu0 0.0
        %6574 = vmatpush1.msra.mxu0 0.0
        %6575 = vmatprep.subr.mxu0 0.0
        %6576 = vmatpush1.msra.mxu0 0.0
        %6577 = vmatprep.subr.mxu0 0.0
        %6578 = vmatpush1.msra.mxu0 0.0
        %6579 = vmatprep.subr.mxu0 0.0
        %6580 = vmatpush1.msra.mxu0 0.0
        %6581 = vmatprep.subr.mxu0 0.0
        %6582 = vmatpush1.msra.mxu0 0.0
        %6583 = vmatprep.subr.mxu0 0.0
        %6584 = vmatpush1.msra.mxu0 0.0
        %6585 = vmatprep.subr.mxu0 0.0
        %6586 = vmatpush1.msra.mxu0 0.0
        %6587 = vmatprep.subr.mxu0 0.0
        %6588 = vmatpush1.msra.mxu0 0.0
        %6589 = vmatprep.subr.mxu0 0.0
        %6590 = vmatpush1.msra.mxu0 0.0
        %6591 = vmatprep.subr.mxu0 0.0
        %6592 = vmatpush1.msra.mxu0 0.0
        %6593 = vmatprep.subr.mxu0 0.0
        %6594 = vmatpush1.msra.mxu0 0.0
        %6595 = vmatprep.subr.mxu0 0.0
        %6596 = vmatpush1.msra.mxu0 0.0
        %6597 = vmatprep.subr.mxu0 0.0
        %6598 = vmatpush1.msra.mxu0 0.0
        %6599 = vmatprep.subr.mxu0 0.0
        %6600 = vmatpush1.msra.mxu0 0.0
        %6601 = vmatprep.subr.mxu0 0.0
        %6602 = vmatpush1.msra.mxu0 0.0
        %6603 = vmatprep.subr.mxu0 0.0
        %6604 = vmatpush1.msra.mxu0 0.0
        %6605 = vmatprep.subr.mxu0 0.0
        %6606 = vmatpush1.msra.mxu0 0.0
        %6607 = vmatprep.subr.mxu0 0.0
        %6608 = vmatpush1.msra.mxu0 0.0
        %6609 = vmatprep.subr.mxu0 0.0
        %6610 = vmatpush1.msra.mxu0 0.0
        %6611 = vmatprep.subr.mxu0 0.0
        %6612 = vmatpush1.msra.mxu0 0.0
        %6613 = vmatprep.subr.mxu0 0.0
        %6614 = vmatpush1.msra.mxu0 0.0
        %6615 = vmatprep.subr.mxu0 0.0
        %6616 = vmatpush1.msra.mxu0 0.0
        %6617 = vmatprep.mubr.f32.mxu0 0.0
        %v6618 = vand.u32 %v6354, 4294901760
        %v6619 = vsub.f32 %v6354, %v6618
        %6620 = vmatmul.mubr.f32.gmra.mrb[0].mxu0 %v6619
        %v6621 = vpop.f32.mrb[0].mxu0
        %v6622 = vadd.f32 %v6536, %v6621
        %v6623 = vpop.f32.mrb[0].mxu0
        %6624 = vmatprep.mubr.f32.mxu0 0.0
        %v6625 = vand.u32 %v6357, 4294901760
        %v6626 = vsub.f32 %v6357, %v6625
        %6627 = vmatmul.mubr.f32.gmra.mrb[0].mxu0 %v6626
        %v6628 = vpop.f32.mrb[0].mxu0
        %v6629 = vadd.f32 %v6542, %v6628
        %v6630 = vpop.f32.mrb[0].mxu0
        %6631 = vdwg.mxu0
        %6632 = vmatprep.subr.mxu0 0.0
        %v6633 = vand.u32 %v6342, 4294901760
        %6634 = vmatpush1.msra.mxu0 %v6633
        %6635 = vmatprep.subr.mxu0 0.0
        %v6636 = vand.u32 %v6343, 4294901760
        %6637 = vmatpush1.msra.mxu0 %v6636
        %6638 = vmatprep.subr.mxu0 0.0
        %v6639 = vand.u32 %v6344, 4294901760
        %6640 = vmatpush1.msra.mxu0 %v6639
        %6641 = vmatprep.subr.mxu0 0.0
        %v6642 = vand.u32 %v6345, 4294901760
        %6643 = vmatpush1.msra.mxu0 %v6642
        %6644 = vmatprep.subr.mxu0 0.0
        %6645 = vmatpush1.msra.mxu0 0.0
        %6646 = vmatprep.subr.mxu0 0.0
        %6647 = vmatpush1.msra.mxu0 0.0
        %6648 = vmatprep.subr.mxu0 0.0
        %6649 = vmatpush1.msra.mxu0 0.0
        %6650 = vmatprep.subr.mxu0 0.0
        %6651 = vmatpush1.msra.mxu0 0.0
        %6652 = vmatprep.subr.mxu0 0.0
        %6653 = vmatpush1.msra.mxu0 0.0
        %6654 = vmatprep.subr.mxu0 0.0
        %6655 = vmatpush1.msra.mxu0 0.0
        %6656 = vmatprep.subr.mxu0 0.0
        %6657 = vmatpush1.msra.mxu0 0.0
        %6658 = vmatprep.subr.mxu0 0.0
        %6659 = vmatpush1.msra.mxu0 0.0
        %6660 = vmatprep.subr.mxu0 0.0
        %6661 = vmatpush1.msra.mxu0 0.0
        %6662 = vmatprep.subr.mxu0 0.0
        %6663 = vmatpush1.msra.mxu0 0.0
        %6664 = vmatprep.subr.mxu0 0.0
        %6665 = vmatpush1.msra.mxu0 0.0
        %6666 = vmatprep.subr.mxu0 0.0
        %6667 = vmatpush1.msra.mxu0 0.0
        %6668 = vmatprep.subr.mxu0 0.0
        %6669 = vmatpush1.msra.mxu0 0.0
        %6670 = vmatprep.subr.mxu0 0.0
        %6671 = vmatpush1.msra.mxu0 0.0
        %6672 = vmatprep.subr.mxu0 0.0
        %6673 = vmatpush1.msra.mxu0 0.0
        %6674 = vmatprep.subr.mxu0 0.0
        %6675 = vmatpush1.msra.mxu0 0.0
        %6676 = vmatprep.subr.mxu0 0.0
        %6677 = vmatpush1.msra.mxu0 0.0
        %6678 = vmatprep.subr.mxu0 0.0
        %6679 = vmatpush1.msra.mxu0 0.0
        %6680 = vmatprep.subr.mxu0 0.0
        %6681 = vmatpush1.msra.mxu0 0.0
        %6682 = vmatprep.subr.mxu0 0.0
        %6683 = vmatpush1.msra.mxu0 0.0
        %6684 = vmatprep.subr.mxu0 0.0
        %6685 = vmatpush1.msra.mxu0 0.0
        %6686 = vmatprep.subr.mxu0 0.0
        %6687 = vmatpush1.msra.mxu0 0.0
        %6688 = vmatprep.subr.mxu0 0.0
        %6689 = vmatpush1.msra.mxu0 0.0
        %6690 = vmatprep.subr.mxu0 0.0
        %6691 = vmatpush1.msra.mxu0 0.0
        %6692 = vmatprep.subr.mxu0 0.0
        %6693 = vmatpush1.msra.mxu0 0.0
        %6694 = vmatprep.subr.mxu0 0.0
        %6695 = vmatpush1.msra.mxu0 0.0
        %6696 = vmatprep.subr.mxu0 0.0
        %6697 = vmatpush1.msra.mxu0 0.0
        %6698 = vmatprep.subr.mxu0 0.0
        %6699 = vmatpush1.msra.mxu0 0.0
        %6700 = vmatprep.mubr.f32.mxu0 0.0
        %v6701 = vand.u32 %v6354, 4294901760
        %v6702 = vsub.f32 %v6354, %v6701
        %v6703 = vand.u32 %v6702, 4294901760
        %6704 = vmatmul.mubr.f32.gmra.mrb[0].mxu0 %v6703
        %v6705 = vpop.f32.mrb[0].mxu0
        %v6706 = vadd.f32 %v6622, %v6705
        %v6707 = vpop.f32.mrb[0].mxu0
        %6708 = vmatprep.mubr.f32.mxu0 0.0
        %v6709 = vand.u32 %v6357, 4294901760
        %v6710 = vsub.f32 %v6357, %v6709
        %v6711 = vand.u32 %v6710, 4294901760
        %6712 = vmatmul.mubr.f32.gmra.mrb[0].mxu0 %v6711
        %v6713 = vpop.f32.mrb[0].mxu0
        %v6714 = vadd.f32 %v6629, %v6713
        %v6715 = vpop.f32.mrb[0].mxu0
        %6716 = vdwg.mxu0
        %6717 = vmatprep.subr.mxu0 0.0
        %v6718 = vand.u32 %v6342, 4294901760
        %v6719 = vsub.f32 %v6342, %v6718
        %v6720 = vand.u32 %v6719, 4294901760
        %6721 = vmatpush1.msra.mxu0 %v6720
        %6722 = vmatprep.subr.mxu0 0.0
        %v6723 = vand.u32 %v6343, 4294901760
        %v6724 = vsub.f32 %v6343, %v6723
        %v6725 = vand.u32 %v6724, 4294901760
        %6726 = vmatpush1.msra.mxu0 %v6725
        %6727 = vmatprep.subr.mxu0 0.0
        %v6728 = vand.u32 %v6344, 4294901760
        %v6729 = vsub.f32 %v6344, %v6728
        %v6730 = vand.u32 %v6729, 4294901760
        %6731 = vmatpush1.msra.mxu0 %v6730
        %6732 = vmatprep.subr.mxu0 0.0
        %v6733 = vand.u32 %v6345, 4294901760
        %v6734 = vsub.f32 %v6345, %v6733
        %v6735 = vand.u32 %v6734, 4294901760
        %6736 = vmatpush1.msra.mxu0 %v6735
        %6737 = vmatprep.subr.mxu0 0.0
        %6738 = vmatpush1.msra.mxu0 0.0
        %6739 = vmatprep.subr.mxu0 0.0
        %6740 = vmatpush1.msra.mxu0 0.0
        %6741 = vmatprep.subr.mxu0 0.0
        %6742 = vmatpush1.msra.mxu0 0.0
        %6743 = vmatprep.subr.mxu0 0.0
        %6744 = vmatpush1.msra.mxu0 0.0
        %6745 = vmatprep.subr.mxu0 0.0
        %6746 = vmatpush1.msra.mxu0 0.0
        %6747 = vmatprep.subr.mxu0 0.0
        %6748 = vmatpush1.msra.mxu0 0.0
        %6749 = vmatprep.subr.mxu0 0.0
        %6750 = vmatpush1.msra.mxu0 0.0
        %6751 = vmatprep.subr.mxu0 0.0
        %6752 = vmatpush1.msra.mxu0 0.0
        %6753 = vmatprep.subr.mxu0 0.0
        %6754 = vmatpush1.msra.mxu0 0.0
        %6755 = vmatprep.subr.mxu0 0.0
        %6756 = vmatpush1.msra.mxu0 0.0
        %6757 = vmatprep.subr.mxu0 0.0
        %6758 = vmatpush1.msra.mxu0 0.0
        %6759 = vmatprep.subr.mxu0 0.0
        %6760 = vmatpush1.msra.mxu0 0.0
        %6761 = vmatprep.subr.mxu0 0.0
        %6762 = vmatpush1.msra.mxu0 0.0
        %6763 = vmatprep.subr.mxu0 0.0
        %6764 = vmatpush1.msra.mxu0 0.0
        %6765 = vmatprep.subr.mxu0 0.0
        %6766 = vmatpush1.msra.mxu0 0.0
        %6767 = vmatprep.subr.mxu0 0.0
        %6768 = vmatpush1.msra.mxu0 0.0
        %6769 = vmatprep.subr.mxu0 0.0
        %6770 = vmatpush1.msra.mxu0 0.0
        %6771 = vmatprep.subr.mxu0 0.0
        %6772 = vmatpush1.msra.mxu0 0.0
        %6773 = vmatprep.subr.mxu0 0.0
        %6774 = vmatpush1.msra.mxu0 0.0
        %6775 = vmatprep.subr.mxu0 0.0
        %6776 = vmatpush1.msra.mxu0 0.0
        %6777 = vmatprep.subr.mxu0 0.0
        %6778 = vmatpush1.msra.mxu0 0.0
        %6779 = vmatprep.subr.mxu0 0.0
        %6780 = vmatpush1.msra.mxu0 0.0
        %6781 = vmatprep.subr.mxu0 0.0
        %6782 = vmatpush1.msra.mxu0 0.0
        %6783 = vmatprep.subr.mxu0 0.0
        %6784 = vmatpush1.msra.mxu0 0.0
        %6785 = vmatprep.subr.mxu0 0.0
        %6786 = vmatpush1.msra.mxu0 0.0
        %6787 = vmatprep.subr.mxu0 0.0
        %6788 = vmatpush1.msra.mxu0 0.0
        %6789 = vmatprep.subr.mxu0 0.0
        %6790 = vmatpush1.msra.mxu0 0.0
        %6791 = vmatprep.subr.mxu0 0.0
        %6792 = vmatpush1.msra.mxu0 0.0
        %6793 = vmatprep.mubr.f32.mxu0 0.0
        %v6794 = vand.u32 %v6354, 4294901760
        %6795 = vmatmul.mubr.f32.gmra.mrb[0].mxu0 %v6794
        %v6796 = vpop.f32.mrb[0].mxu0
        %v6797 = vadd.f32 %v6706, %v6796
        %v6798 = vpop.f32.mrb[0].mxu0
        %6799 = vmatprep.mubr.f32.mxu0 0.0
        %v6800 = vand.u32 %v6357, 4294901760
        %6801 = vmatmul.mubr.f32.gmra.mrb[0].mxu0 %v6800
        %v6802 = vpop.f32.mrb[0].mxu0
        %v6803 = vadd.f32 %v6714, %v6802
        %v6804 = vpop.f32.mrb[0].mxu0
        %6805 = vdwg.mxu0
        %6806 = vmatprep.subr.mxu0 0.0
        %v6807 = vand.u32 %v6342, 4294901760
        %6808 = vmatpush1.msra.mxu0 %v6807
        %6809 = vmatprep.subr.mxu0 0.0
        %v6810 = vand.u32 %v6343, 4294901760
        %6811 = vmatpush1.msra.mxu0 %v6810
        %6812 = vmatprep.subr.mxu0 0.0
        %v6813 = vand.u32 %v6344, 4294901760
        %6814 = vmatpush1.msra.mxu0 %v6813
        %6815 = vmatprep.subr.mxu0 0.0
        %v6816 = vand.u32 %v6345, 4294901760
        %6817 = vmatpush1.msra.mxu0 %v6816
        %6818 = vmatprep.subr.mxu0 0.0
        %6819 = vmatpush1.msra.mxu0 0.0
        %6820 = vmatprep.subr.mxu0 0.0
        %6821 = vmatpush1.msra.mxu0 0.0
        %6822 = vmatprep.subr.mxu0 0.0
        %6823 = vmatpush1.msra.mxu0 0.0
        %6824 = vmatprep.subr.mxu0 0.0
        %6825 = vmatpush1.msra.mxu0 0.0
        %6826 = vmatprep.subr.mxu0 0.0
        %6827 = vmatpush1.msra.mxu0 0.0
        %6828 = vmatprep.subr.mxu0 0.0
        %6829 = vmatpush1.msra.mxu0 0.0
        %6830 = vmatprep.subr.mxu0 0.0
        %6831 = vmatpush1.msra.mxu0 0.0
        %6832 = vmatprep.subr.mxu0 0.0
        %6833 = vmatpush1.msra.mxu0 0.0
        %6834 = vmatprep.subr.mxu0 0.0
        %6835 = vmatpush1.msra.mxu0 0.0
        %6836 = vmatprep.subr.mxu0 0.0
        %6837 = vmatpush1.msra.mxu0 0.0
        %6838 = vmatprep.subr.mxu0 0.0
        %6839 = vmatpush1.msra.mxu0 0.0
        %6840 = vmatprep.subr.mxu0 0.0
        %6841 = vmatpush1.msra.mxu0 0.0
        %6842 = vmatprep.subr.mxu0 0.0
        %6843 = vmatpush1.msra.mxu0 0.0
        %6844 = vmatprep.subr.mxu0 0.0
        %6845 = vmatpush1.msra.mxu0 0.0
        %6846 = vmatprep.subr.mxu0 0.0
        %6847 = vmatpush1.msra.mxu0 0.0
        %6848 = vmatprep.subr.mxu0 0.0
        %6849 = vmatpush1.msra.mxu0 0.0
        %6850 = vmatprep.subr.mxu0 0.0
        %6851 = vmatpush1.msra.mxu0 0.0
        %6852 = vmatprep.subr.mxu0 0.0
        %6853 = vmatpush1.msra.mxu0 0.0
        %6854 = vmatprep.subr.mxu0 0.0
        %6855 = vmatpush1.msra.mxu0 0.0
        %6856 = vmatprep.subr.mxu0 0.0
        %6857 = vmatpush1.msra.mxu0 0.0
        %6858 = vmatprep.subr.mxu0 0.0
        %6859 = vmatpush1.msra.mxu0 0.0
        %6860 = vmatprep.subr.mxu0 0.0
        %6861 = vmatpush1.msra.mxu0 0.0
        %6862 = vmatprep.subr.mxu0 0.0
        %6863 = vmatpush1.msra.mxu0 0.0
        %6864 = vmatprep.subr.mxu0 0.0
        %6865 = vmatpush1.msra.mxu0 0.0
        %6866 = vmatprep.subr.mxu0 0.0
        %6867 = vmatpush1.msra.mxu0 0.0
        %6868 = vmatprep.subr.mxu0 0.0
        %6869 = vmatpush1.msra.mxu0 0.0
        %6870 = vmatprep.subr.mxu0 0.0
        %6871 = vmatpush1.msra.mxu0 0.0
        %6872 = vmatprep.subr.mxu0 0.0
        %6873 = vmatpush1.msra.mxu0 0.0
        %6874 = vmatprep.mubr.f32.mxu0 0.0
        %v6875 = vand.u32 %v6354, 4294901760
        %6876 = vmatmul.mubr.f32.gmra.mrb[0].mxu0 %v6875
        %v6877 = vpop.f32.mrb[0].mxu0
        %v6878 = vadd.f32 %v6797, %v6877
        %v6879 = vpop.f32.mrb[0].mxu0
        %6880 = vmatprep.mubr.f32.mxu0 0.0
        %v6881 = vand.u32 %v6357, 4294901760
        %6882 = vmatmul.mubr.f32.gmra.mrb[0].mxu0 %v6881
        %v6883 = vpop.f32.mrb[0].mxu0
        %v6884 = vadd.f32 %v6803, %v6883
        %v6885 = vpop.f32.mrb[0].mxu0
        %6886 = vdwg.mxu0
        %v6887 = vmul.f32 %v6878, 0.5
        %v6888 = vmul.f32 %v6884, 0.5
        %v6889 = vmul.f32 %v6878, 0.70710677
        %v6890 = vmul.f32 %v6884, 0.70710677
        %v6891 = verf.f32.pop %v6889
        %v6892 = verf.f32.pop %v6890
        %v6893 = vadd.f32 %v6891, 1.0
        %v6894 = vadd.f32 %v6892, 1.0
        %v6895 = vmul.f32 %v6887, %v6893
        %v6896 = vmul.f32 %v6888, %v6894
        %v6897 = vld [vmem:[%s839] sm:$0xff]
        %v6898 = vld [vmem:[%s839 + $0x8] sm:$0xff]
        %v6899 = vld [vmem:[%s839 + $0x10] sm:$0xff]
        %v6900 = vld [vmem:[%s839 + $0x18] sm:$0xff]
        %v6901 = vld [vmem:[%s839 + $0x20] sm:$0xff]
        %v6902 = vld [vmem:[%s839 + $0x28] sm:$0xff]
        %v6903 = vld [vmem:[%s839 + $0x30] sm:$0xff]
        %v6904 = vld [vmem:[%s839 + $0x38] sm:$0xff]
        %v6905 = vld [vmem:[%s839 + $0x40] sm:$0xff]
        %v6906 = vld [vmem:[%s839 + $0x48] sm:$0xff]
        %v6907 = vld [vmem:[%s839 + $0x50] sm:$0xff]
        %v6908 = vld [vmem:[%s839 + $0x58] sm:$0xff]
        %v6909 = vld [vmem:[%s839 + $0x60] sm:$0xff]
        %v6910 = vld [vmem:[%s839 + $0x68] sm:$0xff]
        %v6911 = vld [vmem:[%s839 + $0x70] sm:$0xff]
        %v6912 = vld [vmem:[%s839 + $0x78] sm:$0xff]
        %v6913 = vld [vmem:[%s842] sm:$0x1]
        %v6915 = vlaneseq
        %v6916 = vshrl.u32 %v6915, 7
        %v6917 = vsub.s32 0, %v6916
        %v6918 = vrot.slane %v6913, %v6917
        %6920 = vmatprep.subr.mxu0 0.0
        %v6921 = vand.u32 %v6897, 4294901760
        %6922 = vmatpush1.msra.mxu0 %v6921
        %6923 = vmatprep.subr.mxu0 0.0
        %v6924 = vand.u32 %v6898, 4294901760
        %6925 = vmatpush1.msra.mxu0 %v6924
        %6926 = vmatprep.subr.mxu0 0.0
        %v6927 = vand.u32 %v6899, 4294901760
        %6928 = vmatpush1.msra.mxu0 %v6927
        %6929 = vmatprep.subr.mxu0 0.0
        %v6930 = vand.u32 %v6900, 4294901760
        %6931 = vmatpush1.msra.mxu0 %v6930
        %6932 = vmatprep.subr.mxu0 0.0
        %v6933 = vand.u32 %v6901, 4294901760
        %6934 = vmatpush1.msra.mxu0 %v6933
        %6935 = vmatprep.subr.mxu0 0.0
        %v6936 = vand.u32 %v6902, 4294901760
        %6937 = vmatpush1.msra.mxu0 %v6936
        %6938 = vmatprep.subr.mxu0 0.0
        %v6939 = vand.u32 %v6903, 4294901760
        %6940 = vmatpush1.msra.mxu0 %v6939
        %6941 = vmatprep.subr.mxu0 0.0
        %v6942 = vand.u32 %v6904, 4294901760
        %6943 = vmatpush1.msra.mxu0 %v6942
        %6944 = vmatprep.subr.mxu0 0.0
        %v6945 = vand.u32 %v6905, 4294901760
        %6946 = vmatpush1.msra.mxu0 %v6945
        %6947 = vmatprep.subr.mxu0 0.0
        %v6948 = vand.u32 %v6906, 4294901760
        %6949 = vmatpush1.msra.mxu0 %v6948
        %6950 = vmatprep.subr.mxu0 0.0
        %v6951 = vand.u32 %v6907, 4294901760
        %6952 = vmatpush1.msra.mxu0 %v6951
        %6953 = vmatprep.subr.mxu0 0.0
        %v6954 = vand.u32 %v6908, 4294901760
        %6955 = vmatpush1.msra.mxu0 %v6954
        %6956 = vmatprep.subr.mxu0 0.0
        %v6957 = vand.u32 %v6909, 4294901760
        %6958 = vmatpush1.msra.mxu0 %v6957
        %6959 = vmatprep.subr.mxu0 0.0
        %v6960 = vand.u32 %v6910, 4294901760
        %6961 = vmatpush1.msra.mxu0 %v6960
        %6962 = vmatprep.subr.mxu0 0.0
        %v6963 = vand.u32 %v6911, 4294901760
        %6964 = vmatpush1.msra.mxu0 %v6963
        %6965 = vmatprep.subr.mxu0 0.0
        %v6966 = vand.u32 %v6912, 4294901760
        %6967 = vmatpush1.msra.mxu0 %v6966
        %6968 = vmatprep.subr.mxu0 0.0
        %6969 = vmatpush1.msra.mxu0 0.0
        %6970 = vmatprep.subr.mxu0 0.0
        %6971 = vmatpush1.msra.mxu0 0.0
        %6972 = vmatprep.subr.mxu0 0.0
        %6973 = vmatpush1.msra.mxu0 0.0
        %6974 = vmatprep.subr.mxu0 0.0
        %6975 = vmatpush1.msra.mxu0 0.0
        %6976 = vmatprep.subr.mxu0 0.0
        %6977 = vmatpush1.msra.mxu0 0.0
        %6978 = vmatprep.subr.mxu0 0.0
        %6979 = vmatpush1.msra.mxu0 0.0
        %6980 = vmatprep.subr.mxu0 0.0
        %6981 = vmatpush1.msra.mxu0 0.0
        %6982 = vmatprep.subr.mxu0 0.0
        %6983 = vmatpush1.msra.mxu0 0.0
        %6984 = vmatprep.subr.mxu0 0.0
        %6985 = vmatpush1.msra.mxu0 0.0
        %6986 = vmatprep.subr.mxu0 0.0
        %6987 = vmatpush1.msra.mxu0 0.0
        %6988 = vmatprep.subr.mxu0 0.0
        %6989 = vmatpush1.msra.mxu0 0.0
        %6990 = vmatprep.subr.mxu0 0.0
        %6991 = vmatpush1.msra.mxu0 0.0
        %6992 = vmatprep.subr.mxu0 0.0
        %6993 = vmatpush1.msra.mxu0 0.0
        %6994 = vmatprep.subr.mxu0 0.0
        %6995 = vmatpush1.msra.mxu0 0.0
        %6996 = vmatprep.subr.mxu0 0.0
        %6997 = vmatpush1.msra.mxu0 0.0
        %6998 = vmatprep.subr.mxu0 0.0
        %6999 = vmatpush1.msra.mxu0 0.0
        %7000 = vmatprep.mubr.f32.mxu0 0.0
        %v7001 = vand.u32 %v6895, 4294901760
        %v7002 = vsub.f32 %v6895, %v7001
        %v7003 = vand.u32 %v7002, 4294901760
        %v7004 = vsub.f32 %v7002, %v7003
        %v7005 = vand.u32 %v7004, 4294901760
        %7006 = vmatmul.mubr.f32.gmra.mrb[0].mxu0 %v7005
        %v7007 = vpop.f32.mrb[0].mxu0
        %v7008 = vadd.f32 %v6918, %v7007
        %v7009 = vpop.f32.mrb[0].mxu0
        %7010 = vmatprep.mubr.f32.mxu0 0.0
        %v7011 = vand.u32 %v6896, 4294901760
        %v7012 = vsub.f32 %v6896, %v7011
        %v7013 = vand.u32 %v7012, 4294901760
        %v7014 = vsub.f32 %v7012, %v7013
        %v7015 = vand.u32 %v7014, 4294901760
        %7016 = vmatmul.mubr.f32.gmra.mrb[0].mxu0 %v7015
        %v7017 = vpop.f32.mrb[0].mxu0
        %v7018 = vadd.f32 %v6918, %v7017
        %v7019 = vpop.f32.mrb[0].mxu0
        %7020 = vdwg.mxu0
        %7021 = vmatprep.subr.mxu0 0.0
        %v7022 = vand.u32 %v6897, 4294901760
        %v7023 = vsub.f32 %v6897, %v7022
        %v7024 = vand.u32 %v7023, 4294901760
        %v7025 = vsub.f32 %v7023, %v7024
        %v7026 = vand.u32 %v7025, 4294901760
        %7027 = vmatpush1.msra.mxu0 %v7026
        %7028 = vmatprep.subr.mxu0 0.0
        %v7029 = vand.u32 %v6898, 4294901760
        %v7030 = vsub.f32 %v6898, %v7029
        %v7031 = vand.u32 %v7030, 4294901760
        %v7032 = vsub.f32 %v7030, %v7031
        %v7033 = vand.u32 %v7032, 4294901760
        %7034 = vmatpush1.msra.mxu0 %v7033
        %7035 = vmatprep.subr.mxu0 0.0
        %v7036 = vand.u32 %v6899, 4294901760
        %v7037 = vsub.f32 %v6899, %v7036
        %v7038 = vand.u32 %v7037, 4294901760
        %v7039 = vsub.f32 %v7037, %v7038
        %v7040 = vand.u32 %v7039, 4294901760
        %7041 = vmatpush1.msra.mxu0 %v7040
        %7042 = vmatprep.subr.mxu0 0.0
        %v7043 = vand.u32 %v6900, 4294901760
        %v7044 = vsub.f32 %v6900, %v7043
        %v7045 = vand.u32 %v7044, 4294901760
        %v7046 = vsub.f32 %v7044, %v7045
        %v7047 = vand.u32 %v7046, 4294901760
        %7048 = vmatpush1.msra.mxu0 %v7047
        %7049 = vmatprep.subr.mxu0 0.0
        %v7050 = vand.u32 %v6901, 4294901760
        %v7051 = vsub.f32 %v6901, %v7050
        %v7052 = vand.u32 %v7051, 4294901760
        %v7053 = vsub.f32 %v7051, %v7052
        %v7054 = vand.u32 %v7053, 4294901760
        %7055 = vmatpush1.msra.mxu0 %v7054
        %7056 = vmatprep.subr.mxu0 0.0
        %v7057 = vand.u32 %v6902, 4294901760
        %v7058 = vsub.f32 %v6902, %v7057
        %v7059 = vand.u32 %v7058, 4294901760
        %v7060 = vsub.f32 %v7058, %v7059
        %v7061 = vand.u32 %v7060, 4294901760
        %7062 = vmatpush1.msra.mxu0 %v7061
        %7063 = vmatprep.subr.mxu0 0.0
        %v7064 = vand.u32 %v6903, 4294901760
        %v7065 = vsub.f32 %v6903, %v7064
        %v7066 = vand.u32 %v7065, 4294901760
        %v7067 = vsub.f32 %v7065, %v7066
        %v7068 = vand.u32 %v7067, 4294901760
        %7069 = vmatpush1.msra.mxu0 %v7068
        %7070 = vmatprep.subr.mxu0 0.0
        %v7071 = vand.u32 %v6904, 4294901760
        %v7072 = vsub.f32 %v6904, %v7071
        %v7073 = vand.u32 %v7072, 4294901760
        %v7074 = vsub.f32 %v7072, %v7073
        %v7075 = vand.u32 %v7074, 4294901760
        %7076 = vmatpush1.msra.mxu0 %v7075
        %7077 = vmatprep.subr.mxu0 0.0
        %v7078 = vand.u32 %v6905, 4294901760
        %v7079 = vsub.f32 %v6905, %v7078
        %v7080 = vand.u32 %v7079, 4294901760
        %v7081 = vsub.f32 %v7079, %v7080
        %v7082 = vand.u32 %v7081, 4294901760
        %7083 = vmatpush1.msra.mxu0 %v7082
        %7084 = vmatprep.subr.mxu0 0.0
        %v7085 = vand.u32 %v6906, 4294901760
        %v7086 = vsub.f32 %v6906, %v7085
        %v7087 = vand.u32 %v7086, 4294901760
        %v7088 = vsub.f32 %v7086, %v7087
        %v7089 = vand.u32 %v7088, 4294901760
        %7090 = vmatpush1.msra.mxu0 %v7089
        %7091 = vmatprep.subr.mxu0 0.0
        %v7092 = vand.u32 %v6907, 4294901760
        %v7093 = vsub.f32 %v6907, %v7092
        %v7094 = vand.u32 %v7093, 4294901760
        %v7095 = vsub.f32 %v7093, %v7094
        %v7096 = vand.u32 %v7095, 4294901760
        %7097 = vmatpush1.msra.mxu0 %v7096
        %7098 = vmatprep.subr.mxu0 0.0
        %v7099 = vand.u32 %v6908, 4294901760
        %v7100 = vsub.f32 %v6908, %v7099
        %v7101 = vand.u32 %v7100, 4294901760
        %v7102 = vsub.f32 %v7100, %v7101
        %v7103 = vand.u32 %v7102, 4294901760
        %7104 = vmatpush1.msra.mxu0 %v7103
        %7105 = vmatprep.subr.mxu0 0.0
        %v7106 = vand.u32 %v6909, 4294901760
        %v7107 = vsub.f32 %v6909, %v7106
        %v7108 = vand.u32 %v7107, 4294901760
        %v7109 = vsub.f32 %v7107, %v7108
        %v7110 = vand.u32 %v7109, 4294901760
        %7111 = vmatpush1.msra.mxu0 %v7110
        %7112 = vmatprep.subr.mxu0 0.0
        %v7113 = vand.u32 %v6910, 4294901760
        %v7114 = vsub.f32 %v6910, %v7113
        %v7115 = vand.u32 %v7114, 4294901760
        %v7116 = vsub.f32 %v7114, %v7115
        %v7117 = vand.u32 %v7116, 4294901760
        %7118 = vmatpush1.msra.mxu0 %v7117
        %7119 = vmatprep.subr.mxu0 0.0
        %v7120 = vand.u32 %v6911, 4294901760
        %v7121 = vsub.f32 %v6911, %v7120
        %v7122 = vand.u32 %v7121, 4294901760
        %v7123 = vsub.f32 %v7121, %v7122
        %v7124 = vand.u32 %v7123, 4294901760
        %7125 = vmatpush1.msra.mxu0 %v7124
        %7126 = vmatprep.subr.mxu0 0.0
        %v7127 = vand.u32 %v6912, 4294901760
        %v7128 = vsub.f32 %v6912, %v7127
        %v7129 = vand.u32 %v7128, 4294901760
        %v7130 = vsub.f32 %v7128, %v7129
        %v7131 = vand.u32 %v7130, 4294901760
        %7132 = vmatpush1.msra.mxu0 %v7131
        %7133 = vmatprep.subr.mxu0 0.0
        %7134 = vmatpush1.msra.mxu0 0.0
        %7135 = vmatprep.subr.mxu0 0.0
        %7136 = vmatpush1.msra.mxu0 0.0
        %7137 = vmatprep.subr.mxu0 0.0
        %7138 = vmatpush1.msra.mxu0 0.0
        %7139 = vmatprep.subr.mxu0 0.0
        %7140 = vmatpush1.msra.mxu0 0.0
        %7141 = vmatprep.subr.mxu0 0.0
        %7142 = vmatpush1.msra.mxu0 0.0
        %7143 = vmatprep.subr.mxu0 0.0
        %7144 = vmatpush1.msra.mxu0 0.0
        %7145 = vmatprep.subr.mxu0 0.0
        %7146 = vmatpush1.msra.mxu0 0.0
        %7147 = vmatprep.subr.mxu0 0.0
        %7148 = vmatpush1.msra.mxu0 0.0
        %7149 = vmatprep.subr.mxu0 0.0
        %7150 = vmatpush1.msra.mxu0 0.0
        %7151 = vmatprep.subr.mxu0 0.0
        %7152 = vmatpush1.msra.mxu0 0.0
        %7153 = vmatprep.subr.mxu0 0.0
        %7154 = vmatpush1.msra.mxu0 0.0
        %7155 = vmatprep.subr.mxu0 0.0
        %7156 = vmatpush1.msra.mxu0 0.0
        %7157 = vmatprep.subr.mxu0 0.0
        %7158 = vmatpush1.msra.mxu0 0.0
        %7159 = vmatprep.subr.mxu0 0.0
        %7160 = vmatpush1.msra.mxu0 0.0
        %7161 = vmatprep.subr.mxu0 0.0
        %7162 = vmatpush1.msra.mxu0 0.0
        %7163 = vmatprep.subr.mxu0 0.0
        %7164 = vmatpush1.msra.mxu0 0.0
        %7165 = vmatprep.mubr.f32.mxu0 0.0
        %v7166 = vand.u32 %v6895, 4294901760
        %7167 = vmatmul.mubr.f32.gmra.mrb[0].mxu0 %v7166
        %v7168 = vpop.f32.mrb[0].mxu0
        %v7169 = vadd.f32 %v7008, %v7168
        %v7170 = vpop.f32.mrb[0].mxu0
        %7171 = vmatprep.mubr.f32.mxu0 0.0
        %v7172 = vand.u32 %v6896, 4294901760
        %7173 = vmatmul.mubr.f32.gmra.mrb[0].mxu0 %v7172
        %v7174 = vpop.f32.mrb[0].mxu0
        %v7175 = vadd.f32 %v7018, %v7174
        %v7176 = vpop.f32.mrb[0].mxu0
        %7177 = vdwg.mxu0
        %7178 = vmatprep.subr.mxu0 0.0
        %v7179 = vand.u32 %v6897, 4294901760
        %v7180 = vsub.f32 %v6897, %v7179
        %7181 = vmatpush1.msra.mxu0 %v7180
        %7182 = vmatprep.subr.mxu0 0.0
        %v7183 = vand.u32 %v6898, 4294901760
        %v7184 = vsub.f32 %v6898, %v7183
        %7185 = vmatpush1.msra.mxu0 %v7184
        %7186 = vmatprep.subr.mxu0 0.0
        %v7187 = vand.u32 %v6899, 4294901760
        %v7188 = vsub.f32 %v6899, %v7187
        %7189 = vmatpush1.msra.mxu0 %v7188
        %7190 = vmatprep.subr.mxu0 0.0
        %v7191 = vand.u32 %v6900, 4294901760
        %v7192 = vsub.f32 %v6900, %v7191
        %7193 = vmatpush1.msra.mxu0 %v7192
        %7194 = vmatprep.subr.mxu0 0.0
        %v7195 = vand.u32 %v6901, 4294901760
        %v7196 = vsub.f32 %v6901, %v7195
        %7197 = vmatpush1.msra.mxu0 %v7196
        %7198 = vmatprep.subr.mxu0 0.0
        %v7199 = vand.u32 %v6902, 4294901760
        %v7200 = vsub.f32 %v6902, %v7199
        %7201 = vmatpush1.msra.mxu0 %v7200
        %7202 = vmatprep.subr.mxu0 0.0
        %v7203 = vand.u32 %v6903, 4294901760
        %v7204 = vsub.f32 %v6903, %v7203
        %7205 = vmatpush1.msra.mxu0 %v7204
        %7206 = vmatprep.subr.mxu0 0.0
        %v7207 = vand.u32 %v6904, 4294901760
        %v7208 = vsub.f32 %v6904, %v7207
        %7209 = vmatpush1.msra.mxu0 %v7208
        %7210 = vmatprep.subr.mxu0 0.0
        %v7211 = vand.u32 %v6905, 4294901760
        %v7212 = vsub.f32 %v6905, %v7211
        %7213 = vmatpush1.msra.mxu0 %v7212
        %7214 = vmatprep.subr.mxu0 0.0
        %v7215 = vand.u32 %v6906, 4294901760
        %v7216 = vsub.f32 %v6906, %v7215
        %7217 = vmatpush1.msra.mxu0 %v7216
        %7218 = vmatprep.subr.mxu0 0.0
        %v7219 = vand.u32 %v6907, 4294901760
        %v7220 = vsub.f32 %v6907, %v7219
        %7221 = vmatpush1.msra.mxu0 %v7220
        %7222 = vmatprep.subr.mxu0 0.0
        %v7223 = vand.u32 %v6908, 4294901760
        %v7224 = vsub.f32 %v6908, %v7223
        %7225 = vmatpush1.msra.mxu0 %v7224
        %7226 = vmatprep.subr.mxu0 0.0
        %v7227 = vand.u32 %v6909, 4294901760
        %v7228 = vsub.f32 %v6909, %v7227
        %7229 = vmatpush1.msra.mxu0 %v7228
        %7230 = vmatprep.subr.mxu0 0.0
        %v7231 = vand.u32 %v6910, 4294901760
        %v7232 = vsub.f32 %v6910, %v7231
        %7233 = vmatpush1.msra.mxu0 %v7232
        %7234 = vmatprep.subr.mxu0 0.0
        %v7235 = vand.u32 %v6911, 4294901760
        %v7236 = vsub.f32 %v6911, %v7235
        %7237 = vmatpush1.msra.mxu0 %v7236
        %7238 = vmatprep.subr.mxu0 0.0
        %v7239 = vand.u32 %v6912, 4294901760
        %v7240 = vsub.f32 %v6912, %v7239
        %7241 = vmatpush1.msra.mxu0 %v7240
        %7242 = vmatprep.subr.mxu0 0.0
        %7243 = vmatpush1.msra.mxu0 0.0
        %7244 = vmatprep.subr.mxu0 0.0
        %7245 = vmatpush1.msra.mxu0 0.0
        %7246 = vmatprep.subr.mxu0 0.0
        %7247 = vmatpush1.msra.mxu0 0.0
        %7248 = vmatprep.subr.mxu0 0.0
        %7249 = vmatpush1.msra.mxu0 0.0
        %7250 = vmatprep.subr.mxu0 0.0
        %7251 = vmatpush1.msra.mxu0 0.0
        %7252 = vmatprep.subr.mxu0 0.0
        %7253 = vmatpush1.msra.mxu0 0.0
        %7254 = vmatprep.subr.mxu0 0.0
        %7255 = vmatpush1.msra.mxu0 0.0
        %7256 = vmatprep.subr.mxu0 0.0
        %7257 = vmatpush1.msra.mxu0 0.0
        %7258 = vmatprep.subr.mxu0 0.0
        %7259 = vmatpush1.msra.mxu0 0.0
        %7260 = vmatprep.subr.mxu0 0.0
        %7261 = vmatpush1.msra.mxu0 0.0
        %7262 = vmatprep.subr.mxu0 0.0
        %7263 = vmatpush1.msra.mxu0 0.0
        %7264 = vmatprep.subr.mxu0 0.0
        %7265 = vmatpush1.msra.mxu0 0.0
        %7266 = vmatprep.subr.mxu0 0.0
        %7267 = vmatpush1.msra.mxu0 0.0
        %7268 = vmatprep.subr.mxu0 0.0
        %7269 = vmatpush1.msra.mxu0 0.0
        %7270 = vmatprep.subr.mxu0 0.0
        %7271 = vmatpush1.msra.mxu0 0.0
        %7272 = vmatprep.subr.mxu0 0.0
        %7273 = vmatpush1.msra.mxu0 0.0
        %7274 = vmatprep.mubr.f32.mxu0 0.0
        %v7275 = vand.u32 %v6895, 4294901760
        %v7276 = vsub.f32 %v6895, %v7275
        %7277 = vmatmul.mubr.f32.gmra.mrb[0].mxu0 %v7276
        %v7278 = vpop.f32.mrb[0].mxu0
        %v7279 = vadd.f32 %v7169, %v7278
        %v7280 = vpop.f32.mrb[0].mxu0
        %7281 = vmatprep.mubr.f32.mxu0 0.0
        %v7282 = vand.u32 %v6896, 4294901760
        %v7283 = vsub.f32 %v6896, %v7282
        %7284 = vmatmul.mubr.f32.gmra.mrb[0].mxu0 %v7283
        %v7285 = vpop.f32.mrb[0].mxu0
        %v7286 = vadd.f32 %v7175, %v7285
        %v7287 = vpop.f32.mrb[0].mxu0
        %7288 = vdwg.mxu0
        %7289 = vmatprep.subr.mxu0 0.0
        %v7290 = vand.u32 %v6897, 4294901760
        %7291 = vmatpush1.msra.mxu0 %v7290
        %7292 = vmatprep.subr.mxu0 0.0
        %v7293 = vand.u32 %v6898, 4294901760
        %7294 = vmatpush1.msra.mxu0 %v7293
        %7295 = vmatprep.subr.mxu0 0.0
        %v7296 = vand.u32 %v6899, 4294901760
        %7297 = vmatpush1.msra.mxu0 %v7296
        %7298 = vmatprep.subr.mxu0 0.0
        %v7299 = vand.u32 %v6900, 4294901760
        %7300 = vmatpush1.msra.mxu0 %v7299
        %7301 = vmatprep.subr.mxu0 0.0
        %v7302 = vand.u32 %v6901, 4294901760
        %7303 = vmatpush1.msra.mxu0 %v7302
        %7304 = vmatprep.subr.mxu0 0.0
        %v7305 = vand.u32 %v6902, 4294901760
        %7306 = vmatpush1.msra.mxu0 %v7305
        %7307 = vmatprep.subr.mxu0 0.0
        %v7308 = vand.u32 %v6903, 4294901760
        %7309 = vmatpush1.msra.mxu0 %v7308
        %7310 = vmatprep.subr.mxu0 0.0
        %v7311 = vand.u32 %v6904, 4294901760
        %7312 = vmatpush1.msra.mxu0 %v7311
        %7313 = vmatprep.subr.mxu0 0.0
        %v7314 = vand.u32 %v6905, 4294901760
        %7315 = vmatpush1.msra.mxu0 %v7314
        %7316 = vmatprep.subr.mxu0 0.0
        %v7317 = vand.u32 %v6906, 4294901760
        %7318 = vmatpush1.msra.mxu0 %v7317
        %7319 = vmatprep.subr.mxu0 0.0
        %v7320 = vand.u32 %v6907, 4294901760
        %7321 = vmatpush1.msra.mxu0 %v7320
        %7322 = vmatprep.subr.mxu0 0.0
        %v7323 = vand.u32 %v6908, 4294901760
        %7324 = vmatpush1.msra.mxu0 %v7323
        %7325 = vmatprep.subr.mxu0 0.0
        %v7326 = vand.u32 %v6909, 4294901760
        %7327 = vmatpush1.msra.mxu0 %v7326
        %7328 = vmatprep.subr.mxu0 0.0
        %v7329 = vand.u32 %v6910, 4294901760
        %7330 = vmatpush1.msra.mxu0 %v7329
        %7331 = vmatprep.subr.mxu0 0.0
        %v7332 = vand.u32 %v6911, 4294901760
        %7333 = vmatpush1.msra.mxu0 %v7332
        %7334 = vmatprep.subr.mxu0 0.0
        %v7335 = vand.u32 %v6912, 4294901760
        %7336 = vmatpush1.msra.mxu0 %v7335
        %7337 = vmatprep.subr.mxu0 0.0
        %7338 = vmatpush1.msra.mxu0 0.0
        %7339 = vmatprep.subr.mxu0 0.0
        %7340 = vmatpush1.msra.mxu0 0.0
        %7341 = vmatprep.subr.mxu0 0.0
        %7342 = vmatpush1.msra.mxu0 0.0
        %7343 = vmatprep.subr.mxu0 0.0
        %7344 = vmatpush1.msra.mxu0 0.0
        %7345 = vmatprep.subr.mxu0 0.0
        %7346 = vmatpush1.msra.mxu0 0.0
        %7347 = vmatprep.subr.mxu0 0.0
        %7348 = vmatpush1.msra.mxu0 0.0
        %7349 = vmatprep.subr.mxu0 0.0
        %7350 = vmatpush1.msra.mxu0 0.0
        %7351 = vmatprep.subr.mxu0 0.0
        %7352 = vmatpush1.msra.mxu0 0.0
        %7353 = vmatprep.subr.mxu0 0.0
        %7354 = vmatpush1.msra.mxu0 0.0
        %7355 = vmatprep.subr.mxu0 0.0
        %7356 = vmatpush1.msra.mxu0 0.0
        %7357 = vmatprep.subr.mxu0 0.0
        %7358 = vmatpush1.msra.mxu0 0.0
        %7359 = vmatprep.subr.mxu0 0.0
        %7360 = vmatpush1.msra.mxu0 0.0
        %7361 = vmatprep.subr.mxu0 0.0
        %7362 = vmatpush1.msra.mxu0 0.0
        %7363 = vmatprep.subr.mxu0 0.0
        %7364 = vmatpush1.msra.mxu0 0.0
        %7365 = vmatprep.subr.mxu0 0.0
        %7366 = vmatpush1.msra.mxu0 0.0
        %7367 = vmatprep.subr.mxu0 0.0
        %7368 = vmatpush1.msra.mxu0 0.0
        %7369 = vmatprep.mubr.f32.mxu0 0.0
        %v7370 = vand.u32 %v6895, 4294901760
        %v7371 = vsub.f32 %v6895, %v7370
        %v7372 = vand.u32 %v7371, 4294901760
        %7373 = vmatmul.mubr.f32.gmra.mrb[0].mxu0 %v7372
        %v7374 = vpop.f32.mrb[0].mxu0
        %v7375 = vadd.f32 %v7279, %v7374
        %v7376 = vpop.f32.mrb[0].mxu0
        %7377 = vmatprep.mubr.f32.mxu0 0.0
        %v7378 = vand.u32 %v6896, 4294901760
        %v7379 = vsub.f32 %v6896, %v7378
        %v7380 = vand.u32 %v7379, 4294901760
        %7381 = vmatmul.mubr.f32.gmra.mrb[0].mxu0 %v7380
        %v7382 = vpop.f32.mrb[0].mxu0
        %v7383 = vadd.f32 %v7286, %v7382
        %v7384 = vpop.f32.mrb[0].mxu0
        %7385 = vdwg.mxu0
        %7386 = vmatprep.subr.mxu0 0.0
        %v7387 = vand.u32 %v6897, 4294901760
        %v7388 = vsub.f32 %v6897, %v7387
        %v7389 = vand.u32 %v7388, 4294901760
        %7390 = vmatpush1.msra.mxu0 %v7389
        %7391 = vmatprep.subr.mxu0 0.0
        %v7392 = vand.u32 %v6898, 4294901760
        %v7393 = vsub.f32 %v6898, %v7392
        %v7394 = vand.u32 %v7393, 4294901760
        %7395 = vmatpush1.msra.mxu0 %v7394
        %7396 = vmatprep.subr.mxu0 0.0
        %v7397 = vand.u32 %v6899, 4294901760
        %v7398 = vsub.f32 %v6899, %v7397
        %v7399 = vand.u32 %v7398, 4294901760
        %7400 = vmatpush1.msra.mxu0 %v7399
        %7401 = vmatprep.subr.mxu0 0.0
        %v7402 = vand.u32 %v6900, 4294901760
        %v7403 = vsub.f32 %v6900, %v7402
        %v7404 = vand.u32 %v7403, 4294901760
        %7405 = vmatpush1.msra.mxu0 %v7404
        %7406 = vmatprep.subr.mxu0 0.0
        %v7407 = vand.u32 %v6901, 4294901760
        %v7408 = vsub.f32 %v6901, %v7407
        %v7409 = vand.u32 %v7408, 4294901760
        %7410 = vmatpush1.msra.mxu0 %v7409
        %7411 = vmatprep.subr.mxu0 0.0
        %v7412 = vand.u32 %v6902, 4294901760
        %v7413 = vsub.f32 %v6902, %v7412
        %v7414 = vand.u32 %v7413, 4294901760
        %7415 = vmatpush1.msra.mxu0 %v7414
        %7416 = vmatprep.subr.mxu0 0.0
        %v7417 = vand.u32 %v6903, 4294901760
        %v7418 = vsub.f32 %v6903, %v7417
        %v7419 = vand.u32 %v7418, 4294901760
        %7420 = vmatpush1.msra.mxu0 %v7419
        %7421 = vmatprep.subr.mxu0 0.0
        %v7422 = vand.u32 %v6904, 4294901760
        %v7423 = vsub.f32 %v6904, %v7422
        %v7424 = vand.u32 %v7423, 4294901760
        %7425 = vmatpush1.msra.mxu0 %v7424
        %7426 = vmatprep.subr.mxu0 0.0
        %v7427 = vand.u32 %v6905, 4294901760
        %v7428 = vsub.f32 %v6905, %v7427
        %v7429 = vand.u32 %v7428, 4294901760
        %7430 = vmatpush1.msra.mxu0 %v7429
        %7431 = vmatprep.subr.mxu0 0.0
        %v7432 = vand.u32 %v6906, 4294901760
        %v7433 = vsub.f32 %v6906, %v7432
        %v7434 = vand.u32 %v7433, 4294901760
        %7435 = vmatpush1.msra.mxu0 %v7434
        %7436 = vmatprep.subr.mxu0 0.0
        %v7437 = vand.u32 %v6907, 4294901760
        %v7438 = vsub.f32 %v6907, %v7437
        %v7439 = vand.u32 %v7438, 4294901760
        %7440 = vmatpush1.msra.mxu0 %v7439
        %7441 = vmatprep.subr.mxu0 0.0
        %v7442 = vand.u32 %v6908, 4294901760
        %v7443 = vsub.f32 %v6908, %v7442
        %v7444 = vand.u32 %v7443, 4294901760
        %7445 = vmatpush1.msra.mxu0 %v7444
        %7446 = vmatprep.subr.mxu0 0.0
        %v7447 = vand.u32 %v6909, 4294901760
        %v7448 = vsub.f32 %v6909, %v7447
        %v7449 = vand.u32 %v7448, 4294901760
        %7450 = vmatpush1.msra.mxu0 %v7449
        %7451 = vmatprep.subr.mxu0 0.0
        %v7452 = vand.u32 %v6910, 4294901760
        %v7453 = vsub.f32 %v6910, %v7452
        %v7454 = vand.u32 %v7453, 4294901760
        %7455 = vmatpush1.msra.mxu0 %v7454
        %7456 = vmatprep.subr.mxu0 0.0
        %v7457 = vand.u32 %v6911, 4294901760
        %v7458 = vsub.f32 %v6911, %v7457
        %v7459 = vand.u32 %v7458, 4294901760
        %7460 = vmatpush1.msra.mxu0 %v7459
        %7461 = vmatprep.subr.mxu0 0.0
        %v7462 = vand.u32 %v6912, 4294901760
        %v7463 = vsub.f32 %v6912, %v7462
        %v7464 = vand.u32 %v7463, 4294901760
        %7465 = vmatpush1.msra.mxu0 %v7464
        %7466 = vmatprep.subr.mxu0 0.0
        %7467 = vmatpush1.msra.mxu0 0.0
        %7468 = vmatprep.subr.mxu0 0.0
        %7469 = vmatpush1.msra.mxu0 0.0
        %7470 = vmatprep.subr.mxu0 0.0
        %7471 = vmatpush1.msra.mxu0 0.0
        %7472 = vmatprep.subr.mxu0 0.0
        %7473 = vmatpush1.msra.mxu0 0.0
        %7474 = vmatprep.subr.mxu0 0.0
        %7475 = vmatpush1.msra.mxu0 0.0
        %7476 = vmatprep.subr.mxu0 0.0
        %7477 = vmatpush1.msra.mxu0 0.0
        %7478 = vmatprep.subr.mxu0 0.0
        %7479 = vmatpush1.msra.mxu0 0.0
        %7480 = vmatprep.subr.mxu0 0.0
        %7481 = vmatpush1.msra.mxu0 0.0
        %7482 = vmatprep.subr.mxu0 0.0
        %7483 = vmatpush1.msra.mxu0 0.0
        %7484 = vmatprep.subr.mxu0 0.0
        %7485 = vmatpush1.msra.mxu0 0.0
        %7486 = vmatprep.subr.mxu0 0.0
        %7487 = vmatpush1.msra.mxu0 0.0
        %7488 = vmatprep.subr.mxu0 0.0
        %7489 = vmatpush1.msra.mxu0 0.0
        %7490 = vmatprep.subr.mxu0 0.0
        %7491 = vmatpush1.msra.mxu0 0.0
        %7492 = vmatprep.subr.mxu0 0.0
        %7493 = vmatpush1.msra.mxu0 0.0
        %7494 = vmatprep.subr.mxu0 0.0
        %7495 = vmatpush1.msra.mxu0 0.0
        %7496 = vmatprep.subr.mxu0 0.0
        %7497 = vmatpush1.msra.mxu0 0.0
        %7498 = vmatprep.mubr.f32.mxu0 0.0
        %v7499 = vand.u32 %v6895, 4294901760
        %7500 = vmatmul.mubr.f32.gmra.mrb[0].mxu0 %v7499
        %v7501 = vpop.f32.mrb[0].mxu0
        %v7502 = vadd.f32 %v7375, %v7501
        %v7503 = vpop.f32.mrb[0].mxu0
        %7504 = vmatprep.mubr.f32.mxu0 0.0
        %v7505 = vand.u32 %v6896, 4294901760
        %7506 = vmatmul.mubr.f32.gmra.mrb[0].mxu0 %v7505
        %v7507 = vpop.f32.mrb[0].mxu0
        %v7508 = vadd.f32 %v7383, %v7507
        %v7509 = vpop.f32.mrb[0].mxu0
        %7510 = vdwg.mxu0
        %7511 = vmatprep.subr.mxu0 0.0
        %v7512 = vand.u32 %v6897, 4294901760
        %7513 = vmatpush1.msra.mxu0 %v7512
        %7514 = vmatprep.subr.mxu0 0.0
        %v7515 = vand.u32 %v6898, 4294901760
        %7516 = vmatpush1.msra.mxu0 %v7515
        %7517 = vmatprep.subr.mxu0 0.0
        %v7518 = vand.u32 %v6899, 4294901760
        %7519 = vmatpush1.msra.mxu0 %v7518
        %7520 = vmatprep.subr.mxu0 0.0
        %v7521 = vand.u32 %v6900, 4294901760
        %7522 = vmatpush1.msra.mxu0 %v7521
        %7523 = vmatprep.subr.mxu0 0.0
        %v7524 = vand.u32 %v6901, 4294901760
        %7525 = vmatpush1.msra.mxu0 %v7524
        %7526 = vmatprep.subr.mxu0 0.0
        %v7527 = vand.u32 %v6902, 4294901760
        %7528 = vmatpush1.msra.mxu0 %v7527
        %7529 = vmatprep.subr.mxu0 0.0
        %v7530 = vand.u32 %v6903, 4294901760
        %7531 = vmatpush1.msra.mxu0 %v7530
        %7532 = vmatprep.subr.mxu0 0.0
        %v7533 = vand.u32 %v6904, 4294901760
        %7534 = vmatpush1.msra.mxu0 %v7533
        %7535 = vmatprep.subr.mxu0 0.0
        %v7536 = vand.u32 %v6905, 4294901760
        %7537 = vmatpush1.msra.mxu0 %v7536
        %7538 = vmatprep.subr.mxu0 0.0
        %v7539 = vand.u32 %v6906, 4294901760
        %7540 = vmatpush1.msra.mxu0 %v7539
        %7541 = vmatprep.subr.mxu0 0.0
        %v7542 = vand.u32 %v6907, 4294901760
        %7543 = vmatpush1.msra.mxu0 %v7542
        %7544 = vmatprep.subr.mxu0 0.0
        %v7545 = vand.u32 %v6908, 4294901760
        %7546 = vmatpush1.msra.mxu0 %v7545
        %7547 = vmatprep.subr.mxu0 0.0
        %v7548 = vand.u32 %v6909, 4294901760
        %7549 = vmatpush1.msra.mxu0 %v7548
        %7550 = vmatprep.subr.mxu0 0.0
        %v7551 = vand.u32 %v6910, 4294901760
        %7552 = vmatpush1.msra.mxu0 %v7551
        %7553 = vmatprep.subr.mxu0 0.0
        %v7554 = vand.u32 %v6911, 4294901760
        %7555 = vmatpush1.msra.mxu0 %v7554
        %7556 = vmatprep.subr.mxu0 0.0
        %v7557 = vand.u32 %v6912, 4294901760
        %7558 = vmatpush1.msra.mxu0 %v7557
        %7559 = vmatprep.subr.mxu0 0.0
        %7560 = vmatpush1.msra.mxu0 0.0
        %7561 = vmatprep.subr.mxu0 0.0
        %7562 = vmatpush1.msra.mxu0 0.0
        %7563 = vmatprep.subr.mxu0 0.0
        %7564 = vmatpush1.msra.mxu0 0.0
        %7565 = vmatprep.subr.mxu0 0.0
        %7566 = vmatpush1.msra.mxu0 0.0
        %7567 = vmatprep.subr.mxu0 0.0
        %7568 = vmatpush1.msra.mxu0 0.0
        %7569 = vmatprep.subr.mxu0 0.0
        %7570 = vmatpush1.msra.mxu0 0.0
        %7571 = vmatprep.subr.mxu0 0.0
        %7572 = vmatpush1.msra.mxu0 0.0
        %7573 = vmatprep.subr.mxu0 0.0
        %7574 = vmatpush1.msra.mxu0 0.0
        %7575 = vmatprep.subr.mxu0 0.0
        %7576 = vmatpush1.msra.mxu0 0.0
        %7577 = vmatprep.subr.mxu0 0.0
        %7578 = vmatpush1.msra.mxu0 0.0
        %7579 = vmatprep.subr.mxu0 0.0
        %7580 = vmatpush1.msra.mxu0 0.0
        %7581 = vmatprep.subr.mxu0 0.0
        %7582 = vmatpush1.msra.mxu0 0.0
        %7583 = vmatprep.subr.mxu0 0.0
        %7584 = vmatpush1.msra.mxu0 0.0
        %7585 = vmatprep.subr.mxu0 0.0
        %7586 = vmatpush1.msra.mxu0 0.0
        %7587 = vmatprep.subr.mxu0 0.0
        %7588 = vmatpush1.msra.mxu0 0.0
        %7589 = vmatprep.subr.mxu0 0.0
        %7590 = vmatpush1.msra.mxu0 0.0
        %7591 = vmatprep.mubr.f32.mxu0 0.0
        %v7592 = vand.u32 %v6895, 4294901760
        %7593 = vmatmul.mubr.f32.gmra.mrb[0].mxu0 %v7592
        %v7594 = vpop.f32.mrb[0].mxu0
        %v7595 = vadd.f32 %v7502, %v7594
        %v7596 = vpop.f32.mrb[0].mxu0
        %7597 = vmatprep.mubr.f32.mxu0 0.0
        %v7598 = vand.u32 %v6896, 4294901760
        %7599 = vmatmul.mubr.f32.gmra.mrb[0].mxu0 %v7598
        %v7600 = vpop.f32.mrb[0].mxu0
        %v7601 = vadd.f32 %v7508, %v7600
        %v7602 = vpop.f32.mrb[0].mxu0
        %7603 = vdwg.mxu0
        %v7604 = vld [vmem:[%s845] sm:$0x1]
        %v7606 = vlaneseq
        %v7607 = vshrl.u32 %v7606, 7
        %v7608 = vsub.s32 0, %v7607
        %v7609 = vrot.slane %v7604, %v7608
        %v7611 = vmul.f32 %v7609, %v7595
        %v7612 = vmul.f32 %v7609, %v7601
        %v7613 = vadd.f32 %v6296, %v7611
        %v7614 = vadd.f32 %v6297, %v7612
        %7615 = vst.msk [vmem:[#allocation2] sm:$0xff] %vm905, %v7613
        %7616 = vst.msk [vmem:[#allocation2 + $0x8] sm:$0xf] %vm909, %v7614
        %p7617 = scmp.eq.s32.totalorder %s39, 1
        // Predicated region
        $region105: #{tpu_custom_call.1} parent=99 // pred_check
          %p7618 = pneg %p7617
        $region106: #{tpu_custom_call.1} parent=99 // pred_check_branch
          %7620 = sbr.rel (%p7618) target = $region108
        $region107: #{tpu_custom_call.1} parent=99 // pred_region
          %v7621 = vld [vmem:[%s16] sm:$0x1]
          %v7622 = vld [vmem:[%s17] sm:$0x1]
          %v7623 = vsel %vm909, %v7614, 0.0
          %7624 = vadd.xlane.f32.xlu0 %v7623
          %v7625 = vpop.xlane.xlu0 %7624
          %v7626 = vmul.f32 %v7625, %v913
          %v7627 = vsub.f32 %v7614, %v7626
          %v7628 = vmul.f32 %v7627, %v7627
          %v7629 = vsel %vm909, %v7628, 0.0
          %7630 = vadd.xlane.f32.xlu0 %v7629
          %v7631 = vpop.xlane.xlu0 %7630
          %v7632 = vmul.f32 %v7631, %v913
          %v7633 = vadd.f32 %v7632, 1e-05
          %v7634 = vrsqrt.pop %v7633
          %v7635 = vmul.f32 %v7627, %v7634
          %v7637 = vlaneseq
          %v7638 = vshrl.u32 %v7637, 7
          %v7639 = vsub.s32 0, %v7638
          %v7640 = vrot.slane %v7621, %v7639
          %v7642 = vmul.f32 %v7635, %v7640
          %v7644 = vlaneseq
          %v7645 = vshrl.u32 %v7644, 7
          %v7646 = vsub.s32 0, %v7645
          %v7647 = vrot.slane %v7622, %v7646
          %v7649 = vadd.f32 %v7642, %v7647
          %v7650 = vld [vmem:[%s18] sm:$0xff]
          %v7651 = vld [vmem:[%s18 + $0x8] sm:$0xff]
          %v7652 = vld [vmem:[%s18 + $0x10] sm:$0xff]
          %v7653 = vld [vmem:[%s18 + $0x18] sm:$0xff]
          %v7654 = vld [vmem:[%s19] sm:$0x1]
          %v7656 = vlaneseq
          %v7657 = vshrl.u32 %v7656, 7
          %v7658 = vsub.s32 0, %v7657
          %v7659 = vrot.slane %v7654, %v7658
          %v7662 = vsel %vm905, %v7649, 0
          %7664 = vmatprep.subr.mxu0 0.0
          %v7665 = vand.u32 %v7650, 4294901760
          %7666 = vmatpush1.msra.mxu0 %v7665
          %7667 = vmatprep.subr.mxu0 0.0
          %v7668 = vand.u32 %v7651, 4294901760
          %7669 = vmatpush1.msra.mxu0 %v7668
          %7670 = vmatprep.subr.mxu0 0.0
          %v7671 = vand.u32 %v7652, 4294901760
          %7672 = vmatpush1.msra.mxu0 %v7671
          %7673 = vmatprep.subr.mxu0 0.0
          %v7674 = vand.u32 %v7653, 4294901760
          %7675 = vmatpush1.msra.mxu0 %v7674
          %7676 = vmatprep.subr.mxu0 0.0
          %7677 = vmatpush1.msra.mxu0 0.0
          %7678 = vmatprep.subr.mxu0 0.0
          %7679 = vmatpush1.msra.mxu0 0.0
          %7680 = vmatprep.subr.mxu0 0.0
          %7681 = vmatpush1.msra.mxu0 0.0
          %7682 = vmatprep.subr.mxu0 0.0
          %7683 = vmatpush1.msra.mxu0 0.0
          %7684 = vmatprep.subr.mxu0 0.0
          %7685 = vmatpush1.msra.mxu0 0.0
          %7686 = vmatprep.subr.mxu0 0.0
          %7687 = vmatpush1.msra.mxu0 0.0
          %7688 = vmatprep.subr.mxu0 0.0
          %7689 = vmatpush1.msra.mxu0 0.0
          %7690 = vmatprep.subr.mxu0 0.0
          %7691 = vmatpush1.msra.mxu0 0.0
          %7692 = vmatprep.subr.mxu0 0.0
          %7693 = vmatpush1.msra.mxu0 0.0
          %7694 = vmatprep.subr.mxu0 0.0
          %7695 = vmatpush1.msra.mxu0 0.0
          %7696 = vmatprep.subr.mxu0 0.0
          %7697 = vmatpush1.msra.mxu0 0.0
          %7698 = vmatprep.subr.mxu0 0.0
          %7699 = vmatpush1.msra.mxu0 0.0
          %7700 = vmatprep.subr.mxu0 0.0
          %7701 = vmatpush1.msra.mxu0 0.0
          %7702 = vmatprep.subr.mxu0 0.0
          %7703 = vmatpush1.msra.mxu0 0.0
          %7704 = vmatprep.subr.mxu0 0.0
          %7705 = vmatpush1.msra.mxu0 0.0
          %7706 = vmatprep.subr.mxu0 0.0
          %7707 = vmatpush1.msra.mxu0 0.0
          %7708 = vmatprep.subr.mxu0 0.0
          %7709 = vmatpush1.msra.mxu0 0.0
          %7710 = vmatprep.subr.mxu0 0.0
          %7711 = vmatpush1.msra.mxu0 0.0
          %7712 = vmatprep.subr.mxu0 0.0
          %7713 = vmatpush1.msra.mxu0 0.0
          %7714 = vmatprep.subr.mxu0 0.0
          %7715 = vmatpush1.msra.mxu0 0.0
          %7716 = vmatprep.subr.mxu0 0.0
          %7717 = vmatpush1.msra.mxu0 0.0
          %7718 = vmatprep.subr.mxu0 0.0
          %7719 = vmatpush1.msra.mxu0 0.0
          %7720 = vmatprep.subr.mxu0 0.0
          %7721 = vmatpush1.msra.mxu0 0.0
          %7722 = vmatprep.subr.mxu0 0.0
          %7723 = vmatpush1.msra.mxu0 0.0
          %7724 = vmatprep.subr.mxu0 0.0
          %7725 = vmatpush1.msra.mxu0 0.0
          %7726 = vmatprep.subr.mxu0 0.0
          %7727 = vmatpush1.msra.mxu0 0.0
          %7728 = vmatprep.subr.mxu0 0.0
          %7729 = vmatpush1.msra.mxu0 0.0
          %7730 = vmatprep.subr.mxu0 0.0
          %7731 = vmatpush1.msra.mxu0 0.0
          %7732 = vmatprep.mubr.f32.mxu0 0.0
          %v7733 = vand.u32 %v7662, 4294901760
          %v7734 = vsub.f32 %v7662, %v7733
          %v7735 = vand.u32 %v7734, 4294901760
          %v7736 = vsub.f32 %v7734, %v7735
          %v7737 = vand.u32 %v7736, 4294901760
          %7738 = vmatmul.mubr.f32.gmra.mrb[0].mxu0 %v7737
          %v7739 = vpop.f32.mrb[0].mxu0
          %v7740 = vadd.f32 %v7659, %v7739
          %v7741 = vpop.f32.mrb[0].mxu0
          %7742 = vdwg.mxu0
          %7743 = vmatprep.subr.mxu0 0.0
          %v7744 = vand.u32 %v7650, 4294901760
          %v7745 = vsub.f32 %v7650, %v7744
          %v7746 = vand.u32 %v7745, 4294901760
          %v7747 = vsub.f32 %v7745, %v7746
          %v7748 = vand.u32 %v7747, 4294901760
          %7749 = vmatpush1.msra.mxu0 %v7748
          %7750 = vmatprep.subr.mxu0 0.0
          %v7751 = vand.u32 %v7651, 4294901760
          %v7752 = vsub.f32 %v7651, %v7751
          %v7753 = vand.u32 %v7752, 4294901760
          %v7754 = vsub.f32 %v7752, %v7753
          %v7755 = vand.u32 %v7754, 4294901760
          %7756 = vmatpush1.msra.mxu0 %v7755
          %7757 = vmatprep.subr.mxu0 0.0
          %v7758 = vand.u32 %v7652, 4294901760
          %v7759 = vsub.f32 %v7652, %v7758
          %v7760 = vand.u32 %v7759, 4294901760
          %v7761 = vsub.f32 %v7759, %v7760
          %v7762 = vand.u32 %v7761, 4294901760
          %7763 = vmatpush1.msra.mxu0 %v7762
          %7764 = vmatprep.subr.mxu0 0.0
          %v7765 = vand.u32 %v7653, 4294901760
          %v7766 = vsub.f32 %v7653, %v7765
          %v7767 = vand.u32 %v7766, 4294901760
          %v7768 = vsub.f32 %v7766, %v7767
          %v7769 = vand.u32 %v7768, 4294901760
          %7770 = vmatpush1.msra.mxu0 %v7769
          %7771 = vmatprep.subr.mxu0 0.0
          %7772 = vmatpush1.msra.mxu0 0.0
          %7773 = vmatprep.subr.mxu0 0.0
          %7774 = vmatpush1.msra.mxu0 0.0
          %7775 = vmatprep.subr.mxu0 0.0
          %7776 = vmatpush1.msra.mxu0 0.0
          %7777 = vmatprep.subr.mxu0 0.0
          %7778 = vmatpush1.msra.mxu0 0.0
          %7779 = vmatprep.subr.mxu0 0.0
          %7780 = vmatpush1.msra.mxu0 0.0
          %7781 = vmatprep.subr.mxu0 0.0
          %7782 = vmatpush1.msra.mxu0 0.0
          %7783 = vmatprep.subr.mxu0 0.0
          %7784 = vmatpush1.msra.mxu0 0.0
          %7785 = vmatprep.subr.mxu0 0.0
          %7786 = vmatpush1.msra.mxu0 0.0
          %7787 = vmatprep.subr.mxu0 0.0
          %7788 = vmatpush1.msra.mxu0 0.0
          %7789 = vmatprep.subr.mxu0 0.0
          %7790 = vmatpush1.msra.mxu0 0.0
          %7791 = vmatprep.subr.mxu0 0.0
          %7792 = vmatpush1.msra.mxu0 0.0
          %7793 = vmatprep.subr.mxu0 0.0
          %7794 = vmatpush1.msra.mxu0 0.0
          %7795 = vmatprep.subr.mxu0 0.0
          %7796 = vmatpush1.msra.mxu0 0.0
          %7797 = vmatprep.subr.mxu0 0.0
          %7798 = vmatpush1.msra.mxu0 0.0
          %7799 = vmatprep.subr.mxu0 0.0
          %7800 = vmatpush1.msra.mxu0 0.0
          %7801 = vmatprep.subr.mxu0 0.0
          %7802 = vmatpush1.msra.mxu0 0.0
          %7803 = vmatprep.subr.mxu0 0.0
          %7804 = vmatpush1.msra.mxu0 0.0
          %7805 = vmatprep.subr.mxu0 0.0
          %7806 = vmatpush1.msra.mxu0 0.0
          %7807 = vmatprep.subr.mxu0 0.0
          %7808 = vmatpush1.msra.mxu0 0.0
          %7809 = vmatprep.subr.mxu0 0.0
          %7810 = vmatpush1.msra.mxu0 0.0
          %7811 = vmatprep.subr.mxu0 0.0
          %7812 = vmatpush1.msra.mxu0 0.0
          %7813 = vmatprep.subr.mxu0 0.0
          %7814 = vmatpush1.msra.mxu0 0.0
          %7815 = vmatprep.subr.mxu0 0.0
          %7816 = vmatpush1.msra.mxu0 0.0
          %7817 = vmatprep.subr.mxu0 0.0
          %7818 = vmatpush1.msra.mxu0 0.0
          %7819 = vmatprep.subr.mxu0 0.0
          %7820 = vmatpush1.msra.mxu0 0.0
          %7821 = vmatprep.subr.mxu0 0.0
          %7822 = vmatpush1.msra.mxu0 0.0
          %7823 = vmatprep.subr.mxu0 0.0
          %7824 = vmatpush1.msra.mxu0 0.0
          %7825 = vmatprep.subr.mxu0 0.0
          %7826 = vmatpush1.msra.mxu0 0.0
          %7827 = vmatprep.mubr.f32.mxu0 0.0
          %v7828 = vand.u32 %v7662, 4294901760
          %7829 = vmatmul.mubr.f32.gmra.mrb[0].mxu0 %v7828
          %v7830 = vpop.f32.mrb[0].mxu0
          %v7831 = vadd.f32 %v7740, %v7830
          %v7832 = vpop.f32.mrb[0].mxu0
          %7833 = vdwg.mxu0
          %7834 = vmatprep.subr.mxu0 0.0
          %v7835 = vand.u32 %v7650, 4294901760
          %v7836 = vsub.f32 %v7650, %v7835
          %7837 = vmatpush1.msra.mxu0 %v7836
          %7838 = vmatprep.subr.mxu0 0.0
          %v7839 = vand.u32 %v7651, 4294901760
          %v7840 = vsub.f32 %v7651, %v7839
          %7841 = vmatpush1.msra.mxu0 %v7840
          %7842 = vmatprep.subr.mxu0 0.0
          %v7843 = vand.u32 %v7652, 4294901760
          %v7844 = vsub.f32 %v7652, %v7843
          %7845 = vmatpush1.msra.mxu0 %v7844
          %7846 = vmatprep.subr.mxu0 0.0
          %v7847 = vand.u32 %v7653, 4294901760
          %v7848 = vsub.f32 %v7653, %v7847
          %7849 = vmatpush1.msra.mxu0 %v7848
          %7850 = vmatprep.subr.mxu0 0.0
          %7851 = vmatpush1.msra.mxu0 0.0
          %7852 = vmatprep.subr.mxu0 0.0
          %7853 = vmatpush1.msra.mxu0 0.0
          %7854 = vmatprep.subr.mxu0 0.0
          %7855 = vmatpush1.msra.mxu0 0.0
          %7856 = vmatprep.subr.mxu0 0.0
          %7857 = vmatpush1.msra.mxu0 0.0
          %7858 = vmatprep.subr.mxu0 0.0
          %7859 = vmatpush1.msra.mxu0 0.0
          %7860 = vmatprep.subr.mxu0 0.0
          %7861 = vmatpush1.msra.mxu0 0.0
          %7862 = vmatprep.subr.mxu0 0.0
          %7863 = vmatpush1.msra.mxu0 0.0
          %7864 = vmatprep.subr.mxu0 0.0
          %7865 = vmatpush1.msra.mxu0 0.0
          %7866 = vmatprep.subr.mxu0 0.0
          %7867 = vmatpush1.msra.mxu0 0.0
          %7868 = vmatprep.subr.mxu0 0.0
          %7869 = vmatpush1.msra.mxu0 0.0
          %7870 = vmatprep.subr.mxu0 0.0
          %7871 = vmatpush1.msra.mxu0 0.0
          %7872 = vmatprep.subr.mxu0 0.0
          %7873 = vmatpush1.msra.mxu0 0.0
          %7874 = vmatprep.subr.mxu0 0.0
          %7875 = vmatpush1.msra.mxu0 0.0
          %7876 = vmatprep.subr.mxu0 0.0
          %7877 = vmatpush1.msra.mxu0 0.0
          %7878 = vmatprep.subr.mxu0 0.0
          %7879 = vmatpush1.msra.mxu0 0.0
          %7880 = vmatprep.subr.mxu0 0.0
          %7881 = vmatpush1.msra.mxu0 0.0
          %7882 = vmatprep.subr.mxu0 0.0
          %7883 = vmatpush1.msra.mxu0 0.0
          %7884 = vmatprep.subr.mxu0 0.0
          %7885 = vmatpush1.msra.mxu0 0.0
          %7886 = vmatprep.subr.mxu0 0.0
          %7887 = vmatpush1.msra.mxu0 0.0
          %7888 = vmatprep.subr.mxu0 0.0
          %7889 = vmatpush1.msra.mxu0 0.0
          %7890 = vmatprep.subr.mxu0 0.0
          %7891 = vmatpush1.msra.mxu0 0.0
          %7892 = vmatprep.subr.mxu0 0.0
          %7893 = vmatpush1.msra.mxu0 0.0
          %7894 = vmatprep.subr.mxu0 0.0
          %7895 = vmatpush1.msra.mxu0 0.0
          %7896 = vmatprep.subr.mxu0 0.0
          %7897 = vmatpush1.msra.mxu0 0.0
          %7898 = vmatprep.subr.mxu0 0.0
          %7899 = vmatpush1.msra.mxu0 0.0
          %7900 = vmatprep.subr.mxu0 0.0
          %7901 = vmatpush1.msra.mxu0 0.0
          %7902 = vmatprep.subr.mxu0 0.0
          %7903 = vmatpush1.msra.mxu0 0.0
          %7904 = vmatprep.subr.mxu0 0.0
          %7905 = vmatpush1.msra.mxu0 0.0
          %7906 = vmatprep.mubr.f32.mxu0 0.0
          %v7907 = vand.u32 %v7662, 4294901760
          %v7908 = vsub.f32 %v7662, %v7907
          %7909 = vmatmul.mubr.f32.gmra.mrb[0].mxu0 %v7908
          %v7910 = vpop.f32.mrb[0].mxu0
          %v7911 = vadd.f32 %v7831, %v7910
          %v7912 = vpop.f32.mrb[0].mxu0
          %7913 = vdwg.mxu0
          %7914 = vmatprep.subr.mxu0 0.0
          %v7915 = vand.u32 %v7650, 4294901760
          %7916 = vmatpush1.msra.mxu0 %v7915
          %7917 = vmatprep.subr.mxu0 0.0
          %v7918 = vand.u32 %v7651, 4294901760
          %7919 = vmatpush1.msra.mxu0 %v7918
          %7920 = vmatprep.subr.mxu0 0.0
          %v7921 = vand.u32 %v7652, 4294901760
          %7922 = vmatpush1.msra.mxu0 %v7921
          %7923 = vmatprep.subr.mxu0 0.0
          %v7924 = vand.u32 %v7653, 4294901760
          %7925 = vmatpush1.msra.mxu0 %v7924
          %7926 = vmatprep.subr.mxu0 0.0
          %7927 = vmatpush1.msra.mxu0 0.0
          %7928 = vmatprep.subr.mxu0 0.0
          %7929 = vmatpush1.msra.mxu0 0.0
          %7930 = vmatprep.subr.mxu0 0.0
          %7931 = vmatpush1.msra.mxu0 0.0
          %7932 = vmatprep.subr.mxu0 0.0
          %7933 = vmatpush1.msra.mxu0 0.0
          %7934 = vmatprep.subr.mxu0 0.0
          %7935 = vmatpush1.msra.mxu0 0.0
          %7936 = vmatprep.subr.mxu0 0.0
          %7937 = vmatpush1.msra.mxu0 0.0
          %7938 = vmatprep.subr.mxu0 0.0
          %7939 = vmatpush1.msra.mxu0 0.0
          %7940 = vmatprep.subr.mxu0 0.0
          %7941 = vmatpush1.msra.mxu0 0.0
          %7942 = vmatprep.subr.mxu0 0.0
          %7943 = vmatpush1.msra.mxu0 0.0
          %7944 = vmatprep.subr.mxu0 0.0
          %7945 = vmatpush1.msra.mxu0 0.0
          %7946 = vmatprep.subr.mxu0 0.0
          %7947 = vmatpush1.msra.mxu0 0.0
          %7948 = vmatprep.subr.mxu0 0.0
          %7949 = vmatpush1.msra.mxu0 0.0
          %7950 = vmatprep.subr.mxu0 0.0
          %7951 = vmatpush1.msra.mxu0 0.0
          %7952 = vmatprep.subr.mxu0 0.0
          %7953 = vmatpush1.msra.mxu0 0.0
          %7954 = vmatprep.subr.mxu0 0.0
          %7955 = vmatpush1.msra.mxu0 0.0
          %7956 = vmatprep.subr.mxu0 0.0
          %7957 = vmatpush1.msra.mxu0 0.0
          %7958 = vmatprep.subr.mxu0 0.0
          %7959 = vmatpush1.msra.mxu0 0.0
          %7960 = vmatprep.subr.mxu0 0.0
          %7961 = vmatpush1.msra.mxu0 0.0
          %7962 = vmatprep.subr.mxu0 0.0
          %7963 = vmatpush1.msra.mxu0 0.0
          %7964 = vmatprep.subr.mxu0 0.0
          %7965 = vmatpush1.msra.mxu0 0.0
          %7966 = vmatprep.subr.mxu0 0.0
          %7967 = vmatpush1.msra.mxu0 0.0
          %7968 = vmatprep.subr.mxu0 0.0
          %7969 = vmatpush1.msra.mxu0 0.0
          %7970 = vmatprep.subr.mxu0 0.0
          %7971 = vmatpush1.msra.mxu0 0.0
          %7972 = vmatprep.subr.mxu0 0.0
          %7973 = vmatpush1.msra.mxu0 0.0
          %7974 = vmatprep.subr.mxu0 0.0
          %7975 = vmatpush1.msra.mxu0 0.0
          %7976 = vmatprep.subr.mxu0 0.0
          %7977 = vmatpush1.msra.mxu0 0.0
          %7978 = vmatprep.subr.mxu0 0.0
          %7979 = vmatpush1.msra.mxu0 0.0
          %7980 = vmatprep.subr.mxu0 0.0
          %7981 = vmatpush1.msra.mxu0 0.0
          %7982 = vmatprep.mubr.f32.mxu0 0.0
          %v7983 = vand.u32 %v7662, 4294901760
          %v7984 = vsub.f32 %v7662, %v7983
          %v7985 = vand.u32 %v7984, 4294901760
          %7986 = vmatmul.mubr.f32.gmra.mrb[0].mxu0 %v7985
          %v7987 = vpop.f32.mrb[0].mxu0
          %v7988 = vadd.f32 %v7911, %v7987
          %v7989 = vpop.f32.mrb[0].mxu0
          %7990 = vdwg.mxu0
          %7991 = vmatprep.subr.mxu0 0.0
          %v7992 = vand.u32 %v7650, 4294901760
          %v7993 = vsub.f32 %v7650, %v7992
          %v7994 = vand.u32 %v7993, 4294901760
          %7995 = vmatpush1.msra.mxu0 %v7994
          %7996 = vmatprep.subr.mxu0 0.0
          %v7997 = vand.u32 %v7651, 4294901760
          %v7998 = vsub.f32 %v7651, %v7997
          %v7999 = vand.u32 %v7998, 4294901760
          %8000 = vmatpush1.msra.mxu0 %v7999
          %8001 = vmatprep.subr.mxu0 0.0
          %v8002 = vand.u32 %v7652, 4294901760
          %v8003 = vsub.f32 %v7652, %v8002
          %v8004 = vand.u32 %v8003, 4294901760
          %8005 = vmatpush1.msra.mxu0 %v8004
          %8006 = vmatprep.subr.mxu0 0.0
          %v8007 = vand.u32 %v7653, 4294901760
          %v8008 = vsub.f32 %v7653, %v8007
          %v8009 = vand.u32 %v8008, 4294901760
          %8010 = vmatpush1.msra.mxu0 %v8009
          %8011 = vmatprep.subr.mxu0 0.0
          %8012 = vmatpush1.msra.mxu0 0.0
          %8013 = vmatprep.subr.mxu0 0.0
          %8014 = vmatpush1.msra.mxu0 0.0
          %8015 = vmatprep.subr.mxu0 0.0
          %8016 = vmatpush1.msra.mxu0 0.0
          %8017 = vmatprep.subr.mxu0 0.0
          %8018 = vmatpush1.msra.mxu0 0.0
          %8019 = vmatprep.subr.mxu0 0.0
          %8020 = vmatpush1.msra.mxu0 0.0
          %8021 = vmatprep.subr.mxu0 0.0
          %8022 = vmatpush1.msra.mxu0 0.0
          %8023 = vmatprep.subr.mxu0 0.0
          %8024 = vmatpush1.msra.mxu0 0.0
          %8025 = vmatprep.subr.mxu0 0.0
          %8026 = vmatpush1.msra.mxu0 0.0
          %8027 = vmatprep.subr.mxu0 0.0
          %8028 = vmatpush1.msra.mxu0 0.0
          %8029 = vmatprep.subr.mxu0 0.0
          %8030 = vmatpush1.msra.mxu0 0.0
          %8031 = vmatprep.subr.mxu0 0.0
          %8032 = vmatpush1.msra.mxu0 0.0
          %8033 = vmatprep.subr.mxu0 0.0
          %8034 = vmatpush1.msra.mxu0 0.0
          %8035 = vmatprep.subr.mxu0 0.0
          %8036 = vmatpush1.msra.mxu0 0.0
          %8037 = vmatprep.subr.mxu0 0.0
          %8038 = vmatpush1.msra.mxu0 0.0
          %8039 = vmatprep.subr.mxu0 0.0
          %8040 = vmatpush1.msra.mxu0 0.0
          %8041 = vmatprep.subr.mxu0 0.0
          %8042 = vmatpush1.msra.mxu0 0.0
          %8043 = vmatprep.subr.mxu0 0.0
          %8044 = vmatpush1.msra.mxu0 0.0
          %8045 = vmatprep.subr.mxu0 0.0
          %8046 = vmatpush1.msra.mxu0 0.0
          %8047 = vmatprep.subr.mxu0 0.0
          %8048 = vmatpush1.msra.mxu0 0.0
          %8049 = vmatprep.subr.mxu0 0.0
          %8050 = vmatpush1.msra.mxu0 0.0
          %8051 = vmatprep.subr.mxu0 0.0
          %8052 = vmatpush1.msra.mxu0 0.0
          %8053 = vmatprep.subr.mxu0 0.0
          %8054 = vmatpush1.msra.mxu0 0.0
          %8055 = vmatprep.subr.mxu0 0.0
          %8056 = vmatpush1.msra.mxu0 0.0
          %8057 = vmatprep.subr.mxu0 0.0
          %8058 = vmatpush1.msra.mxu0 0.0
          %8059 = vmatprep.subr.mxu0 0.0
          %8060 = vmatpush1.msra.mxu0 0.0
          %8061 = vmatprep.subr.mxu0 0.0
          %8062 = vmatpush1.msra.mxu0 0.0
          %8063 = vmatprep.subr.mxu0 0.0
          %8064 = vmatpush1.msra.mxu0 0.0
          %8065 = vmatprep.subr.mxu0 0.0
          %8066 = vmatpush1.msra.mxu0 0.0
          %8067 = vmatprep.mubr.f32.mxu0 0.0
          %v8068 = vand.u32 %v7662, 4294901760
          %8069 = vmatmul.mubr.f32.gmra.mrb[0].mxu0 %v8068
          %v8070 = vpop.f32.mrb[0].mxu0
          %v8071 = vadd.f32 %v7988, %v8070
          %v8072 = vpop.f32.mrb[0].mxu0
          %8073 = vdwg.mxu0
          %8074 = vmatprep.subr.mxu0 0.0
          %v8075 = vand.u32 %v7650, 4294901760
          %8076 = vmatpush1.msra.mxu0 %v8075
          %8077 = vmatprep.subr.mxu0 0.0
          %v8078 = vand.u32 %v7651, 4294901760
          %8079 = vmatpush1.msra.mxu0 %v8078
          %8080 = vmatprep.subr.mxu0 0.0
          %v8081 = vand.u32 %v7652, 4294901760
          %8082 = vmatpush1.msra.mxu0 %v8081
          %8083 = vmatprep.subr.mxu0 0.0
          %v8084 = vand.u32 %v7653, 4294901760
          %8085 = vmatpush1.msra.mxu0 %v8084
          %8086 = vmatprep.subr.mxu0 0.0
          %8087 = vmatpush1.msra.mxu0 0.0
          %8088 = vmatprep.subr.mxu0 0.0
          %8089 = vmatpush1.msra.mxu0 0.0
          %8090 = vmatprep.subr.mxu0 0.0
          %8091 = vmatpush1.msra.mxu0 0.0
          %8092 = vmatprep.subr.mxu0 0.0
          %8093 = vmatpush1.msra.mxu0 0.0
          %8094 = vmatprep.subr.mxu0 0.0
          %8095 = vmatpush1.msra.mxu0 0.0
          %8096 = vmatprep.subr.mxu0 0.0
          %8097 = vmatpush1.msra.mxu0 0.0
          %8098 = vmatprep.subr.mxu0 0.0
          %8099 = vmatpush1.msra.mxu0 0.0
          %8100 = vmatprep.subr.mxu0 0.0
          %8101 = vmatpush1.msra.mxu0 0.0
          %8102 = vmatprep.subr.mxu0 0.0
          %8103 = vmatpush1.msra.mxu0 0.0
          %8104 = vmatprep.subr.mxu0 0.0
          %8105 = vmatpush1.msra.mxu0 0.0
          %8106 = vmatprep.subr.mxu0 0.0
          %8107 = vmatpush1.msra.mxu0 0.0
          %8108 = vmatprep.subr.mxu0 0.0
          %8109 = vmatpush1.msra.mxu0 0.0
          %8110 = vmatprep.subr.mxu0 0.0
          %8111 = vmatpush1.msra.mxu0 0.0
          %8112 = vmatprep.subr.mxu0 0.0
          %8113 = vmatpush1.msra.mxu0 0.0
          %8114 = vmatprep.subr.mxu0 0.0
          %8115 = vmatpush1.msra.mxu0 0.0
          %8116 = vmatprep.subr.mxu0 0.0
          %8117 = vmatpush1.msra.mxu0 0.0
          %8118 = vmatprep.subr.mxu0 0.0
          %8119 = vmatpush1.msra.mxu0 0.0
          %8120 = vmatprep.subr.mxu0 0.0
          %8121 = vmatpush1.msra.mxu0 0.0
          %8122 = vmatprep.subr.mxu0 0.0
          %8123 = vmatpush1.msra.mxu0 0.0
          %8124 = vmatprep.subr.mxu0 0.0
          %8125 = vmatpush1.msra.mxu0 0.0
          %8126 = vmatprep.subr.mxu0 0.0
          %8127 = vmatpush1.msra.mxu0 0.0
          %8128 = vmatprep.subr.mxu0 0.0
          %8129 = vmatpush1.msra.mxu0 0.0
          %8130 = vmatprep.subr.mxu0 0.0
          %8131 = vmatpush1.msra.mxu0 0.0
          %8132 = vmatprep.subr.mxu0 0.0
          %8133 = vmatpush1.msra.mxu0 0.0
          %8134 = vmatprep.subr.mxu0 0.0
          %8135 = vmatpush1.msra.mxu0 0.0
          %8136 = vmatprep.subr.mxu0 0.0
          %8137 = vmatpush1.msra.mxu0 0.0
          %8138 = vmatprep.subr.mxu0 0.0
          %8139 = vmatpush1.msra.mxu0 0.0
          %8140 = vmatprep.subr.mxu0 0.0
          %8141 = vmatpush1.msra.mxu0 0.0
          %8142 = vmatprep.mubr.f32.mxu0 0.0
          %v8143 = vand.u32 %v7662, 4294901760
          %8144 = vmatmul.mubr.f32.gmra.mrb[0].mxu0 %v8143
          %v8145 = vpop.f32.mrb[0].mxu0
          %v8146 = vadd.f32 %v8071, %v8145
          %v8147 = vpop.f32.mrb[0].mxu0
          %8148 = vdwg.mxu0
          %8149 = vst [vmem:[%s793] sm:$0xf] %v8146
        $region108: #{tpu_custom_call.1} parent=99 // pred_fallthru
          _
        %s8150 = sand.u32 %s544, 1
        %s8151 = scalar_lea.sflag [#allocation4], %s8150
        %s8152 = sand.u32 %s544, 1
        %s8153 = smul.addr %s8152, 4
        %s8154 = scalar_lea.vmem [#allocation3], %s8153
        // Predicated region
        $region109: #{tpu_custom_call.1} parent=99 // pred_check
          %p8155 = pneg %p554
        $region110: #{tpu_custom_call.1} parent=99 // pred_check_branch
          %8157 = sbr.rel (%p8155) target = $region112
        $region111: #{tpu_custom_call.1} parent=99 // pred_region
          %s8159 = ssub.s32 64, 64
          %8160 = vsyncadd %s8151, %s8159
          %s8161 = smul.addr %s38, 64
          %s8162 = scalar_lea.hbm %s20, %s8161
          %s8164 = sshll.u32 %s8154, 4
          %s8165 = int_to_ptr.vmem [resolvable:$true] %s8164
          %8167 = dma.vmem_to_hbm [thread:$0]  %s8165, 64, %s8162, %s8151
        $region112: #{tpu_custom_call.1} parent=99 // pred_fallthru
          _
      $region100: #{tpu_custom_call.1} parent=5 // pred_fallthru
        _
      %p8168 = scmp.le.s32.totalorder 2, %s29
      // Predicated region
      $region113: #{tpu_custom_call.1} parent=5 // pred_check
        %p8169 = pneg %p8168
      $region114: #{tpu_custom_call.1} parent=5 // pred_check_branch
        %8171 = sbr.rel (%p8169) target = $region116
      $region115: #{tpu_custom_call.1} parent=5 // pred_region
        %s8172 = ssub.s32 %s29, 2
        // Predicated region
        $region117: #{tpu_custom_call.1} parent=115 // pred_check
          %p8173 = pneg %p560
        $region118: #{tpu_custom_call.1} parent=115 // pred_check_branch
          %8175 = sbr.rel (%p8173) target = $region120
        $region119: #{tpu_custom_call.1} parent=115 // pred_region
          %s8176 = sand.u32 %s545, 1
          %s8177 = scalar_lea.sflag [#allocation4], %s8176
          %s8178 = sand.u32 %s545, 1
          %s8179 = smul.addr %s8178, 4
          %s8180 = scalar_lea.vmem [#allocation3], %s8179
          %8181 = dma.done %s8177, 64
        $region120: #{tpu_custom_call.1} parent=115 // pred_fallthru
          _
      $region116: #{tpu_custom_call.1} parent=5 // pred_fallthru
        _
    $region6: #{tpu_custom_call.1} parent=1 // loop_footer
      %s33 = sadd.s32 1, %s29
    $region7: #{tpu_custom_call.1} parent=1 // loop_footer_branch
      %28 = sbr.rel target = $region3
    $region8: #{tpu_custom_call.1} parent=1 // loop_exit
      _
    %8182 = vsyncpa [#allocation4], 1
    %s8183 = scalar_lea.sflag [#allocation4], 1
    %8184 = vsyncpa %s8183, 1

</llo_original>
